<compile_context>
chip_gen: v6e
topology: v6e:2x2x1
jax: 0.10.0
libtpu: 0.0.40
codegen_flags: <defaults>
</compile_context>

<pallas_src>
import jax
import jax.numpy as jnp
from jax.experimental import pallas as pl
from jax.experimental.pallas import tpu as pltpu


# --------------------------------------------------------------------------- #
# Kernel
# --------------------------------------------------------------------------- #
def _lstm_fc_kernel(x_ref,                          # (tc*Bp, D)  mxu dtype, time-major (batch inner)
                    wih0_ref, whh0_ref, b0_ref,     # (D,4Hp), (Hp,4Hp) mxu ; (1,4Hp) f32
                    wih1_ref, whh1_ref, b1_ref,     # (Hp,4Hp), (Hp,4Hp) mxu ; (1,4Hp) f32
                    wfc_ref, bfc_ref,               # (Hp,Op) mxu ; (1,Op) f32
                    out_ref,                        # (Bp, Op) f32
                    gx0_ref,                        # (tc*Bp, 4Hp) f32 scratch
                    h0_ref, c0_ref, h1_ref, c1_ref):  # (Bp,Hp) scratch: h mxu-dtype, c f32
    t_blk = pl.program_id(0)
    Bp = out_ref.shape[0]
    Hp = whh0_ref.shape[0]
    tc = x_ref.shape[0] // Bp
    mxu_dt = whh0_ref.dtype

    # Zero the carried recurrent state at the start of the time sweep.
    @pl.when(t_blk == 0)
    def _init():
        h0_ref[...] = jnp.zeros_like(h0_ref)
        c0_ref[...] = jnp.zeros_like(c0_ref)
        h1_ref[...] = jnp.zeros_like(h1_ref)
        c1_ref[...] = jnp.zeros_like(c1_ref)

    # Hoisted layer-0 input projection: one (tc*Bp, D) @ (D, 4Hp) matmul per
    # chunk with b_ih0+b_hh0 folded in; stored to VMEM scratch so the
    # recurrent loop reads it back with aligned dynamic vlds.
    # TODO(synk): if this head matmul shows up exposed in the trace, split it
    # into 2-4 sub-matmuls and start the recurrence after the first slice.
    gx0_ref[...] = (jnp.dot(x_ref[...], wih0_ref[...],
                            preferred_element_type=jnp.float32) + b0_ref[...])

    whh0 = whh0_ref[...]
    wih1 = wih1_ref[...]
    whh1 = whh1_ref[...]
    # Hoisted broadcast (JAX does not CSE broadcast_in_dim inside loops).
    b1 = jnp.broadcast_to(b1_ref[...], (Bp, 4 * Hp))

    def sig(v):
        # sigmoid via tanh: one EUP push instead of two (exp + reciprocal).
        return 0.5 * jnp.tanh(0.5 * v) + 0.5

    def gates_to_hc(gates, c):
        # PyTorch gate order [i, f, g, o].  Hp is a multiple of 128, so each
        # slice is a lane-aligned vreg view.  All elementwise math in f32;
        # single cast of h to the MXU dtype per layer per timestep.
        i = sig(gates[:, 0:Hp])
        f = sig(gates[:, Hp:2 * Hp])
        g = jnp.tanh(gates[:, 2 * Hp:3 * Hp])
        o = sig(gates[:, 3 * Hp:4 * Hp])
        c_new = f * c + i * g
        h_new = (o * jnp.tanh(c_new)).astype(mxu_dt)
        return h_new, c_new

    def step(t, carry):
        h0, c0, h1, c1 = carry                       # h*: mxu dtype, c*: f32
        row = pl.multiple_of(t * Bp, Bp)             # Bp is a multiple of 8
        # layer 0: only the recurrent matmul remains on the critical path.
        g0 = gx0_ref[pl.ds(row, Bp), :] + jnp.dot(
            h0, whh0, preferred_element_type=jnp.float32)
        h0, c0 = gates_to_hc(g0, c0)
        # layer 1: two accumulated dots — no concat on the serial chain.
        g1 = (jnp.dot(h0, wih1, preferred_element_type=jnp.float32)
              + jnp.dot(h1, whh1, preferred_element_type=jnp.float32) + b1)
        h1, c1 = gates_to_hc(g1, c1)
        return h0, c0, h1, c1

    h0, c0, h1, c1 = jax.lax.fori_loop(
        0, tc, step,
        (h0_ref[...], c0_ref[...], h1_ref[...], c1_ref[...]),
        unroll=min(tc, 8))

    # Carry state to the next time chunk.
    h0_ref[...] = h0
    c0_ref[...] = c0
    h1_ref[...] = h1
    c1_ref[...] = c1

    # FC on the final timestep's top-layer hidden state (lane-dense Op block).
    @pl.when(t_blk == pl.num_programs(0) - 1)
    def _finalize():
        out_ref[...] = (jnp.dot(h1, wfc_ref[...],
                                preferred_element_type=jnp.float32)
                        + bfc_ref[...])


# --------------------------------------------------------------------------- #
# Host-side helpers
# --------------------------------------------------------------------------- #
_LANE = 128
_SUBLANE = 8


def _round_up(n, m):
    return ((n + m - 1) // m) * m


def _pad_gate_cols(w, H, Hp):
    """(..., 4H) -> (..., 4Hp): zero-pad each of the 4 gate blocks to Hp lanes."""
    if Hp == H:
        return w
    pad = [(0, 0)] * (w.ndim - 1) + [(0, Hp - H)]
    parts = [jnp.pad(w[..., k * H:(k + 1) * H], pad) for k in range(4)]
    return jnp.concatenate(parts, axis=-1)


def _pad_rows(w, H, Hp):
    if Hp == H:
        return w
    return jnp.pad(w, [(0, Hp - H)] + [(0, 0)] * (w.ndim - 1))


def _vmem_capacity_bytes():
    try:
        return int(pltpu.get_tpu_info().vmem_capacity_bytes)
    except Exception:
        return 64 * 1024 * 1024      # conservative (v7x per-TC physical VMEM)


def _pick_t_chunk(T, want):
    want = max(1, min(int(want), T))
    for tc in range(want, 0, -1):
        if T % tc == 0:
            return tc
    return 1


def lstm_model_forward(x, params, *, t_chunk=None, mxu_dtype=jnp.bfloat16):
    """x: (B, T, D) float32.  Returns (B, output_size) float32."""
    B, T, D = x.shape
    H = params["whh0"].shape[0]
    O = params["wfc"].shape[1]

    Hp = max(_LANE, _round_up(H, _LANE))      # lane-aligned gate slices
    Op = max(_LANE, _round_up(O, _LANE))      # lane-dense FC output block
    Bp = _round_up(B, _SUBLANE)               # sublane-aligned batch rows

    # ---- weights: per-gate lane padding (+ row padding), MXU dtype ---------
    wih0 = _pad_gate_cols(params["wih0"], H, Hp).astype(mxu_dtype)            # (D, 4Hp)
    whh0 = _pad_rows(_pad_gate_cols(params["whh0"], H, Hp), H, Hp).astype(mxu_dtype)
    wih1 = _pad_rows(_pad_gate_cols(params["wih1"], H, Hp), H, Hp).astype(mxu_dtype)
    whh1 = _pad_rows(_pad_gate_cols(params["whh1"], H, Hp), H, Hp).astype(mxu_dtype)
    wfc = jnp.pad(params["wfc"], ((0, Hp - H), (0, Op - O))).astype(mxu_dtype)  # (Hp, Op)
    b0 = _pad_gate_cols(params["b0"], H, Hp)                                  # (1, 4Hp) f32
    b1 = _pad_gate_cols(params["b1"], H, Hp)                                  # (1, 4Hp) f32
    bfc = jnp.pad(params["bfc"], ((0, 0), (0, Op - O)))                       # (1, Op)  f32

    # ---- x: batch-pad, time-major, batch-inner, flatten to 2D --------------
    xb = jnp.pad(x, ((0, Bp - B), (0, 0), (0, 0)))
    x_2d = jnp.transpose(xb, (1, 0, 2)).reshape(T * Bp, D).astype(mxu_dtype)

    # ---- time chunking: ~256-512 rows per chunk, divisor of T --------------
    if t_chunk is None:
        t_chunk = max(1, 512 // Bp)
    tc = _pick_t_chunk(T, t_chunk)
    n_t = T // tc

    # TODO(synk): for B >= 16 on v7x, add a leading "parallel" batch grid axis
    # so the recurrence is split across the chip's 2 TensorCores.

    itm = jnp.dtype(mxu_dtype).itemsize
    weight_bytes = int(sum(int(w.size) * w.dtype.itemsize
                           for w in (wih0, whh0, b0, wih1, whh1, b1, wfc, bfc)))
    x_block_bytes = tc * Bp * D * itm
    gx0_bytes = tc * Bp * 4 * Hp * 4
    state_bytes = Bp * Hp * (2 * itm + 2 * 4)
    out_bytes = Bp * Op * 4

    cap = _vmem_capacity_bytes()                       # 128 MiB v5e/v6e, 64 MiB v7x
    ceiling = min(100 * 1024 * 1024, (cap * 3) // 4)   # ~96 MiB / ~48 MiB

    flops = int(T * B * 8 * H * (D + 3 * H) + 2 * B * H * O)
    transcendentals = int(T * B * 2 * 5 * H)
    bytes_accessed = int(x_2d.size) * itm + weight_bytes + B * O * 4
    cost = pl.CostEstimate(flops=flops, transcendentals=transcendentals,
                           bytes_accessed=bytes_accessed)

    def build(single_buffer_weights):
        if single_buffer_weights:
            def wspec(shape):
                return pl.BlockSpec(shape, lambda j: (0, 0),
                                    pipeline_mode=pl.Buffered(1))
            w_mult = 1
        else:
            def wspec(shape):
                return pl.BlockSpec(shape, lambda j: (0, 0))
            w_mult = 2

        need = (2 * x_block_bytes + w_mult * weight_bytes + gx0_bytes
                + state_bytes + out_bytes)
        vmem_limit = int(min(ceiling, max(need + (4 << 20), 16 << 20)))

        in_specs = [
            pl.BlockSpec((tc * Bp, D), lambda j: (j, 0)),   # streamed x chunk
            wspec((D, 4 * Hp)),                             # resident weights
            wspec((Hp, 4 * Hp)),
            wspec((1, 4 * Hp)),
            wspec((Hp, 4 * Hp)),
            wspec((Hp, 4 * Hp)),
            wspec((1, 4 * Hp)),
            wspec((Hp, Op)),
            wspec((1, Op)),
        ]
        out_specs = pl.BlockSpec((Bp, Op), lambda j: (0, 0))
        scratch_shapes = [
            pltpu.VMEM((tc * Bp, 4 * Hp), jnp.float32),     # hoisted layer-0 gates
            pltpu.VMEM((Bp, Hp), mxu_dtype),                # h0 (carried)
            pltpu.VMEM((Bp, Hp), jnp.float32),              # c0
            pltpu.VMEM((Bp, Hp), mxu_dtype),                # h1
            pltpu.VMEM((Bp, Hp), jnp.float32),              # c1
        ]
        return pl.pallas_call(
            _lstm_fc_kernel,
            out_shape=jax.ShapeDtypeStruct((Bp, Op), jnp.float32),
            grid=(n_t,),
            in_specs=in_specs,
            out_specs=out_specs,
            scratch_shapes=scratch_shapes,
            compiler_params=pltpu.CompilerParams(
                dimension_semantics=("arbitrary",),          # sequential recurrence
                vmem_limit_bytes=vmem_limit,
            ),
            cost_estimate=cost,
        )

    args = (x_2d, wih0, whh0, b0, wih1, whh1, b1, wfc, bfc)
    try:
        out = build(True)(*args)
    except Exception:
        # Fallback if single-buffered (Buffered(1)) weight specs are not
        # supported by the installed Pallas version.
        out = build(False)(*args)

    return out[:B, :O]


# --------------------------------------------------------------------------- #
# Parameters & pure-JAX reference
# --------------------------------------------------------------------------- #
def make_params(key, input_size, hidden_size, output_size):
    """Deterministic synthetic parameters (PyTorch-style uniform init),
    pre-transposed so gates = x @ W_ih^T + h @ W_hh^T + (b_ih + b_hh)."""
    H = hidden_size
    k = 1.0 / jnp.sqrt(H)
    keys = jax.random.split(key, 12)
    u = lambda kk, shape: jax.random.uniform(kk, shape, jnp.float32, -k, k)
    w_ih0 = u(keys[0], (4 * H, input_size))
    w_hh0 = u(keys[1], (4 * H, H))
    b_ih0 = u(keys[2], (4 * H,))
    b_hh0 = u(keys[3], (4 * H,))
    w_ih1 = u(keys[4], (4 * H, H))
    w_hh1 = u(keys[5], (4 * H, H))
    b_ih1 = u(keys[6], (4 * H,))
    b_hh1 = u(keys[7], (4 * H,))
    w_fc = jax.random.uniform(keys[8], (output_size, H), jnp.float32, -k, k)
    b_fc = jax.random.uniform(keys[9], (output_size,), jnp.float32, -k, k)
    return {
        "wih0": w_ih0.T, "whh0": w_hh0.T, "b0": (b_ih0 + b_hh0)[None, :],
        "wih1": w_ih1.T, "whh1": w_hh1.T, "b1": (b_ih1 + b_hh1)[None, :],
        "wfc": w_fc.T, "bfc": b_fc[None, :],
    }


def ref_forward(x, params, matmul_dtype=jnp.float32):
    """Pure-JAX reference replicating PyTorch nn.LSTM + nn.Linear semantics.
    matmul_dtype=bfloat16 mirrors the kernel's MXU operand precision."""
    B, T, D = x.shape
    H = params["whh0"].shape[0]

    def mm(a, w):
        return jnp.dot(a.astype(matmul_dtype), w.astype(matmul_dtype),
                       preferred_element_type=jnp.float32)

    def cell(x_t, h, c, wih, whh, b):
        gates = mm(x_t, wih) + mm(h, whh) + b
        i = jax.nn.sigmoid(gates[:, 0:H])
        f = jax.nn.sigmoid(gates[:, H:2 * H])
        g = jnp.tanh(gates[:, 2 * H:3 * H])
        o = jax.nn.sigmoid(gates[:, 3 * H:4 * H])
        c = f * c + i * g
        h = o * jnp.tanh(c)
        return h, c

    h0 = c0 = h1 = c1 = jnp.zeros((B, H), jnp.float32)
    for t in range(T):
        h0, c0 = cell(x[:, t, :], h0, c0, params["wih0"], params["whh0"], params["b0"])
        h1, c1 = cell(h0, h1, c1, params["wih1"], params["whh1"], params["b1"])
    return mm(h1, params["wfc"]) + params["bfc"]


# --------------------------------------------------------------------------- #
# Self-test
# --------------------------------------------------------------------------- #
if __name__ == "__main__":
    B, T, D, H, O = 2, 8, 4, 32, 1

    key = jax.random.PRNGKey(0)
    kx, kp = jax.random.split(key)
    x = jax.random.normal(kx, (B, T, D), jnp.float32)
    params = make_params(kp, input_size=D, hidden_size=H, output_size=O)

    # t_chunk=4 -> 2 time chunks: exercises the streaming grid + state carry.
    out = jax.block_until_ready(lstm_model_forward(x, params, t_chunk=4))

    ref_bf16 = ref_forward(x, params, matmul_dtype=jnp.bfloat16)  # matches kernel precision
    ref_f32 = ref_forward(x, params)                              # full-precision sanity

    assert out.shape == (B, O)
    assert jnp.allclose(out, ref_bf16, atol=2e-3, rtol=2e-3), (out, ref_bf16)
    assert jnp.allclose(out, ref_f32, atol=5e-2, rtol=5e-2), (out, ref_f32)

    print("KERNEL_OK")
</pallas_src>

<mosaic_0001>
module attributes {stable_mosaic.version = 11 : i64} {
  func.func @_lstm_fc_kernel(%arg0: i32, %arg1: memref<32x4xbf16, #tpu.memory_space<vmem>>, %arg2: memref<4x512xbf16, #tpu.memory_space<vmem>>, %arg3: memref<128x512xbf16, #tpu.memory_space<vmem>>, %arg4: memref<1x512xf32, #tpu.memory_space<vmem>>, %arg5: memref<128x512xbf16, #tpu.memory_space<vmem>>, %arg6: memref<128x512xbf16, #tpu.memory_space<vmem>>, %arg7: memref<1x512xf32, #tpu.memory_space<vmem>>, %arg8: memref<128x128xbf16, #tpu.memory_space<vmem>>, %arg9: memref<1x128xf32, #tpu.memory_space<vmem>>, %arg10: memref<8x128xf32, #tpu.memory_space<vmem>>, %arg11: memref<32x512xf32, #tpu.memory_space<vmem>>, %arg12: memref<8x128xbf16, #tpu.memory_space<vmem>>, %arg13: memref<8x128xf32, #tpu.memory_space<vmem>>, %arg14: memref<8x128xbf16, #tpu.memory_space<vmem>>, %arg15: memref<8x128xf32, #tpu.memory_space<vmem>>) attributes {dimension_semantics = [#tpu.dimension_semantics<arbitrary>], iteration_bounds = array<i64: 2>, scalar_prefetch = 0 : i64, scratch_operands = 5 : i64, tpu.core_type = #tpu.core_type<tc>, window_params = [{transform_indices = @transform_0, window_bounds = array<i64: 32, 4>}, {pipeline_mode = #tpu.pipeline_mode<synchronous>, transform_indices = @transform_1, window_bounds = array<i64: 4, 512>}, {pipeline_mode = #tpu.pipeline_mode<synchronous>, transform_indices = @transform_2, window_bounds = array<i64: 128, 512>}, {pipeline_mode = #tpu.pipeline_mode<synchronous>, transform_indices = @transform_3, window_bounds = array<i64: 1, 512>}, {pipeline_mode = #tpu.pipeline_mode<synchronous>, transform_indices = @transform_4, window_bounds = array<i64: 128, 512>}, {pipeline_mode = #tpu.pipeline_mode<synchronous>, transform_indices = @transform_5, window_bounds = array<i64: 128, 512>}, {pipeline_mode = #tpu.pipeline_mode<synchronous>, transform_indices = @transform_6, window_bounds = array<i64: 1, 512>}, {pipeline_mode = #tpu.pipeline_mode<synchronous>, transform_indices = @transform_7, window_bounds = array<i64: 128, 128>}, {pipeline_mode = #tpu.pipeline_mode<synchronous>, transform_indices = @transform_8, window_bounds = array<i64: 1, 128>}, {pipeline_mode = #tpu.pipeline_mode<synchronous>, transform_indices = @transform_9, window_bounds = array<i64: 8, 128>}]} {
    %c0_i32 = arith.constant 0 : i32
    %0 = arith.cmpi eq, %arg0, %c0_i32 : i32
    %1 = arith.extui %0 : i1 to i32
    %c0_i32_0 = arith.constant 0 : i32
    %2 = arith.cmpi ne, %1, %c0_i32_0 : i32
    scf.if %2 {
      %cst_126 = arith.constant 0.000000e+00 : bf16
      %323 = vector.broadcast %cst_126 : bf16 to vector<8x128xbf16>
      %c0_127 = arith.constant 0 : index
      %c0_128 = arith.constant 0 : index
      %324 = vector.load %arg12[%c0_127, %c0_128] : memref<8x128xbf16, #tpu.memory_space<vmem>>, vector<8x128xbf16>
      tpu.vector_store %arg12[%c0_127, %c0_128], %323 {strides = array<i32>} : memref<8x128xbf16, #tpu.memory_space<vmem>>, vector<8x128xbf16>,
      %cst_129 = arith.constant 0.000000e+00 : f32
      %325 = vector.broadcast %cst_129 : f32 to vector<8x128xf32>
      %c0_130 = arith.constant 0 : index
      %c0_131 = arith.constant 0 : index
      %326 = vector.load %arg13[%c0_130, %c0_131] : memref<8x128xf32, #tpu.memory_space<vmem>>, vector<8x128xf32>
      tpu.vector_store %arg13[%c0_130, %c0_131], %325 {strides = array<i32>} : memref<8x128xf32, #tpu.memory_space<vmem>>, vector<8x128xf32>,
      %cst_132 = arith.constant 0.000000e+00 : bf16
      %327 = vector.broadcast %cst_132 : bf16 to vector<8x128xbf16>
      %c0_133 = arith.constant 0 : index
      %c0_134 = arith.constant 0 : index
      %328 = vector.load %arg14[%c0_133, %c0_134] : memref<8x128xbf16, #tpu.memory_space<vmem>>, vector<8x128xbf16>
      tpu.vector_store %arg14[%c0_133, %c0_134], %327 {strides = array<i32>} : memref<8x128xbf16, #tpu.memory_space<vmem>>, vector<8x128xbf16>,
      %cst_135 = arith.constant 0.000000e+00 : f32
      %329 = vector.broadcast %cst_135 : f32 to vector<8x128xf32>
      %c0_136 = arith.constant 0 : index
      %c0_137 = arith.constant 0 : index
      %330 = vector.load %arg15[%c0_136, %c0_137] : memref<8x128xf32, #tpu.memory_space<vmem>>, vector<8x128xf32>
      tpu.vector_store %arg15[%c0_136, %c0_137], %329 {strides = array<i32>} : memref<8x128xf32, #tpu.memory_space<vmem>>, vector<8x128xf32>,
    } else {
    }
    %c0 = arith.constant 0 : index
    %c0_1 = arith.constant 0 : index
    %3 = vector.load %arg1[%c0, %c0_1] : memref<32x4xbf16, #tpu.memory_space<vmem>>, vector<32x4xbf16>
    %c0_2 = arith.constant 0 : index
    %c0_3 = arith.constant 0 : index
    %4 = vector.load %arg2[%c0_2, %c0_3] : memref<4x512xbf16, #tpu.memory_space<vmem>>, vector<4x512xbf16>
    %cst = arith.constant dense<0.000000e+00> : vector<32x512xf32>
    %5 = tpu.matmul %3, %4, %cst {dimension_numbers = #tpu.dot_dimension_numbers<[1], [0], [0], [1], [0, 0, 1, 1], [], []>} : vector<32x4xbf16>, vector<4x512xbf16>, vector<32x512xf32> -> vector<32x512xf32>
    %c0_4 = arith.constant 0 : index
    %c0_5 = arith.constant 0 : index
    %6 = vector.load %arg4[%c0_4, %c0_5] : memref<1x512xf32, #tpu.memory_space<vmem>>, vector<1x512xf32>
    %7 = vector.broadcast %6 : vector<1x512xf32> to vector<32x512xf32>
    %8 = arith.addf %5, %7 : vector<32x512xf32>
    %c0_6 = arith.constant 0 : index
    %c0_7 = arith.constant 0 : index
    %9 = vector.load %arg11[%c0_6, %c0_7] : memref<32x512xf32, #tpu.memory_space<vmem>>, vector<32x512xf32>
    tpu.vector_store %arg11[%c0_6, %c0_7], %8 {strides = array<i32>} : memref<32x512xf32, #tpu.memory_space<vmem>>, vector<32x512xf32>,
    %c0_8 = arith.constant 0 : index
    %c0_9 = arith.constant 0 : index
    %10 = vector.load %arg3[%c0_8, %c0_9] : memref<128x512xbf16, #tpu.memory_space<vmem>>, vector<128x512xbf16>
    %c0_10 = arith.constant 0 : index
    %c0_11 = arith.constant 0 : index
    %11 = vector.load %arg5[%c0_10, %c0_11] : memref<128x512xbf16, #tpu.memory_space<vmem>>, vector<128x512xbf16>
    %c0_12 = arith.constant 0 : index
    %c0_13 = arith.constant 0 : index
    %12 = vector.load %arg6[%c0_12, %c0_13] : memref<128x512xbf16, #tpu.memory_space<vmem>>, vector<128x512xbf16>
    %c0_14 = arith.constant 0 : index
    %c0_15 = arith.constant 0 : index
    %13 = vector.load %arg7[%c0_14, %c0_15] : memref<1x512xf32, #tpu.memory_space<vmem>>, vector<1x512xf32>
    %14 = vector.shape_cast %13 : vector<1x512xf32> to vector<1x512xf32>
    %15 = vector.broadcast %14 : vector<1x512xf32> to vector<8x512xf32>
    %c0_16 = arith.constant 0 : index
    %c0_17 = arith.constant 0 : index
    %16 = vector.load %arg12[%c0_16, %c0_17] : memref<8x128xbf16, #tpu.memory_space<vmem>>, vector<8x128xbf16>
    %c0_18 = arith.constant 0 : index
    %c0_19 = arith.constant 0 : index
    %17 = vector.load %arg13[%c0_18, %c0_19] : memref<8x128xf32, #tpu.memory_space<vmem>>, vector<8x128xf32>
    %c0_20 = arith.constant 0 : index
    %c0_21 = arith.constant 0 : index
    %18 = vector.load %arg14[%c0_20, %c0_21] : memref<8x128xbf16, #tpu.memory_space<vmem>>, vector<8x128xbf16>
    %c0_22 = arith.constant 0 : index
    %c0_23 = arith.constant 0 : index
    %19 = vector.load %arg15[%c0_22, %c0_23] : memref<8x128xf32, #tpu.memory_space<vmem>>, vector<8x128xf32>
    %c0_i32_24 = arith.constant 0 : i32
    %c8_i32 = arith.constant 8 : i32
    %20 = arith.muli %c0_i32_24, %c8_i32 : i32
    %21 = tpu.assume_multiple %20, 8 : i32
    %22 = arith.index_cast %21 : i32 to index
    %c0_25 = arith.constant 0 : index
    %23 = vector.load %arg11[%22, %c0_25] : memref<32x512xf32, #tpu.memory_space<vmem>>, vector<8x512xf32>
    %cst_26 = arith.constant dense<0.000000e+00> : vector<8x512xf32>
    %24 = tpu.matmul %16, %10, %cst_26 {dimension_numbers = #tpu.dot_dimension_numbers<[1], [0], [0], [1], [0, 0, 1, 1], [], []>} : vector<8x128xbf16>, vector<128x512xbf16>, vector<8x512xf32> -> vector<8x512xf32>
    %25 = arith.addf %23, %24 : vector<8x512xf32>
    %26 = vector.extract_strided_slice %25 {offsets = [0, 0], sizes = [8, 128], strides = [1, 1]} : vector<8x512xf32> to vector<8x128xf32>
    %cst_27 = arith.constant 5.000000e-01 : f32
    %27 = vector.broadcast %cst_27 : f32 to vector<8x128xf32>
    %28 = arith.mulf %27, %26 : vector<8x128xf32>
    %29 = math.tanh %28 : vector<8x128xf32>
    %cst_28 = arith.constant 5.000000e-01 : f32
    %30 = vector.broadcast %cst_28 : f32 to vector<8x128xf32>
    %31 = arith.mulf %30, %29 : vector<8x128xf32>
    %cst_29 = arith.constant 5.000000e-01 : f32
    %32 = vector.broadcast %cst_29 : f32 to vector<8x128xf32>
    %33 = arith.addf %31, %32 : vector<8x128xf32>
    %34 = vector.extract_strided_slice %25 {offsets = [0, 128], sizes = [8, 128], strides = [1, 1]} : vector<8x512xf32> to vector<8x128xf32>
    %cst_30 = arith.constant 5.000000e-01 : f32
    %35 = vector.broadcast %cst_30 : f32 to vector<8x128xf32>
    %36 = arith.mulf %35, %34 : vector<8x128xf32>
    %37 = math.tanh %36 : vector<8x128xf32>
    %cst_31 = arith.constant 5.000000e-01 : f32
    %38 = vector.broadcast %cst_31 : f32 to vector<8x128xf32>
    %39 = arith.mulf %38, %37 : vector<8x128xf32>
    %cst_32 = arith.constant 5.000000e-01 : f32
    %40 = vector.broadcast %cst_32 : f32 to vector<8x128xf32>
    %41 = arith.addf %39, %40 : vector<8x128xf32>
    %42 = vector.extract_strided_slice %25 {offsets = [0, 256], sizes = [8, 128], strides = [1, 1]} : vector<8x512xf32> to vector<8x128xf32>
    %43 = math.tanh %42 : vector<8x128xf32>
    %44 = vector.extract_strided_slice %25 {offsets = [0, 384], sizes = [8, 128], strides = [1, 1]} : vector<8x512xf32> to vector<8x128xf32>
    %cst_33 = arith.constant 5.000000e-01 : f32
    %45 = vector.broadcast %cst_33 : f32 to vector<8x128xf32>
    %46 = arith.mulf %45, %44 : vector<8x128xf32>
    %47 = math.tanh %46 : vector<8x128xf32>
    %cst_34 = arith.constant 5.000000e-01 : f32
    %48 = vector.broadcast %cst_34 : f32 to vector<8x128xf32>
    %49 = arith.mulf %48, %47 : vector<8x128xf32>
    %cst_35 = arith.constant 5.000000e-01 : f32
    %50 = vector.broadcast %cst_35 : f32 to vector<8x128xf32>
    %51 = arith.addf %49, %50 : vector<8x128xf32>
    %52 = arith.mulf %41, %17 : vector<8x128xf32>
    %53 = arith.mulf %33, %43 : vector<8x128xf32>
    %54 = arith.addf %52, %53 : vector<8x128xf32>
    %55 = math.tanh %54 : vector<8x128xf32>
    %56 = arith.mulf %51, %55 : vector<8x128xf32>
    %57 = arith.truncf %56 : vector<8x128xf32> to vector<8x128xbf16>
    %cst_36 = arith.constant dense<0.000000e+00> : vector<8x512xf32>
    %58 = tpu.matmul %57, %11, %cst_36 {dimension_numbers = #tpu.dot_dimension_numbers<[1], [0], [0], [1], [0, 0, 1, 1], [], []>} : vector<8x128xbf16>, vector<128x512xbf16>, vector<8x512xf32> -> vector<8x512xf32>
    %cst_37 = arith.constant dense<0.000000e+00> : vector<8x512xf32>
    %59 = tpu.matmul %18, %12, %cst_37 {dimension_numbers = #tpu.dot_dimension_numbers<[1], [0], [0], [1], [0, 0, 1, 1], [], []>} : vector<8x128xbf16>, vector<128x512xbf16>, vector<8x512xf32> -> vector<8x512xf32>
    %60 = arith.addf %58, %59 : vector<8x512xf32>
    %61 = arith.addf %60, %15 : vector<8x512xf32>
    %62 = vector.extract_strided_slice %61 {offsets = [0, 0], sizes = [8, 128], strides = [1, 1]} : vector<8x512xf32> to vector<8x128xf32>
    %cst_38 = arith.constant 5.000000e-01 : f32
    %63 = vector.broadcast %cst_38 : f32 to vector<8x128xf32>
    %64 = arith.mulf %63, %62 : vector<8x128xf32>
    %65 = math.tanh %64 : vector<8x128xf32>
    %cst_39 = arith.constant 5.000000e-01 : f32
    %66 = vector.broadcast %cst_39 : f32 to vector<8x128xf32>
    %67 = arith.mulf %66, %65 : vector<8x128xf32>
    %cst_40 = arith.constant 5.000000e-01 : f32
    %68 = vector.broadcast %cst_40 : f32 to vector<8x128xf32>
    %69 = arith.addf %67, %68 : vector<8x128xf32>
    %70 = vector.extract_strided_slice %61 {offsets = [0, 128], sizes = [8, 128], strides = [1, 1]} : vector<8x512xf32> to vector<8x128xf32>
    %cst_41 = arith.constant 5.000000e-01 : f32
    %71 = vector.broadcast %cst_41 : f32 to vector<8x128xf32>
    %72 = arith.mulf %71, %70 : vector<8x128xf32>
    %73 = math.tanh %72 : vector<8x128xf32>
    %cst_42 = arith.constant 5.000000e-01 : f32
    %74 = vector.broadcast %cst_42 : f32 to vector<8x128xf32>
    %75 = arith.mulf %74, %73 : vector<8x128xf32>
    %cst_43 = arith.constant 5.000000e-01 : f32
    %76 = vector.broadcast %cst_43 : f32 to vector<8x128xf32>
    %77 = arith.addf %75, %76 : vector<8x128xf32>
    %78 = vector.extract_strided_slice %61 {offsets = [0, 256], sizes = [8, 128], strides = [1, 1]} : vector<8x512xf32> to vector<8x128xf32>
    %79 = math.tanh %78 : vector<8x128xf32>
    %80 = vector.extract_strided_slice %61 {offsets = [0, 384], sizes = [8, 128], strides = [1, 1]} : vector<8x512xf32> to vector<8x128xf32>
    %cst_44 = arith.constant 5.000000e-01 : f32
    %81 = vector.broadcast %cst_44 : f32 to vector<8x128xf32>
    %82 = arith.mulf %81, %80 : vector<8x128xf32>
    %83 = math.tanh %82 : vector<8x128xf32>
    %cst_45 = arith.constant 5.000000e-01 : f32
    %84 = vector.broadcast %cst_45 : f32 to vector<8x128xf32>
    %85 = arith.mulf %84, %83 : vector<8x128xf32>
    %cst_46 = arith.constant 5.000000e-01 : f32
    %86 = vector.broadcast %cst_46 : f32 to vector<8x128xf32>
    %87 = arith.addf %85, %86 : vector<8x128xf32>
    %88 = arith.mulf %77, %19 : vector<8x128xf32>
    %89 = arith.mulf %69, %79 : vector<8x128xf32>
    %90 = arith.addf %88, %89 : vector<8x128xf32>
    %91 = math.tanh %90 : vector<8x128xf32>
    %92 = arith.mulf %87, %91 : vector<8x128xf32>
    %93 = arith.truncf %92 : vector<8x128xf32> to vector<8x128xbf16>
    %c1_i32 = arith.constant 1 : i32
    %c8_i32_47 = arith.constant 8 : i32
    %94 = arith.muli %c1_i32, %c8_i32_47 : i32
    %95 = tpu.assume_multiple %94, 8 : i32
    %96 = arith.index_cast %95 : i32 to index
    %c0_48 = arith.constant 0 : index
    %97 = vector.load %arg11[%96, %c0_48] : memref<32x512xf32, #tpu.memory_space<vmem>>, vector<8x512xf32>
    %cst_49 = arith.constant dense<0.000000e+00> : vector<8x512xf32>
    %98 = tpu.matmul %57, %10, %cst_49 {dimension_numbers = #tpu.dot_dimension_numbers<[1], [0], [0], [1], [0, 0, 1, 1], [], []>} : vector<8x128xbf16>, vector<128x512xbf16>, vector<8x512xf32> -> vector<8x512xf32>
    %99 = arith.addf %97, %98 : vector<8x512xf32>
    %100 = vector.extract_strided_slice %99 {offsets = [0, 0], sizes = [8, 128], strides = [1, 1]} : vector<8x512xf32> to vector<8x128xf32>
    %cst_50 = arith.constant 5.000000e-01 : f32
    %101 = vector.broadcast %cst_50 : f32 to vector<8x128xf32>
    %102 = arith.mulf %101, %100 : vector<8x128xf32>
    %103 = math.tanh %102 : vector<8x128xf32>
    %cst_51 = arith.constant 5.000000e-01 : f32
    %104 = vector.broadcast %cst_51 : f32 to vector<8x128xf32>
    %105 = arith.mulf %104, %103 : vector<8x128xf32>
    %cst_52 = arith.constant 5.000000e-01 : f32
    %106 = vector.broadcast %cst_52 : f32 to vector<8x128xf32>
    %107 = arith.addf %105, %106 : vector<8x128xf32>
    %108 = vector.extract_strided_slice %99 {offsets = [0, 128], sizes = [8, 128], strides = [1, 1]} : vector<8x512xf32> to vector<8x128xf32>
    %cst_53 = arith.constant 5.000000e-01 : f32
    %109 = vector.broadcast %cst_53 : f32 to vector<8x128xf32>
    %110 = arith.mulf %109, %108 : vector<8x128xf32>
    %111 = math.tanh %110 : vector<8x128xf32>
    %cst_54 = arith.constant 5.000000e-01 : f32
    %112 = vector.broadcast %cst_54 : f32 to vector<8x128xf32>
    %113 = arith.mulf %112, %111 : vector<8x128xf32>
    %cst_55 = arith.constant 5.000000e-01 : f32
    %114 = vector.broadcast %cst_55 : f32 to vector<8x128xf32>
    %115 = arith.addf %113, %114 : vector<8x128xf32>
    %116 = vector.extract_strided_slice %99 {offsets = [0, 256], sizes = [8, 128], strides = [1, 1]} : vector<8x512xf32> to vector<8x128xf32>
    %117 = math.tanh %116 : vector<8x128xf32>
    %118 = vector.extract_strided_slice %99 {offsets = [0, 384], sizes = [8, 128], strides = [1, 1]} : vector<8x512xf32> to vector<8x128xf32>
    %cst_56 = arith.constant 5.000000e-01 : f32
    %119 = vector.broadcast %cst_56 : f32 to vector<8x128xf32>
    %120 = arith.mulf %119, %118 : vector<8x128xf32>
    %121 = math.tanh %120 : vector<8x128xf32>
    %cst_57 = arith.constant 5.000000e-01 : f32
    %122 = vector.broadcast %cst_57 : f32 to vector<8x128xf32>
    %123 = arith.mulf %122, %121 : vector<8x128xf32>
    %cst_58 = arith.constant 5.000000e-01 : f32
    %124 = vector.broadcast %cst_58 : f32 to vector<8x128xf32>
    %125 = arith.addf %123, %124 : vector<8x128xf32>
    %126 = arith.mulf %115, %54 : vector<8x128xf32>
    %127 = arith.mulf %107, %117 : vector<8x128xf32>
    %128 = arith.addf %126, %127 : vector<8x128xf32>
    %129 = math.tanh %128 : vector<8x128xf32>
    %130 = arith.mulf %125, %129 : vector<8x128xf32>
    %131 = arith.truncf %130 : vector<8x128xf32> to vector<8x128xbf16>
    %cst_59 = arith.constant dense<0.000000e+00> : vector<8x512xf32>
    %132 = tpu.matmul %131, %11, %cst_59 {dimension_numbers = #tpu.dot_dimension_numbers<[1], [0], [0], [1], [0, 0, 1, 1], [], []>} : vector<8x128xbf16>, vector<128x512xbf16>, vector<8x512xf32> -> vector<8x512xf32>
    %cst_60 = arith.constant dense<0.000000e+00> : vector<8x512xf32>
    %133 = tpu.matmul %93, %12, %cst_60 {dimension_numbers = #tpu.dot_dimension_numbers<[1], [0], [0], [1], [0, 0, 1, 1], [], []>} : vector<8x128xbf16>, vector<128x512xbf16>, vector<8x512xf32> -> vector<8x512xf32>
    %134 = arith.addf %132, %133 : vector<8x512xf32>
    %135 = arith.addf %134, %15 : vector<8x512xf32>
    %136 = vector.extract_strided_slice %135 {offsets = [0, 0], sizes = [8, 128], strides = [1, 1]} : vector<8x512xf32> to vector<8x128xf32>
    %cst_61 = arith.constant 5.000000e-01 : f32
    %137 = vector.broadcast %cst_61 : f32 to vector<8x128xf32>
    %138 = arith.mulf %137, %136 : vector<8x128xf32>
    %139 = math.tanh %138 : vector<8x128xf32>
    %cst_62 = arith.constant 5.000000e-01 : f32
    %140 = vector.broadcast %cst_62 : f32 to vector<8x128xf32>
    %141 = arith.mulf %140, %139 : vector<8x128xf32>
    %cst_63 = arith.constant 5.000000e-01 : f32
    %142 = vector.broadcast %cst_63 : f32 to vector<8x128xf32>
    %143 = arith.addf %141, %142 : vector<8x128xf32>
    %144 = vector.extract_strided_slice %135 {offsets = [0, 128], sizes = [8, 128], strides = [1, 1]} : vector<8x512xf32> to vector<8x128xf32>
    %cst_64 = arith.constant 5.000000e-01 : f32
    %145 = vector.broadcast %cst_64 : f32 to vector<8x128xf32>
    %146 = arith.mulf %145, %144 : vector<8x128xf32>
    %147 = math.tanh %146 : vector<8x128xf32>
    %cst_65 = arith.constant 5.000000e-01 : f32
    %148 = vector.broadcast %cst_65 : f32 to vector<8x128xf32>
    %149 = arith.mulf %148, %147 : vector<8x128xf32>
    %cst_66 = arith.constant 5.000000e-01 : f32
    %150 = vector.broadcast %cst_66 : f32 to vector<8x128xf32>
    %151 = arith.addf %149, %150 : vector<8x128xf32>
    %152 = vector.extract_strided_slice %135 {offsets = [0, 256], sizes = [8, 128], strides = [1, 1]} : vector<8x512xf32> to vector<8x128xf32>
    %153 = math.tanh %152 : vector<8x128xf32>
    %154 = vector.extract_strided_slice %135 {offsets = [0, 384], sizes = [8, 128], strides = [1, 1]} : vector<8x512xf32> to vector<8x128xf32>
    %cst_67 = arith.constant 5.000000e-01 : f32
    %155 = vector.broadcast %cst_67 : f32 to vector<8x128xf32>
    %156 = arith.mulf %155, %154 : vector<8x128xf32>
    %157 = math.tanh %156 : vector<8x128xf32>
    %cst_68 = arith.constant 5.000000e-01 : f32
    %158 = vector.broadcast %cst_68 : f32 to vector<8x128xf32>
    %159 = arith.mulf %158, %157 : vector<8x128xf32>
    %cst_69 = arith.constant 5.000000e-01 : f32
    %160 = vector.broadcast %cst_69 : f32 to vector<8x128xf32>
    %161 = arith.addf %159, %160 : vector<8x128xf32>
    %162 = arith.mulf %151, %90 : vector<8x128xf32>
    %163 = arith.mulf %143, %153 : vector<8x128xf32>
    %164 = arith.addf %162, %163 : vector<8x128xf32>
    %165 = math.tanh %164 : vector<8x128xf32>
    %166 = arith.mulf %161, %165 : vector<8x128xf32>
    %167 = arith.truncf %166 : vector<8x128xf32> to vector<8x128xbf16>
    %c2_i32 = arith.constant 2 : i32
    %c8_i32_70 = arith.constant 8 : i32
    %168 = arith.muli %c2_i32, %c8_i32_70 : i32
    %169 = tpu.assume_multiple %168, 8 : i32
    %170 = arith.index_cast %169 : i32 to index
    %c0_71 = arith.constant 0 : index
    %171 = vector.load %arg11[%170, %c0_71] : memref<32x512xf32, #tpu.memory_space<vmem>>, vector<8x512xf32>
    %cst_72 = arith.constant dense<0.000000e+00> : vector<8x512xf32>
    %172 = tpu.matmul %131, %10, %cst_72 {dimension_numbers = #tpu.dot_dimension_numbers<[1], [0], [0], [1], [0, 0, 1, 1], [], []>} : vector<8x128xbf16>, vector<128x512xbf16>, vector<8x512xf32> -> vector<8x512xf32>
    %173 = arith.addf %171, %172 : vector<8x512xf32>
    %174 = vector.extract_strided_slice %173 {offsets = [0, 0], sizes = [8, 128], strides = [1, 1]} : vector<8x512xf32> to vector<8x128xf32>
    %cst_73 = arith.constant 5.000000e-01 : f32
    %175 = vector.broadcast %cst_73 : f32 to vector<8x128xf32>
    %176 = arith.mulf %175, %174 : vector<8x128xf32>
    %177 = math.tanh %176 : vector<8x128xf32>
    %cst_74 = arith.constant 5.000000e-01 : f32
    %178 = vector.broadcast %cst_74 : f32 to vector<8x128xf32>
    %179 = arith.mulf %178, %177 : vector<8x128xf32>
    %cst_75 = arith.constant 5.000000e-01 : f32
    %180 = vector.broadcast %cst_75 : f32 to vector<8x128xf32>
    %181 = arith.addf %179, %180 : vector<8x128xf32>
    %182 = vector.extract_strided_slice %173 {offsets = [0, 128], sizes = [8, 128], strides = [1, 1]} : vector<8x512xf32> to vector<8x128xf32>
    %cst_76 = arith.constant 5.000000e-01 : f32
    %183 = vector.broadcast %cst_76 : f32 to vector<8x128xf32>
    %184 = arith.mulf %183, %182 : vector<8x128xf32>
    %185 = math.tanh %184 : vector<8x128xf32>
    %cst_77 = arith.constant 5.000000e-01 : f32
    %186 = vector.broadcast %cst_77 : f32 to vector<8x128xf32>
    %187 = arith.mulf %186, %185 : vector<8x128xf32>
    %cst_78 = arith.constant 5.000000e-01 : f32
    %188 = vector.broadcast %cst_78 : f32 to vector<8x128xf32>
    %189 = arith.addf %187, %188 : vector<8x128xf32>
    %190 = vector.extract_strided_slice %173 {offsets = [0, 256], sizes = [8, 128], strides = [1, 1]} : vector<8x512xf32> to vector<8x128xf32>
    %191 = math.tanh %190 : vector<8x128xf32>
    %192 = vector.extract_strided_slice %173 {offsets = [0, 384], sizes = [8, 128], strides = [1, 1]} : vector<8x512xf32> to vector<8x128xf32>
    %cst_79 = arith.constant 5.000000e-01 : f32
    %193 = vector.broadcast %cst_79 : f32 to vector<8x128xf32>
    %194 = arith.mulf %193, %192 : vector<8x128xf32>
    %195 = math.tanh %194 : vector<8x128xf32>
    %cst_80 = arith.constant 5.000000e-01 : f32
    %196 = vector.broadcast %cst_80 : f32 to vector<8x128xf32>
    %197 = arith.mulf %196, %195 : vector<8x128xf32>
    %cst_81 = arith.constant 5.000000e-01 : f32
    %198 = vector.broadcast %cst_81 : f32 to vector<8x128xf32>
    %199 = arith.addf %197, %198 : vector<8x128xf32>
    %200 = arith.mulf %189, %128 : vector<8x128xf32>
    %201 = arith.mulf %181, %191 : vector<8x128xf32>
    %202 = arith.addf %200, %201 : vector<8x128xf32>
    %203 = math.tanh %202 : vector<8x128xf32>
    %204 = arith.mulf %199, %203 : vector<8x128xf32>
    %205 = arith.truncf %204 : vector<8x128xf32> to vector<8x128xbf16>
    %cst_82 = arith.constant dense<0.000000e+00> : vector<8x512xf32>
    %206 = tpu.matmul %205, %11, %cst_82 {dimension_numbers = #tpu.dot_dimension_numbers<[1], [0], [0], [1], [0, 0, 1, 1], [], []>} : vector<8x128xbf16>, vector<128x512xbf16>, vector<8x512xf32> -> vector<8x512xf32>
    %cst_83 = arith.constant dense<0.000000e+00> : vector<8x512xf32>
    %207 = tpu.matmul %167, %12, %cst_83 {dimension_numbers = #tpu.dot_dimension_numbers<[1], [0], [0], [1], [0, 0, 1, 1], [], []>} : vector<8x128xbf16>, vector<128x512xbf16>, vector<8x512xf32> -> vector<8x512xf32>
    %208 = arith.addf %206, %207 : vector<8x512xf32>
    %209 = arith.addf %208, %15 : vector<8x512xf32>
    %210 = vector.extract_strided_slice %209 {offsets = [0, 0], sizes = [8, 128], strides = [1, 1]} : vector<8x512xf32> to vector<8x128xf32>
    %cst_84 = arith.constant 5.000000e-01 : f32
    %211 = vector.broadcast %cst_84 : f32 to vector<8x128xf32>
    %212 = arith.mulf %211, %210 : vector<8x128xf32>
    %213 = math.tanh %212 : vector<8x128xf32>
    %cst_85 = arith.constant 5.000000e-01 : f32
    %214 = vector.broadcast %cst_85 : f32 to vector<8x128xf32>
    %215 = arith.mulf %214, %213 : vector<8x128xf32>
    %cst_86 = arith.constant 5.000000e-01 : f32
    %216 = vector.broadcast %cst_86 : f32 to vector<8x128xf32>
    %217 = arith.addf %215, %216 : vector<8x128xf32>
    %218 = vector.extract_strided_slice %209 {offsets = [0, 128], sizes = [8, 128], strides = [1, 1]} : vector<8x512xf32> to vector<8x128xf32>
    %cst_87 = arith.constant 5.000000e-01 : f32
    %219 = vector.broadcast %cst_87 : f32 to vector<8x128xf32>
    %220 = arith.mulf %219, %218 : vector<8x128xf32>
    %221 = math.tanh %220 : vector<8x128xf32>
    %cst_88 = arith.constant 5.000000e-01 : f32
    %222 = vector.broadcast %cst_88 : f32 to vector<8x128xf32>
    %223 = arith.mulf %222, %221 : vector<8x128xf32>
    %cst_89 = arith.constant 5.000000e-01 : f32
    %224 = vector.broadcast %cst_89 : f32 to vector<8x128xf32>
    %225 = arith.addf %223, %224 : vector<8x128xf32>
    %226 = vector.extract_strided_slice %209 {offsets = [0, 256], sizes = [8, 128], strides = [1, 1]} : vector<8x512xf32> to vector<8x128xf32>
    %227 = math.tanh %226 : vector<8x128xf32>
    %228 = vector.extract_strided_slice %209 {offsets = [0, 384], sizes = [8, 128], strides = [1, 1]} : vector<8x512xf32> to vector<8x128xf32>
    %cst_90 = arith.constant 5.000000e-01 : f32
    %229 = vector.broadcast %cst_90 : f32 to vector<8x128xf32>
    %230 = arith.mulf %229, %228 : vector<8x128xf32>
    %231 = math.tanh %230 : vector<8x128xf32>
    %cst_91 = arith.constant 5.000000e-01 : f32
    %232 = vector.broadcast %cst_91 : f32 to vector<8x128xf32>
    %233 = arith.mulf %232, %231 : vector<8x128xf32>
    %cst_92 = arith.constant 5.000000e-01 : f32
    %234 = vector.broadcast %cst_92 : f32 to vector<8x128xf32>
    %235 = arith.addf %233, %234 : vector<8x128xf32>
    %236 = arith.mulf %225, %164 : vector<8x128xf32>
    %237 = arith.mulf %217, %227 : vector<8x128xf32>
    %238 = arith.addf %236, %237 : vector<8x128xf32>
    %239 = math.tanh %238 : vector<8x128xf32>
    %240 = arith.mulf %235, %239 : vector<8x128xf32>
    %241 = arith.truncf %240 : vector<8x128xf32> to vector<8x128xbf16>
    %c3_i32 = arith.constant 3 : i32
    %c8_i32_93 = arith.constant 8 : i32
    %242 = arith.muli %c3_i32, %c8_i32_93 : i32
    %243 = tpu.assume_multiple %242, 8 : i32
    %244 = arith.index_cast %243 : i32 to index
    %c0_94 = arith.constant 0 : index
    %245 = vector.load %arg11[%244, %c0_94] : memref<32x512xf32, #tpu.memory_space<vmem>>, vector<8x512xf32>
    %cst_95 = arith.constant dense<0.000000e+00> : vector<8x512xf32>
    %246 = tpu.matmul %205, %10, %cst_95 {dimension_numbers = #tpu.dot_dimension_numbers<[1], [0], [0], [1], [0, 0, 1, 1], [], []>} : vector<8x128xbf16>, vector<128x512xbf16>, vector<8x512xf32> -> vector<8x512xf32>
    %247 = arith.addf %245, %246 : vector<8x512xf32>
    %248 = vector.extract_strided_slice %247 {offsets = [0, 0], sizes = [8, 128], strides = [1, 1]} : vector<8x512xf32> to vector<8x128xf32>
    %cst_96 = arith.constant 5.000000e-01 : f32
    %249 = vector.broadcast %cst_96 : f32 to vector<8x128xf32>
    %250 = arith.mulf %249, %248 : vector<8x128xf32>
    %251 = math.tanh %250 : vector<8x128xf32>
    %cst_97 = arith.constant 5.000000e-01 : f32
    %252 = vector.broadcast %cst_97 : f32 to vector<8x128xf32>
    %253 = arith.mulf %252, %251 : vector<8x128xf32>
    %cst_98 = arith.constant 5.000000e-01 : f32
    %254 = vector.broadcast %cst_98 : f32 to vector<8x128xf32>
    %255 = arith.addf %253, %254 : vector<8x128xf32>
    %256 = vector.extract_strided_slice %247 {offsets = [0, 128], sizes = [8, 128], strides = [1, 1]} : vector<8x512xf32> to vector<8x128xf32>
    %cst_99 = arith.constant 5.000000e-01 : f32
    %257 = vector.broadcast %cst_99 : f32 to vector<8x128xf32>
    %258 = arith.mulf %257, %256 : vector<8x128xf32>
    %259 = math.tanh %258 : vector<8x128xf32>
    %cst_100 = arith.constant 5.000000e-01 : f32
    %260 = vector.broadcast %cst_100 : f32 to vector<8x128xf32>
    %261 = arith.mulf %260, %259 : vector<8x128xf32>
    %cst_101 = arith.constant 5.000000e-01 : f32
    %262 = vector.broadcast %cst_101 : f32 to vector<8x128xf32>
    %263 = arith.addf %261, %262 : vector<8x128xf32>
    %264 = vector.extract_strided_slice %247 {offsets = [0, 256], sizes = [8, 128], strides = [1, 1]} : vector<8x512xf32> to vector<8x128xf32>
    %265 = math.tanh %264 : vector<8x128xf32>
    %266 = vector.extract_strided_slice %247 {offsets = [0, 384], sizes = [8, 128], strides = [1, 1]} : vector<8x512xf32> to vector<8x128xf32>
    %cst_102 = arith.constant 5.000000e-01 : f32
    %267 = vector.broadcast %cst_102 : f32 to vector<8x128xf32>
    %268 = arith.mulf %267, %266 : vector<8x128xf32>
    %269 = math.tanh %268 : vector<8x128xf32>
    %cst_103 = arith.constant 5.000000e-01 : f32
    %270 = vector.broadcast %cst_103 : f32 to vector<8x128xf32>
    %271 = arith.mulf %270, %269 : vector<8x128xf32>
    %cst_104 = arith.constant 5.000000e-01 : f32
    %272 = vector.broadcast %cst_104 : f32 to vector<8x128xf32>
    %273 = arith.addf %271, %272 : vector<8x128xf32>
    %274 = arith.mulf %263, %202 : vector<8x128xf32>
    %275 = arith.mulf %255, %265 : vector<8x128xf32>
    %276 = arith.addf %274, %275 : vector<8x128xf32>
    %277 = math.tanh %276 : vector<8x128xf32>
    %278 = arith.mulf %273, %277 : vector<8x128xf32>
    %279 = arith.truncf %278 : vector<8x128xf32> to vector<8x128xbf16>
    %cst_105 = arith.constant dense<0.000000e+00> : vector<8x512xf32>
    %280 = tpu.matmul %279, %11, %cst_105 {dimension_numbers = #tpu.dot_dimension_numbers<[1], [0], [0], [1], [0, 0, 1, 1], [], []>} : vector<8x128xbf16>, vector<128x512xbf16>, vector<8x512xf32> -> vector<8x512xf32>
    %cst_106 = arith.constant dense<0.000000e+00> : vector<8x512xf32>
    %281 = tpu.matmul %241, %12, %cst_106 {dimension_numbers = #tpu.dot_dimension_numbers<[1], [0], [0], [1], [0, 0, 1, 1], [], []>} : vector<8x128xbf16>, vector<128x512xbf16>, vector<8x512xf32> -> vector<8x512xf32>
    %282 = arith.addf %280, %281 : vector<8x512xf32>
    %283 = arith.addf %282, %15 : vector<8x512xf32>
    %284 = vector.extract_strided_slice %283 {offsets = [0, 0], sizes = [8, 128], strides = [1, 1]} : vector<8x512xf32> to vector<8x128xf32>
    %cst_107 = arith.constant 5.000000e-01 : f32
    %285 = vector.broadcast %cst_107 : f32 to vector<8x128xf32>
    %286 = arith.mulf %285, %284 : vector<8x128xf32>
    %287 = math.tanh %286 : vector<8x128xf32>
    %cst_108 = arith.constant 5.000000e-01 : f32
    %288 = vector.broadcast %cst_108 : f32 to vector<8x128xf32>
    %289 = arith.mulf %288, %287 : vector<8x128xf32>
    %cst_109 = arith.constant 5.000000e-01 : f32
    %290 = vector.broadcast %cst_109 : f32 to vector<8x128xf32>
    %291 = arith.addf %289, %290 : vector<8x128xf32>
    %292 = vector.extract_strided_slice %283 {offsets = [0, 128], sizes = [8, 128], strides = [1, 1]} : vector<8x512xf32> to vector<8x128xf32>
    %cst_110 = arith.constant 5.000000e-01 : f32
    %293 = vector.broadcast %cst_110 : f32 to vector<8x128xf32>
    %294 = arith.mulf %293, %292 : vector<8x128xf32>
    %295 = math.tanh %294 : vector<8x128xf32>
    %cst_111 = arith.constant 5.000000e-01 : f32
    %296 = vector.broadcast %cst_111 : f32 to vector<8x128xf32>
    %297 = arith.mulf %296, %295 : vector<8x128xf32>
    %cst_112 = arith.constant 5.000000e-01 : f32
    %298 = vector.broadcast %cst_112 : f32 to vector<8x128xf32>
    %299 = arith.addf %297, %298 : vector<8x128xf32>
    %300 = vector.extract_strided_slice %283 {offsets = [0, 256], sizes = [8, 128], strides = [1, 1]} : vector<8x512xf32> to vector<8x128xf32>
    %301 = math.tanh %300 : vector<8x128xf32>
    %302 = vector.extract_strided_slice %283 {offsets = [0, 384], sizes = [8, 128], strides = [1, 1]} : vector<8x512xf32> to vector<8x128xf32>
    %cst_113 = arith.constant 5.000000e-01 : f32
    %303 = vector.broadcast %cst_113 : f32 to vector<8x128xf32>
    %304 = arith.mulf %303, %302 : vector<8x128xf32>
    %305 = math.tanh %304 : vector<8x128xf32>
    %cst_114 = arith.constant 5.000000e-01 : f32
    %306 = vector.broadcast %cst_114 : f32 to vector<8x128xf32>
    %307 = arith.mulf %306, %305 : vector<8x128xf32>
    %cst_115 = arith.constant 5.000000e-01 : f32
    %308 = vector.broadcast %cst_115 : f32 to vector<8x128xf32>
    %309 = arith.addf %307, %308 : vector<8x128xf32>
    %310 = arith.mulf %299, %238 : vector<8x128xf32>
    %311 = arith.mulf %291, %301 : vector<8x128xf32>
    %312 = arith.addf %310, %311 : vector<8x128xf32>
    %313 = math.tanh %312 : vector<8x128xf32>
    %314 = arith.mulf %309, %313 : vector<8x128xf32>
    %315 = arith.truncf %314 : vector<8x128xf32> to vector<8x128xbf16>
    %c4_i32 = arith.constant 4 : i32
    %c0_116 = arith.constant 0 : index
    %c0_117 = arith.constant 0 : index
    %316 = vector.load %arg12[%c0_116, %c0_117] : memref<8x128xbf16, #tpu.memory_space<vmem>>, vector<8x128xbf16>
    tpu.vector_store %arg12[%c0_116, %c0_117], %279 {strides = array<i32>} : memref<8x128xbf16, #tpu.memory_space<vmem>>, vector<8x128xbf16>,
    %c0_118 = arith.constant 0 : index
    %c0_119 = arith.constant 0 : index
    %317 = vector.load %arg13[%c0_118, %c0_119] : memref<8x128xf32, #tpu.memory_space<vmem>>, vector<8x128xf32>
    tpu.vector_store %arg13[%c0_118, %c0_119], %276 {strides = array<i32>} : memref<8x128xf32, #tpu.memory_space<vmem>>, vector<8x128xf32>,
    %c0_120 = arith.constant 0 : index
    %c0_121 = arith.constant 0 : index
    %318 = vector.load %arg14[%c0_120, %c0_121] : memref<8x128xbf16, #tpu.memory_space<vmem>>, vector<8x128xbf16>
    tpu.vector_store %arg14[%c0_120, %c0_121], %315 {strides = array<i32>} : memref<8x128xbf16, #tpu.memory_space<vmem>>, vector<8x128xbf16>,
    %c0_122 = arith.constant 0 : index
    %c0_123 = arith.constant 0 : index
    %319 = vector.load %arg15[%c0_122, %c0_123] : memref<8x128xf32, #tpu.memory_space<vmem>>, vector<8x128xf32>
    tpu.vector_store %arg15[%c0_122, %c0_123], %312 {strides = array<i32>} : memref<8x128xf32, #tpu.memory_space<vmem>>, vector<8x128xf32>,
    %c1_i32_124 = arith.constant 1 : i32
    %320 = arith.cmpi eq, %arg0, %c1_i32_124 : i32
    %321 = arith.extui %320 : i1 to i32
    %c0_i32_125 = arith.constant 0 : i32
    %322 = arith.cmpi ne, %321, %c0_i32_125 : i32
    scf.if %322 {
      %c0_126 = arith.constant 0 : index
      %c0_127 = arith.constant 0 : index
      %323 = vector.load %arg8[%c0_126, %c0_127] : memref<128x128xbf16, #tpu.memory_space<vmem>>, vector<128x128xbf16>
      %cst_128 = arith.constant dense<0.000000e+00> : vector<8x128xf32>
      %324 = tpu.matmul %315, %323, %cst_128 {dimension_numbers = #tpu.dot_dimension_numbers<[1], [0], [0], [1], [0, 0, 1, 1], [], []>} : vector<8x128xbf16>, vector<128x128xbf16>, vector<8x128xf32> -> vector<8x128xf32>
      %c0_129 = arith.constant 0 : index
      %c0_130 = arith.constant 0 : index
      %325 = vector.load %arg9[%c0_129, %c0_130] : memref<1x128xf32, #tpu.memory_space<vmem>>, vector<1x128xf32>
      %326 = vector.broadcast %325 : vector<1x128xf32> to vector<8x128xf32>
      %327 = arith.addf %324, %326 : vector<8x128xf32>
      %c0_131 = arith.constant 0 : index
      %c0_132 = arith.constant 0 : index
      %328 = vector.load %arg10[%c0_131, %c0_132] : memref<8x128xf32, #tpu.memory_space<vmem>>, vector<8x128xf32>
      tpu.vector_store %arg10[%c0_131, %c0_132], %327 {strides = array<i32>} : memref<8x128xf32, #tpu.memory_space<vmem>>, vector<8x128xf32>,
    } else {
    }
    return
  }
  func.func @transform_0(%arg0: i32) -> (i32, i32) {
    %c0_i32 = arith.constant 0 : i32
    %c0_i32_0 = arith.constant 0 : i32
    return %arg0, %c0_i32 : i32, i32
  }
  func.func @transform_1(%arg0: i32) -> (i32, i32) {
    %c0_i32 = arith.constant 0 : i32
    %c0_i32_0 = arith.constant 0 : i32
    %c0_i32_1 = arith.constant 0 : i32
    return %c0_i32, %c0_i32_0 : i32, i32
  }
  func.func @transform_2(%arg0: i32) -> (i32, i32) {
    %c0_i32 = arith.constant 0 : i32
    %c0_i32_0 = arith.constant 0 : i32
    %c0_i32_1 = arith.constant 0 : i32
    return %c0_i32, %c0_i32_0 : i32, i32
  }
  func.func @transform_3(%arg0: i32) -> (i32, i32) {
    %c0_i32 = arith.constant 0 : i32
    %c0_i32_0 = arith.constant 0 : i32
    %c0_i32_1 = arith.constant 0 : i32
    return %c0_i32, %c0_i32_0 : i32, i32
  }
  func.func @transform_4(%arg0: i32) -> (i32, i32) {
    %c0_i32 = arith.constant 0 : i32
    %c0_i32_0 = arith.constant 0 : i32
    %c0_i32_1 = arith.constant 0 : i32
    return %c0_i32, %c0_i32_0 : i32, i32
  }
  func.func @transform_5(%arg0: i32) -> (i32, i32) {
    %c0_i32 = arith.constant 0 : i32
    %c0_i32_0 = arith.constant 0 : i32
    %c0_i32_1 = arith.constant 0 : i32
    return %c0_i32, %c0_i32_0 : i32, i32
  }
  func.func @transform_6(%arg0: i32) -> (i32, i32) {
    %c0_i32 = arith.constant 0 : i32
    %c0_i32_0 = arith.constant 0 : i32
    %c0_i32_1 = arith.constant 0 : i32
    return %c0_i32, %c0_i32_0 : i32, i32
  }
  func.func @transform_7(%arg0: i32) -> (i32, i32) {
    %c0_i32 = arith.constant 0 : i32
    %c0_i32_0 = arith.constant 0 : i32
    %c0_i32_1 = arith.constant 0 : i32
    return %c0_i32, %c0_i32_0 : i32, i32
  }
  func.func @transform_8(%arg0: i32) -> (i32, i32) {
    %c0_i32 = arith.constant 0 : i32
    %c0_i32_0 = arith.constant 0 : i32
    %c0_i32_1 = arith.constant 0 : i32
    return %c0_i32, %c0_i32_0 : i32, i32
  }
  func.func @transform_9(%arg0: i32) -> (i32, i32) {
    %c0_i32 = arith.constant 0 : i32
    %c0_i32_0 = arith.constant 0 : i32
    %c0_i32_1 = arith.constant 0 : i32
    return %c0_i32, %c0_i32_0 : i32, i32
  }
}

module attributes {stable_mosaic.version = 11 : i64} {
  func.func @_lstm_fc_kernel(%arg0: i32, %arg1: memref<32x4xbf16, #tpu.memory_space<vmem>>, %arg2: memref<4x512xbf16, #tpu.memory_space<vmem>>, %arg3: memref<128x512xbf16, #tpu.memory_space<vmem>>, %arg4: memref<1x512xf32, #tpu.memory_space<vmem>>, %arg5: memref<128x512xbf16, #tpu.memory_space<vmem>>, %arg6: memref<128x512xbf16, #tpu.memory_space<vmem>>, %arg7: memref<1x512xf32, #tpu.memory_space<vmem>>, %arg8: memref<128x128xbf16, #tpu.memory_space<vmem>>, %arg9: memref<1x128xf32, #tpu.memory_space<vmem>>, %arg10: memref<8x128xf32, #tpu.memory_space<vmem>>, %arg11: memref<32x512xf32, #tpu.memory_space<vmem>>, %arg12: memref<8x128xbf16, #tpu.memory_space<vmem>>, %arg13: memref<8x128xf32, #tpu.memory_space<vmem>>, %arg14: memref<8x128xbf16, #tpu.memory_space<vmem>>, %arg15: memref<8x128xf32, #tpu.memory_space<vmem>>) attributes {dimension_semantics = [#tpu.dimension_semantics<arbitrary>], iteration_bounds = array<i64: 2>, scalar_prefetch = 0 : i64, scratch_operands = 5 : i64, tpu.core_type = #tpu.core_type<tc>, window_params = [{transform_indices = @transform_0, window_bounds = array<i64: 32, 4>}, {pipeline_mode = #tpu.pipeline_mode<synchronous>, transform_indices = @transform_1, window_bounds = array<i64: 4, 512>}, {pipeline_mode = #tpu.pipeline_mode<synchronous>, transform_indices = @transform_2, window_bounds = array<i64: 128, 512>}, {pipeline_mode = #tpu.pipeline_mode<synchronous>, transform_indices = @transform_3, window_bounds = array<i64: 1, 512>}, {pipeline_mode = #tpu.pipeline_mode<synchronous>, transform_indices = @transform_4, window_bounds = array<i64: 128, 512>}, {pipeline_mode = #tpu.pipeline_mode<synchronous>, transform_indices = @transform_5, window_bounds = array<i64: 128, 512>}, {pipeline_mode = #tpu.pipeline_mode<synchronous>, transform_indices = @transform_6, window_bounds = array<i64: 1, 512>}, {pipeline_mode = #tpu.pipeline_mode<synchronous>, transform_indices = @transform_7, window_bounds = array<i64: 128, 128>}, {pipeline_mode = #tpu.pipeline_mode<synchronous>, transform_indices = @transform_8, window_bounds = array<i64: 1, 128>}, {pipeline_mode = #tpu.pipeline_mode<synchronous>, transform_indices = @transform_9, window_bounds = array<i64: 8, 128>}]} {
    %c0_i32 = arith.constant 0 : i32
    %0 = arith.cmpi eq, %arg0, %c0_i32 : i32
    %1 = arith.extui %0 : i1 to i32
    %c0_i32_0 = arith.constant 0 : i32
    %2 = arith.cmpi ne, %1, %c0_i32_0 : i32
    scf.if %2 {
      %cst_126 = arith.constant 0.000000e+00 : bf16
      %323 = vector.broadcast %cst_126 : bf16 to vector<8x128xbf16>
      %c0_127 = arith.constant 0 : index
      %c0_128 = arith.constant 0 : index
      %324 = vector.load %arg12[%c0_127, %c0_128] : memref<8x128xbf16, #tpu.memory_space<vmem>>, vector<8x128xbf16>
      tpu.vector_store %arg12[%c0_127, %c0_128], %323 {strides = array<i32>} : memref<8x128xbf16, #tpu.memory_space<vmem>>, vector<8x128xbf16>,
      %cst_129 = arith.constant 0.000000e+00 : f32
      %325 = vector.broadcast %cst_129 : f32 to vector<8x128xf32>
      %c0_130 = arith.constant 0 : index
      %c0_131 = arith.constant 0 : index
      %326 = vector.load %arg13[%c0_130, %c0_131] : memref<8x128xf32, #tpu.memory_space<vmem>>, vector<8x128xf32>
      tpu.vector_store %arg13[%c0_130, %c0_131], %325 {strides = array<i32>} : memref<8x128xf32, #tpu.memory_space<vmem>>, vector<8x128xf32>,
      %cst_132 = arith.constant 0.000000e+00 : bf16
      %327 = vector.broadcast %cst_132 : bf16 to vector<8x128xbf16>
      %c0_133 = arith.constant 0 : index
      %c0_134 = arith.constant 0 : index
      %328 = vector.load %arg14[%c0_133, %c0_134] : memref<8x128xbf16, #tpu.memory_space<vmem>>, vector<8x128xbf16>
      tpu.vector_store %arg14[%c0_133, %c0_134], %327 {strides = array<i32>} : memref<8x128xbf16, #tpu.memory_space<vmem>>, vector<8x128xbf16>,
      %cst_135 = arith.constant 0.000000e+00 : f32
      %329 = vector.broadcast %cst_135 : f32 to vector<8x128xf32>
      %c0_136 = arith.constant 0 : index
      %c0_137 = arith.constant 0 : index
      %330 = vector.load %arg15[%c0_136, %c0_137] : memref<8x128xf32, #tpu.memory_space<vmem>>, vector<8x128xf32>
      tpu.vector_store %arg15[%c0_136, %c0_137], %329 {strides = array<i32>} : memref<8x128xf32, #tpu.memory_space<vmem>>, vector<8x128xf32>,
    } else {
    }
    %c0 = arith.constant 0 : index
    %c0_1 = arith.constant 0 : index
    %3 = vector.load %arg1[%c0, %c0_1] : memref<32x4xbf16, #tpu.memory_space<vmem>>, vector<32x4xbf16>
    %c0_2 = arith.constant 0 : index
    %c0_3 = arith.constant 0 : index
    %4 = vector.load %arg2[%c0_2, %c0_3] : memref<4x512xbf16, #tpu.memory_space<vmem>>, vector<4x512xbf16>
    %cst = arith.constant dense<0.000000e+00> : vector<32x512xf32>
    %5 = tpu.matmul %3, %4, %cst {dimension_numbers = #tpu.dot_dimension_numbers<[1], [0], [0], [1], [0, 0, 1, 1], [], []>} : vector<32x4xbf16>, vector<4x512xbf16>, vector<32x512xf32> -> vector<32x512xf32>
    %c0_4 = arith.constant 0 : index
    %c0_5 = arith.constant 0 : index
    %6 = vector.load %arg4[%c0_4, %c0_5] : memref<1x512xf32, #tpu.memory_space<vmem>>, vector<1x512xf32>
    %7 = vector.broadcast %6 : vector<1x512xf32> to vector<32x512xf32>
    %8 = arith.addf %5, %7 : vector<32x512xf32>
    %c0_6 = arith.constant 0 : index
    %c0_7 = arith.constant 0 : index
    %9 = vector.load %arg11[%c0_6, %c0_7] : memref<32x512xf32, #tpu.memory_space<vmem>>, vector<32x512xf32>
    tpu.vector_store %arg11[%c0_6, %c0_7], %8 {strides = array<i32>} : memref<32x512xf32, #tpu.memory_space<vmem>>, vector<32x512xf32>,
    %c0_8 = arith.constant 0 : index
    %c0_9 = arith.constant 0 : index
    %10 = vector.load %arg3[%c0_8, %c0_9] : memref<128x512xbf16, #tpu.memory_space<vmem>>, vector<128x512xbf16>
    %c0_10 = arith.constant 0 : index
    %c0_11 = arith.constant 0 : index
    %11 = vector.load %arg5[%c0_10, %c0_11] : memref<128x512xbf16, #tpu.memory_space<vmem>>, vector<128x512xbf16>
    %c0_12 = arith.constant 0 : index
    %c0_13 = arith.constant 0 : index
    %12 = vector.load %arg6[%c0_12, %c0_13] : memref<128x512xbf16, #tpu.memory_space<vmem>>, vector<128x512xbf16>
    %c0_14 = arith.constant 0 : index
    %c0_15 = arith.constant 0 : index
    %13 = vector.load %arg7[%c0_14, %c0_15] : memref<1x512xf32, #tpu.memory_space<vmem>>, vector<1x512xf32>
    %14 = vector.shape_cast %13 : vector<1x512xf32> to vector<1x512xf32>
    %15 = vector.broadcast %14 : vector<1x512xf32> to vector<8x512xf32>
    %c0_16 = arith.constant 0 : index
    %c0_17 = arith.constant 0 : index
    %16 = vector.load %arg12[%c0_16, %c0_17] : memref<8x128xbf16, #tpu.memory_space<vmem>>, vector<8x128xbf16>
    %c0_18 = arith.constant 0 : index
    %c0_19 = arith.constant 0 : index
    %17 = vector.load %arg13[%c0_18, %c0_19] : memref<8x128xf32, #tpu.memory_space<vmem>>, vector<8x128xf32>
    %c0_20 = arith.constant 0 : index
    %c0_21 = arith.constant 0 : index
    %18 = vector.load %arg14[%c0_20, %c0_21] : memref<8x128xbf16, #tpu.memory_space<vmem>>, vector<8x128xbf16>
    %c0_22 = arith.constant 0 : index
    %c0_23 = arith.constant 0 : index
    %19 = vector.load %arg15[%c0_22, %c0_23] : memref<8x128xf32, #tpu.memory_space<vmem>>, vector<8x128xf32>
    %c0_i32_24 = arith.constant 0 : i32
    %c8_i32 = arith.constant 8 : i32
    %20 = arith.muli %c0_i32_24, %c8_i32 : i32
    %21 = tpu.assume_multiple %20, 8 : i32
    %22 = arith.index_cast %21 : i32 to index
    %c0_25 = arith.constant 0 : index
    %23 = vector.load %arg11[%22, %c0_25] : memref<32x512xf32, #tpu.memory_space<vmem>>, vector<8x512xf32>
    %cst_26 = arith.constant dense<0.000000e+00> : vector<8x512xf32>
    %24 = tpu.matmul %16, %10, %cst_26 {dimension_numbers = #tpu.dot_dimension_numbers<[1], [0], [0], [1], [0, 0, 1, 1], [], []>} : vector<8x128xbf16>, vector<128x512xbf16>, vector<8x512xf32> -> vector<8x512xf32>
    %25 = arith.addf %23, %24 : vector<8x512xf32>
    %26 = vector.extract_strided_slice %25 {offsets = [0, 0], sizes = [8, 128], strides = [1, 1]} : vector<8x512xf32> to vector<8x128xf32>
    %cst_27 = arith.constant 5.000000e-01 : f32
    %27 = vector.broadcast %cst_27 : f32 to vector<8x128xf32>
    %28 = arith.mulf %27, %26 : vector<8x128xf32>
    %29 = math.tanh %28 : vector<8x128xf32>
    %cst_28 = arith.constant 5.000000e-01 : f32
    %30 = vector.broadcast %cst_28 : f32 to vector<8x128xf32>
    %31 = arith.mulf %30, %29 : vector<8x128xf32>
    %cst_29 = arith.constant 5.000000e-01 : f32
    %32 = vector.broadcast %cst_29 : f32 to vector<8x128xf32>
    %33 = arith.addf %31, %32 : vector<8x128xf32>
    %34 = vector.extract_strided_slice %25 {offsets = [0, 128], sizes = [8, 128], strides = [1, 1]} : vector<8x512xf32> to vector<8x128xf32>
    %cst_30 = arith.constant 5.000000e-01 : f32
    %35 = vector.broadcast %cst_30 : f32 to vector<8x128xf32>
    %36 = arith.mulf %35, %34 : vector<8x128xf32>
    %37 = math.tanh %36 : vector<8x128xf32>
    %cst_31 = arith.constant 5.000000e-01 : f32
    %38 = vector.broadcast %cst_31 : f32 to vector<8x128xf32>
    %39 = arith.mulf %38, %37 : vector<8x128xf32>
    %cst_32 = arith.constant 5.000000e-01 : f32
    %40 = vector.broadcast %cst_32 : f32 to vector<8x128xf32>
    %41 = arith.addf %39, %40 : vector<8x128xf32>
    %42 = vector.extract_strided_slice %25 {offsets = [0, 256], sizes = [8, 128], strides = [1, 1]} : vector<8x512xf32> to vector<8x128xf32>
    %43 = math.tanh %42 : vector<8x128xf32>
    %44 = vector.extract_strided_slice %25 {offsets = [0, 384], sizes = [8, 128], strides = [1, 1]} : vector<8x512xf32> to vector<8x128xf32>
    %cst_33 = arith.constant 5.000000e-01 : f32
    %45 = vector.broadcast %cst_33 : f32 to vector<8x128xf32>
    %46 = arith.mulf %45, %44 : vector<8x128xf32>
    %47 = math.tanh %46 : vector<8x128xf32>
    %cst_34 = arith.constant 5.000000e-01 : f32
    %48 = vector.broadcast %cst_34 : f32 to vector<8x128xf32>
    %49 = arith.mulf %48, %47 : vector<8x128xf32>
    %cst_35 = arith.constant 5.000000e-01 : f32
    %50 = vector.broadcast %cst_35 : f32 to vector<8x128xf32>
    %51 = arith.addf %49, %50 : vector<8x128xf32>
    %52 = arith.mulf %41, %17 : vector<8x128xf32>
    %53 = arith.mulf %33, %43 : vector<8x128xf32>
    %54 = arith.addf %52, %53 : vector<8x128xf32>
    %55 = math.tanh %54 : vector<8x128xf32>
    %56 = arith.mulf %51, %55 : vector<8x128xf32>
    %57 = arith.truncf %56 : vector<8x128xf32> to vector<8x128xbf16>
    %cst_36 = arith.constant dense<0.000000e+00> : vector<8x512xf32>
    %58 = tpu.matmul %57, %11, %cst_36 {dimension_numbers = #tpu.dot_dimension_numbers<[1], [0], [0], [1], [0, 0, 1, 1], [], []>} : vector<8x128xbf16>, vector<128x512xbf16>, vector<8x512xf32> -> vector<8x512xf32>
    %cst_37 = arith.constant dense<0.000000e+00> : vector<8x512xf32>
    %59 = tpu.matmul %18, %12, %cst_37 {dimension_numbers = #tpu.dot_dimension_numbers<[1], [0], [0], [1], [0, 0, 1, 1], [], []>} : vector<8x128xbf16>, vector<128x512xbf16>, vector<8x512xf32> -> vector<8x512xf32>
    %60 = arith.addf %58, %59 : vector<8x512xf32>
    %61 = arith.addf %60, %15 : vector<8x512xf32>
    %62 = vector.extract_strided_slice %61 {offsets = [0, 0], sizes = [8, 128], strides = [1, 1]} : vector<8x512xf32> to vector<8x128xf32>
    %cst_38 = arith.constant 5.000000e-01 : f32
    %63 = vector.broadcast %cst_38 : f32 to vector<8x128xf32>
    %64 = arith.mulf %63, %62 : vector<8x128xf32>
    %65 = math.tanh %64 : vector<8x128xf32>
    %cst_39 = arith.constant 5.000000e-01 : f32
    %66 = vector.broadcast %cst_39 : f32 to vector<8x128xf32>
    %67 = arith.mulf %66, %65 : vector<8x128xf32>
    %cst_40 = arith.constant 5.000000e-01 : f32
    %68 = vector.broadcast %cst_40 : f32 to vector<8x128xf32>
    %69 = arith.addf %67, %68 : vector<8x128xf32>
    %70 = vector.extract_strided_slice %61 {offsets = [0, 128], sizes = [8, 128], strides = [1, 1]} : vector<8x512xf32> to vector<8x128xf32>
    %cst_41 = arith.constant 5.000000e-01 : f32
    %71 = vector.broadcast %cst_41 : f32 to vector<8x128xf32>
    %72 = arith.mulf %71, %70 : vector<8x128xf32>
    %73 = math.tanh %72 : vector<8x128xf32>
    %cst_42 = arith.constant 5.000000e-01 : f32
    %74 = vector.broadcast %cst_42 : f32 to vector<8x128xf32>
    %75 = arith.mulf %74, %73 : vector<8x128xf32>
    %cst_43 = arith.constant 5.000000e-01 : f32
    %76 = vector.broadcast %cst_43 : f32 to vector<8x128xf32>
    %77 = arith.addf %75, %76 : vector<8x128xf32>
    %78 = vector.extract_strided_slice %61 {offsets = [0, 256], sizes = [8, 128], strides = [1, 1]} : vector<8x512xf32> to vector<8x128xf32>
    %79 = math.tanh %78 : vector<8x128xf32>
    %80 = vector.extract_strided_slice %61 {offsets = [0, 384], sizes = [8, 128], strides = [1, 1]} : vector<8x512xf32> to vector<8x128xf32>
    %cst_44 = arith.constant 5.000000e-01 : f32
    %81 = vector.broadcast %cst_44 : f32 to vector<8x128xf32>
    %82 = arith.mulf %81, %80 : vector<8x128xf32>
    %83 = math.tanh %82 : vector<8x128xf32>
    %cst_45 = arith.constant 5.000000e-01 : f32
    %84 = vector.broadcast %cst_45 : f32 to vector<8x128xf32>
    %85 = arith.mulf %84, %83 : vector<8x128xf32>
    %cst_46 = arith.constant 5.000000e-01 : f32
    %86 = vector.broadcast %cst_46 : f32 to vector<8x128xf32>
    %87 = arith.addf %85, %86 : vector<8x128xf32>
    %88 = arith.mulf %77, %19 : vector<8x128xf32>
    %89 = arith.mulf %69, %79 : vector<8x128xf32>
    %90 = arith.addf %88, %89 : vector<8x128xf32>
    %91 = math.tanh %90 : vector<8x128xf32>
    %92 = arith.mulf %87, %91 : vector<8x128xf32>
    %93 = arith.truncf %92 : vector<8x128xf32> to vector<8x128xbf16>
    %c1_i32 = arith.constant 1 : i32
    %c8_i32_47 = arith.constant 8 : i32
    %94 = arith.muli %c1_i32, %c8_i32_47 : i32
    %95 = tpu.assume_multiple %94, 8 : i32
    %96 = arith.index_cast %95 : i32 to index
    %c0_48 = arith.constant 0 : index
    %97 = vector.load %arg11[%96, %c0_48] : memref<32x512xf32, #tpu.memory_space<vmem>>, vector<8x512xf32>
    %cst_49 = arith.constant dense<0.000000e+00> : vector<8x512xf32>
    %98 = tpu.matmul %57, %10, %cst_49 {dimension_numbers = #tpu.dot_dimension_numbers<[1], [0], [0], [1], [0, 0, 1, 1], [], []>} : vector<8x128xbf16>, vector<128x512xbf16>, vector<8x512xf32> -> vector<8x512xf32>
    %99 = arith.addf %97, %98 : vector<8x512xf32>
    %100 = vector.extract_strided_slice %99 {offsets = [0, 0], sizes = [8, 128], strides = [1, 1]} : vector<8x512xf32> to vector<8x128xf32>
    %cst_50 = arith.constant 5.000000e-01 : f32
    %101 = vector.broadcast %cst_50 : f32 to vector<8x128xf32>
    %102 = arith.mulf %101, %100 : vector<8x128xf32>
    %103 = math.tanh %102 : vector<8x128xf32>
    %cst_51 = arith.constant 5.000000e-01 : f32
    %104 = vector.broadcast %cst_51 : f32 to vector<8x128xf32>
    %105 = arith.mulf %104, %103 : vector<8x128xf32>
    %cst_52 = arith.constant 5.000000e-01 : f32
    %106 = vector.broadcast %cst_52 : f32 to vector<8x128xf32>
    %107 = arith.addf %105, %106 : vector<8x128xf32>
    %108 = vector.extract_strided_slice %99 {offsets = [0, 128], sizes = [8, 128], strides = [1, 1]} : vector<8x512xf32> to vector<8x128xf32>
    %cst_53 = arith.constant 5.000000e-01 : f32
    %109 = vector.broadcast %cst_53 : f32 to vector<8x128xf32>
    %110 = arith.mulf %109, %108 : vector<8x128xf32>
    %111 = math.tanh %110 : vector<8x128xf32>
    %cst_54 = arith.constant 5.000000e-01 : f32
    %112 = vector.broadcast %cst_54 : f32 to vector<8x128xf32>
    %113 = arith.mulf %112, %111 : vector<8x128xf32>
    %cst_55 = arith.constant 5.000000e-01 : f32
    %114 = vector.broadcast %cst_55 : f32 to vector<8x128xf32>
    %115 = arith.addf %113, %114 : vector<8x128xf32>
    %116 = vector.extract_strided_slice %99 {offsets = [0, 256], sizes = [8, 128], strides = [1, 1]} : vector<8x512xf32> to vector<8x128xf32>
    %117 = math.tanh %116 : vector<8x128xf32>
    %118 = vector.extract_strided_slice %99 {offsets = [0, 384], sizes = [8, 128], strides = [1, 1]} : vector<8x512xf32> to vector<8x128xf32>
    %cst_56 = arith.constant 5.000000e-01 : f32
    %119 = vector.broadcast %cst_56 : f32 to vector<8x128xf32>
    %120 = arith.mulf %119, %118 : vector<8x128xf32>
    %121 = math.tanh %120 : vector<8x128xf32>
    %cst_57 = arith.constant 5.000000e-01 : f32
    %122 = vector.broadcast %cst_57 : f32 to vector<8x128xf32>
    %123 = arith.mulf %122, %121 : vector<8x128xf32>
    %cst_58 = arith.constant 5.000000e-01 : f32
    %124 = vector.broadcast %cst_58 : f32 to vector<8x128xf32>
    %125 = arith.addf %123, %124 : vector<8x128xf32>
    %126 = arith.mulf %115, %54 : vector<8x128xf32>
    %127 = arith.mulf %107, %117 : vector<8x128xf32>
    %128 = arith.addf %126, %127 : vector<8x128xf32>
    %129 = math.tanh %128 : vector<8x128xf32>
    %130 = arith.mulf %125, %129 : vector<8x128xf32>
    %131 = arith.truncf %130 : vector<8x128xf32> to vector<8x128xbf16>
    %cst_59 = arith.constant dense<0.000000e+00> : vector<8x512xf32>
    %132 = tpu.matmul %131, %11, %cst_59 {dimension_numbers = #tpu.dot_dimension_numbers<[1], [0], [0], [1], [0, 0, 1, 1], [], []>} : vector<8x128xbf16>, vector<128x512xbf16>, vector<8x512xf32> -> vector<8x512xf32>
    %cst_60 = arith.constant dense<0.000000e+00> : vector<8x512xf32>
    %133 = tpu.matmul %93, %12, %cst_60 {dimension_numbers = #tpu.dot_dimension_numbers<[1], [0], [0], [1], [0, 0, 1, 1], [], []>} : vector<8x128xbf16>, vector<128x512xbf16>, vector<8x512xf32> -> vector<8x512xf32>
    %134 = arith.addf %132, %133 : vector<8x512xf32>
    %135 = arith.addf %134, %15 : vector<8x512xf32>
    %136 = vector.extract_strided_slice %135 {offsets = [0, 0], sizes = [8, 128], strides = [1, 1]} : vector<8x512xf32> to vector<8x128xf32>
    %cst_61 = arith.constant 5.000000e-01 : f32
    %137 = vector.broadcast %cst_61 : f32 to vector<8x128xf32>
    %138 = arith.mulf %137, %136 : vector<8x128xf32>
    %139 = math.tanh %138 : vector<8x128xf32>
    %cst_62 = arith.constant 5.000000e-01 : f32
    %140 = vector.broadcast %cst_62 : f32 to vector<8x128xf32>
    %141 = arith.mulf %140, %139 : vector<8x128xf32>
    %cst_63 = arith.constant 5.000000e-01 : f32
    %142 = vector.broadcast %cst_63 : f32 to vector<8x128xf32>
    %143 = arith.addf %141, %142 : vector<8x128xf32>
    %144 = vector.extract_strided_slice %135 {offsets = [0, 128], sizes = [8, 128], strides = [1, 1]} : vector<8x512xf32> to vector<8x128xf32>
    %cst_64 = arith.constant 5.000000e-01 : f32
    %145 = vector.broadcast %cst_64 : f32 to vector<8x128xf32>
    %146 = arith.mulf %145, %144 : vector<8x128xf32>
    %147 = math.tanh %146 : vector<8x128xf32>
    %cst_65 = arith.constant 5.000000e-01 : f32
    %148 = vector.broadcast %cst_65 : f32 to vector<8x128xf32>
    %149 = arith.mulf %148, %147 : vector<8x128xf32>
    %cst_66 = arith.constant 5.000000e-01 : f32
    %150 = vector.broadcast %cst_66 : f32 to vector<8x128xf32>
    %151 = arith.addf %149, %150 : vector<8x128xf32>
    %152 = vector.extract_strided_slice %135 {offsets = [0, 256], sizes = [8, 128], strides = [1, 1]} : vector<8x512xf32> to vector<8x128xf32>
    %153 = math.tanh %152 : vector<8x128xf32>
    %154 = vector.extract_strided_slice %135 {offsets = [0, 384], sizes = [8, 128], strides = [1, 1]} : vector<8x512xf32> to vector<8x128xf32>
    %cst_67 = arith.constant 5.000000e-01 : f32
    %155 = vector.broadcast %cst_67 : f32 to vector<8x128xf32>
    %156 = arith.mulf %155, %154 : vector<8x128xf32>
    %157 = math.tanh %156 : vector<8x128xf32>
    %cst_68 = arith.constant 5.000000e-01 : f32
    %158 = vector.broadcast %cst_68 : f32 to vector<8x128xf32>
    %159 = arith.mulf %158, %157 : vector<8x128xf32>
    %cst_69 = arith.constant 5.000000e-01 : f32
    %160 = vector.broadcast %cst_69 : f32 to vector<8x128xf32>
    %161 = arith.addf %159, %160 : vector<8x128xf32>
    %162 = arith.mulf %151, %90 : vector<8x128xf32>
    %163 = arith.mulf %143, %153 : vector<8x128xf32>
    %164 = arith.addf %162, %163 : vector<8x128xf32>
    %165 = math.tanh %164 : vector<8x128xf32>
    %166 = arith.mulf %161, %165 : vector<8x128xf32>
    %167 = arith.truncf %166 : vector<8x128xf32> to vector<8x128xbf16>
    %c2_i32 = arith.constant 2 : i32
    %c8_i32_70 = arith.constant 8 : i32
    %168 = arith.muli %c2_i32, %c8_i32_70 : i32
    %169 = tpu.assume_multiple %168, 8 : i32
    %170 = arith.index_cast %169 : i32 to index
    %c0_71 = arith.constant 0 : index
    %171 = vector.load %arg11[%170, %c0_71] : memref<32x512xf32, #tpu.memory_space<vmem>>, vector<8x512xf32>
    %cst_72 = arith.constant dense<0.000000e+00> : vector<8x512xf32>
    %172 = tpu.matmul %131, %10, %cst_72 {dimension_numbers = #tpu.dot_dimension_numbers<[1], [0], [0], [1], [0, 0, 1, 1], [], []>} : vector<8x128xbf16>, vector<128x512xbf16>, vector<8x512xf32> -> vector<8x512xf32>
    %173 = arith.addf %171, %172 : vector<8x512xf32>
    %174 = vector.extract_strided_slice %173 {offsets = [0, 0], sizes = [8, 128], strides = [1, 1]} : vector<8x512xf32> to vector<8x128xf32>
    %cst_73 = arith.constant 5.000000e-01 : f32
    %175 = vector.broadcast %cst_73 : f32 to vector<8x128xf32>
    %176 = arith.mulf %175, %174 : vector<8x128xf32>
    %177 = math.tanh %176 : vector<8x128xf32>
    %cst_74 = arith.constant 5.000000e-01 : f32
    %178 = vector.broadcast %cst_74 : f32 to vector<8x128xf32>
    %179 = arith.mulf %178, %177 : vector<8x128xf32>
    %cst_75 = arith.constant 5.000000e-01 : f32
    %180 = vector.broadcast %cst_75 : f32 to vector<8x128xf32>
    %181 = arith.addf %179, %180 : vector<8x128xf32>
    %182 = vector.extract_strided_slice %173 {offsets = [0, 128], sizes = [8, 128], strides = [1, 1]} : vector<8x512xf32> to vector<8x128xf32>
    %cst_76 = arith.constant 5.000000e-01 : f32
    %183 = vector.broadcast %cst_76 : f32 to vector<8x128xf32>
    %184 = arith.mulf %183, %182 : vector<8x128xf32>
    %185 = math.tanh %184 : vector<8x128xf32>
    %cst_77 = arith.constant 5.000000e-01 : f32
    %186 = vector.broadcast %cst_77 : f32 to vector<8x128xf32>
    %187 = arith.mulf %186, %185 : vector<8x128xf32>
    %cst_78 = arith.constant 5.000000e-01 : f32
    %188 = vector.broadcast %cst_78 : f32 to vector<8x128xf32>
    %189 = arith.addf %187, %188 : vector<8x128xf32>
    %190 = vector.extract_strided_slice %173 {offsets = [0, 256], sizes = [8, 128], strides = [1, 1]} : vector<8x512xf32> to vector<8x128xf32>
    %191 = math.tanh %190 : vector<8x128xf32>
    %192 = vector.extract_strided_slice %173 {offsets = [0, 384], sizes = [8, 128], strides = [1, 1]} : vector<8x512xf32> to vector<8x128xf32>
    %cst_79 = arith.constant 5.000000e-01 : f32
    %193 = vector.broadcast %cst_79 : f32 to vector<8x128xf32>
    %194 = arith.mulf %193, %192 : vector<8x128xf32>
    %195 = math.tanh %194 : vector<8x128xf32>
    %cst_80 = arith.constant 5.000000e-01 : f32
    %196 = vector.broadcast %cst_80 : f32 to vector<8x128xf32>
    %197 = arith.mulf %196, %195 : vector<8x128xf32>
    %cst_81 = arith.constant 5.000000e-01 : f32
    %198 = vector.broadcast %cst_81 : f32 to vector<8x128xf32>
    %199 = arith.addf %197, %198 : vector<8x128xf32>
    %200 = arith.mulf %189, %128 : vector<8x128xf32>
    %201 = arith.mulf %181, %191 : vector<8x128xf32>
    %202 = arith.addf %200, %201 : vector<8x128xf32>
    %203 = math.tanh %202 : vector<8x128xf32>
    %204 = arith.mulf %199, %203 : vector<8x128xf32>
    %205 = arith.truncf %204 : vector<8x128xf32> to vector<8x128xbf16>
    %cst_82 = arith.constant dense<0.000000e+00> : vector<8x512xf32>
    %206 = tpu.matmul %205, %11, %cst_82 {dimension_numbers = #tpu.dot_dimension_numbers<[1], [0], [0], [1], [0, 0, 1, 1], [], []>} : vector<8x128xbf16>, vector<128x512xbf16>, vector<8x512xf32> -> vector<8x512xf32>
    %cst_83 = arith.constant dense<0.000000e+00> : vector<8x512xf32>
    %207 = tpu.matmul %167, %12, %cst_83 {dimension_numbers = #tpu.dot_dimension_numbers<[1], [0], [0], [1], [0, 0, 1, 1], [], []>} : vector<8x128xbf16>, vector<128x512xbf16>, vector<8x512xf32> -> vector<8x512xf32>
    %208 = arith.addf %206, %207 : vector<8x512xf32>
    %209 = arith.addf %208, %15 : vector<8x512xf32>
    %210 = vector.extract_strided_slice %209 {offsets = [0, 0], sizes = [8, 128], strides = [1, 1]} : vector<8x512xf32> to vector<8x128xf32>
    %cst_84 = arith.constant 5.000000e-01 : f32
    %211 = vector.broadcast %cst_84 : f32 to vector<8x128xf32>
    %212 = arith.mulf %211, %210 : vector<8x128xf32>
    %213 = math.tanh %212 : vector<8x128xf32>
    %cst_85 = arith.constant 5.000000e-01 : f32
    %214 = vector.broadcast %cst_85 : f32 to vector<8x128xf32>
    %215 = arith.mulf %214, %213 : vector<8x128xf32>
    %cst_86 = arith.constant 5.000000e-01 : f32
    %216 = vector.broadcast %cst_86 : f32 to vector<8x128xf32>
    %217 = arith.addf %215, %216 : vector<8x128xf32>
    %218 = vector.extract_strided_slice %209 {offsets = [0, 128], sizes = [8, 128], strides = [1, 1]} : vector<8x512xf32> to vector<8x128xf32>
    %cst_87 = arith.constant 5.000000e-01 : f32
    %219 = vector.broadcast %cst_87 : f32 to vector<8x128xf32>
    %220 = arith.mulf %219, %218 : vector<8x128xf32>
    %221 = math.tanh %220 : vector<8x128xf32>
    %cst_88 = arith.constant 5.000000e-01 : f32
    %222 = vector.broadcast %cst_88 : f32 to vector<8x128xf32>
    %223 = arith.mulf %222, %221 : vector<8x128xf32>
    %cst_89 = arith.constant 5.000000e-01 : f32
    %224 = vector.broadcast %cst_89 : f32 to vector<8x128xf32>
    %225 = arith.addf %223, %224 : vector<8x128xf32>
    %226 = vector.extract_strided_slice %209 {offsets = [0, 256], sizes = [8, 128], strides = [1, 1]} : vector<8x512xf32> to vector<8x128xf32>
    %227 = math.tanh %226 : vector<8x128xf32>
    %228 = vector.extract_strided_slice %209 {offsets = [0, 384], sizes = [8, 128], strides = [1, 1]} : vector<8x512xf32> to vector<8x128xf32>
    %cst_90 = arith.constant 5.000000e-01 : f32
    %229 = vector.broadcast %cst_90 : f32 to vector<8x128xf32>
    %230 = arith.mulf %229, %228 : vector<8x128xf32>
    %231 = math.tanh %230 : vector<8x128xf32>
    %cst_91 = arith.constant 5.000000e-01 : f32
    %232 = vector.broadcast %cst_91 : f32 to vector<8x128xf32>
    %233 = arith.mulf %232, %231 : vector<8x128xf32>
    %cst_92 = arith.constant 5.000000e-01 : f32
    %234 = vector.broadcast %cst_92 : f32 to vector<8x128xf32>
    %235 = arith.addf %233, %234 : vector<8x128xf32>
    %236 = arith.mulf %225, %164 : vector<8x128xf32>
    %237 = arith.mulf %217, %227 : vector<8x128xf32>
    %238 = arith.addf %236, %237 : vector<8x128xf32>
    %239 = math.tanh %238 : vector<8x128xf32>
    %240 = arith.mulf %235, %239 : vector<8x128xf32>
    %241 = arith.truncf %240 : vector<8x128xf32> to vector<8x128xbf16>
    %c3_i32 = arith.constant 3 : i32
    %c8_i32_93 = arith.constant 8 : i32
    %242 = arith.muli %c3_i32, %c8_i32_93 : i32
    %243 = tpu.assume_multiple %242, 8 : i32
    %244 = arith.index_cast %243 : i32 to index
    %c0_94 = arith.constant 0 : index
    %245 = vector.load %arg11[%244, %c0_94] : memref<32x512xf32, #tpu.memory_space<vmem>>, vector<8x512xf32>
    %cst_95 = arith.constant dense<0.000000e+00> : vector<8x512xf32>
    %246 = tpu.matmul %205, %10, %cst_95 {dimension_numbers = #tpu.dot_dimension_numbers<[1], [0], [0], [1], [0, 0, 1, 1], [], []>} : vector<8x128xbf16>, vector<128x512xbf16>, vector<8x512xf32> -> vector<8x512xf32>
    %247 = arith.addf %245, %246 : vector<8x512xf32>
    %248 = vector.extract_strided_slice %247 {offsets = [0, 0], sizes = [8, 128], strides = [1, 1]} : vector<8x512xf32> to vector<8x128xf32>
    %cst_96 = arith.constant 5.000000e-01 : f32
    %249 = vector.broadcast %cst_96 : f32 to vector<8x128xf32>
    %250 = arith.mulf %249, %248 : vector<8x128xf32>
    %251 = math.tanh %250 : vector<8x128xf32>
    %cst_97 = arith.constant 5.000000e-01 : f32
    %252 = vector.broadcast %cst_97 : f32 to vector<8x128xf32>
    %253 = arith.mulf %252, %251 : vector<8x128xf32>
    %cst_98 = arith.constant 5.000000e-01 : f32
    %254 = vector.broadcast %cst_98 : f32 to vector<8x128xf32>
    %255 = arith.addf %253, %254 : vector<8x128xf32>
    %256 = vector.extract_strided_slice %247 {offsets = [0, 128], sizes = [8, 128], strides = [1, 1]} : vector<8x512xf32> to vector<8x128xf32>
    %cst_99 = arith.constant 5.000000e-01 : f32
    %257 = vector.broadcast %cst_99 : f32 to vector<8x128xf32>
    %258 = arith.mulf %257, %256 : vector<8x128xf32>
    %259 = math.tanh %258 : vector<8x128xf32>
    %cst_100 = arith.constant 5.000000e-01 : f32
    %260 = vector.broadcast %cst_100 : f32 to vector<8x128xf32>
    %261 = arith.mulf %260, %259 : vector<8x128xf32>
    %cst_101 = arith.constant 5.000000e-01 : f32
    %262 = vector.broadcast %cst_101 : f32 to vector<8x128xf32>
    %263 = arith.addf %261, %262 : vector<8x128xf32>
    %264 = vector.extract_strided_slice %247 {offsets = [0, 256], sizes = [8, 128], strides = [1, 1]} : vector<8x512xf32> to vector<8x128xf32>
    %265 = math.tanh %264 : vector<8x128xf32>
    %266 = vector.extract_strided_slice %247 {offsets = [0, 384], sizes = [8, 128], strides = [1, 1]} : vector<8x512xf32> to vector<8x128xf32>
    %cst_102 = arith.constant 5.000000e-01 : f32
    %267 = vector.broadcast %cst_102 : f32 to vector<8x128xf32>
    %268 = arith.mulf %267, %266 : vector<8x128xf32>
    %269 = math.tanh %268 : vector<8x128xf32>
    %cst_103 = arith.constant 5.000000e-01 : f32
    %270 = vector.broadcast %cst_103 : f32 to vector<8x128xf32>
    %271 = arith.mulf %270, %269 : vector<8x128xf32>
    %cst_104 = arith.constant 5.000000e-01 : f32
    %272 = vector.broadcast %cst_104 : f32 to vector<8x128xf32>
    %273 = arith.addf %271, %272 : vector<8x128xf32>
    %274 = arith.mulf %263, %202 : vector<8x128xf32>
    %275 = arith.mulf %255, %265 : vector<8x128xf32>
    %276 = arith.addf %274, %275 : vector<8x128xf32>
    %277 = math.tanh %276 : vector<8x128xf32>
    %278 = arith.mulf %273, %277 : vector<8x128xf32>
    %279 = arith.truncf %278 : vector<8x128xf32> to vector<8x128xbf16>
    %cst_105 = arith.constant dense<0.000000e+00> : vector<8x512xf32>
    %280 = tpu.matmul %279, %11, %cst_105 {dimension_numbers = #tpu.dot_dimension_numbers<[1], [0], [0], [1], [0, 0, 1, 1], [], []>} : vector<8x128xbf16>, vector<128x512xbf16>, vector<8x512xf32> -> vector<8x512xf32>
    %cst_106 = arith.constant dense<0.000000e+00> : vector<8x512xf32>
    %281 = tpu.matmul %241, %12, %cst_106 {dimension_numbers = #tpu.dot_dimension_numbers<[1], [0], [0], [1], [0, 0, 1, 1], [], []>} : vector<8x128xbf16>, vector<128x512xbf16>, vector<8x512xf32> -> vector<8x512xf32>
    %282 = arith.addf %280, %281 : vector<8x512xf32>
    %283 = arith.addf %282, %15 : vector<8x512xf32>
    %284 = vector.extract_strided_slice %283 {offsets = [0, 0], sizes = [8, 128], strides = [1, 1]} : vector<8x512xf32> to vector<8x128xf32>
    %cst_107 = arith.constant 5.000000e-01 : f32
    %285 = vector.broadcast %cst_107 : f32 to vector<8x128xf32>
    %286 = arith.mulf %285, %284 : vector<8x128xf32>
    %287 = math.tanh %286 : vector<8x128xf32>
    %cst_108 = arith.constant 5.000000e-01 : f32
    %288 = vector.broadcast %cst_108 : f32 to vector<8x128xf32>
    %289 = arith.mulf %288, %287 : vector<8x128xf32>
    %cst_109 = arith.constant 5.000000e-01 : f32
    %290 = vector.broadcast %cst_109 : f32 to vector<8x128xf32>
    %291 = arith.addf %289, %290 : vector<8x128xf32>
    %292 = vector.extract_strided_slice %283 {offsets = [0, 128], sizes = [8, 128], strides = [1, 1]} : vector<8x512xf32> to vector<8x128xf32>
    %cst_110 = arith.constant 5.000000e-01 : f32
    %293 = vector.broadcast %cst_110 : f32 to vector<8x128xf32>
    %294 = arith.mulf %293, %292 : vector<8x128xf32>
    %295 = math.tanh %294 : vector<8x128xf32>
    %cst_111 = arith.constant 5.000000e-01 : f32
    %296 = vector.broadcast %cst_111 : f32 to vector<8x128xf32>
    %297 = arith.mulf %296, %295 : vector<8x128xf32>
    %cst_112 = arith.constant 5.000000e-01 : f32
    %298 = vector.broadcast %cst_112 : f32 to vector<8x128xf32>
    %299 = arith.addf %297, %298 : vector<8x128xf32>
    %300 = vector.extract_strided_slice %283 {offsets = [0, 256], sizes = [8, 128], strides = [1, 1]} : vector<8x512xf32> to vector<8x128xf32>
    %301 = math.tanh %300 : vector<8x128xf32>
    %302 = vector.extract_strided_slice %283 {offsets = [0, 384], sizes = [8, 128], strides = [1, 1]} : vector<8x512xf32> to vector<8x128xf32>
    %cst_113 = arith.constant 5.000000e-01 : f32
    %303 = vector.broadcast %cst_113 : f32 to vector<8x128xf32>
    %304 = arith.mulf %303, %302 : vector<8x128xf32>
    %305 = math.tanh %304 : vector<8x128xf32>
    %cst_114 = arith.constant 5.000000e-01 : f32
    %306 = vector.broadcast %cst_114 : f32 to vector<8x128xf32>
    %307 = arith.mulf %306, %305 : vector<8x128xf32>
    %cst_115 = arith.constant 5.000000e-01 : f32
    %308 = vector.broadcast %cst_115 : f32 to vector<8x128xf32>
    %309 = arith.addf %307, %308 : vector<8x128xf32>
    %310 = arith.mulf %299, %238 : vector<8x128xf32>
    %311 = arith.mulf %291, %301 : vector<8x128xf32>
    %312 = arith.addf %310, %311 : vector<8x128xf32>
    %313 = math.tanh %312 : vector<8x128xf32>
    %314 = arith.mulf %309, %313 : vector<8x128xf32>
    %315 = arith.truncf %314 : vector<8x128xf32> to vector<8x128xbf16>
    %c4_i32 = arith.constant 4 : i32
    %c0_116 = arith.constant 0 : index
    %c0_117 = arith.constant 0 : index
    %316 = vector.load %arg12[%c0_116, %c0_117] : memref<8x128xbf16, #tpu.memory_space<vmem>>, vector<8x128xbf16>
    tpu.vector_store %arg12[%c0_116, %c0_117], %279 {strides = array<i32>} : memref<8x128xbf16, #tpu.memory_space<vmem>>, vector<8x128xbf16>,
    %c0_118 = arith.constant 0 : index
    %c0_119 = arith.constant 0 : index
    %317 = vector.load %arg13[%c0_118, %c0_119] : memref<8x128xf32, #tpu.memory_space<vmem>>, vector<8x128xf32>
    tpu.vector_store %arg13[%c0_118, %c0_119], %276 {strides = array<i32>} : memref<8x128xf32, #tpu.memory_space<vmem>>, vector<8x128xf32>,
    %c0_120 = arith.constant 0 : index
    %c0_121 = arith.constant 0 : index
    %318 = vector.load %arg14[%c0_120, %c0_121] : memref<8x128xbf16, #tpu.memory_space<vmem>>, vector<8x128xbf16>
    tpu.vector_store %arg14[%c0_120, %c0_121], %315 {strides = array<i32>} : memref<8x128xbf16, #tpu.memory_space<vmem>>, vector<8x128xbf16>,
    %c0_122 = arith.constant 0 : index
    %c0_123 = arith.constant 0 : index
    %319 = vector.load %arg15[%c0_122, %c0_123] : memref<8x128xf32, #tpu.memory_space<vmem>>, vector<8x128xf32>
    tpu.vector_store %arg15[%c0_122, %c0_123], %312 {strides = array<i32>} : memref<8x128xf32, #tpu.memory_space<vmem>>, vector<8x128xf32>,
    %c1_i32_124 = arith.constant 1 : i32
    %320 = arith.cmpi eq, %arg0, %c1_i32_124 : i32
    %321 = arith.extui %320 : i1 to i32
    %c0_i32_125 = arith.constant 0 : i32
    %322 = arith.cmpi ne, %321, %c0_i32_125 : i32
    scf.if %322 {
      %c0_126 = arith.constant 0 : index
      %c0_127 = arith.constant 0 : index
      %323 = vector.load %arg8[%c0_126, %c0_127] : memref<128x128xbf16, #tpu.memory_space<vmem>>, vector<128x128xbf16>
      %cst_128 = arith.constant dense<0.000000e+00> : vector<8x128xf32>
      %324 = tpu.matmul %315, %323, %cst_128 {dimension_numbers = #tpu.dot_dimension_numbers<[1], [0], [0], [1], [0, 0, 1, 1], [], []>} : vector<8x128xbf16>, vector<128x128xbf16>, vector<8x128xf32> -> vector<8x128xf32>
      %c0_129 = arith.constant 0 : index
      %c0_130 = arith.constant 0 : index
      %325 = vector.load %arg9[%c0_129, %c0_130] : memref<1x128xf32, #tpu.memory_space<vmem>>, vector<1x128xf32>
      %326 = vector.broadcast %325 : vector<1x128xf32> to vector<8x128xf32>
      %327 = arith.addf %324, %326 : vector<8x128xf32>
      %c0_131 = arith.constant 0 : index
      %c0_132 = arith.constant 0 : index
      %328 = vector.load %arg10[%c0_131, %c0_132] : memref<8x128xf32, #tpu.memory_space<vmem>>, vector<8x128xf32>
      tpu.vector_store %arg10[%c0_131, %c0_132], %327 {strides = array<i32>} : memref<8x128xf32, #tpu.memory_space<vmem>>, vector<8x128xf32>,
    } else {
    }
    return
  }
  func.func @transform_0(%arg0: i32) -> (i32, i32) {
    %c0_i32 = arith.constant 0 : i32
    %c0_i32_0 = arith.constant 0 : i32
    return %arg0, %c0_i32 : i32, i32
  }
  func.func @transform_1(%arg0: i32) -> (i32, i32) {
    %c0_i32 = arith.constant 0 : i32
    %c0_i32_0 = arith.constant 0 : i32
    %c0_i32_1 = arith.constant 0 : i32
    return %c0_i32, %c0_i32_0 : i32, i32
  }
  func.func @transform_2(%arg0: i32) -> (i32, i32) {
    %c0_i32 = arith.constant 0 : i32
    %c0_i32_0 = arith.constant 0 : i32
    %c0_i32_1 = arith.constant 0 : i32
    return %c0_i32, %c0_i32_0 : i32, i32
  }
  func.func @transform_3(%arg0: i32) -> (i32, i32) {
    %c0_i32 = arith.constant 0 : i32
    %c0_i32_0 = arith.constant 0 : i32
    %c0_i32_1 = arith.constant 0 : i32
    return %c0_i32, %c0_i32_0 : i32, i32
  }
  func.func @transform_4(%arg0: i32) -> (i32, i32) {
    %c0_i32 = arith.constant 0 : i32
    %c0_i32_0 = arith.constant 0 : i32
    %c0_i32_1 = arith.constant 0 : i32
    return %c0_i32, %c0_i32_0 : i32, i32
  }
  func.func @transform_5(%arg0: i32) -> (i32, i32) {
    %c0_i32 = arith.constant 0 : i32
    %c0_i32_0 = arith.constant 0 : i32
    %c0_i32_1 = arith.constant 0 : i32
    return %c0_i32, %c0_i32_0 : i32, i32
  }
  func.func @transform_6(%arg0: i32) -> (i32, i32) {
    %c0_i32 = arith.constant 0 : i32
    %c0_i32_0 = arith.constant 0 : i32
    %c0_i32_1 = arith.constant 0 : i32
    return %c0_i32, %c0_i32_0 : i32, i32
  }
  func.func @transform_7(%arg0: i32) -> (i32, i32) {
    %c0_i32 = arith.constant 0 : i32
    %c0_i32_0 = arith.constant 0 : i32
    %c0_i32_1 = arith.constant 0 : i32
    return %c0_i32, %c0_i32_0 : i32, i32
  }
  func.func @transform_8(%arg0: i32) -> (i32, i32) {
    %c0_i32 = arith.constant 0 : i32
    %c0_i32_0 = arith.constant 0 : i32
    %c0_i32_1 = arith.constant 0 : i32
    return %c0_i32, %c0_i32_0 : i32, i32
  }
  func.func @transform_9(%arg0: i32) -> (i32, i32) {
    %c0_i32 = arith.constant 0 : i32
    %c0_i32_0 = arith.constant 0 : i32
    %c0_i32_1 = arith.constant 0 : i32
    return %c0_i32, %c0_i32_0 : i32, i32
  }
}

</mosaic_0001>

<llo_original>
// kernel: tpu_custom_call.1
$region0: #{tpu_custom_call.1}
  #allocation0 [shape = 'u32[]', space=smem, size = 0x4, offset = 0x4, fixed_abs, tag = 'smem constant byte address 0x4 - core index']
  #allocation1 [shape = 'u32[144,128]{1,0:T(1,128)}', space=vmem, size = 0x12000, scoped, tag = 'internal scratch']
  #allocation2 [shape = 'f32[32,512]{1,0:T(8,128)}', space=vmem, size = 0x10000, scoped, tag = 'scratch operand']
  #allocation3 [shape = 'bf16[8,128]{1,0:T(8,128)(2,1)}', space=vmem, size = 0x800, scoped, tag = 'scratch operand']
  #allocation4 [shape = 'f32[8,128]{1,0:T(8,128)}', space=vmem, size = 0x1000, scoped, tag = 'scratch operand']
  #allocation5 [shape = 'bf16[8,128]{1,0:T(8,128)(2,1)}', space=vmem, size = 0x800, scoped, tag = 'scratch operand']
  #allocation6 [shape = 'f32[8,128]{1,0:T(8,128)}', space=vmem, size = 0x1000, scoped, tag = 'scratch operand']
  %s0 = inlined_call_operand.vmem [shape: bf16[64,4], index: 0, kind: input, shape index: {}]
  %s1 = inlined_call_operand.vmem [shape: bf16[4,512], index: 1, kind: input, shape index: {}]
  %s2 = inlined_call_operand.hbm [shape: bf16[128,512], index: 2, kind: input, shape index: {}]
  %s3 = inlined_call_operand.vmem [shape: f32[1,512], index: 3, kind: input, shape index: {}]
  %s4 = inlined_call_operand.hbm [shape: bf16[128,512], index: 4, kind: input, shape index: {}]
  %s5 = inlined_call_operand.hbm [shape: bf16[128,512], index: 5, kind: input, shape index: {}]
  %s6 = inlined_call_operand.vmem [shape: f32[1,512], index: 6, kind: input, shape index: {}]
  %s7 = inlined_call_operand.hbm [shape: bf16[128,128], index: 7, kind: input, shape index: {}]
  %s8 = inlined_call_operand.vmem [shape: f32[1,128], index: 8, kind: input, shape index: {}]
  %s9 = inlined_call_operand.hbm [shape: f32[8,128], index: 9, kind: output, shape index: {}]
  %s10 = sld [smem:[#allocation0]]
  $region93: #{tpu_custom_call.1} parent=0
    _
  %s12 = ssub.s32 1, %s10
  %s13 = scalar_select 0, %s12, %s10
  $region1: #{tpu_custom_call.1} parent=0
    #allocation7 [shape = 'u8[131072]{0}', space=vmem, size = 0x20000, scoped, tag = 'input window, operand 2, single buffered']
    #allocation8 [shape = 's32[2]{0}', space=sflag, size = 0x8, scoped, tag = 'scoped memory for tpu_custom_call.1']
    #allocation9 [shape = 's32[2]{0}', space=sflag, size = 0x8, scoped, tag = 'scoped memory for tpu_custom_call.1']
    #allocation10 [shape = 'u8[131072]{0}', space=vmem, size = 0x20000, scoped, tag = 'input window, operand 4, single buffered']
    #allocation11 [shape = 's32[1]{0}', space=sflag, size = 0x4, scoped, tag = 'scoped memory for tpu_custom_call.1']
    #allocation12 [shape = 'u8[131072]{0}', space=vmem, size = 0x20000, scoped, tag = 'input window, operand 5, single buffered']
    #allocation13 [shape = 'u8[32768]{0}', space=vmem, size = 0x8000, scoped, tag = 'input window, operand 7, single buffered']
    #allocation14 [shape = 's32[1]{0}', space=sflag, size = 0x4, scoped, tag = 'scoped memory for tpu_custom_call.1']
    #allocation15 [shape = 'u8[4096]{0}', space=vmem, size = 0x1000, scoped, tag = 'output window, operand 0, single buffered']
    %14 = vsyncpa [#allocation8], 0
    %15 = vsyncpa [#allocation11], 0
    %16 = vsyncpa [#allocation14], 0
    %17 = vsyncpa [#allocation9], 0
    loop: start=0, step=1, limit=4
    $region2: #{tpu_custom_call.1} parent=1 // loop_pre_header
      _
    $region3: #{tpu_custom_call.1} parent=1 // loop_header
      %s19 = sphi 0, %s23
      %p20 = scmp.ge.s32.totalorder %s19, 4
      %s29 = sphi 0, %s31
      %s32 = sphi 0, %s29
      %s33 = sphi 0, %s32
      %s49 = sphi 0, %s33
      %s53 = sphi 0, %s53
      %s55 = sphi 0, %s53
      %s56 = sphi 0, %s55
      %s70 = sphi 0, %s56
      %s74 = sphi 0, %s74
      %s76 = sphi 0, %s74
      %s77 = sphi 0, %s76
      %s91 = sphi 0, %s77
      %s95 = sphi 0, %s95
      %s97 = sphi 0, %s95
      %s98 = sphi 0, %s97
      %s112 = sphi 0, %s98
      %s116 = sphi 0, %s116
      %s118 = sphi 0, %s116
      %s119 = sphi 0, %s118
      %s133 = sphi 0, %s119
      %s137 = sphi 0, %s137
      %s139 = sphi 0, %s137
      %s140 = sphi 0, %s139
      %s154 = sphi 0, %s140
      %s158 = sphi 0, %s158
      %s160 = sphi 0, %s158
      %s161 = sphi 0, %s160
      %s175 = sphi 0, %s161
      %s179 = sphi 0, %s179
      %s181 = sphi 0, %s179
      %s182 = sphi 0, %s181
      %s196 = sphi 0, %s182
      %s200 = sphi 0, %s200
      %s202 = sphi 0, %s200
      %s203 = sphi 0, %s202
      %s217 = sphi 0, %s203
      %s221 = sphi 0, %s221
      %s223 = sphi 0, %s221
      %s224 = sphi 0, %s223
      %s238 = sphi 0, %s224
    $region4: #{tpu_custom_call.1} parent=1 // loop_header_branch
      %22 = sbr.rel (%p20) target = $region8
    $region5: #{tpu_custom_call.1} parent=1 // loop_body
      %s24 = ssub.s32 %s19, 1
      %s25 = ssub.s32 %s19, 2
      %s26 = sadd.s32 %s19, 1
      %s27 = ssub.s32 %s19, %s26
      %p28 = scmp.eq.s32.totalorder %s27, 0
      %s30 = sadd.s32 %s29, 1
      %s31 = scalar_select %p28, %s29, %s30
      %p34 = pneg %p28
      %p35 = scmp.eq.s32.totalorder %s19, 1
      %p36 = por %p34, %p35
      %p37 = scmp.ne.s32.totalorder %s29, %s32
      %p38 = scmp.eq.s32.totalorder %s19, 0
      %p39 = por %p37, %p38
      %p40 = scmp.ne.s32.totalorder %s29, %s32
      %p41 = scmp.eq.s32.totalorder %s24, 1
      %p42 = por %p40, %p41
      %p43 = scmp.ne.s32.totalorder %s32, %s33
      %p44 = scmp.eq.s32.totalorder %s24, 0
      %p45 = por %p43, %p44
      %p46 = scmp.ne.s32.totalorder %s32, %s33
      %p47 = scmp.eq.s32.totalorder %s25, 1
      %p48 = por %p46, %p47
      %p50 = scmp.ne.s32.totalorder %s33, %s49
      %p51 = scmp.eq.s32.totalorder %s25, 0
      %p52 = por %p50, %p51
      %s54 = sadd.s32 %s53, 1
      %p57 = scmp.eq.s32.totalorder %s19, 1
      %p58 = scmp.ne.s32.totalorder %s53, %s55
      %p59 = scmp.eq.s32.totalorder %s19, 0
      %p60 = por %p58, %p59
      %p61 = scmp.ne.s32.totalorder %s53, %s55
      %p62 = scmp.eq.s32.totalorder %s24, 1
      %p63 = por %p61, %p62
      %p64 = scmp.ne.s32.totalorder %s55, %s56
      %p65 = scmp.eq.s32.totalorder %s24, 0
      %p66 = por %p64, %p65
      %p67 = scmp.ne.s32.totalorder %s55, %s56
      %p68 = scmp.eq.s32.totalorder %s25, 1
      %p69 = por %p67, %p68
      %p71 = scmp.ne.s32.totalorder %s56, %s70
      %p72 = scmp.eq.s32.totalorder %s25, 0
      %p73 = por %p71, %p72
      %s75 = sadd.s32 %s74, 1
      %p78 = scmp.eq.s32.totalorder %s19, 1
      %p79 = scmp.ne.s32.totalorder %s74, %s76
      %p80 = scmp.eq.s32.totalorder %s19, 0
      %p81 = por %p79, %p80
      %p82 = scmp.ne.s32.totalorder %s74, %s76
      %p83 = scmp.eq.s32.totalorder %s24, 1
      %p84 = por %p82, %p83
      %p85 = scmp.ne.s32.totalorder %s76, %s77
      %p86 = scmp.eq.s32.totalorder %s24, 0
      %p87 = por %p85, %p86
      %p88 = scmp.ne.s32.totalorder %s76, %s77
      %p89 = scmp.eq.s32.totalorder %s25, 1
      %p90 = por %p88, %p89
      %p92 = scmp.ne.s32.totalorder %s77, %s91
      %p93 = scmp.eq.s32.totalorder %s25, 0
      %p94 = por %p92, %p93
      %s96 = sadd.s32 %s95, 1
      %p99 = scmp.eq.s32.totalorder %s19, 1
      %p100 = scmp.ne.s32.totalorder %s95, %s97
      %p101 = scmp.eq.s32.totalorder %s19, 0
      %p102 = por %p100, %p101
      %p103 = scmp.ne.s32.totalorder %s95, %s97
      %p104 = scmp.eq.s32.totalorder %s24, 1
      %p105 = por %p103, %p104
      %p106 = scmp.ne.s32.totalorder %s97, %s98
      %p107 = scmp.eq.s32.totalorder %s24, 0
      %p108 = por %p106, %p107
      %p109 = scmp.ne.s32.totalorder %s97, %s98
      %p110 = scmp.eq.s32.totalorder %s25, 1
      %p111 = por %p109, %p110
      %p113 = scmp.ne.s32.totalorder %s98, %s112
      %p114 = scmp.eq.s32.totalorder %s25, 0
      %p115 = por %p113, %p114
      %s117 = sadd.s32 %s116, 1
      %p120 = scmp.eq.s32.totalorder %s19, 1
      %p121 = scmp.ne.s32.totalorder %s116, %s118
      %p122 = scmp.eq.s32.totalorder %s19, 0
      %p123 = por %p121, %p122
      %p124 = scmp.ne.s32.totalorder %s116, %s118
      %p125 = scmp.eq.s32.totalorder %s24, 1
      %p126 = por %p124, %p125
      %p127 = scmp.ne.s32.totalorder %s118, %s119
      %p128 = scmp.eq.s32.totalorder %s24, 0
      %p129 = por %p127, %p128
      %p130 = scmp.ne.s32.totalorder %s118, %s119
      %p131 = scmp.eq.s32.totalorder %s25, 1
      %p132 = por %p130, %p131
      %p134 = scmp.ne.s32.totalorder %s119, %s133
      %p135 = scmp.eq.s32.totalorder %s25, 0
      %p136 = por %p134, %p135
      %s138 = sadd.s32 %s137, 1
      %p141 = scmp.eq.s32.totalorder %s19, 1
      %p142 = scmp.ne.s32.totalorder %s137, %s139
      %p143 = scmp.eq.s32.totalorder %s19, 0
      %p144 = por %p142, %p143
      %p145 = scmp.ne.s32.totalorder %s137, %s139
      %p146 = scmp.eq.s32.totalorder %s24, 1
      %p147 = por %p145, %p146
      %p148 = scmp.ne.s32.totalorder %s139, %s140
      %p149 = scmp.eq.s32.totalorder %s24, 0
      %p150 = por %p148, %p149
      %p151 = scmp.ne.s32.totalorder %s139, %s140
      %p152 = scmp.eq.s32.totalorder %s25, 1
      %p153 = por %p151, %p152
      %p155 = scmp.ne.s32.totalorder %s140, %s154
      %p156 = scmp.eq.s32.totalorder %s25, 0
      %p157 = por %p155, %p156
      %s159 = sadd.s32 %s158, 1
      %p162 = scmp.eq.s32.totalorder %s19, 1
      %p163 = scmp.ne.s32.totalorder %s158, %s160
      %p164 = scmp.eq.s32.totalorder %s19, 0
      %p165 = por %p163, %p164
      %p166 = scmp.ne.s32.totalorder %s158, %s160
      %p167 = scmp.eq.s32.totalorder %s24, 1
      %p168 = por %p166, %p167
      %p169 = scmp.ne.s32.totalorder %s160, %s161
      %p170 = scmp.eq.s32.totalorder %s24, 0
      %p171 = por %p169, %p170
      %p172 = scmp.ne.s32.totalorder %s160, %s161
      %p173 = scmp.eq.s32.totalorder %s25, 1
      %p174 = por %p172, %p173
      %p176 = scmp.ne.s32.totalorder %s161, %s175
      %p177 = scmp.eq.s32.totalorder %s25, 0
      %p178 = por %p176, %p177
      %s180 = sadd.s32 %s179, 1
      %p183 = scmp.eq.s32.totalorder %s19, 1
      %p184 = scmp.ne.s32.totalorder %s179, %s181
      %p185 = scmp.eq.s32.totalorder %s19, 0
      %p186 = por %p184, %p185
      %p187 = scmp.ne.s32.totalorder %s179, %s181
      %p188 = scmp.eq.s32.totalorder %s24, 1
      %p189 = por %p187, %p188
      %p190 = scmp.ne.s32.totalorder %s181, %s182
      %p191 = scmp.eq.s32.totalorder %s24, 0
      %p192 = por %p190, %p191
      %p193 = scmp.ne.s32.totalorder %s181, %s182
      %p194 = scmp.eq.s32.totalorder %s25, 1
      %p195 = por %p193, %p194
      %p197 = scmp.ne.s32.totalorder %s182, %s196
      %p198 = scmp.eq.s32.totalorder %s25, 0
      %p199 = por %p197, %p198
      %s201 = sadd.s32 %s200, 1
      %p204 = scmp.eq.s32.totalorder %s19, 1
      %p205 = scmp.ne.s32.totalorder %s200, %s202
      %p206 = scmp.eq.s32.totalorder %s19, 0
      %p207 = por %p205, %p206
      %p208 = scmp.ne.s32.totalorder %s200, %s202
      %p209 = scmp.eq.s32.totalorder %s24, 1
      %p210 = por %p208, %p209
      %p211 = scmp.ne.s32.totalorder %s202, %s203
      %p212 = scmp.eq.s32.totalorder %s24, 0
      %p213 = por %p211, %p212
      %p214 = scmp.ne.s32.totalorder %s202, %s203
      %p215 = scmp.eq.s32.totalorder %s25, 1
      %p216 = por %p214, %p215
      %p218 = scmp.ne.s32.totalorder %s203, %s217
      %p219 = scmp.eq.s32.totalorder %s25, 0
      %p220 = por %p218, %p219
      %s222 = sadd.s32 %s221, 1
      %p225 = scmp.eq.s32.totalorder %s19, 1
      %p226 = scmp.ne.s32.totalorder %s221, %s223
      %p227 = scmp.eq.s32.totalorder %s19, 0
      %p228 = por %p226, %p227
      %p229 = scmp.ne.s32.totalorder %s221, %s223
      %p230 = scmp.eq.s32.totalorder %s24, 1
      %p231 = por %p229, %p230
      %p232 = scmp.ne.s32.totalorder %s223, %s224
      %p233 = scmp.eq.s32.totalorder %s24, 0
      %p234 = por %p232, %p233
      %p235 = scmp.ne.s32.totalorder %s223, %s224
      %p236 = scmp.eq.s32.totalorder %s25, 1
      %p237 = por %p235, %p236
      %p239 = scmp.ne.s32.totalorder %s224, %s238
      %p240 = scmp.eq.s32.totalorder %s25, 0
      %p241 = por %p239, %p240
      %p242 = scmp.le.s32.totalorder 1, %s19
      %p243 = scmp.lt.s32.totalorder %s19, 3
      %p244 = pnand %p242, %p243
      %p245 = pneg %p244
      // Predicated region
      $region9: #{tpu_custom_call.1} parent=5 // pred_check
        _
      $region10: #{tpu_custom_call.1} parent=5 // pred_check_branch
        %247 = sbr.rel (%p244) target = $region12
      $region11: #{tpu_custom_call.1} parent=5 // pred_region
        %s248 = ssub.s32 %s19, 1
        // Predicated region
        $region13: #{tpu_custom_call.1} parent=11 // pred_check
          %p249 = pneg %p66
        $region14: #{tpu_custom_call.1} parent=11 // pred_check_branch
          %251 = sbr.rel (%p249) target = $region16
        $region15: #{tpu_custom_call.1} parent=11 // pred_region
          _
        $region16: #{tpu_custom_call.1} parent=11 // pred_fallthru
          _
        // Predicated region
        $region17: #{tpu_custom_call.1} parent=11 // pred_check
          %p252 = pneg %p87
        $region18: #{tpu_custom_call.1} parent=11 // pred_check_branch
          %254 = sbr.rel (%p252) target = $region20
        $region19: #{tpu_custom_call.1} parent=11 // pred_region
          %s256 = ssub.s32 4096, 4096
          %257 = vsyncadd [#allocation8], %s256
          %s258 = sshll.u32 [#allocation7], 4
          %s259 = int_to_ptr.vmem [resolvable:$true] %s258
          %264 = dma.hbm_to_vmem [thread:$0]  %s2, 4096, %s259, [#allocation8], 256, 256, 16
        $region20: #{tpu_custom_call.1} parent=11 // pred_fallthru
          _
        // Predicated region
        $region21: #{tpu_custom_call.1} parent=11 // pred_check
          %p265 = pneg %p108
        $region22: #{tpu_custom_call.1} parent=11 // pred_check_branch
          %267 = sbr.rel (%p265) target = $region24
        $region23: #{tpu_custom_call.1} parent=11 // pred_region
          _
        $region24: #{tpu_custom_call.1} parent=11 // pred_fallthru
          _
        // Predicated region
        $region25: #{tpu_custom_call.1} parent=11 // pred_check
          %p268 = pneg %p129
        $region26: #{tpu_custom_call.1} parent=11 // pred_check_branch
          %270 = sbr.rel (%p268) target = $region28
        $region27: #{tpu_custom_call.1} parent=11 // pred_region
          %s272 = ssub.s32 4096, 4096
          %273 = vsyncadd [#allocation11], %s272
          %s274 = sshll.u32 [#allocation10], 4
          %s275 = int_to_ptr.vmem [resolvable:$true] %s274
          %280 = dma.hbm_to_vmem [thread:$0]  %s4, 4096, %s275, [#allocation11], 256, 256, 16
        $region28: #{tpu_custom_call.1} parent=11 // pred_fallthru
          _
        // Predicated region
        $region29: #{tpu_custom_call.1} parent=11 // pred_check
          %p281 = pneg %p150
        $region30: #{tpu_custom_call.1} parent=11 // pred_check_branch
          %283 = sbr.rel (%p281) target = $region32
        $region31: #{tpu_custom_call.1} parent=11 // pred_region
          %s285 = ssub.s32 4096, 4096
          %286 = vsyncadd [#allocation11], %s285
          %s287 = sshll.u32 [#allocation12], 4
          %s288 = int_to_ptr.vmem [resolvable:$true] %s287
          %293 = dma.hbm_to_vmem [thread:$0]  %s5, 4096, %s288, [#allocation11], 256, 256, 16
        $region32: #{tpu_custom_call.1} parent=11 // pred_fallthru
          _
        // Predicated region
        $region33: #{tpu_custom_call.1} parent=11 // pred_check
          %p294 = pneg %p171
        $region34: #{tpu_custom_call.1} parent=11 // pred_check_branch
          %296 = sbr.rel (%p294) target = $region36
        $region35: #{tpu_custom_call.1} parent=11 // pred_region
          _
        $region36: #{tpu_custom_call.1} parent=11 // pred_fallthru
          _
        // Predicated region
        $region37: #{tpu_custom_call.1} parent=11 // pred_check
          %p297 = pneg %p192
        $region38: #{tpu_custom_call.1} parent=11 // pred_check_branch
          %299 = sbr.rel (%p297) target = $region40
        $region39: #{tpu_custom_call.1} parent=11 // pred_region
          %s301 = ssub.s32 1024, 1024
          %302 = vsyncadd [#allocation14], %s301
          %s303 = sshll.u32 [#allocation13], 4
          %s304 = int_to_ptr.vmem [resolvable:$true] %s303
          %309 = dma.hbm_to_vmem [thread:$0]  %s7, 1024, %s304, [#allocation14], 64, 64, 4
        $region40: #{tpu_custom_call.1} parent=11 // pred_fallthru
          _
        // Predicated region
        $region41: #{tpu_custom_call.1} parent=11 // pred_check
          %p310 = pneg %p213
        $region42: #{tpu_custom_call.1} parent=11 // pred_check_branch
          %312 = sbr.rel (%p310) target = $region44
        $region43: #{tpu_custom_call.1} parent=11 // pred_region
          _
        $region44: #{tpu_custom_call.1} parent=11 // pred_fallthru
          _
      $region12: #{tpu_custom_call.1} parent=5 // pred_fallthru
        _
      %p313 = scmp.lt.s32.totalorder %s19, 2
      // Predicated region
      $region45: #{tpu_custom_call.1} parent=5 // pred_check
        %p314 = pneg %p313
      $region46: #{tpu_custom_call.1} parent=5 // pred_check_branch
        %316 = sbr.rel (%p314) target = $region48
      $region47: #{tpu_custom_call.1} parent=5 // pred_region
        // Predicated region
        $region49: #{tpu_custom_call.1} parent=47 // pred_check
          %p317 = pneg %p39
        $region50: #{tpu_custom_call.1} parent=47 // pred_check_branch
          %319 = sbr.rel (%p317) target = $region52
        $region51: #{tpu_custom_call.1} parent=47 // pred_region
          %s320 = smul.u32 4, %s19
          %p321 = scmp.lt.s32.totalorder %s320, 7
          %s322 = scalar_select %p321, %s320, 7
          %s323 = smul.addr %s322, 4
          %s324 = scalar_lea.vmem %s0, %s323
          %s325 = smul.u32 4, %s19
        $region52: #{tpu_custom_call.1} parent=47 // pred_fallthru
          _
      $region48: #{tpu_custom_call.1} parent=5 // pred_fallthru
        _
      %p326 = scmp.le.s32.totalorder 1, %s19
      %p327 = scmp.lt.s32.totalorder %s19, 3
      %p328 = pnand %p326, %p327
      %p329 = pneg %p328
      // Predicated region
      $region53: #{tpu_custom_call.1} parent=5 // pred_check
        _
      $region54: #{tpu_custom_call.1} parent=5 // pred_check_branch
        %331 = sbr.rel (%p328) target = $region56
      $region55: #{tpu_custom_call.1} parent=5 // pred_region
        %s332 = ssub.s32 %s19, 1
        // Predicated region
        $region57: #{tpu_custom_call.1} parent=55 // pred_check
          %p333 = pneg %p87
        $region58: #{tpu_custom_call.1} parent=55 // pred_check_branch
          %335 = sbr.rel (%p333) target = $region60
        $region59: #{tpu_custom_call.1} parent=55 // pred_region
          %336 = dma.done [#allocation8], 4096
        $region60: #{tpu_custom_call.1} parent=55 // pred_fallthru
          _
        // Predicated region
        $region61: #{tpu_custom_call.1} parent=55 // pred_check
          %p337 = pneg %p129
        $region62: #{tpu_custom_call.1} parent=55 // pred_check_branch
          %339 = sbr.rel (%p337) target = $region64
        $region63: #{tpu_custom_call.1} parent=55 // pred_region
          %340 = dma.done [#allocation11], 4096
        $region64: #{tpu_custom_call.1} parent=55 // pred_fallthru
          _
        // Predicated region
        $region65: #{tpu_custom_call.1} parent=55 // pred_check
          %p341 = pneg %p150
        $region66: #{tpu_custom_call.1} parent=55 // pred_check_branch
          %343 = sbr.rel (%p341) target = $region68
        $region67: #{tpu_custom_call.1} parent=55 // pred_region
          %344 = dma.done [#allocation11], 4096
        $region68: #{tpu_custom_call.1} parent=55 // pred_fallthru
          _
        // Predicated region
        $region69: #{tpu_custom_call.1} parent=55 // pred_check
          %p345 = pneg %p192
        $region70: #{tpu_custom_call.1} parent=55 // pred_check_branch
          %347 = sbr.rel (%p345) target = $region72
        $region71: #{tpu_custom_call.1} parent=55 // pred_region
          %348 = dma.done [#allocation14], 1024
        $region72: #{tpu_custom_call.1} parent=55 // pred_fallthru
          _
        %s349 = smul.u32 4, %s24
        %p350 = scmp.lt.s32.totalorder %s349, 7
        %s351 = scalar_select %p350, %s349, 7
        %s352 = smul.addr %s351, 4
        %s353 = scalar_lea.vmem %s0, %s352
        %p354 = pneg %p45
        %p355 = pneg %p42
        %p356 = pneg %p66
        %p357 = pneg %p63
        %p358 = pneg %p87
        %p359 = pneg %p84
        %p360 = pneg %p108
        %p361 = pneg %p105
        %p362 = pneg %p129
        %p363 = pneg %p126
        %p364 = pneg %p150
        %p365 = pneg %p147
        %p366 = pneg %p171
        %p367 = pneg %p168
        %p368 = pneg %p192
        %p369 = pneg %p189
        %p370 = pneg %p213
        %p371 = pneg %p210
        %p372 = pneg %p234
        %p373 = pneg %p231
        %s374 = smul.u32 4, %s24
        %p375 = scmp.lt.s32.totalorder %s374, 7
        %s376 = scalar_select %p375, %s374, 7
        %s377 = smul.addr %s376, 4
        %s378 = scalar_lea.vmem %s0, %s377
        %s379 = smul.u32 4, %s24
        %p381 = scmp.eq.s32.totalorder %s24, 0
        // Predicated region
        $region73: #{tpu_custom_call.1} parent=55 // pred_check
          %p382 = pneg %p381
        $region74: #{tpu_custom_call.1} parent=55 // pred_check_branch
          %384 = sbr.rel (%p382) target = $region76
        $region75: #{tpu_custom_call.1} parent=55 // pred_region
          %385 = vst [vmem:[#allocation3] sm:$0xf] 0
          %386 = vst [vmem:[#allocation4] sm:$0xff] 0.0
          %387 = vst [vmem:[#allocation5] sm:$0xf] 0
          %388 = vst [vmem:[#allocation6] sm:$0xff] 0.0
        $region76: #{tpu_custom_call.1} parent=55 // pred_fallthru
          _
        %v389 = vld [vmem:[%s378] sm:$0xf]
        %v390 = vld [vmem:[%s378 + $0x4] sm:$0xf]
        %v391 = vld [vmem:[%s378 + $0x8] sm:$0xf]
        %v392 = vld [vmem:[%s378 + $0xc] sm:$0xf]
        %v393 = vld [vmem:[%s1] sm:$0xff]
        %v394 = vld [vmem:[%s3] sm:$0xf]
        %v396 = vlaneseq
        %v397 = vshrl.u32 %v396, 7
        %v398 = vsub.s32 0, %v397
        %v399 = vrot.slane %v394, %v398
        %v400 = vlaneseq
        %v401 = vshrl.u32 %v400, 7
        %v402 = vsub.s32 1, %v401
        %v403 = vrot.slane %v394, %v402
        %v404 = vlaneseq
        %v405 = vshrl.u32 %v404, 7
        %v406 = vsub.s32 2, %v405
        %v407 = vrot.slane %v394, %v406
        %v408 = vlaneseq
        %v409 = vshrl.u32 %v408, 7
        %v410 = vsub.s32 3, %v409
        %v411 = vrot.slane %v394, %v410
        %v420 = vunpack.c.l.b16 %v389
        %v421 = vunpack.c.l.b16 %v390
        %v422 = vunpack.c.l.b16 %v391
        %v423 = vunpack.c.l.b16 %v392
        %v424 = vpack.c.b16 %v421, %v420
        %v425 = vpack.c.b16 %v423, %v422
        %v427 = vcombine.high %v393, %v393
        %v429 = vunpack.c.l.s4 1983009808
        %v430 = vunpack.c.0.s8 %v429
        %v431 = vlaneseq
        %v432 = vshrl.u32 %v431, 7
        %v433 = vsub.s32 %v430, %v432
        %v434 = vrot.slane %v393, %v433
        %v436 = vunpack.c.l.s4 1983009808
        %v437 = vunpack.c.0.s8 %v436
        %v438 = vlaneseq
        %v439 = vshrl.u32 %v438, 7
        %v440 = vsub.s32 %v437, %v439
        %v441 = vrot.slane %v427, %v440
        %v442 = vcombine.high %v434, %v434
        %v443 = vcombine.high %v441, %v441
        %vm444 = vcmask 31744
        %v446 = vsel %vm444, %v424, 0
        %v449 = vsel %vm444, %v425, 0
        %vm451 = vcmask 1041408
        %v453 = vsel %vm451, %v434, 0
        %v456 = vsel %vm451, %v442, 0
        %v459 = vsel %vm451, %v441, 0
        %v462 = vsel %vm451, %v443, 0
        %464 = vmatprep.subr.bf16.mxu0 0
        %465 = vmatpush1.bf16.msra.mxu0 0
        %466 = vmatprep.subr.bf16.mxu0 0
        %467 = vmatpush1.bf16.msra.mxu0 0
        %468 = vmatprep.subr.bf16.mxu0 0
        %469 = vmatpush1.bf16.msra.mxu0 0
        %470 = vmatprep.subr.bf16.mxu0 0
        %471 = vmatpush1.bf16.msra.mxu0 0
        %472 = vmatprep.subr.bf16.mxu0 0
        %473 = vmatpush1.bf16.msra.mxu0 0
        %474 = vmatprep.subr.bf16.mxu0 0
        %475 = vmatpush1.bf16.msra.mxu0 0
        %476 = vmatprep.subr.bf16.mxu0 0
        %477 = vmatpush1.bf16.msra.mxu0 0
        %478 = vmatprep.subr.bf16.mxu0 %v456
        %479 = vmatpush1.bf16.msra.mxu0 %v453
        %480 = vmatprep.subr.bf16.mxu0 0
        %481 = vmatpush2.bf16.msra.mxu0 0
        %482 = vmatprep.subr.bf16.mxu0 0
        %483 = vmatpush2.bf16.msra.mxu0 0
        %484 = vmatprep.subr.bf16.mxu0 0
        %485 = vmatpush2.bf16.msra.mxu0 0
        %486 = vmatprep.subr.bf16.mxu0 0
        %487 = vmatpush2.bf16.msra.mxu0 0
        %488 = vmatprep.subr.bf16.mxu0 0
        %489 = vmatpush2.bf16.msra.mxu0 0
        %490 = vmatprep.subr.bf16.mxu0 0
        %491 = vmatpush2.bf16.msra.mxu0 0
        %492 = vmatprep.subr.bf16.mxu0 0
        %493 = vmatpush2.bf16.msra.mxu0 0
        %494 = vmatprep.subr.bf16.mxu0 0
        %495 = vmatpush2.bf16.msra.mxu0 0
        %496 = vmatprep.mubr.bf16.mxu0 0
        %497 = vmatmul.mubr.bf16.gmra.mxu0 %v446
        %v498 = vpop.f32.mrf.mxu0
        %v499 = vadd.f32 %v399, %v498
        %v500 = vpop.f32.mrf.mxu0
        %v501 = vadd.f32 %v403, %v500
        %v502 = vpop.f32.mrf.mxu0
        %v503 = vadd.f32 %v399, %v502
        %v504 = vpop.f32.mrf.mxu0
        %v505 = vadd.f32 %v403, %v504
        %506 = vmatprep.mubr.bf16.mxu0 0
        %507 = vmatmul.mubr.bf16.gmra.mxu0 %v449
        %v508 = vpop.f32.mrf.mxu0
        %v509 = vadd.f32 %v399, %v508
        %v510 = vpop.f32.mrf.mxu0
        %v511 = vadd.f32 %v403, %v510
        %v512 = vpop.f32.mrf.mxu0
        %v513 = vadd.f32 %v399, %v512
        %v514 = vpop.f32.mrf.mxu0
        %v515 = vadd.f32 %v403, %v514
        %516 = vdwg.mxu0
        %517 = vmatprep.subr.bf16.mxu0 0
        %518 = vmatpush1.bf16.msra.mxu0 0
        %519 = vmatprep.subr.bf16.mxu0 0
        %520 = vmatpush1.bf16.msra.mxu0 0
        %521 = vmatprep.subr.bf16.mxu0 0
        %522 = vmatpush1.bf16.msra.mxu0 0
        %523 = vmatprep.subr.bf16.mxu0 0
        %524 = vmatpush1.bf16.msra.mxu0 0
        %525 = vmatprep.subr.bf16.mxu0 0
        %526 = vmatpush1.bf16.msra.mxu0 0
        %527 = vmatprep.subr.bf16.mxu0 0
        %528 = vmatpush1.bf16.msra.mxu0 0
        %529 = vmatprep.subr.bf16.mxu0 0
        %530 = vmatpush1.bf16.msra.mxu0 0
        %531 = vmatprep.subr.bf16.mxu0 %v462
        %532 = vmatpush1.bf16.msra.mxu0 %v459
        %533 = vmatprep.subr.bf16.mxu0 0
        %534 = vmatpush2.bf16.msra.mxu0 0
        %535 = vmatprep.subr.bf16.mxu0 0
        %536 = vmatpush2.bf16.msra.mxu0 0
        %537 = vmatprep.subr.bf16.mxu0 0
        %538 = vmatpush2.bf16.msra.mxu0 0
        %539 = vmatprep.subr.bf16.mxu0 0
        %540 = vmatpush2.bf16.msra.mxu0 0
        %541 = vmatprep.subr.bf16.mxu0 0
        %542 = vmatpush2.bf16.msra.mxu0 0
        %543 = vmatprep.subr.bf16.mxu0 0
        %544 = vmatpush2.bf16.msra.mxu0 0
        %545 = vmatprep.subr.bf16.mxu0 0
        %546 = vmatpush2.bf16.msra.mxu0 0
        %547 = vmatprep.subr.bf16.mxu0 0
        %548 = vmatpush2.bf16.msra.mxu0 0
        %549 = vmatprep.mubr.bf16.mxu0 0
        %550 = vmatmul.mubr.bf16.gmra.mxu0 %v446
        %v551 = vpop.f32.mrf.mxu0
        %v552 = vadd.f32 %v407, %v551
        %v553 = vpop.f32.mrf.mxu0
        %v554 = vadd.f32 %v411, %v553
        %v555 = vpop.f32.mrf.mxu0
        %v556 = vadd.f32 %v407, %v555
        %v557 = vpop.f32.mrf.mxu0
        %v558 = vadd.f32 %v411, %v557
        %559 = vmatprep.mubr.bf16.mxu0 0
        %560 = vmatmul.mubr.bf16.gmra.mxu0 %v449
        %v561 = vpop.f32.mrf.mxu0
        %v562 = vadd.f32 %v407, %v561
        %v563 = vpop.f32.mrf.mxu0
        %v564 = vadd.f32 %v411, %v563
        %v565 = vpop.f32.mrf.mxu0
        %v566 = vadd.f32 %v407, %v565
        %v567 = vpop.f32.mrf.mxu0
        %v568 = vadd.f32 %v411, %v567
        %569 = vdwg.mxu0
        %570 = vst [vmem:[#allocation2] sm:$0xff] %v499
        %571 = vst [vmem:[#allocation2 + $0x8] sm:$0xff] %v501
        %572 = vst [vmem:[#allocation2 + $0x10] sm:$0xff] %v552
        %573 = vst [vmem:[#allocation2 + $0x18] sm:$0xff] %v554
        %574 = vst [vmem:[#allocation2 + $0x20] sm:$0xff] %v503
        %575 = vst [vmem:[#allocation2 + $0x28] sm:$0xff] %v505
        %576 = vst [vmem:[#allocation2 + $0x30] sm:$0xff] %v556
        %577 = vst [vmem:[#allocation2 + $0x38] sm:$0xff] %v558
        %578 = vst [vmem:[#allocation2 + $0x40] sm:$0xff] %v509
        %579 = vst [vmem:[#allocation2 + $0x48] sm:$0xff] %v511
        %580 = vst [vmem:[#allocation2 + $0x50] sm:$0xff] %v562
        %581 = vst [vmem:[#allocation2 + $0x58] sm:$0xff] %v564
        %582 = vst [vmem:[#allocation2 + $0x60] sm:$0xff] %v513
        %583 = vst [vmem:[#allocation2 + $0x68] sm:$0xff] %v515
        %584 = vst [vmem:[#allocation2 + $0x70] sm:$0xff] %v566
        %585 = vst [vmem:[#allocation2 + $0x78] sm:$0xff] %v568
        %v586 = vld [vmem:[#allocation7] sm:$0xff]
        %v587 = vld [vmem:[#allocation7 + $0x8] sm:$0xff]
        %v588 = vld [vmem:[#allocation7 + $0x10] sm:$0xff]
        %v589 = vld [vmem:[#allocation7 + $0x18] sm:$0xff]
        %v590 = vld [vmem:[#allocation7 + $0x20] sm:$0xff]
        %v591 = vld [vmem:[#allocation7 + $0x28] sm:$0xff]
        %v592 = vld [vmem:[#allocation7 + $0x30] sm:$0xff]
        %v593 = vld [vmem:[#allocation7 + $0x38] sm:$0xff]
        %v594 = vld [vmem:[#allocation7 + $0x40] sm:$0xff]
        %v595 = vld [vmem:[#allocation7 + $0x48] sm:$0xff]
        %v596 = vld [vmem:[#allocation7 + $0x50] sm:$0xff]
        %v597 = vld [vmem:[#allocation7 + $0x58] sm:$0xff]
        %v598 = vld [vmem:[#allocation7 + $0x60] sm:$0xff]
        %v599 = vld [vmem:[#allocation7 + $0x68] sm:$0xff]
        %v600 = vld [vmem:[#allocation7 + $0x70] sm:$0xff]
        %v601 = vld [vmem:[#allocation7 + $0x78] sm:$0xff]
        %v602 = vld [vmem:[#allocation7 + $0x80] sm:$0xff]
        %v603 = vld [vmem:[#allocation7 + $0x88] sm:$0xff]
        %v604 = vld [vmem:[#allocation7 + $0x90] sm:$0xff]
        %v605 = vld [vmem:[#allocation7 + $0x98] sm:$0xff]
        %v606 = vld [vmem:[#allocation7 + $0xa0] sm:$0xff]
        %v607 = vld [vmem:[#allocation7 + $0xa8] sm:$0xff]
        %v608 = vld [vmem:[#allocation7 + $0xb0] sm:$0xff]
        %v609 = vld [vmem:[#allocation7 + $0xb8] sm:$0xff]
        %v610 = vld [vmem:[#allocation7 + $0xc0] sm:$0xff]
        %v611 = vld [vmem:[#allocation7 + $0xc8] sm:$0xff]
        %v612 = vld [vmem:[#allocation7 + $0xd0] sm:$0xff]
        %v613 = vld [vmem:[#allocation7 + $0xd8] sm:$0xff]
        %v614 = vld [vmem:[#allocation7 + $0xe0] sm:$0xff]
        %v615 = vld [vmem:[#allocation7 + $0xe8] sm:$0xff]
        %v616 = vld [vmem:[#allocation7 + $0xf0] sm:$0xff]
        %v617 = vld [vmem:[#allocation7 + $0xf8] sm:$0xff]
        %v618 = vld [vmem:[#allocation10] sm:$0xff]
        %v619 = vld [vmem:[#allocation10 + $0x8] sm:$0xff]
        %v620 = vld [vmem:[#allocation10 + $0x10] sm:$0xff]
        %v621 = vld [vmem:[#allocation10 + $0x18] sm:$0xff]
        %v622 = vld [vmem:[#allocation10 + $0x20] sm:$0xff]
        %v623 = vld [vmem:[#allocation10 + $0x28] sm:$0xff]
        %v624 = vld [vmem:[#allocation10 + $0x30] sm:$0xff]
        %v625 = vld [vmem:[#allocation10 + $0x38] sm:$0xff]
        %v626 = vld [vmem:[#allocation10 + $0x40] sm:$0xff]
        %v627 = vld [vmem:[#allocation10 + $0x48] sm:$0xff]
        %v628 = vld [vmem:[#allocation10 + $0x50] sm:$0xff]
        %v629 = vld [vmem:[#allocation10 + $0x58] sm:$0xff]
        %v630 = vld [vmem:[#allocation10 + $0x60] sm:$0xff]
        %v631 = vld [vmem:[#allocation10 + $0x68] sm:$0xff]
        %v632 = vld [vmem:[#allocation10 + $0x70] sm:$0xff]
        %v633 = vld [vmem:[#allocation10 + $0x78] sm:$0xff]
        %v634 = vld [vmem:[#allocation10 + $0x80] sm:$0xff]
        %v635 = vld [vmem:[#allocation10 + $0x88] sm:$0xff]
        %v636 = vld [vmem:[#allocation10 + $0x90] sm:$0xff]
        %v637 = vld [vmem:[#allocation10 + $0x98] sm:$0xff]
        %v638 = vld [vmem:[#allocation10 + $0xa0] sm:$0xff]
        %v639 = vld [vmem:[#allocation10 + $0xa8] sm:$0xff]
        %v640 = vld [vmem:[#allocation10 + $0xb0] sm:$0xff]
        %v641 = vld [vmem:[#allocation10 + $0xb8] sm:$0xff]
        %v642 = vld [vmem:[#allocation10 + $0xc0] sm:$0xff]
        %v643 = vld [vmem:[#allocation10 + $0xc8] sm:$0xff]
        %v644 = vld [vmem:[#allocation10 + $0xd0] sm:$0xff]
        %v645 = vld [vmem:[#allocation10 + $0xd8] sm:$0xff]
        %v646 = vld [vmem:[#allocation10 + $0xe0] sm:$0xff]
        %v647 = vld [vmem:[#allocation10 + $0xe8] sm:$0xff]
        %v648 = vld [vmem:[#allocation10 + $0xf0] sm:$0xff]
        %v649 = vld [vmem:[#allocation10 + $0xf8] sm:$0xff]
        %v650 = vld [vmem:[#allocation12] sm:$0xff]
        %v651 = vld [vmem:[#allocation12 + $0x8] sm:$0xff]
        %v652 = vld [vmem:[#allocation12 + $0x10] sm:$0xff]
        %v653 = vld [vmem:[#allocation12 + $0x18] sm:$0xff]
        %v654 = vld [vmem:[#allocation12 + $0x20] sm:$0xff]
        %v655 = vld [vmem:[#allocation12 + $0x28] sm:$0xff]
        %v656 = vld [vmem:[#allocation12 + $0x30] sm:$0xff]
        %v657 = vld [vmem:[#allocation12 + $0x38] sm:$0xff]
        %v658 = vld [vmem:[#allocation12 + $0x40] sm:$0xff]
        %v659 = vld [vmem:[#allocation12 + $0x48] sm:$0xff]
        %v660 = vld [vmem:[#allocation12 + $0x50] sm:$0xff]
        %v661 = vld [vmem:[#allocation12 + $0x58] sm:$0xff]
        %v662 = vld [vmem:[#allocation12 + $0x60] sm:$0xff]
        %v663 = vld [vmem:[#allocation12 + $0x68] sm:$0xff]
        %v664 = vld [vmem:[#allocation12 + $0x70] sm:$0xff]
        %v665 = vld [vmem:[#allocation12 + $0x78] sm:$0xff]
        %v666 = vld [vmem:[#allocation12 + $0x80] sm:$0xff]
        %v667 = vld [vmem:[#allocation12 + $0x88] sm:$0xff]
        %v668 = vld [vmem:[#allocation12 + $0x90] sm:$0xff]
        %v669 = vld [vmem:[#allocation12 + $0x98] sm:$0xff]
        %v670 = vld [vmem:[#allocation12 + $0xa0] sm:$0xff]
        %v671 = vld [vmem:[#allocation12 + $0xa8] sm:$0xff]
        %v672 = vld [vmem:[#allocation12 + $0xb0] sm:$0xff]
        %v673 = vld [vmem:[#allocation12 + $0xb8] sm:$0xff]
        %v674 = vld [vmem:[#allocation12 + $0xc0] sm:$0xff]
        %v675 = vld [vmem:[#allocation12 + $0xc8] sm:$0xff]
        %v676 = vld [vmem:[#allocation12 + $0xd0] sm:$0xff]
        %v677 = vld [vmem:[#allocation12 + $0xd8] sm:$0xff]
        %v678 = vld [vmem:[#allocation12 + $0xe0] sm:$0xff]
        %v679 = vld [vmem:[#allocation12 + $0xe8] sm:$0xff]
        %v680 = vld [vmem:[#allocation12 + $0xf0] sm:$0xff]
        %v681 = vld [vmem:[#allocation12 + $0xf8] sm:$0xff]
        %v682 = vld [vmem:[%s6] sm:$0xf]
        %v684 = vlaneseq
        %v685 = vshrl.u32 %v684, 7
        %v686 = vsub.s32 0, %v685
        %v687 = vrot.slane %v682, %v686
        %v688 = vlaneseq
        %v689 = vshrl.u32 %v688, 7
        %v690 = vsub.s32 1, %v689
        %v691 = vrot.slane %v682, %v690
        %v692 = vlaneseq
        %v693 = vshrl.u32 %v692, 7
        %v694 = vsub.s32 2, %v693
        %v695 = vrot.slane %v682, %v694
        %v696 = vlaneseq
        %v697 = vshrl.u32 %v696, 7
        %v698 = vsub.s32 3, %v697
        %v699 = vrot.slane %v682, %v698
        %v704 = vld [vmem:[#allocation3] sm:$0xf]
        %v705 = vld [vmem:[#allocation4] sm:$0xff]
        %v706 = vld [vmem:[#allocation5] sm:$0xf]
        %v707 = vld [vmem:[#allocation6] sm:$0xff]
        %s708 = smul.u32 0, 4
        %s709 = smul.addr %s708, 8
        %s710 = scalar_lea.vmem [#allocation2], %s709
        %v711 = vld [vmem:[%s710] sm:$0xff]
        %v712 = vld [vmem:[%s710 + $0x8] sm:$0xff]
        %v713 = vld [vmem:[%s710 + $0x10] sm:$0xff]
        %v714 = vld [vmem:[%s710 + $0x18] sm:$0xff]
        %v747 = vunpack.c.l.b16 %v586
        %v748 = vunpack.c.h.b16 %v586
        %v749 = vunpack.c.l.b16 %v587
        %v750 = vunpack.c.h.b16 %v587
        %v751 = vunpack.c.l.b16 %v588
        %v752 = vunpack.c.h.b16 %v588
        %v753 = vunpack.c.l.b16 %v589
        %v754 = vunpack.c.h.b16 %v589
        %v755 = vunpack.c.l.b16 %v590
        %v756 = vunpack.c.h.b16 %v590
        %v757 = vunpack.c.l.b16 %v591
        %v758 = vunpack.c.h.b16 %v591
        %v759 = vunpack.c.l.b16 %v592
        %v760 = vunpack.c.h.b16 %v592
        %v761 = vunpack.c.l.b16 %v593
        %v762 = vunpack.c.h.b16 %v593
        %v763 = vunpack.c.l.b16 %v594
        %v764 = vunpack.c.h.b16 %v594
        %v765 = vunpack.c.l.b16 %v595
        %v766 = vunpack.c.h.b16 %v595
        %v767 = vunpack.c.l.b16 %v596
        %v768 = vunpack.c.h.b16 %v596
        %v769 = vunpack.c.l.b16 %v597
        %v770 = vunpack.c.h.b16 %v597
        %v771 = vunpack.c.l.b16 %v598
        %v772 = vunpack.c.h.b16 %v598
        %v773 = vunpack.c.l.b16 %v599
        %v774 = vunpack.c.h.b16 %v599
        %v775 = vunpack.c.l.b16 %v600
        %v776 = vunpack.c.h.b16 %v600
        %v777 = vunpack.c.l.b16 %v601
        %v778 = vunpack.c.h.b16 %v601
        %v779 = vunpack.c.l.b16 %v602
        %v780 = vunpack.c.h.b16 %v602
        %v781 = vunpack.c.l.b16 %v603
        %v782 = vunpack.c.h.b16 %v603
        %v783 = vunpack.c.l.b16 %v604
        %v784 = vunpack.c.h.b16 %v604
        %v785 = vunpack.c.l.b16 %v605
        %v786 = vunpack.c.h.b16 %v605
        %v787 = vunpack.c.l.b16 %v606
        %v788 = vunpack.c.h.b16 %v606
        %v789 = vunpack.c.l.b16 %v607
        %v790 = vunpack.c.h.b16 %v607
        %v791 = vunpack.c.l.b16 %v608
        %v792 = vunpack.c.h.b16 %v608
        %v793 = vunpack.c.l.b16 %v609
        %v794 = vunpack.c.h.b16 %v609
        %v795 = vunpack.c.l.b16 %v610
        %v796 = vunpack.c.h.b16 %v610
        %v797 = vunpack.c.l.b16 %v611
        %v798 = vunpack.c.h.b16 %v611
        %v799 = vunpack.c.l.b16 %v612
        %v800 = vunpack.c.h.b16 %v612
        %v801 = vunpack.c.l.b16 %v613
        %v802 = vunpack.c.h.b16 %v613
        %v803 = vunpack.c.l.b16 %v614
        %v804 = vunpack.c.h.b16 %v614
        %v805 = vunpack.c.l.b16 %v615
        %v806 = vunpack.c.h.b16 %v615
        %v807 = vunpack.c.l.b16 %v616
        %v808 = vunpack.c.h.b16 %v616
        %v809 = vunpack.c.l.b16 %v617
        %v810 = vunpack.c.h.b16 %v617
        %v811 = vpack.c.b16 %v751, %v747
        %v812 = vpack.c.b16 %v752, %v748
        %v813 = vpack.c.b16 %v753, %v749
        %v814 = vpack.c.b16 %v754, %v750
        %v815 = vpack.c.b16 %v759, %v755
        %v816 = vpack.c.b16 %v760, %v756
        %v817 = vpack.c.b16 %v761, %v757
        %v818 = vpack.c.b16 %v762, %v758
        %v819 = vpack.c.b16 %v767, %v763
        %v820 = vpack.c.b16 %v768, %v764
        %v821 = vpack.c.b16 %v769, %v765
        %v822 = vpack.c.b16 %v770, %v766
        %v823 = vpack.c.b16 %v775, %v771
        %v824 = vpack.c.b16 %v776, %v772
        %v825 = vpack.c.b16 %v777, %v773
        %v826 = vpack.c.b16 %v778, %v774
        %v827 = vpack.c.b16 %v783, %v779
        %v828 = vpack.c.b16 %v784, %v780
        %v829 = vpack.c.b16 %v785, %v781
        %v830 = vpack.c.b16 %v786, %v782
        %v831 = vpack.c.b16 %v791, %v787
        %v832 = vpack.c.b16 %v792, %v788
        %v833 = vpack.c.b16 %v793, %v789
        %v834 = vpack.c.b16 %v794, %v790
        %v835 = vpack.c.b16 %v799, %v795
        %v836 = vpack.c.b16 %v800, %v796
        %v837 = vpack.c.b16 %v801, %v797
        %v838 = vpack.c.b16 %v802, %v798
        %v839 = vpack.c.b16 %v807, %v803
        %v840 = vpack.c.b16 %v808, %v804
        %v841 = vpack.c.b16 %v809, %v805
        %v842 = vpack.c.b16 %v810, %v806
        %875 = vmatprep.subr.bf16.mxu0 %v840
        %876 = vmatpush1.bf16.msra.mxu0 %v839
        %877 = vmatprep.subr.bf16.mxu0 %v836
        %878 = vmatpush1.bf16.msra.mxu0 %v835
        %879 = vmatprep.subr.bf16.mxu0 %v832
        %880 = vmatpush1.bf16.msra.mxu0 %v831
        %881 = vmatprep.subr.bf16.mxu0 %v828
        %882 = vmatpush1.bf16.msra.mxu0 %v827
        %883 = vmatprep.subr.bf16.mxu0 %v824
        %884 = vmatpush1.bf16.msra.mxu0 %v823
        %885 = vmatprep.subr.bf16.mxu0 %v820
        %886 = vmatpush1.bf16.msra.mxu0 %v819
        %887 = vmatprep.subr.bf16.mxu0 %v816
        %888 = vmatpush1.bf16.msra.mxu0 %v815
        %889 = vmatprep.subr.bf16.mxu0 %v812
        %890 = vmatpush1.bf16.msra.mxu0 %v811
        %891 = vmatprep.subr.bf16.mxu0 0
        %892 = vmatpush2.bf16.msra.mxu0 0
        %893 = vmatprep.subr.bf16.mxu0 0
        %894 = vmatpush2.bf16.msra.mxu0 0
        %895 = vmatprep.subr.bf16.mxu0 0
        %896 = vmatpush2.bf16.msra.mxu0 0
        %897 = vmatprep.subr.bf16.mxu0 0
        %898 = vmatpush2.bf16.msra.mxu0 0
        %899 = vmatprep.subr.bf16.mxu0 0
        %900 = vmatpush2.bf16.msra.mxu0 0
        %901 = vmatprep.subr.bf16.mxu0 0
        %902 = vmatpush2.bf16.msra.mxu0 0
        %903 = vmatprep.subr.bf16.mxu0 0
        %904 = vmatpush2.bf16.msra.mxu0 0
        %905 = vmatprep.subr.bf16.mxu0 0
        %906 = vmatpush2.bf16.msra.mxu0 0
        %907 = vmatprep.mubr.bf16.mxu0 0
        %908 = vmatmul.mubr.bf16.gmra.mxu0 %v704
        %v909 = vpop.f32.mrf.mxu0
        %v910 = vadd.f32 0.0, %v909
        %v911 = vpop.f32.mrf.mxu0
        %v912 = vadd.f32 0.0, %v911
        %v913 = vpop.f32.mrf.mxu0
        %v914 = vpop.f32.mrf.mxu0
        %915 = vdwg.mxu0
        %916 = vmatprep.subr.bf16.mxu0 %v842
        %917 = vmatpush1.bf16.msra.mxu0 %v841
        %918 = vmatprep.subr.bf16.mxu0 %v838
        %919 = vmatpush1.bf16.msra.mxu0 %v837
        %920 = vmatprep.subr.bf16.mxu0 %v834
        %921 = vmatpush1.bf16.msra.mxu0 %v833
        %922 = vmatprep.subr.bf16.mxu0 %v830
        %923 = vmatpush1.bf16.msra.mxu0 %v829
        %924 = vmatprep.subr.bf16.mxu0 %v826
        %925 = vmatpush1.bf16.msra.mxu0 %v825
        %926 = vmatprep.subr.bf16.mxu0 %v822
        %927 = vmatpush1.bf16.msra.mxu0 %v821
        %928 = vmatprep.subr.bf16.mxu0 %v818
        %929 = vmatpush1.bf16.msra.mxu0 %v817
        %930 = vmatprep.subr.bf16.mxu0 %v814
        %931 = vmatpush1.bf16.msra.mxu0 %v813
        %932 = vmatprep.subr.bf16.mxu0 0
        %933 = vmatpush2.bf16.msra.mxu0 0
        %934 = vmatprep.subr.bf16.mxu0 0
        %935 = vmatpush2.bf16.msra.mxu0 0
        %936 = vmatprep.subr.bf16.mxu0 0
        %937 = vmatpush2.bf16.msra.mxu0 0
        %938 = vmatprep.subr.bf16.mxu0 0
        %939 = vmatpush2.bf16.msra.mxu0 0
        %940 = vmatprep.subr.bf16.mxu0 0
        %941 = vmatpush2.bf16.msra.mxu0 0
        %942 = vmatprep.subr.bf16.mxu0 0
        %943 = vmatpush2.bf16.msra.mxu0 0
        %944 = vmatprep.subr.bf16.mxu0 0
        %945 = vmatpush2.bf16.msra.mxu0 0
        %946 = vmatprep.subr.bf16.mxu0 0
        %947 = vmatpush2.bf16.msra.mxu0 0
        %948 = vmatprep.mubr.bf16.mxu0 0
        %949 = vmatmul.mubr.bf16.gmra.mxu0 %v704
        %v950 = vpop.f32.mrf.mxu0
        %v951 = vadd.f32 0.0, %v950
        %v952 = vpop.f32.mrf.mxu0
        %v953 = vadd.f32 0.0, %v952
        %v954 = vpop.f32.mrf.mxu0
        %v955 = vpop.f32.mrf.mxu0
        %956 = vdwg.mxu0
        %v957 = vadd.f32 %v711, %v910
        %v958 = vadd.f32 %v712, %v912
        %v959 = vadd.f32 %v713, %v951
        %v960 = vadd.f32 %v714, %v953
        %v961 = vmul.f32 %v957, 0.5
        %v962 = vtanh.pop %v961
        %v963 = vmul.f32 %v962, 0.5
        %v964 = vadd.f32 %v963, 0.5
        %v965 = vmul.f32 %v958, 0.5
        %v966 = vtanh.pop %v965
        %v967 = vmul.f32 %v966, 0.5
        %v968 = vadd.f32 %v967, 0.5
        %v969 = vtanh.pop %v959
        %v970 = vmul.f32 %v960, 0.5
        %v971 = vtanh.pop %v970
        %v972 = vmul.f32 %v971, 0.5
        %v973 = vadd.f32 %v972, 0.5
        %v974 = vmul.f32 %v968, %v705
        %v975 = vmul.f32 %v964, %v969
        %v976 = vadd.f32 %v974, %v975
        %v977 = vtanh.pop %v976
        %v978 = vmul.f32 %v973, %v977
        %v979 = vpack.c.bf16 %v978, %v978
        %v1012 = vunpack.c.l.b16 %v650
        %v1013 = vunpack.c.h.b16 %v650
        %v1014 = vunpack.c.l.b16 %v651
        %v1015 = vunpack.c.h.b16 %v651
        %v1016 = vunpack.c.l.b16 %v652
        %v1017 = vunpack.c.h.b16 %v652
        %v1018 = vunpack.c.l.b16 %v653
        %v1019 = vunpack.c.h.b16 %v653
        %v1020 = vunpack.c.l.b16 %v654
        %v1021 = vunpack.c.h.b16 %v654
        %v1022 = vunpack.c.l.b16 %v655
        %v1023 = vunpack.c.h.b16 %v655
        %v1024 = vunpack.c.l.b16 %v656
        %v1025 = vunpack.c.h.b16 %v656
        %v1026 = vunpack.c.l.b16 %v657
        %v1027 = vunpack.c.h.b16 %v657
        %v1028 = vunpack.c.l.b16 %v658
        %v1029 = vunpack.c.h.b16 %v658
        %v1030 = vunpack.c.l.b16 %v659
        %v1031 = vunpack.c.h.b16 %v659
        %v1032 = vunpack.c.l.b16 %v660
        %v1033 = vunpack.c.h.b16 %v660
        %v1034 = vunpack.c.l.b16 %v661
        %v1035 = vunpack.c.h.b16 %v661
        %v1036 = vunpack.c.l.b16 %v662
        %v1037 = vunpack.c.h.b16 %v662
        %v1038 = vunpack.c.l.b16 %v663
        %v1039 = vunpack.c.h.b16 %v663
        %v1040 = vunpack.c.l.b16 %v664
        %v1041 = vunpack.c.h.b16 %v664
        %v1042 = vunpack.c.l.b16 %v665
        %v1043 = vunpack.c.h.b16 %v665
        %v1044 = vunpack.c.l.b16 %v666
        %v1045 = vunpack.c.h.b16 %v666
        %v1046 = vunpack.c.l.b16 %v667
        %v1047 = vunpack.c.h.b16 %v667
        %v1048 = vunpack.c.l.b16 %v668
        %v1049 = vunpack.c.h.b16 %v668
        %v1050 = vunpack.c.l.b16 %v669
        %v1051 = vunpack.c.h.b16 %v669
        %v1052 = vunpack.c.l.b16 %v670
        %v1053 = vunpack.c.h.b16 %v670
        %v1054 = vunpack.c.l.b16 %v671
        %v1055 = vunpack.c.h.b16 %v671
        %v1056 = vunpack.c.l.b16 %v672
        %v1057 = vunpack.c.h.b16 %v672
        %v1058 = vunpack.c.l.b16 %v673
        %v1059 = vunpack.c.h.b16 %v673
        %v1060 = vunpack.c.l.b16 %v674
        %v1061 = vunpack.c.h.b16 %v674
        %v1062 = vunpack.c.l.b16 %v675
        %v1063 = vunpack.c.h.b16 %v675
        %v1064 = vunpack.c.l.b16 %v676
        %v1065 = vunpack.c.h.b16 %v676
        %v1066 = vunpack.c.l.b16 %v677
        %v1067 = vunpack.c.h.b16 %v677
        %v1068 = vunpack.c.l.b16 %v678
        %v1069 = vunpack.c.h.b16 %v678
        %v1070 = vunpack.c.l.b16 %v679
        %v1071 = vunpack.c.h.b16 %v679
        %v1072 = vunpack.c.l.b16 %v680
        %v1073 = vunpack.c.h.b16 %v680
        %v1074 = vunpack.c.l.b16 %v681
        %v1075 = vunpack.c.h.b16 %v681
        %v1076 = vpack.c.b16 %v1016, %v1012
        %v1077 = vpack.c.b16 %v1017, %v1013
        %v1078 = vpack.c.b16 %v1018, %v1014
        %v1079 = vpack.c.b16 %v1019, %v1015
        %v1080 = vpack.c.b16 %v1024, %v1020
        %v1081 = vpack.c.b16 %v1025, %v1021
        %v1082 = vpack.c.b16 %v1026, %v1022
        %v1083 = vpack.c.b16 %v1027, %v1023
        %v1084 = vpack.c.b16 %v1032, %v1028
        %v1085 = vpack.c.b16 %v1033, %v1029
        %v1086 = vpack.c.b16 %v1034, %v1030
        %v1087 = vpack.c.b16 %v1035, %v1031
        %v1088 = vpack.c.b16 %v1040, %v1036
        %v1089 = vpack.c.b16 %v1041, %v1037
        %v1090 = vpack.c.b16 %v1042, %v1038
        %v1091 = vpack.c.b16 %v1043, %v1039
        %v1092 = vpack.c.b16 %v1048, %v1044
        %v1093 = vpack.c.b16 %v1049, %v1045
        %v1094 = vpack.c.b16 %v1050, %v1046
        %v1095 = vpack.c.b16 %v1051, %v1047
        %v1096 = vpack.c.b16 %v1056, %v1052
        %v1097 = vpack.c.b16 %v1057, %v1053
        %v1098 = vpack.c.b16 %v1058, %v1054
        %v1099 = vpack.c.b16 %v1059, %v1055
        %v1100 = vpack.c.b16 %v1064, %v1060
        %v1101 = vpack.c.b16 %v1065, %v1061
        %v1102 = vpack.c.b16 %v1066, %v1062
        %v1103 = vpack.c.b16 %v1067, %v1063
        %v1104 = vpack.c.b16 %v1072, %v1068
        %v1105 = vpack.c.b16 %v1073, %v1069
        %v1106 = vpack.c.b16 %v1074, %v1070
        %v1107 = vpack.c.b16 %v1075, %v1071
        %1140 = vmatprep.subr.bf16.mxu0 %v1105
        %1141 = vmatpush1.bf16.msra.mxu0 %v1104
        %1142 = vmatprep.subr.bf16.mxu0 %v1101
        %1143 = vmatpush1.bf16.msra.mxu0 %v1100
        %1144 = vmatprep.subr.bf16.mxu0 %v1097
        %1145 = vmatpush1.bf16.msra.mxu0 %v1096
        %1146 = vmatprep.subr.bf16.mxu0 %v1093
        %1147 = vmatpush1.bf16.msra.mxu0 %v1092
        %1148 = vmatprep.subr.bf16.mxu0 %v1089
        %1149 = vmatpush1.bf16.msra.mxu0 %v1088
        %1150 = vmatprep.subr.bf16.mxu0 %v1085
        %1151 = vmatpush1.bf16.msra.mxu0 %v1084
        %1152 = vmatprep.subr.bf16.mxu0 %v1081
        %1153 = vmatpush1.bf16.msra.mxu0 %v1080
        %1154 = vmatprep.subr.bf16.mxu0 %v1077
        %1155 = vmatpush1.bf16.msra.mxu0 %v1076
        %1156 = vmatprep.subr.bf16.mxu0 0
        %1157 = vmatpush2.bf16.msra.mxu0 0
        %1158 = vmatprep.subr.bf16.mxu0 0
        %1159 = vmatpush2.bf16.msra.mxu0 0
        %1160 = vmatprep.subr.bf16.mxu0 0
        %1161 = vmatpush2.bf16.msra.mxu0 0
        %1162 = vmatprep.subr.bf16.mxu0 0
        %1163 = vmatpush2.bf16.msra.mxu0 0
        %1164 = vmatprep.subr.bf16.mxu0 0
        %1165 = vmatpush2.bf16.msra.mxu0 0
        %1166 = vmatprep.subr.bf16.mxu0 0
        %1167 = vmatpush2.bf16.msra.mxu0 0
        %1168 = vmatprep.subr.bf16.mxu0 0
        %1169 = vmatpush2.bf16.msra.mxu0 0
        %1170 = vmatprep.subr.bf16.mxu0 0
        %1171 = vmatpush2.bf16.msra.mxu0 0
        %1172 = vmatprep.mubr.bf16.mxu0 0
        %1173 = vmatmul.mubr.bf16.gmra.mxu0 %v706
        %v1174 = vpop.f32.mrf.mxu0
        %v1175 = vadd.f32 0.0, %v1174
        %v1176 = vpop.f32.mrf.mxu0
        %v1177 = vadd.f32 0.0, %v1176
        %v1178 = vpop.f32.mrf.mxu0
        %v1179 = vpop.f32.mrf.mxu0
        %1180 = vdwg.mxu0
        %1181 = vmatprep.subr.bf16.mxu0 %v1107
        %1182 = vmatpush1.bf16.msra.mxu0 %v1106
        %1183 = vmatprep.subr.bf16.mxu0 %v1103
        %1184 = vmatpush1.bf16.msra.mxu0 %v1102
        %1185 = vmatprep.subr.bf16.mxu0 %v1099
        %1186 = vmatpush1.bf16.msra.mxu0 %v1098
        %1187 = vmatprep.subr.bf16.mxu0 %v1095
        %1188 = vmatpush1.bf16.msra.mxu0 %v1094
        %1189 = vmatprep.subr.bf16.mxu0 %v1091
        %1190 = vmatpush1.bf16.msra.mxu0 %v1090
        %1191 = vmatprep.subr.bf16.mxu0 %v1087
        %1192 = vmatpush1.bf16.msra.mxu0 %v1086
        %1193 = vmatprep.subr.bf16.mxu0 %v1083
        %1194 = vmatpush1.bf16.msra.mxu0 %v1082
        %1195 = vmatprep.subr.bf16.mxu0 %v1079
        %1196 = vmatpush1.bf16.msra.mxu0 %v1078
        %1197 = vmatprep.subr.bf16.mxu0 0
        %1198 = vmatpush2.bf16.msra.mxu0 0
        %1199 = vmatprep.subr.bf16.mxu0 0
        %1200 = vmatpush2.bf16.msra.mxu0 0
        %1201 = vmatprep.subr.bf16.mxu0 0
        %1202 = vmatpush2.bf16.msra.mxu0 0
        %1203 = vmatprep.subr.bf16.mxu0 0
        %1204 = vmatpush2.bf16.msra.mxu0 0
        %1205 = vmatprep.subr.bf16.mxu0 0
        %1206 = vmatpush2.bf16.msra.mxu0 0
        %1207 = vmatprep.subr.bf16.mxu0 0
        %1208 = vmatpush2.bf16.msra.mxu0 0
        %1209 = vmatprep.subr.bf16.mxu0 0
        %1210 = vmatpush2.bf16.msra.mxu0 0
        %1211 = vmatprep.subr.bf16.mxu0 0
        %1212 = vmatpush2.bf16.msra.mxu0 0
        %1213 = vmatprep.mubr.bf16.mxu0 0
        %1214 = vmatmul.mubr.bf16.gmra.mxu0 %v706
        %v1215 = vpop.f32.mrf.mxu0
        %v1216 = vadd.f32 0.0, %v1215
        %v1217 = vpop.f32.mrf.mxu0
        %v1218 = vadd.f32 0.0, %v1217
        %v1219 = vpop.f32.mrf.mxu0
        %v1220 = vpop.f32.mrf.mxu0
        %1221 = vdwg.mxu0
        %v1254 = vunpack.c.l.b16 %v618
        %v1255 = vunpack.c.h.b16 %v618
        %v1256 = vunpack.c.l.b16 %v619
        %v1257 = vunpack.c.h.b16 %v619
        %v1258 = vunpack.c.l.b16 %v620
        %v1259 = vunpack.c.h.b16 %v620
        %v1260 = vunpack.c.l.b16 %v621
        %v1261 = vunpack.c.h.b16 %v621
        %v1262 = vunpack.c.l.b16 %v622
        %v1263 = vunpack.c.h.b16 %v622
        %v1264 = vunpack.c.l.b16 %v623
        %v1265 = vunpack.c.h.b16 %v623
        %v1266 = vunpack.c.l.b16 %v624
        %v1267 = vunpack.c.h.b16 %v624
        %v1268 = vunpack.c.l.b16 %v625
        %v1269 = vunpack.c.h.b16 %v625
        %v1270 = vunpack.c.l.b16 %v626
        %v1271 = vunpack.c.h.b16 %v626
        %v1272 = vunpack.c.l.b16 %v627
        %v1273 = vunpack.c.h.b16 %v627
        %v1274 = vunpack.c.l.b16 %v628
        %v1275 = vunpack.c.h.b16 %v628
        %v1276 = vunpack.c.l.b16 %v629
        %v1277 = vunpack.c.h.b16 %v629
        %v1278 = vunpack.c.l.b16 %v630
        %v1279 = vunpack.c.h.b16 %v630
        %v1280 = vunpack.c.l.b16 %v631
        %v1281 = vunpack.c.h.b16 %v631
        %v1282 = vunpack.c.l.b16 %v632
        %v1283 = vunpack.c.h.b16 %v632
        %v1284 = vunpack.c.l.b16 %v633
        %v1285 = vunpack.c.h.b16 %v633
        %v1286 = vunpack.c.l.b16 %v634
        %v1287 = vunpack.c.h.b16 %v634
        %v1288 = vunpack.c.l.b16 %v635
        %v1289 = vunpack.c.h.b16 %v635
        %v1290 = vunpack.c.l.b16 %v636
        %v1291 = vunpack.c.h.b16 %v636
        %v1292 = vunpack.c.l.b16 %v637
        %v1293 = vunpack.c.h.b16 %v637
        %v1294 = vunpack.c.l.b16 %v638
        %v1295 = vunpack.c.h.b16 %v638
        %v1296 = vunpack.c.l.b16 %v639
        %v1297 = vunpack.c.h.b16 %v639
        %v1298 = vunpack.c.l.b16 %v640
        %v1299 = vunpack.c.h.b16 %v640
        %v1300 = vunpack.c.l.b16 %v641
        %v1301 = vunpack.c.h.b16 %v641
        %v1302 = vunpack.c.l.b16 %v642
        %v1303 = vunpack.c.h.b16 %v642
        %v1304 = vunpack.c.l.b16 %v643
        %v1305 = vunpack.c.h.b16 %v643
        %v1306 = vunpack.c.l.b16 %v644
        %v1307 = vunpack.c.h.b16 %v644
        %v1308 = vunpack.c.l.b16 %v645
        %v1309 = vunpack.c.h.b16 %v645
        %v1310 = vunpack.c.l.b16 %v646
        %v1311 = vunpack.c.h.b16 %v646
        %v1312 = vunpack.c.l.b16 %v647
        %v1313 = vunpack.c.h.b16 %v647
        %v1314 = vunpack.c.l.b16 %v648
        %v1315 = vunpack.c.h.b16 %v648
        %v1316 = vunpack.c.l.b16 %v649
        %v1317 = vunpack.c.h.b16 %v649
        %v1318 = vpack.c.b16 %v1258, %v1254
        %v1319 = vpack.c.b16 %v1259, %v1255
        %v1320 = vpack.c.b16 %v1260, %v1256
        %v1321 = vpack.c.b16 %v1261, %v1257
        %v1322 = vpack.c.b16 %v1266, %v1262
        %v1323 = vpack.c.b16 %v1267, %v1263
        %v1324 = vpack.c.b16 %v1268, %v1264
        %v1325 = vpack.c.b16 %v1269, %v1265
        %v1326 = vpack.c.b16 %v1274, %v1270
        %v1327 = vpack.c.b16 %v1275, %v1271
        %v1328 = vpack.c.b16 %v1276, %v1272
        %v1329 = vpack.c.b16 %v1277, %v1273
        %v1330 = vpack.c.b16 %v1282, %v1278
        %v1331 = vpack.c.b16 %v1283, %v1279
        %v1332 = vpack.c.b16 %v1284, %v1280
        %v1333 = vpack.c.b16 %v1285, %v1281
        %v1334 = vpack.c.b16 %v1290, %v1286
        %v1335 = vpack.c.b16 %v1291, %v1287
        %v1336 = vpack.c.b16 %v1292, %v1288
        %v1337 = vpack.c.b16 %v1293, %v1289
        %v1338 = vpack.c.b16 %v1298, %v1294
        %v1339 = vpack.c.b16 %v1299, %v1295
        %v1340 = vpack.c.b16 %v1300, %v1296
        %v1341 = vpack.c.b16 %v1301, %v1297
        %v1342 = vpack.c.b16 %v1306, %v1302
        %v1343 = vpack.c.b16 %v1307, %v1303
        %v1344 = vpack.c.b16 %v1308, %v1304
        %v1345 = vpack.c.b16 %v1309, %v1305
        %v1346 = vpack.c.b16 %v1314, %v1310
        %v1347 = vpack.c.b16 %v1315, %v1311
        %v1348 = vpack.c.b16 %v1316, %v1312
        %v1349 = vpack.c.b16 %v1317, %v1313
        %1382 = vmatprep.subr.bf16.mxu0 %v1347
        %1383 = vmatpush1.bf16.msra.mxu0 %v1346
        %1384 = vmatprep.subr.bf16.mxu0 %v1343
        %1385 = vmatpush1.bf16.msra.mxu0 %v1342
        %1386 = vmatprep.subr.bf16.mxu0 %v1339
        %1387 = vmatpush1.bf16.msra.mxu0 %v1338
        %1388 = vmatprep.subr.bf16.mxu0 %v1335
        %1389 = vmatpush1.bf16.msra.mxu0 %v1334
        %1390 = vmatprep.subr.bf16.mxu0 %v1331
        %1391 = vmatpush1.bf16.msra.mxu0 %v1330
        %1392 = vmatprep.subr.bf16.mxu0 %v1327
        %1393 = vmatpush1.bf16.msra.mxu0 %v1326
        %1394 = vmatprep.subr.bf16.mxu0 %v1323
        %1395 = vmatpush1.bf16.msra.mxu0 %v1322
        %1396 = vmatprep.subr.bf16.mxu0 %v1319
        %1397 = vmatpush1.bf16.msra.mxu0 %v1318
        %1398 = vmatprep.subr.bf16.mxu0 0
        %1399 = vmatpush2.bf16.msra.mxu0 0
        %1400 = vmatprep.subr.bf16.mxu0 0
        %1401 = vmatpush2.bf16.msra.mxu0 0
        %1402 = vmatprep.subr.bf16.mxu0 0
        %1403 = vmatpush2.bf16.msra.mxu0 0
        %1404 = vmatprep.subr.bf16.mxu0 0
        %1405 = vmatpush2.bf16.msra.mxu0 0
        %1406 = vmatprep.subr.bf16.mxu0 0
        %1407 = vmatpush2.bf16.msra.mxu0 0
        %1408 = vmatprep.subr.bf16.mxu0 0
        %1409 = vmatpush2.bf16.msra.mxu0 0
        %1410 = vmatprep.subr.bf16.mxu0 0
        %1411 = vmatpush2.bf16.msra.mxu0 0
        %1412 = vmatprep.subr.bf16.mxu0 0
        %1413 = vmatpush2.bf16.msra.mxu0 0
        %1414 = vmatprep.mubr.bf16.mxu0 0
        %1415 = vmatmul.mubr.bf16.gmra.mxu0 %v979
        %v1416 = vpop.f32.mrf.mxu0
        %v1417 = vadd.f32 %v1175, %v1416
        %v1418 = vpop.f32.mrf.mxu0
        %v1419 = vadd.f32 %v1177, %v1418
        %v1420 = vpop.f32.mrf.mxu0
        %v1421 = vpop.f32.mrf.mxu0
        %1422 = vdwg.mxu0
        %1423 = vmatprep.subr.bf16.mxu0 %v1349
        %1424 = vmatpush1.bf16.msra.mxu0 %v1348
        %1425 = vmatprep.subr.bf16.mxu0 %v1345
        %1426 = vmatpush1.bf16.msra.mxu0 %v1344
        %1427 = vmatprep.subr.bf16.mxu0 %v1341
        %1428 = vmatpush1.bf16.msra.mxu0 %v1340
        %1429 = vmatprep.subr.bf16.mxu0 %v1337
        %1430 = vmatpush1.bf16.msra.mxu0 %v1336
        %1431 = vmatprep.subr.bf16.mxu0 %v1333
        %1432 = vmatpush1.bf16.msra.mxu0 %v1332
        %1433 = vmatprep.subr.bf16.mxu0 %v1329
        %1434 = vmatpush1.bf16.msra.mxu0 %v1328
        %1435 = vmatprep.subr.bf16.mxu0 %v1325
        %1436 = vmatpush1.bf16.msra.mxu0 %v1324
        %1437 = vmatprep.subr.bf16.mxu0 %v1321
        %1438 = vmatpush1.bf16.msra.mxu0 %v1320
        %1439 = vmatprep.subr.bf16.mxu0 0
        %1440 = vmatpush2.bf16.msra.mxu0 0
        %1441 = vmatprep.subr.bf16.mxu0 0
        %1442 = vmatpush2.bf16.msra.mxu0 0
        %1443 = vmatprep.subr.bf16.mxu0 0
        %1444 = vmatpush2.bf16.msra.mxu0 0
        %1445 = vmatprep.subr.bf16.mxu0 0
        %1446 = vmatpush2.bf16.msra.mxu0 0
        %1447 = vmatprep.subr.bf16.mxu0 0
        %1448 = vmatpush2.bf16.msra.mxu0 0
        %1449 = vmatprep.subr.bf16.mxu0 0
        %1450 = vmatpush2.bf16.msra.mxu0 0
        %1451 = vmatprep.subr.bf16.mxu0 0
        %1452 = vmatpush2.bf16.msra.mxu0 0
        %1453 = vmatprep.subr.bf16.mxu0 0
        %1454 = vmatpush2.bf16.msra.mxu0 0
        %1455 = vmatprep.mubr.bf16.mxu0 0
        %1456 = vmatmul.mubr.bf16.gmra.mxu0 %v979
        %v1457 = vpop.f32.mrf.mxu0
        %v1458 = vadd.f32 %v1216, %v1457
        %v1459 = vpop.f32.mrf.mxu0
        %v1460 = vadd.f32 %v1218, %v1459
        %v1461 = vpop.f32.mrf.mxu0
        %v1462 = vpop.f32.mrf.mxu0
        %1463 = vdwg.mxu0
        %v1464 = vadd.f32 %v1417, %v687
        %v1465 = vadd.f32 %v1419, %v691
        %v1466 = vadd.f32 %v1458, %v695
        %v1467 = vadd.f32 %v1460, %v699
        %v1468 = vmul.f32 %v1464, 0.5
        %v1469 = vtanh.pop %v1468
        %v1470 = vmul.f32 %v1469, 0.5
        %v1471 = vadd.f32 %v1470, 0.5
        %v1472 = vmul.f32 %v1465, 0.5
        %v1473 = vtanh.pop %v1472
        %v1474 = vmul.f32 %v1473, 0.5
        %v1475 = vadd.f32 %v1474, 0.5
        %v1476 = vtanh.pop %v1466
        %v1477 = vmul.f32 %v1467, 0.5
        %v1478 = vtanh.pop %v1477
        %v1479 = vmul.f32 %v1478, 0.5
        %v1480 = vadd.f32 %v1479, 0.5
        %v1481 = vmul.f32 %v1475, %v707
        %v1482 = vmul.f32 %v1471, %v1476
        %v1483 = vadd.f32 %v1481, %v1482
        %v1484 = vtanh.pop %v1483
        %v1485 = vmul.f32 %v1480, %v1484
        %v1486 = vpack.c.bf16 %v1485, %v1485
        %s1487 = smul.u32 1, 4
        %s1488 = smul.addr %s1487, 8
        %s1489 = scalar_lea.vmem [#allocation2], %s1488
        %v1490 = vld [vmem:[%s1489] sm:$0xff]
        %v1491 = vld [vmem:[%s1489 + $0x8] sm:$0xff]
        %v1492 = vld [vmem:[%s1489 + $0x10] sm:$0xff]
        %v1493 = vld [vmem:[%s1489 + $0x18] sm:$0xff]
        %1494 = vmatprep.subr.bf16.mxu0 %v840
        %1495 = vmatpush1.bf16.msra.mxu0 %v839
        %1496 = vmatprep.subr.bf16.mxu0 %v836
        %1497 = vmatpush1.bf16.msra.mxu0 %v835
        %1498 = vmatprep.subr.bf16.mxu0 %v832
        %1499 = vmatpush1.bf16.msra.mxu0 %v831
        %1500 = vmatprep.subr.bf16.mxu0 %v828
        %1501 = vmatpush1.bf16.msra.mxu0 %v827
        %1502 = vmatprep.subr.bf16.mxu0 %v824
        %1503 = vmatpush1.bf16.msra.mxu0 %v823
        %1504 = vmatprep.subr.bf16.mxu0 %v820
        %1505 = vmatpush1.bf16.msra.mxu0 %v819
        %1506 = vmatprep.subr.bf16.mxu0 %v816
        %1507 = vmatpush1.bf16.msra.mxu0 %v815
        %1508 = vmatprep.subr.bf16.mxu0 %v812
        %1509 = vmatpush1.bf16.msra.mxu0 %v811
        %1510 = vmatprep.subr.bf16.mxu0 0
        %1511 = vmatpush2.bf16.msra.mxu0 0
        %1512 = vmatprep.subr.bf16.mxu0 0
        %1513 = vmatpush2.bf16.msra.mxu0 0
        %1514 = vmatprep.subr.bf16.mxu0 0
        %1515 = vmatpush2.bf16.msra.mxu0 0
        %1516 = vmatprep.subr.bf16.mxu0 0
        %1517 = vmatpush2.bf16.msra.mxu0 0
        %1518 = vmatprep.subr.bf16.mxu0 0
        %1519 = vmatpush2.bf16.msra.mxu0 0
        %1520 = vmatprep.subr.bf16.mxu0 0
        %1521 = vmatpush2.bf16.msra.mxu0 0
        %1522 = vmatprep.subr.bf16.mxu0 0
        %1523 = vmatpush2.bf16.msra.mxu0 0
        %1524 = vmatprep.subr.bf16.mxu0 0
        %1525 = vmatpush2.bf16.msra.mxu0 0
        %1526 = vmatprep.mubr.bf16.mxu0 0
        %1527 = vmatmul.mubr.bf16.gmra.mxu0 %v979
        %v1528 = vpop.f32.mrf.mxu0
        %v1529 = vadd.f32 0.0, %v1528
        %v1530 = vpop.f32.mrf.mxu0
        %v1531 = vadd.f32 0.0, %v1530
        %v1532 = vpop.f32.mrf.mxu0
        %v1533 = vpop.f32.mrf.mxu0
        %1534 = vdwg.mxu0
        %1535 = vmatprep.subr.bf16.mxu0 %v842
        %1536 = vmatpush1.bf16.msra.mxu0 %v841
        %1537 = vmatprep.subr.bf16.mxu0 %v838
        %1538 = vmatpush1.bf16.msra.mxu0 %v837
        %1539 = vmatprep.subr.bf16.mxu0 %v834
        %1540 = vmatpush1.bf16.msra.mxu0 %v833
        %1541 = vmatprep.subr.bf16.mxu0 %v830
        %1542 = vmatpush1.bf16.msra.mxu0 %v829
        %1543 = vmatprep.subr.bf16.mxu0 %v826
        %1544 = vmatpush1.bf16.msra.mxu0 %v825
        %1545 = vmatprep.subr.bf16.mxu0 %v822
        %1546 = vmatpush1.bf16.msra.mxu0 %v821
        %1547 = vmatprep.subr.bf16.mxu0 %v818
        %1548 = vmatpush1.bf16.msra.mxu0 %v817
        %1549 = vmatprep.subr.bf16.mxu0 %v814
        %1550 = vmatpush1.bf16.msra.mxu0 %v813
        %1551 = vmatprep.subr.bf16.mxu0 0
        %1552 = vmatpush2.bf16.msra.mxu0 0
        %1553 = vmatprep.subr.bf16.mxu0 0
        %1554 = vmatpush2.bf16.msra.mxu0 0
        %1555 = vmatprep.subr.bf16.mxu0 0
        %1556 = vmatpush2.bf16.msra.mxu0 0
        %1557 = vmatprep.subr.bf16.mxu0 0
        %1558 = vmatpush2.bf16.msra.mxu0 0
        %1559 = vmatprep.subr.bf16.mxu0 0
        %1560 = vmatpush2.bf16.msra.mxu0 0
        %1561 = vmatprep.subr.bf16.mxu0 0
        %1562 = vmatpush2.bf16.msra.mxu0 0
        %1563 = vmatprep.subr.bf16.mxu0 0
        %1564 = vmatpush2.bf16.msra.mxu0 0
        %1565 = vmatprep.subr.bf16.mxu0 0
        %1566 = vmatpush2.bf16.msra.mxu0 0
        %1567 = vmatprep.mubr.bf16.mxu0 0
        %1568 = vmatmul.mubr.bf16.gmra.mxu0 %v979
        %v1569 = vpop.f32.mrf.mxu0
        %v1570 = vadd.f32 0.0, %v1569
        %v1571 = vpop.f32.mrf.mxu0
        %v1572 = vadd.f32 0.0, %v1571
        %v1573 = vpop.f32.mrf.mxu0
        %v1574 = vpop.f32.mrf.mxu0
        %1575 = vdwg.mxu0
        %v1576 = vadd.f32 %v1490, %v1529
        %v1577 = vadd.f32 %v1491, %v1531
        %v1578 = vadd.f32 %v1492, %v1570
        %v1579 = vadd.f32 %v1493, %v1572
        %v1580 = vmul.f32 %v1576, 0.5
        %v1581 = vtanh.pop %v1580
        %v1582 = vmul.f32 %v1581, 0.5
        %v1583 = vadd.f32 %v1582, 0.5
        %v1584 = vmul.f32 %v1577, 0.5
        %v1585 = vtanh.pop %v1584
        %v1586 = vmul.f32 %v1585, 0.5
        %v1587 = vadd.f32 %v1586, 0.5
        %v1588 = vtanh.pop %v1578
        %v1589 = vmul.f32 %v1579, 0.5
        %v1590 = vtanh.pop %v1589
        %v1591 = vmul.f32 %v1590, 0.5
        %v1592 = vadd.f32 %v1591, 0.5
        %v1593 = vmul.f32 %v1587, %v976
        %v1594 = vmul.f32 %v1583, %v1588
        %v1595 = vadd.f32 %v1593, %v1594
        %v1596 = vtanh.pop %v1595
        %v1597 = vmul.f32 %v1592, %v1596
        %v1598 = vpack.c.bf16 %v1597, %v1597
        %1599 = vmatprep.subr.bf16.mxu0 %v1105
        %1600 = vmatpush1.bf16.msra.mxu0 %v1104
        %1601 = vmatprep.subr.bf16.mxu0 %v1101
        %1602 = vmatpush1.bf16.msra.mxu0 %v1100
        %1603 = vmatprep.subr.bf16.mxu0 %v1097
        %1604 = vmatpush1.bf16.msra.mxu0 %v1096
        %1605 = vmatprep.subr.bf16.mxu0 %v1093
        %1606 = vmatpush1.bf16.msra.mxu0 %v1092
        %1607 = vmatprep.subr.bf16.mxu0 %v1089
        %1608 = vmatpush1.bf16.msra.mxu0 %v1088
        %1609 = vmatprep.subr.bf16.mxu0 %v1085
        %1610 = vmatpush1.bf16.msra.mxu0 %v1084
        %1611 = vmatprep.subr.bf16.mxu0 %v1081
        %1612 = vmatpush1.bf16.msra.mxu0 %v1080
        %1613 = vmatprep.subr.bf16.mxu0 %v1077
        %1614 = vmatpush1.bf16.msra.mxu0 %v1076
        %1615 = vmatprep.subr.bf16.mxu0 0
        %1616 = vmatpush2.bf16.msra.mxu0 0
        %1617 = vmatprep.subr.bf16.mxu0 0
        %1618 = vmatpush2.bf16.msra.mxu0 0
        %1619 = vmatprep.subr.bf16.mxu0 0
        %1620 = vmatpush2.bf16.msra.mxu0 0
        %1621 = vmatprep.subr.bf16.mxu0 0
        %1622 = vmatpush2.bf16.msra.mxu0 0
        %1623 = vmatprep.subr.bf16.mxu0 0
        %1624 = vmatpush2.bf16.msra.mxu0 0
        %1625 = vmatprep.subr.bf16.mxu0 0
        %1626 = vmatpush2.bf16.msra.mxu0 0
        %1627 = vmatprep.subr.bf16.mxu0 0
        %1628 = vmatpush2.bf16.msra.mxu0 0
        %1629 = vmatprep.subr.bf16.mxu0 0
        %1630 = vmatpush2.bf16.msra.mxu0 0
        %1631 = vmatprep.mubr.bf16.mxu0 0
        %1632 = vmatmul.mubr.bf16.gmra.mxu0 %v1486
        %v1633 = vpop.f32.mrf.mxu0
        %v1634 = vadd.f32 0.0, %v1633
        %v1635 = vpop.f32.mrf.mxu0
        %v1636 = vadd.f32 0.0, %v1635
        %v1637 = vpop.f32.mrf.mxu0
        %v1638 = vpop.f32.mrf.mxu0
        %1639 = vdwg.mxu0
        %1640 = vmatprep.subr.bf16.mxu0 %v1107
        %1641 = vmatpush1.bf16.msra.mxu0 %v1106
        %1642 = vmatprep.subr.bf16.mxu0 %v1103
        %1643 = vmatpush1.bf16.msra.mxu0 %v1102
        %1644 = vmatprep.subr.bf16.mxu0 %v1099
        %1645 = vmatpush1.bf16.msra.mxu0 %v1098
        %1646 = vmatprep.subr.bf16.mxu0 %v1095
        %1647 = vmatpush1.bf16.msra.mxu0 %v1094
        %1648 = vmatprep.subr.bf16.mxu0 %v1091
        %1649 = vmatpush1.bf16.msra.mxu0 %v1090
        %1650 = vmatprep.subr.bf16.mxu0 %v1087
        %1651 = vmatpush1.bf16.msra.mxu0 %v1086
        %1652 = vmatprep.subr.bf16.mxu0 %v1083
        %1653 = vmatpush1.bf16.msra.mxu0 %v1082
        %1654 = vmatprep.subr.bf16.mxu0 %v1079
        %1655 = vmatpush1.bf16.msra.mxu0 %v1078
        %1656 = vmatprep.subr.bf16.mxu0 0
        %1657 = vmatpush2.bf16.msra.mxu0 0
        %1658 = vmatprep.subr.bf16.mxu0 0
        %1659 = vmatpush2.bf16.msra.mxu0 0
        %1660 = vmatprep.subr.bf16.mxu0 0
        %1661 = vmatpush2.bf16.msra.mxu0 0
        %1662 = vmatprep.subr.bf16.mxu0 0
        %1663 = vmatpush2.bf16.msra.mxu0 0
        %1664 = vmatprep.subr.bf16.mxu0 0
        %1665 = vmatpush2.bf16.msra.mxu0 0
        %1666 = vmatprep.subr.bf16.mxu0 0
        %1667 = vmatpush2.bf16.msra.mxu0 0
        %1668 = vmatprep.subr.bf16.mxu0 0
        %1669 = vmatpush2.bf16.msra.mxu0 0
        %1670 = vmatprep.subr.bf16.mxu0 0
        %1671 = vmatpush2.bf16.msra.mxu0 0
        %1672 = vmatprep.mubr.bf16.mxu0 0
        %1673 = vmatmul.mubr.bf16.gmra.mxu0 %v1486
        %v1674 = vpop.f32.mrf.mxu0
        %v1675 = vadd.f32 0.0, %v1674
        %v1676 = vpop.f32.mrf.mxu0
        %v1677 = vadd.f32 0.0, %v1676
        %v1678 = vpop.f32.mrf.mxu0
        %v1679 = vpop.f32.mrf.mxu0
        %1680 = vdwg.mxu0
        %1681 = vmatprep.subr.bf16.mxu0 %v1347
        %1682 = vmatpush1.bf16.msra.mxu0 %v1346
        %1683 = vmatprep.subr.bf16.mxu0 %v1343
        %1684 = vmatpush1.bf16.msra.mxu0 %v1342
        %1685 = vmatprep.subr.bf16.mxu0 %v1339
        %1686 = vmatpush1.bf16.msra.mxu0 %v1338
        %1687 = vmatprep.subr.bf16.mxu0 %v1335
        %1688 = vmatpush1.bf16.msra.mxu0 %v1334
        %1689 = vmatprep.subr.bf16.mxu0 %v1331
        %1690 = vmatpush1.bf16.msra.mxu0 %v1330
        %1691 = vmatprep.subr.bf16.mxu0 %v1327
        %1692 = vmatpush1.bf16.msra.mxu0 %v1326
        %1693 = vmatprep.subr.bf16.mxu0 %v1323
        %1694 = vmatpush1.bf16.msra.mxu0 %v1322
        %1695 = vmatprep.subr.bf16.mxu0 %v1319
        %1696 = vmatpush1.bf16.msra.mxu0 %v1318
        %1697 = vmatprep.subr.bf16.mxu0 0
        %1698 = vmatpush2.bf16.msra.mxu0 0
        %1699 = vmatprep.subr.bf16.mxu0 0
        %1700 = vmatpush2.bf16.msra.mxu0 0
        %1701 = vmatprep.subr.bf16.mxu0 0
        %1702 = vmatpush2.bf16.msra.mxu0 0
        %1703 = vmatprep.subr.bf16.mxu0 0
        %1704 = vmatpush2.bf16.msra.mxu0 0
        %1705 = vmatprep.subr.bf16.mxu0 0
        %1706 = vmatpush2.bf16.msra.mxu0 0
        %1707 = vmatprep.subr.bf16.mxu0 0
        %1708 = vmatpush2.bf16.msra.mxu0 0
        %1709 = vmatprep.subr.bf16.mxu0 0
        %1710 = vmatpush2.bf16.msra.mxu0 0
        %1711 = vmatprep.subr.bf16.mxu0 0
        %1712 = vmatpush2.bf16.msra.mxu0 0
        %1713 = vmatprep.mubr.bf16.mxu0 0
        %1714 = vmatmul.mubr.bf16.gmra.mxu0 %v1598
        %v1715 = vpop.f32.mrf.mxu0
        %v1716 = vadd.f32 %v1634, %v1715
        %v1717 = vpop.f32.mrf.mxu0
        %v1718 = vadd.f32 %v1636, %v1717
        %v1719 = vpop.f32.mrf.mxu0
        %v1720 = vpop.f32.mrf.mxu0
        %1721 = vdwg.mxu0
        %1722 = vmatprep.subr.bf16.mxu0 %v1349
        %1723 = vmatpush1.bf16.msra.mxu0 %v1348
        %1724 = vmatprep.subr.bf16.mxu0 %v1345
        %1725 = vmatpush1.bf16.msra.mxu0 %v1344
        %1726 = vmatprep.subr.bf16.mxu0 %v1341
        %1727 = vmatpush1.bf16.msra.mxu0 %v1340
        %1728 = vmatprep.subr.bf16.mxu0 %v1337
        %1729 = vmatpush1.bf16.msra.mxu0 %v1336
        %1730 = vmatprep.subr.bf16.mxu0 %v1333
        %1731 = vmatpush1.bf16.msra.mxu0 %v1332
        %1732 = vmatprep.subr.bf16.mxu0 %v1329
        %1733 = vmatpush1.bf16.msra.mxu0 %v1328
        %1734 = vmatprep.subr.bf16.mxu0 %v1325
        %1735 = vmatpush1.bf16.msra.mxu0 %v1324
        %1736 = vmatprep.subr.bf16.mxu0 %v1321
        %1737 = vmatpush1.bf16.msra.mxu0 %v1320
        %1738 = vmatprep.subr.bf16.mxu0 0
        %1739 = vmatpush2.bf16.msra.mxu0 0
        %1740 = vmatprep.subr.bf16.mxu0 0
        %1741 = vmatpush2.bf16.msra.mxu0 0
        %1742 = vmatprep.subr.bf16.mxu0 0
        %1743 = vmatpush2.bf16.msra.mxu0 0
        %1744 = vmatprep.subr.bf16.mxu0 0
        %1745 = vmatpush2.bf16.msra.mxu0 0
        %1746 = vmatprep.subr.bf16.mxu0 0
        %1747 = vmatpush2.bf16.msra.mxu0 0
        %1748 = vmatprep.subr.bf16.mxu0 0
        %1749 = vmatpush2.bf16.msra.mxu0 0
        %1750 = vmatprep.subr.bf16.mxu0 0
        %1751 = vmatpush2.bf16.msra.mxu0 0
        %1752 = vmatprep.subr.bf16.mxu0 0
        %1753 = vmatpush2.bf16.msra.mxu0 0
        %1754 = vmatprep.mubr.bf16.mxu0 0
        %1755 = vmatmul.mubr.bf16.gmra.mxu0 %v1598
        %v1756 = vpop.f32.mrf.mxu0
        %v1757 = vadd.f32 %v1675, %v1756
        %v1758 = vpop.f32.mrf.mxu0
        %v1759 = vadd.f32 %v1677, %v1758
        %v1760 = vpop.f32.mrf.mxu0
        %v1761 = vpop.f32.mrf.mxu0
        %1762 = vdwg.mxu0
        %v1763 = vadd.f32 %v1716, %v687
        %v1764 = vadd.f32 %v1718, %v691
        %v1765 = vadd.f32 %v1757, %v695
        %v1766 = vadd.f32 %v1759, %v699
        %v1767 = vmul.f32 %v1763, 0.5
        %v1768 = vtanh.pop %v1767
        %v1769 = vmul.f32 %v1768, 0.5
        %v1770 = vadd.f32 %v1769, 0.5
        %v1771 = vmul.f32 %v1764, 0.5
        %v1772 = vtanh.pop %v1771
        %v1773 = vmul.f32 %v1772, 0.5
        %v1774 = vadd.f32 %v1773, 0.5
        %v1775 = vtanh.pop %v1765
        %v1776 = vmul.f32 %v1766, 0.5
        %v1777 = vtanh.pop %v1776
        %v1778 = vmul.f32 %v1777, 0.5
        %v1779 = vadd.f32 %v1778, 0.5
        %v1780 = vmul.f32 %v1774, %v1483
        %v1781 = vmul.f32 %v1770, %v1775
        %v1782 = vadd.f32 %v1780, %v1781
        %v1783 = vtanh.pop %v1782
        %v1784 = vmul.f32 %v1779, %v1783
        %v1785 = vpack.c.bf16 %v1784, %v1784
        %s1786 = smul.u32 2, 4
        %s1787 = smul.addr %s1786, 8
        %s1788 = scalar_lea.vmem [#allocation2], %s1787
        %v1789 = vld [vmem:[%s1788] sm:$0xff]
        %v1790 = vld [vmem:[%s1788 + $0x8] sm:$0xff]
        %v1791 = vld [vmem:[%s1788 + $0x10] sm:$0xff]
        %v1792 = vld [vmem:[%s1788 + $0x18] sm:$0xff]
        %1793 = vmatprep.subr.bf16.mxu0 %v840
        %1794 = vmatpush1.bf16.msra.mxu0 %v839
        %1795 = vmatprep.subr.bf16.mxu0 %v836
        %1796 = vmatpush1.bf16.msra.mxu0 %v835
        %1797 = vmatprep.subr.bf16.mxu0 %v832
        %1798 = vmatpush1.bf16.msra.mxu0 %v831
        %1799 = vmatprep.subr.bf16.mxu0 %v828
        %1800 = vmatpush1.bf16.msra.mxu0 %v827
        %1801 = vmatprep.subr.bf16.mxu0 %v824
        %1802 = vmatpush1.bf16.msra.mxu0 %v823
        %1803 = vmatprep.subr.bf16.mxu0 %v820
        %1804 = vmatpush1.bf16.msra.mxu0 %v819
        %1805 = vmatprep.subr.bf16.mxu0 %v816
        %1806 = vmatpush1.bf16.msra.mxu0 %v815
        %1807 = vmatprep.subr.bf16.mxu0 %v812
        %1808 = vmatpush1.bf16.msra.mxu0 %v811
        %1809 = vmatprep.subr.bf16.mxu0 0
        %1810 = vmatpush2.bf16.msra.mxu0 0
        %1811 = vmatprep.subr.bf16.mxu0 0
        %1812 = vmatpush2.bf16.msra.mxu0 0
        %1813 = vmatprep.subr.bf16.mxu0 0
        %1814 = vmatpush2.bf16.msra.mxu0 0
        %1815 = vmatprep.subr.bf16.mxu0 0
        %1816 = vmatpush2.bf16.msra.mxu0 0
        %1817 = vmatprep.subr.bf16.mxu0 0
        %1818 = vmatpush2.bf16.msra.mxu0 0
        %1819 = vmatprep.subr.bf16.mxu0 0
        %1820 = vmatpush2.bf16.msra.mxu0 0
        %1821 = vmatprep.subr.bf16.mxu0 0
        %1822 = vmatpush2.bf16.msra.mxu0 0
        %1823 = vmatprep.subr.bf16.mxu0 0
        %1824 = vmatpush2.bf16.msra.mxu0 0
        %1825 = vmatprep.mubr.bf16.mxu0 0
        %1826 = vmatmul.mubr.bf16.gmra.mxu0 %v1598
        %v1827 = vpop.f32.mrf.mxu0
        %v1828 = vadd.f32 0.0, %v1827
        %v1829 = vpop.f32.mrf.mxu0
        %v1830 = vadd.f32 0.0, %v1829
        %v1831 = vpop.f32.mrf.mxu0
        %v1832 = vpop.f32.mrf.mxu0
        %1833 = vdwg.mxu0
        %1834 = vmatprep.subr.bf16.mxu0 %v842
        %1835 = vmatpush1.bf16.msra.mxu0 %v841
        %1836 = vmatprep.subr.bf16.mxu0 %v838
        %1837 = vmatpush1.bf16.msra.mxu0 %v837
        %1838 = vmatprep.subr.bf16.mxu0 %v834
        %1839 = vmatpush1.bf16.msra.mxu0 %v833
        %1840 = vmatprep.subr.bf16.mxu0 %v830
        %1841 = vmatpush1.bf16.msra.mxu0 %v829
        %1842 = vmatprep.subr.bf16.mxu0 %v826
        %1843 = vmatpush1.bf16.msra.mxu0 %v825
        %1844 = vmatprep.subr.bf16.mxu0 %v822
        %1845 = vmatpush1.bf16.msra.mxu0 %v821
        %1846 = vmatprep.subr.bf16.mxu0 %v818
        %1847 = vmatpush1.bf16.msra.mxu0 %v817
        %1848 = vmatprep.subr.bf16.mxu0 %v814
        %1849 = vmatpush1.bf16.msra.mxu0 %v813
        %1850 = vmatprep.subr.bf16.mxu0 0
        %1851 = vmatpush2.bf16.msra.mxu0 0
        %1852 = vmatprep.subr.bf16.mxu0 0
        %1853 = vmatpush2.bf16.msra.mxu0 0
        %1854 = vmatprep.subr.bf16.mxu0 0
        %1855 = vmatpush2.bf16.msra.mxu0 0
        %1856 = vmatprep.subr.bf16.mxu0 0
        %1857 = vmatpush2.bf16.msra.mxu0 0
        %1858 = vmatprep.subr.bf16.mxu0 0
        %1859 = vmatpush2.bf16.msra.mxu0 0
        %1860 = vmatprep.subr.bf16.mxu0 0
        %1861 = vmatpush2.bf16.msra.mxu0 0
        %1862 = vmatprep.subr.bf16.mxu0 0
        %1863 = vmatpush2.bf16.msra.mxu0 0
        %1864 = vmatprep.subr.bf16.mxu0 0
        %1865 = vmatpush2.bf16.msra.mxu0 0
        %1866 = vmatprep.mubr.bf16.mxu0 0
        %1867 = vmatmul.mubr.bf16.gmra.mxu0 %v1598
        %v1868 = vpop.f32.mrf.mxu0
        %v1869 = vadd.f32 0.0, %v1868
        %v1870 = vpop.f32.mrf.mxu0
        %v1871 = vadd.f32 0.0, %v1870
        %v1872 = vpop.f32.mrf.mxu0
        %v1873 = vpop.f32.mrf.mxu0
        %1874 = vdwg.mxu0
        %v1875 = vadd.f32 %v1789, %v1828
        %v1876 = vadd.f32 %v1790, %v1830
        %v1877 = vadd.f32 %v1791, %v1869
        %v1878 = vadd.f32 %v1792, %v1871
        %v1879 = vmul.f32 %v1875, 0.5
        %v1880 = vtanh.pop %v1879
        %v1881 = vmul.f32 %v1880, 0.5
        %v1882 = vadd.f32 %v1881, 0.5
        %v1883 = vmul.f32 %v1876, 0.5
        %v1884 = vtanh.pop %v1883
        %v1885 = vmul.f32 %v1884, 0.5
        %v1886 = vadd.f32 %v1885, 0.5
        %v1887 = vtanh.pop %v1877
        %v1888 = vmul.f32 %v1878, 0.5
        %v1889 = vtanh.pop %v1888
        %v1890 = vmul.f32 %v1889, 0.5
        %v1891 = vadd.f32 %v1890, 0.5
        %v1892 = vmul.f32 %v1886, %v1595
        %v1893 = vmul.f32 %v1882, %v1887
        %v1894 = vadd.f32 %v1892, %v1893
        %v1895 = vtanh.pop %v1894
        %v1896 = vmul.f32 %v1891, %v1895
        %v1897 = vpack.c.bf16 %v1896, %v1896
        %1898 = vmatprep.subr.bf16.mxu0 %v1105
        %1899 = vmatpush1.bf16.msra.mxu0 %v1104
        %1900 = vmatprep.subr.bf16.mxu0 %v1101
        %1901 = vmatpush1.bf16.msra.mxu0 %v1100
        %1902 = vmatprep.subr.bf16.mxu0 %v1097
        %1903 = vmatpush1.bf16.msra.mxu0 %v1096
        %1904 = vmatprep.subr.bf16.mxu0 %v1093
        %1905 = vmatpush1.bf16.msra.mxu0 %v1092
        %1906 = vmatprep.subr.bf16.mxu0 %v1089
        %1907 = vmatpush1.bf16.msra.mxu0 %v1088
        %1908 = vmatprep.subr.bf16.mxu0 %v1085
        %1909 = vmatpush1.bf16.msra.mxu0 %v1084
        %1910 = vmatprep.subr.bf16.mxu0 %v1081
        %1911 = vmatpush1.bf16.msra.mxu0 %v1080
        %1912 = vmatprep.subr.bf16.mxu0 %v1077
        %1913 = vmatpush1.bf16.msra.mxu0 %v1076
        %1914 = vmatprep.subr.bf16.mxu0 0
        %1915 = vmatpush2.bf16.msra.mxu0 0
        %1916 = vmatprep.subr.bf16.mxu0 0
        %1917 = vmatpush2.bf16.msra.mxu0 0
        %1918 = vmatprep.subr.bf16.mxu0 0
        %1919 = vmatpush2.bf16.msra.mxu0 0
        %1920 = vmatprep.subr.bf16.mxu0 0
        %1921 = vmatpush2.bf16.msra.mxu0 0
        %1922 = vmatprep.subr.bf16.mxu0 0
        %1923 = vmatpush2.bf16.msra.mxu0 0
        %1924 = vmatprep.subr.bf16.mxu0 0
        %1925 = vmatpush2.bf16.msra.mxu0 0
        %1926 = vmatprep.subr.bf16.mxu0 0
        %1927 = vmatpush2.bf16.msra.mxu0 0
        %1928 = vmatprep.subr.bf16.mxu0 0
        %1929 = vmatpush2.bf16.msra.mxu0 0
        %1930 = vmatprep.mubr.bf16.mxu0 0
        %1931 = vmatmul.mubr.bf16.gmra.mxu0 %v1785
        %v1932 = vpop.f32.mrf.mxu0
        %v1933 = vadd.f32 0.0, %v1932
        %v1934 = vpop.f32.mrf.mxu0
        %v1935 = vadd.f32 0.0, %v1934
        %v1936 = vpop.f32.mrf.mxu0
        %v1937 = vpop.f32.mrf.mxu0
        %1938 = vdwg.mxu0
        %1939 = vmatprep.subr.bf16.mxu0 %v1107
        %1940 = vmatpush1.bf16.msra.mxu0 %v1106
        %1941 = vmatprep.subr.bf16.mxu0 %v1103
        %1942 = vmatpush1.bf16.msra.mxu0 %v1102
        %1943 = vmatprep.subr.bf16.mxu0 %v1099
        %1944 = vmatpush1.bf16.msra.mxu0 %v1098
        %1945 = vmatprep.subr.bf16.mxu0 %v1095
        %1946 = vmatpush1.bf16.msra.mxu0 %v1094
        %1947 = vmatprep.subr.bf16.mxu0 %v1091
        %1948 = vmatpush1.bf16.msra.mxu0 %v1090
        %1949 = vmatprep.subr.bf16.mxu0 %v1087
        %1950 = vmatpush1.bf16.msra.mxu0 %v1086
        %1951 = vmatprep.subr.bf16.mxu0 %v1083
        %1952 = vmatpush1.bf16.msra.mxu0 %v1082
        %1953 = vmatprep.subr.bf16.mxu0 %v1079
        %1954 = vmatpush1.bf16.msra.mxu0 %v1078
        %1955 = vmatprep.subr.bf16.mxu0 0
        %1956 = vmatpush2.bf16.msra.mxu0 0
        %1957 = vmatprep.subr.bf16.mxu0 0
        %1958 = vmatpush2.bf16.msra.mxu0 0
        %1959 = vmatprep.subr.bf16.mxu0 0
        %1960 = vmatpush2.bf16.msra.mxu0 0
        %1961 = vmatprep.subr.bf16.mxu0 0
        %1962 = vmatpush2.bf16.msra.mxu0 0
        %1963 = vmatprep.subr.bf16.mxu0 0
        %1964 = vmatpush2.bf16.msra.mxu0 0
        %1965 = vmatprep.subr.bf16.mxu0 0
        %1966 = vmatpush2.bf16.msra.mxu0 0
        %1967 = vmatprep.subr.bf16.mxu0 0
        %1968 = vmatpush2.bf16.msra.mxu0 0
        %1969 = vmatprep.subr.bf16.mxu0 0
        %1970 = vmatpush2.bf16.msra.mxu0 0
        %1971 = vmatprep.mubr.bf16.mxu0 0
        %1972 = vmatmul.mubr.bf16.gmra.mxu0 %v1785
        %v1973 = vpop.f32.mrf.mxu0
        %v1974 = vadd.f32 0.0, %v1973
        %v1975 = vpop.f32.mrf.mxu0
        %v1976 = vadd.f32 0.0, %v1975
        %v1977 = vpop.f32.mrf.mxu0
        %v1978 = vpop.f32.mrf.mxu0
        %1979 = vdwg.mxu0
        %1980 = vmatprep.subr.bf16.mxu0 %v1347
        %1981 = vmatpush1.bf16.msra.mxu0 %v1346
        %1982 = vmatprep.subr.bf16.mxu0 %v1343
        %1983 = vmatpush1.bf16.msra.mxu0 %v1342
        %1984 = vmatprep.subr.bf16.mxu0 %v1339
        %1985 = vmatpush1.bf16.msra.mxu0 %v1338
        %1986 = vmatprep.subr.bf16.mxu0 %v1335
        %1987 = vmatpush1.bf16.msra.mxu0 %v1334
        %1988 = vmatprep.subr.bf16.mxu0 %v1331
        %1989 = vmatpush1.bf16.msra.mxu0 %v1330
        %1990 = vmatprep.subr.bf16.mxu0 %v1327
        %1991 = vmatpush1.bf16.msra.mxu0 %v1326
        %1992 = vmatprep.subr.bf16.mxu0 %v1323
        %1993 = vmatpush1.bf16.msra.mxu0 %v1322
        %1994 = vmatprep.subr.bf16.mxu0 %v1319
        %1995 = vmatpush1.bf16.msra.mxu0 %v1318
        %1996 = vmatprep.subr.bf16.mxu0 0
        %1997 = vmatpush2.bf16.msra.mxu0 0
        %1998 = vmatprep.subr.bf16.mxu0 0
        %1999 = vmatpush2.bf16.msra.mxu0 0
        %2000 = vmatprep.subr.bf16.mxu0 0
        %2001 = vmatpush2.bf16.msra.mxu0 0
        %2002 = vmatprep.subr.bf16.mxu0 0
        %2003 = vmatpush2.bf16.msra.mxu0 0
        %2004 = vmatprep.subr.bf16.mxu0 0
        %2005 = vmatpush2.bf16.msra.mxu0 0
        %2006 = vmatprep.subr.bf16.mxu0 0
        %2007 = vmatpush2.bf16.msra.mxu0 0
        %2008 = vmatprep.subr.bf16.mxu0 0
        %2009 = vmatpush2.bf16.msra.mxu0 0
        %2010 = vmatprep.subr.bf16.mxu0 0
        %2011 = vmatpush2.bf16.msra.mxu0 0
        %2012 = vmatprep.mubr.bf16.mxu0 0
        %2013 = vmatmul.mubr.bf16.gmra.mxu0 %v1897
        %v2014 = vpop.f32.mrf.mxu0
        %v2015 = vadd.f32 %v1933, %v2014
        %v2016 = vpop.f32.mrf.mxu0
        %v2017 = vadd.f32 %v1935, %v2016
        %v2018 = vpop.f32.mrf.mxu0
        %v2019 = vpop.f32.mrf.mxu0
        %2020 = vdwg.mxu0
        %2021 = vmatprep.subr.bf16.mxu0 %v1349
        %2022 = vmatpush1.bf16.msra.mxu0 %v1348
        %2023 = vmatprep.subr.bf16.mxu0 %v1345
        %2024 = vmatpush1.bf16.msra.mxu0 %v1344
        %2025 = vmatprep.subr.bf16.mxu0 %v1341
        %2026 = vmatpush1.bf16.msra.mxu0 %v1340
        %2027 = vmatprep.subr.bf16.mxu0 %v1337
        %2028 = vmatpush1.bf16.msra.mxu0 %v1336
        %2029 = vmatprep.subr.bf16.mxu0 %v1333
        %2030 = vmatpush1.bf16.msra.mxu0 %v1332
        %2031 = vmatprep.subr.bf16.mxu0 %v1329
        %2032 = vmatpush1.bf16.msra.mxu0 %v1328
        %2033 = vmatprep.subr.bf16.mxu0 %v1325
        %2034 = vmatpush1.bf16.msra.mxu0 %v1324
        %2035 = vmatprep.subr.bf16.mxu0 %v1321
        %2036 = vmatpush1.bf16.msra.mxu0 %v1320
        %2037 = vmatprep.subr.bf16.mxu0 0
        %2038 = vmatpush2.bf16.msra.mxu0 0
        %2039 = vmatprep.subr.bf16.mxu0 0
        %2040 = vmatpush2.bf16.msra.mxu0 0
        %2041 = vmatprep.subr.bf16.mxu0 0
        %2042 = vmatpush2.bf16.msra.mxu0 0
        %2043 = vmatprep.subr.bf16.mxu0 0
        %2044 = vmatpush2.bf16.msra.mxu0 0
        %2045 = vmatprep.subr.bf16.mxu0 0
        %2046 = vmatpush2.bf16.msra.mxu0 0
        %2047 = vmatprep.subr.bf16.mxu0 0
        %2048 = vmatpush2.bf16.msra.mxu0 0
        %2049 = vmatprep.subr.bf16.mxu0 0
        %2050 = vmatpush2.bf16.msra.mxu0 0
        %2051 = vmatprep.subr.bf16.mxu0 0
        %2052 = vmatpush2.bf16.msra.mxu0 0
        %2053 = vmatprep.mubr.bf16.mxu0 0
        %2054 = vmatmul.mubr.bf16.gmra.mxu0 %v1897
        %v2055 = vpop.f32.mrf.mxu0
        %v2056 = vadd.f32 %v1974, %v2055
        %v2057 = vpop.f32.mrf.mxu0
        %v2058 = vadd.f32 %v1976, %v2057
        %v2059 = vpop.f32.mrf.mxu0
        %v2060 = vpop.f32.mrf.mxu0
        %2061 = vdwg.mxu0
        %v2062 = vadd.f32 %v2015, %v687
        %v2063 = vadd.f32 %v2017, %v691
        %v2064 = vadd.f32 %v2056, %v695
        %v2065 = vadd.f32 %v2058, %v699
        %v2066 = vmul.f32 %v2062, 0.5
        %v2067 = vtanh.pop %v2066
        %v2068 = vmul.f32 %v2067, 0.5
        %v2069 = vadd.f32 %v2068, 0.5
        %v2070 = vmul.f32 %v2063, 0.5
        %v2071 = vtanh.pop %v2070
        %v2072 = vmul.f32 %v2071, 0.5
        %v2073 = vadd.f32 %v2072, 0.5
        %v2074 = vtanh.pop %v2064
        %v2075 = vmul.f32 %v2065, 0.5
        %v2076 = vtanh.pop %v2075
        %v2077 = vmul.f32 %v2076, 0.5
        %v2078 = vadd.f32 %v2077, 0.5
        %v2079 = vmul.f32 %v2073, %v1782
        %v2080 = vmul.f32 %v2069, %v2074
        %v2081 = vadd.f32 %v2079, %v2080
        %v2082 = vtanh.pop %v2081
        %v2083 = vmul.f32 %v2078, %v2082
        %v2084 = vpack.c.bf16 %v2083, %v2083
        %s2085 = smul.u32 3, 4
        %s2086 = smul.addr %s2085, 8
        %s2087 = scalar_lea.vmem [#allocation2], %s2086
        %v2088 = vld [vmem:[%s2087] sm:$0xff]
        %v2089 = vld [vmem:[%s2087 + $0x8] sm:$0xff]
        %v2090 = vld [vmem:[%s2087 + $0x10] sm:$0xff]
        %v2091 = vld [vmem:[%s2087 + $0x18] sm:$0xff]
        %2092 = vmatprep.subr.bf16.mxu0 %v840
        %2093 = vmatpush1.bf16.msra.mxu0 %v839
        %2094 = vmatprep.subr.bf16.mxu0 %v836
        %2095 = vmatpush1.bf16.msra.mxu0 %v835
        %2096 = vmatprep.subr.bf16.mxu0 %v832
        %2097 = vmatpush1.bf16.msra.mxu0 %v831
        %2098 = vmatprep.subr.bf16.mxu0 %v828
        %2099 = vmatpush1.bf16.msra.mxu0 %v827
        %2100 = vmatprep.subr.bf16.mxu0 %v824
        %2101 = vmatpush1.bf16.msra.mxu0 %v823
        %2102 = vmatprep.subr.bf16.mxu0 %v820
        %2103 = vmatpush1.bf16.msra.mxu0 %v819
        %2104 = vmatprep.subr.bf16.mxu0 %v816
        %2105 = vmatpush1.bf16.msra.mxu0 %v815
        %2106 = vmatprep.subr.bf16.mxu0 %v812
        %2107 = vmatpush1.bf16.msra.mxu0 %v811
        %2108 = vmatprep.subr.bf16.mxu0 0
        %2109 = vmatpush2.bf16.msra.mxu0 0
        %2110 = vmatprep.subr.bf16.mxu0 0
        %2111 = vmatpush2.bf16.msra.mxu0 0
        %2112 = vmatprep.subr.bf16.mxu0 0
        %2113 = vmatpush2.bf16.msra.mxu0 0
        %2114 = vmatprep.subr.bf16.mxu0 0
        %2115 = vmatpush2.bf16.msra.mxu0 0
        %2116 = vmatprep.subr.bf16.mxu0 0
        %2117 = vmatpush2.bf16.msra.mxu0 0
        %2118 = vmatprep.subr.bf16.mxu0 0
        %2119 = vmatpush2.bf16.msra.mxu0 0
        %2120 = vmatprep.subr.bf16.mxu0 0
        %2121 = vmatpush2.bf16.msra.mxu0 0
        %2122 = vmatprep.subr.bf16.mxu0 0
        %2123 = vmatpush2.bf16.msra.mxu0 0
        %2124 = vmatprep.mubr.bf16.mxu0 0
        %2125 = vmatmul.mubr.bf16.gmra.mxu0 %v1897
        %v2126 = vpop.f32.mrf.mxu0
        %v2127 = vadd.f32 0.0, %v2126
        %v2128 = vpop.f32.mrf.mxu0
        %v2129 = vadd.f32 0.0, %v2128
        %v2130 = vpop.f32.mrf.mxu0
        %v2131 = vpop.f32.mrf.mxu0
        %2132 = vdwg.mxu0
        %2133 = vmatprep.subr.bf16.mxu0 %v842
        %2134 = vmatpush1.bf16.msra.mxu0 %v841
        %2135 = vmatprep.subr.bf16.mxu0 %v838
        %2136 = vmatpush1.bf16.msra.mxu0 %v837
        %2137 = vmatprep.subr.bf16.mxu0 %v834
        %2138 = vmatpush1.bf16.msra.mxu0 %v833
        %2139 = vmatprep.subr.bf16.mxu0 %v830
        %2140 = vmatpush1.bf16.msra.mxu0 %v829
        %2141 = vmatprep.subr.bf16.mxu0 %v826
        %2142 = vmatpush1.bf16.msra.mxu0 %v825
        %2143 = vmatprep.subr.bf16.mxu0 %v822
        %2144 = vmatpush1.bf16.msra.mxu0 %v821
        %2145 = vmatprep.subr.bf16.mxu0 %v818
        %2146 = vmatpush1.bf16.msra.mxu0 %v817
        %2147 = vmatprep.subr.bf16.mxu0 %v814
        %2148 = vmatpush1.bf16.msra.mxu0 %v813
        %2149 = vmatprep.subr.bf16.mxu0 0
        %2150 = vmatpush2.bf16.msra.mxu0 0
        %2151 = vmatprep.subr.bf16.mxu0 0
        %2152 = vmatpush2.bf16.msra.mxu0 0
        %2153 = vmatprep.subr.bf16.mxu0 0
        %2154 = vmatpush2.bf16.msra.mxu0 0
        %2155 = vmatprep.subr.bf16.mxu0 0
        %2156 = vmatpush2.bf16.msra.mxu0 0
        %2157 = vmatprep.subr.bf16.mxu0 0
        %2158 = vmatpush2.bf16.msra.mxu0 0
        %2159 = vmatprep.subr.bf16.mxu0 0
        %2160 = vmatpush2.bf16.msra.mxu0 0
        %2161 = vmatprep.subr.bf16.mxu0 0
        %2162 = vmatpush2.bf16.msra.mxu0 0
        %2163 = vmatprep.subr.bf16.mxu0 0
        %2164 = vmatpush2.bf16.msra.mxu0 0
        %2165 = vmatprep.mubr.bf16.mxu0 0
        %2166 = vmatmul.mubr.bf16.gmra.mxu0 %v1897
        %v2167 = vpop.f32.mrf.mxu0
        %v2168 = vadd.f32 0.0, %v2167
        %v2169 = vpop.f32.mrf.mxu0
        %v2170 = vadd.f32 0.0, %v2169
        %v2171 = vpop.f32.mrf.mxu0
        %v2172 = vpop.f32.mrf.mxu0
        %2173 = vdwg.mxu0
        %v2174 = vadd.f32 %v2088, %v2127
        %v2175 = vadd.f32 %v2089, %v2129
        %v2176 = vadd.f32 %v2090, %v2168
        %v2177 = vadd.f32 %v2091, %v2170
        %v2178 = vmul.f32 %v2174, 0.5
        %v2179 = vtanh.pop %v2178
        %v2180 = vmul.f32 %v2179, 0.5
        %v2181 = vadd.f32 %v2180, 0.5
        %v2182 = vmul.f32 %v2175, 0.5
        %v2183 = vtanh.pop %v2182
        %v2184 = vmul.f32 %v2183, 0.5
        %v2185 = vadd.f32 %v2184, 0.5
        %v2186 = vtanh.pop %v2176
        %v2187 = vmul.f32 %v2177, 0.5
        %v2188 = vtanh.pop %v2187
        %v2189 = vmul.f32 %v2188, 0.5
        %v2190 = vadd.f32 %v2189, 0.5
        %v2191 = vmul.f32 %v2185, %v1894
        %v2192 = vmul.f32 %v2181, %v2186
        %v2193 = vadd.f32 %v2191, %v2192
        %v2194 = vtanh.pop %v2193
        %v2195 = vmul.f32 %v2190, %v2194
        %v2196 = vpack.c.bf16 %v2195, %v2195
        %2197 = vmatprep.subr.bf16.mxu0 %v1105
        %2198 = vmatpush1.bf16.msra.mxu0 %v1104
        %2199 = vmatprep.subr.bf16.mxu0 %v1101
        %2200 = vmatpush1.bf16.msra.mxu0 %v1100
        %2201 = vmatprep.subr.bf16.mxu0 %v1097
        %2202 = vmatpush1.bf16.msra.mxu0 %v1096
        %2203 = vmatprep.subr.bf16.mxu0 %v1093
        %2204 = vmatpush1.bf16.msra.mxu0 %v1092
        %2205 = vmatprep.subr.bf16.mxu0 %v1089
        %2206 = vmatpush1.bf16.msra.mxu0 %v1088
        %2207 = vmatprep.subr.bf16.mxu0 %v1085
        %2208 = vmatpush1.bf16.msra.mxu0 %v1084
        %2209 = vmatprep.subr.bf16.mxu0 %v1081
        %2210 = vmatpush1.bf16.msra.mxu0 %v1080
        %2211 = vmatprep.subr.bf16.mxu0 %v1077
        %2212 = vmatpush1.bf16.msra.mxu0 %v1076
        %2213 = vmatprep.subr.bf16.mxu0 0
        %2214 = vmatpush2.bf16.msra.mxu0 0
        %2215 = vmatprep.subr.bf16.mxu0 0
        %2216 = vmatpush2.bf16.msra.mxu0 0
        %2217 = vmatprep.subr.bf16.mxu0 0
        %2218 = vmatpush2.bf16.msra.mxu0 0
        %2219 = vmatprep.subr.bf16.mxu0 0
        %2220 = vmatpush2.bf16.msra.mxu0 0
        %2221 = vmatprep.subr.bf16.mxu0 0
        %2222 = vmatpush2.bf16.msra.mxu0 0
        %2223 = vmatprep.subr.bf16.mxu0 0
        %2224 = vmatpush2.bf16.msra.mxu0 0
        %2225 = vmatprep.subr.bf16.mxu0 0
        %2226 = vmatpush2.bf16.msra.mxu0 0
        %2227 = vmatprep.subr.bf16.mxu0 0
        %2228 = vmatpush2.bf16.msra.mxu0 0
        %2229 = vmatprep.mubr.bf16.mxu0 0
        %2230 = vmatmul.mubr.bf16.gmra.mxu0 %v2084
        %v2231 = vpop.f32.mrf.mxu0
        %v2232 = vadd.f32 0.0, %v2231
        %v2233 = vpop.f32.mrf.mxu0
        %v2234 = vadd.f32 0.0, %v2233
        %v2235 = vpop.f32.mrf.mxu0
        %v2236 = vpop.f32.mrf.mxu0
        %2237 = vdwg.mxu0
        %2238 = vmatprep.subr.bf16.mxu0 %v1107
        %2239 = vmatpush1.bf16.msra.mxu0 %v1106
        %2240 = vmatprep.subr.bf16.mxu0 %v1103
        %2241 = vmatpush1.bf16.msra.mxu0 %v1102
        %2242 = vmatprep.subr.bf16.mxu0 %v1099
        %2243 = vmatpush1.bf16.msra.mxu0 %v1098
        %2244 = vmatprep.subr.bf16.mxu0 %v1095
        %2245 = vmatpush1.bf16.msra.mxu0 %v1094
        %2246 = vmatprep.subr.bf16.mxu0 %v1091
        %2247 = vmatpush1.bf16.msra.mxu0 %v1090
        %2248 = vmatprep.subr.bf16.mxu0 %v1087
        %2249 = vmatpush1.bf16.msra.mxu0 %v1086
        %2250 = vmatprep.subr.bf16.mxu0 %v1083
        %2251 = vmatpush1.bf16.msra.mxu0 %v1082
        %2252 = vmatprep.subr.bf16.mxu0 %v1079
        %2253 = vmatpush1.bf16.msra.mxu0 %v1078
        %2254 = vmatprep.subr.bf16.mxu0 0
        %2255 = vmatpush2.bf16.msra.mxu0 0
        %2256 = vmatprep.subr.bf16.mxu0 0
        %2257 = vmatpush2.bf16.msra.mxu0 0
        %2258 = vmatprep.subr.bf16.mxu0 0
        %2259 = vmatpush2.bf16.msra.mxu0 0
        %2260 = vmatprep.subr.bf16.mxu0 0
        %2261 = vmatpush2.bf16.msra.mxu0 0
        %2262 = vmatprep.subr.bf16.mxu0 0
        %2263 = vmatpush2.bf16.msra.mxu0 0
        %2264 = vmatprep.subr.bf16.mxu0 0
        %2265 = vmatpush2.bf16.msra.mxu0 0
        %2266 = vmatprep.subr.bf16.mxu0 0
        %2267 = vmatpush2.bf16.msra.mxu0 0
        %2268 = vmatprep.subr.bf16.mxu0 0
        %2269 = vmatpush2.bf16.msra.mxu0 0
        %2270 = vmatprep.mubr.bf16.mxu0 0
        %2271 = vmatmul.mubr.bf16.gmra.mxu0 %v2084
        %v2272 = vpop.f32.mrf.mxu0
        %v2273 = vadd.f32 0.0, %v2272
        %v2274 = vpop.f32.mrf.mxu0
        %v2275 = vadd.f32 0.0, %v2274
        %v2276 = vpop.f32.mrf.mxu0
        %v2277 = vpop.f32.mrf.mxu0
        %2278 = vdwg.mxu0
        %2279 = vmatprep.subr.bf16.mxu0 %v1347
        %2280 = vmatpush1.bf16.msra.mxu0 %v1346
        %2281 = vmatprep.subr.bf16.mxu0 %v1343
        %2282 = vmatpush1.bf16.msra.mxu0 %v1342
        %2283 = vmatprep.subr.bf16.mxu0 %v1339
        %2284 = vmatpush1.bf16.msra.mxu0 %v1338
        %2285 = vmatprep.subr.bf16.mxu0 %v1335
        %2286 = vmatpush1.bf16.msra.mxu0 %v1334
        %2287 = vmatprep.subr.bf16.mxu0 %v1331
        %2288 = vmatpush1.bf16.msra.mxu0 %v1330
        %2289 = vmatprep.subr.bf16.mxu0 %v1327
        %2290 = vmatpush1.bf16.msra.mxu0 %v1326
        %2291 = vmatprep.subr.bf16.mxu0 %v1323
        %2292 = vmatpush1.bf16.msra.mxu0 %v1322
        %2293 = vmatprep.subr.bf16.mxu0 %v1319
        %2294 = vmatpush1.bf16.msra.mxu0 %v1318
        %2295 = vmatprep.subr.bf16.mxu0 0
        %2296 = vmatpush2.bf16.msra.mxu0 0
        %2297 = vmatprep.subr.bf16.mxu0 0
        %2298 = vmatpush2.bf16.msra.mxu0 0
        %2299 = vmatprep.subr.bf16.mxu0 0
        %2300 = vmatpush2.bf16.msra.mxu0 0
        %2301 = vmatprep.subr.bf16.mxu0 0
        %2302 = vmatpush2.bf16.msra.mxu0 0
        %2303 = vmatprep.subr.bf16.mxu0 0
        %2304 = vmatpush2.bf16.msra.mxu0 0
        %2305 = vmatprep.subr.bf16.mxu0 0
        %2306 = vmatpush2.bf16.msra.mxu0 0
        %2307 = vmatprep.subr.bf16.mxu0 0
        %2308 = vmatpush2.bf16.msra.mxu0 0
        %2309 = vmatprep.subr.bf16.mxu0 0
        %2310 = vmatpush2.bf16.msra.mxu0 0
        %2311 = vmatprep.mubr.bf16.mxu0 0
        %2312 = vmatmul.mubr.bf16.gmra.mxu0 %v2196
        %v2313 = vpop.f32.mrf.mxu0
        %v2314 = vadd.f32 %v2232, %v2313
        %v2315 = vpop.f32.mrf.mxu0
        %v2316 = vadd.f32 %v2234, %v2315
        %v2317 = vpop.f32.mrf.mxu0
        %v2318 = vpop.f32.mrf.mxu0
        %2319 = vdwg.mxu0
        %2320 = vmatprep.subr.bf16.mxu0 %v1349
        %2321 = vmatpush1.bf16.msra.mxu0 %v1348
        %2322 = vmatprep.subr.bf16.mxu0 %v1345
        %2323 = vmatpush1.bf16.msra.mxu0 %v1344
        %2324 = vmatprep.subr.bf16.mxu0 %v1341
        %2325 = vmatpush1.bf16.msra.mxu0 %v1340
        %2326 = vmatprep.subr.bf16.mxu0 %v1337
        %2327 = vmatpush1.bf16.msra.mxu0 %v1336
        %2328 = vmatprep.subr.bf16.mxu0 %v1333
        %2329 = vmatpush1.bf16.msra.mxu0 %v1332
        %2330 = vmatprep.subr.bf16.mxu0 %v1329
        %2331 = vmatpush1.bf16.msra.mxu0 %v1328
        %2332 = vmatprep.subr.bf16.mxu0 %v1325
        %2333 = vmatpush1.bf16.msra.mxu0 %v1324
        %2334 = vmatprep.subr.bf16.mxu0 %v1321
        %2335 = vmatpush1.bf16.msra.mxu0 %v1320
        %2336 = vmatprep.subr.bf16.mxu0 0
        %2337 = vmatpush2.bf16.msra.mxu0 0
        %2338 = vmatprep.subr.bf16.mxu0 0
        %2339 = vmatpush2.bf16.msra.mxu0 0
        %2340 = vmatprep.subr.bf16.mxu0 0
        %2341 = vmatpush2.bf16.msra.mxu0 0
        %2342 = vmatprep.subr.bf16.mxu0 0
        %2343 = vmatpush2.bf16.msra.mxu0 0
        %2344 = vmatprep.subr.bf16.mxu0 0
        %2345 = vmatpush2.bf16.msra.mxu0 0
        %2346 = vmatprep.subr.bf16.mxu0 0
        %2347 = vmatpush2.bf16.msra.mxu0 0
        %2348 = vmatprep.subr.bf16.mxu0 0
        %2349 = vmatpush2.bf16.msra.mxu0 0
        %2350 = vmatprep.subr.bf16.mxu0 0
        %2351 = vmatpush2.bf16.msra.mxu0 0
        %2352 = vmatprep.mubr.bf16.mxu0 0
        %2353 = vmatmul.mubr.bf16.gmra.mxu0 %v2196
        %v2354 = vpop.f32.mrf.mxu0
        %v2355 = vadd.f32 %v2273, %v2354
        %v2356 = vpop.f32.mrf.mxu0
        %v2357 = vadd.f32 %v2275, %v2356
        %v2358 = vpop.f32.mrf.mxu0
        %v2359 = vpop.f32.mrf.mxu0
        %2360 = vdwg.mxu0
        %v2361 = vadd.f32 %v2314, %v687
        %v2362 = vadd.f32 %v2316, %v691
        %v2363 = vadd.f32 %v2355, %v695
        %v2364 = vadd.f32 %v2357, %v699
        %v2365 = vmul.f32 %v2361, 0.5
        %v2366 = vtanh.pop %v2365
        %v2367 = vmul.f32 %v2366, 0.5
        %v2368 = vadd.f32 %v2367, 0.5
        %v2369 = vmul.f32 %v2362, 0.5
        %v2370 = vtanh.pop %v2369
        %v2371 = vmul.f32 %v2370, 0.5
        %v2372 = vadd.f32 %v2371, 0.5
        %v2373 = vtanh.pop %v2363
        %v2374 = vmul.f32 %v2364, 0.5
        %v2375 = vtanh.pop %v2374
        %v2376 = vmul.f32 %v2375, 0.5
        %v2377 = vadd.f32 %v2376, 0.5
        %v2378 = vmul.f32 %v2372, %v2081
        %v2379 = vmul.f32 %v2368, %v2373
        %v2380 = vadd.f32 %v2378, %v2379
        %v2381 = vtanh.pop %v2380
        %v2382 = vmul.f32 %v2377, %v2381
        %v2383 = vpack.c.bf16 %v2382, %v2382
        %2384 = vst [vmem:[#allocation3] sm:$0xf] %v2196
        %2385 = vst [vmem:[#allocation4] sm:$0xff] %v2193
        %2386 = vst [vmem:[#allocation5] sm:$0xf] %v2383
        %2387 = vst [vmem:[#allocation6] sm:$0xff] %v2380
        %p2388 = scmp.eq.s32.totalorder %s24, 1
        // Predicated region
        $region77: #{tpu_custom_call.1} parent=55 // pred_check
          %p2389 = pneg %p2388
        $region78: #{tpu_custom_call.1} parent=55 // pred_check_branch
          %2391 = sbr.rel (%p2389) target = $region80
        $region79: #{tpu_custom_call.1} parent=55 // pred_region
          %v2392 = vld [vmem:[#allocation13] sm:$0xf]
          %v2393 = vld [vmem:[#allocation13 + $0x4] sm:$0xf]
          %v2394 = vld [vmem:[#allocation13 + $0x8] sm:$0xf]
          %v2395 = vld [vmem:[#allocation13 + $0xc] sm:$0xf]
          %v2396 = vld [vmem:[#allocation13 + $0x10] sm:$0xf]
          %v2397 = vld [vmem:[#allocation13 + $0x14] sm:$0xf]
          %v2398 = vld [vmem:[#allocation13 + $0x18] sm:$0xf]
          %v2399 = vld [vmem:[#allocation13 + $0x1c] sm:$0xf]
          %v2400 = vld [vmem:[#allocation13 + $0x20] sm:$0xf]
          %v2401 = vld [vmem:[#allocation13 + $0x24] sm:$0xf]
          %v2402 = vld [vmem:[#allocation13 + $0x28] sm:$0xf]
          %v2403 = vld [vmem:[#allocation13 + $0x2c] sm:$0xf]
          %v2404 = vld [vmem:[#allocation13 + $0x30] sm:$0xf]
          %v2405 = vld [vmem:[#allocation13 + $0x34] sm:$0xf]
          %v2406 = vld [vmem:[#allocation13 + $0x38] sm:$0xf]
          %v2407 = vld [vmem:[#allocation13 + $0x3c] sm:$0xf]
          %v2408 = vld [vmem:[%s8] sm:$0x1]
          %v2410 = vlaneseq
          %v2411 = vshrl.u32 %v2410, 7
          %v2412 = vsub.s32 0, %v2411
          %v2413 = vrot.slane %v2408, %v2412
          %v2431 = vunpack.c.l.b16 %v2392
          %v2432 = vunpack.c.l.b16 %v2393
          %v2433 = vunpack.c.l.b16 %v2394
          %v2434 = vunpack.c.l.b16 %v2395
          %v2435 = vunpack.c.l.b16 %v2396
          %v2436 = vunpack.c.l.b16 %v2397
          %v2437 = vunpack.c.l.b16 %v2398
          %v2438 = vunpack.c.l.b16 %v2399
          %v2439 = vunpack.c.l.b16 %v2400
          %v2440 = vunpack.c.l.b16 %v2401
          %v2441 = vunpack.c.l.b16 %v2402
          %v2442 = vunpack.c.l.b16 %v2403
          %v2443 = vunpack.c.l.b16 %v2404
          %v2444 = vunpack.c.l.b16 %v2405
          %v2445 = vunpack.c.l.b16 %v2406
          %v2446 = vunpack.c.l.b16 %v2407
          %v2447 = vpack.c.b16 %v2432, %v2431
          %v2448 = vpack.c.b16 %v2434, %v2433
          %v2449 = vpack.c.b16 %v2436, %v2435
          %v2450 = vpack.c.b16 %v2438, %v2437
          %v2451 = vpack.c.b16 %v2440, %v2439
          %v2452 = vpack.c.b16 %v2442, %v2441
          %v2453 = vpack.c.b16 %v2444, %v2443
          %v2454 = vpack.c.b16 %v2446, %v2445
          %2463 = vmatprep.subr.bf16.mxu0 0
          %2464 = vmatpush1.bf16.msra.mxu0 %v2454
          %2465 = vmatprep.subr.bf16.mxu0 0
          %2466 = vmatpush1.bf16.msra.mxu0 %v2453
          %2467 = vmatprep.subr.bf16.mxu0 0
          %2468 = vmatpush1.bf16.msra.mxu0 %v2452
          %2469 = vmatprep.subr.bf16.mxu0 0
          %2470 = vmatpush1.bf16.msra.mxu0 %v2451
          %2471 = vmatprep.subr.bf16.mxu0 0
          %2472 = vmatpush1.bf16.msra.mxu0 %v2450
          %2473 = vmatprep.subr.bf16.mxu0 0
          %2474 = vmatpush1.bf16.msra.mxu0 %v2449
          %2475 = vmatprep.subr.bf16.mxu0 0
          %2476 = vmatpush1.bf16.msra.mxu0 %v2448
          %2477 = vmatprep.subr.bf16.mxu0 0
          %2478 = vmatpush1.bf16.msra.mxu0 %v2447
          %2479 = vmatprep.subr.bf16.mxu0 0
          %2480 = vmatpush2.bf16.msra.mxu0 0
          %2481 = vmatprep.subr.bf16.mxu0 0
          %2482 = vmatpush2.bf16.msra.mxu0 0
          %2483 = vmatprep.subr.bf16.mxu0 0
          %2484 = vmatpush2.bf16.msra.mxu0 0
          %2485 = vmatprep.subr.bf16.mxu0 0
          %2486 = vmatpush2.bf16.msra.mxu0 0
          %2487 = vmatprep.subr.bf16.mxu0 0
          %2488 = vmatpush2.bf16.msra.mxu0 0
          %2489 = vmatprep.subr.bf16.mxu0 0
          %2490 = vmatpush2.bf16.msra.mxu0 0
          %2491 = vmatprep.subr.bf16.mxu0 0
          %2492 = vmatpush2.bf16.msra.mxu0 0
          %2493 = vmatprep.subr.bf16.mxu0 0
          %2494 = vmatpush2.bf16.msra.mxu0 0
          %2495 = vmatprep.mubr.bf16.mxu0 0
          %2496 = vmatmul.mubr.bf16.gmra.mxu0 %v2383
          %v2497 = vpop.f32.mrf.mxu0
          %v2498 = vadd.f32 %v2413, %v2497
          %v2499 = vpop.f32.mrf.mxu0
          %v2500 = vpop.f32.mrf.mxu0
          %v2501 = vpop.f32.mrf.mxu0
          %2502 = vdwg.mxu0
          %2503 = vst [vmem:[#allocation15] sm:$0xff] %v2498
        $region80: #{tpu_custom_call.1} parent=55 // pred_fallthru
          _
        // Predicated region
        $region81: #{tpu_custom_call.1} parent=55 // pred_check
          %p2504 = pneg %p231
        $region82: #{tpu_custom_call.1} parent=55 // pred_check_branch
          %2506 = sbr.rel (%p2504) target = $region84
        $region83: #{tpu_custom_call.1} parent=55 // pred_region
          %s2508 = ssub.s32 128, 128
          %2509 = vsyncadd [#allocation9], %s2508
          %s2511 = sshll.u32 [#allocation15], 4
          %s2512 = int_to_ptr.vmem [resolvable:$true] %s2511
          %2514 = dma.vmem_to_hbm [thread:$0]  %s2512, 128, %s9, [#allocation9]
        $region84: #{tpu_custom_call.1} parent=55 // pred_fallthru
          _
        // Predicated region
        $region85: #{tpu_custom_call.1} parent=55 // pred_check
          %p2515 = pneg %p231
        $region86: #{tpu_custom_call.1} parent=55 // pred_check_branch
          %2517 = sbr.rel (%p2515) target = $region88
        $region87: #{tpu_custom_call.1} parent=55 // pred_region
          %2518 = dma.done [#allocation9], 128
        $region88: #{tpu_custom_call.1} parent=55 // pred_fallthru
          _
      $region56: #{tpu_custom_call.1} parent=5 // pred_fallthru
        _
      %p2519 = scmp.le.s32.totalorder 2, %s19
      // Predicated region
      $region89: #{tpu_custom_call.1} parent=5 // pred_check
        %p2520 = pneg %p2519
      $region90: #{tpu_custom_call.1} parent=5 // pred_check_branch
        %2522 = sbr.rel (%p2520) target = $region92
      $region91: #{tpu_custom_call.1} parent=5 // pred_region
        %s2523 = ssub.s32 %s19, 2
      $region92: #{tpu_custom_call.1} parent=5 // pred_fallthru
        _
    $region6: #{tpu_custom_call.1} parent=1 // loop_footer
      %s23 = sadd.s32 1, %s19
    $region7: #{tpu_custom_call.1} parent=1 // loop_footer_branch
      %18 = sbr.rel target = $region3
    $region8: #{tpu_custom_call.1} parent=1 // loop_exit
      _
    %2524 = vsyncpa [#allocation8], 1
    %s2525 = scalar_lea.sflag [#allocation8], 1
    %2526 = vsyncpa %s2525, 1
    %2527 = vsyncpa [#allocation11], 1
    %2528 = vsyncpa [#allocation14], 1
    %2529 = vsyncpa [#allocation9], 1
    %s2530 = scalar_lea.sflag [#allocation9], 1
    %2531 = vsyncpa %s2530, 1

// kernel: tpu_custom_call.1
$region0: #{tpu_custom_call.1}
  #allocation0 [shape = 'u32[]', space=smem, size = 0x4, offset = 0x4, fixed_abs, tag = 'smem constant byte address 0x4 - core index']
  #allocation1 [shape = 'u32[144,128]{1,0:T(1,128)}', space=vmem, size = 0x12000, scoped, tag = 'internal scratch']
  #allocation2 [shape = 'f32[32,512]{1,0:T(8,128)}', space=vmem, size = 0x10000, scoped, tag = 'scratch operand']
  #allocation3 [shape = 'bf16[8,128]{1,0:T(8,128)(2,1)}', space=vmem, size = 0x800, scoped, tag = 'scratch operand']
  #allocation4 [shape = 'f32[8,128]{1,0:T(8,128)}', space=vmem, size = 0x1000, scoped, tag = 'scratch operand']
  #allocation5 [shape = 'bf16[8,128]{1,0:T(8,128)(2,1)}', space=vmem, size = 0x800, scoped, tag = 'scratch operand']
  #allocation6 [shape = 'f32[8,128]{1,0:T(8,128)}', space=vmem, size = 0x1000, scoped, tag = 'scratch operand']
  %s0 = inlined_call_operand.vmem [shape: bf16[64,4], index: 0, kind: input, shape index: {}]
  %s1 = inlined_call_operand.vmem [shape: bf16[4,512], index: 1, kind: input, shape index: {}]
  %s2 = inlined_call_operand.hbm [shape: bf16[128,512], index: 2, kind: input, shape index: {}]
  %s3 = inlined_call_operand.vmem [shape: f32[1,512], index: 3, kind: input, shape index: {}]
  %s4 = inlined_call_operand.hbm [shape: bf16[128,512], index: 4, kind: input, shape index: {}]
  %s5 = inlined_call_operand.hbm [shape: bf16[128,512], index: 5, kind: input, shape index: {}]
  %s6 = inlined_call_operand.vmem [shape: f32[1,512], index: 6, kind: input, shape index: {}]
  %s7 = inlined_call_operand.hbm [shape: bf16[128,128], index: 7, kind: input, shape index: {}]
  %s8 = inlined_call_operand.vmem [shape: f32[1,128], index: 8, kind: input, shape index: {}]
  %s9 = inlined_call_operand.hbm [shape: f32[8,128], index: 9, kind: output, shape index: {}]
  %s10 = sld [smem:[#allocation0]]
  $region93: #{tpu_custom_call.1} parent=0
    _
  %s12 = ssub.s32 1, %s10
  %s13 = scalar_select 0, %s12, %s10
  $region1: #{tpu_custom_call.1} parent=0
    #allocation7 [shape = 'u8[131072]{0}', space=vmem, size = 0x20000, scoped, tag = 'input window, operand 2, single buffered']
    #allocation8 [shape = 's32[2]{0}', space=sflag, size = 0x8, scoped, tag = 'scoped memory for tpu_custom_call.1']
    #allocation9 [shape = 's32[2]{0}', space=sflag, size = 0x8, scoped, tag = 'scoped memory for tpu_custom_call.1']
    #allocation10 [shape = 'u8[131072]{0}', space=vmem, size = 0x20000, scoped, tag = 'input window, operand 4, single buffered']
    #allocation11 [shape = 's32[1]{0}', space=sflag, size = 0x4, scoped, tag = 'scoped memory for tpu_custom_call.1']
    #allocation12 [shape = 'u8[131072]{0}', space=vmem, size = 0x20000, scoped, tag = 'input window, operand 5, single buffered']
    #allocation13 [shape = 'u8[32768]{0}', space=vmem, size = 0x8000, scoped, tag = 'input window, operand 7, single buffered']
    #allocation14 [shape = 's32[1]{0}', space=sflag, size = 0x4, scoped, tag = 'scoped memory for tpu_custom_call.1']
    #allocation15 [shape = 'u8[4096]{0}', space=vmem, size = 0x1000, scoped, tag = 'output window, operand 0, single buffered']
    %14 = vsyncpa [#allocation8], 0
    %15 = vsyncpa [#allocation11], 0
    %16 = vsyncpa [#allocation14], 0
    %17 = vsyncpa [#allocation9], 0
    loop: start=0, step=1, limit=4
    $region2: #{tpu_custom_call.1} parent=1 // loop_pre_header
      _
    $region3: #{tpu_custom_call.1} parent=1 // loop_header
      %s19 = sphi 0, %s23
      %p20 = scmp.ge.s32.totalorder %s19, 4
      %s29 = sphi 0, %s31
      %s32 = sphi 0, %s29
      %s33 = sphi 0, %s32
      %s49 = sphi 0, %s33
      %s53 = sphi 0, %s53
      %s55 = sphi 0, %s53
      %s56 = sphi 0, %s55
      %s70 = sphi 0, %s56
      %s74 = sphi 0, %s74
      %s76 = sphi 0, %s74
      %s77 = sphi 0, %s76
      %s91 = sphi 0, %s77
      %s95 = sphi 0, %s95
      %s97 = sphi 0, %s95
      %s98 = sphi 0, %s97
      %s112 = sphi 0, %s98
      %s116 = sphi 0, %s116
      %s118 = sphi 0, %s116
      %s119 = sphi 0, %s118
      %s133 = sphi 0, %s119
      %s137 = sphi 0, %s137
      %s139 = sphi 0, %s137
      %s140 = sphi 0, %s139
      %s154 = sphi 0, %s140
      %s158 = sphi 0, %s158
      %s160 = sphi 0, %s158
      %s161 = sphi 0, %s160
      %s175 = sphi 0, %s161
      %s179 = sphi 0, %s179
      %s181 = sphi 0, %s179
      %s182 = sphi 0, %s181
      %s196 = sphi 0, %s182
      %s200 = sphi 0, %s200
      %s202 = sphi 0, %s200
      %s203 = sphi 0, %s202
      %s217 = sphi 0, %s203
      %s221 = sphi 0, %s221
      %s223 = sphi 0, %s221
      %s224 = sphi 0, %s223
      %s238 = sphi 0, %s224
    $region4: #{tpu_custom_call.1} parent=1 // loop_header_branch
      %22 = sbr.rel (%p20) target = $region8
    $region5: #{tpu_custom_call.1} parent=1 // loop_body
      %s24 = ssub.s32 %s19, 1
      %s25 = ssub.s32 %s19, 2
      %s26 = sadd.s32 %s19, 1
      %s27 = ssub.s32 %s19, %s26
      %p28 = scmp.eq.s32.totalorder %s27, 0
      %s30 = sadd.s32 %s29, 1
      %s31 = scalar_select %p28, %s29, %s30
      %p34 = pneg %p28
      %p35 = scmp.eq.s32.totalorder %s19, 1
      %p36 = por %p34, %p35
      %p37 = scmp.ne.s32.totalorder %s29, %s32
      %p38 = scmp.eq.s32.totalorder %s19, 0
      %p39 = por %p37, %p38
      %p40 = scmp.ne.s32.totalorder %s29, %s32
      %p41 = scmp.eq.s32.totalorder %s24, 1
      %p42 = por %p40, %p41
      %p43 = scmp.ne.s32.totalorder %s32, %s33
      %p44 = scmp.eq.s32.totalorder %s24, 0
      %p45 = por %p43, %p44
      %p46 = scmp.ne.s32.totalorder %s32, %s33
      %p47 = scmp.eq.s32.totalorder %s25, 1
      %p48 = por %p46, %p47
      %p50 = scmp.ne.s32.totalorder %s33, %s49
      %p51 = scmp.eq.s32.totalorder %s25, 0
      %p52 = por %p50, %p51
      %s54 = sadd.s32 %s53, 1
      %p57 = scmp.eq.s32.totalorder %s19, 1
      %p58 = scmp.ne.s32.totalorder %s53, %s55
      %p59 = scmp.eq.s32.totalorder %s19, 0
      %p60 = por %p58, %p59
      %p61 = scmp.ne.s32.totalorder %s53, %s55
      %p62 = scmp.eq.s32.totalorder %s24, 1
      %p63 = por %p61, %p62
      %p64 = scmp.ne.s32.totalorder %s55, %s56
      %p65 = scmp.eq.s32.totalorder %s24, 0
      %p66 = por %p64, %p65
      %p67 = scmp.ne.s32.totalorder %s55, %s56
      %p68 = scmp.eq.s32.totalorder %s25, 1
      %p69 = por %p67, %p68
      %p71 = scmp.ne.s32.totalorder %s56, %s70
      %p72 = scmp.eq.s32.totalorder %s25, 0
      %p73 = por %p71, %p72
      %s75 = sadd.s32 %s74, 1
      %p78 = scmp.eq.s32.totalorder %s19, 1
      %p79 = scmp.ne.s32.totalorder %s74, %s76
      %p80 = scmp.eq.s32.totalorder %s19, 0
      %p81 = por %p79, %p80
      %p82 = scmp.ne.s32.totalorder %s74, %s76
      %p83 = scmp.eq.s32.totalorder %s24, 1
      %p84 = por %p82, %p83
      %p85 = scmp.ne.s32.totalorder %s76, %s77
      %p86 = scmp.eq.s32.totalorder %s24, 0
      %p87 = por %p85, %p86
      %p88 = scmp.ne.s32.totalorder %s76, %s77
      %p89 = scmp.eq.s32.totalorder %s25, 1
      %p90 = por %p88, %p89
      %p92 = scmp.ne.s32.totalorder %s77, %s91
      %p93 = scmp.eq.s32.totalorder %s25, 0
      %p94 = por %p92, %p93
      %s96 = sadd.s32 %s95, 1
      %p99 = scmp.eq.s32.totalorder %s19, 1
      %p100 = scmp.ne.s32.totalorder %s95, %s97
      %p101 = scmp.eq.s32.totalorder %s19, 0
      %p102 = por %p100, %p101
      %p103 = scmp.ne.s32.totalorder %s95, %s97
      %p104 = scmp.eq.s32.totalorder %s24, 1
      %p105 = por %p103, %p104
      %p106 = scmp.ne.s32.totalorder %s97, %s98
      %p107 = scmp.eq.s32.totalorder %s24, 0
      %p108 = por %p106, %p107
      %p109 = scmp.ne.s32.totalorder %s97, %s98
      %p110 = scmp.eq.s32.totalorder %s25, 1
      %p111 = por %p109, %p110
      %p113 = scmp.ne.s32.totalorder %s98, %s112
      %p114 = scmp.eq.s32.totalorder %s25, 0
      %p115 = por %p113, %p114
      %s117 = sadd.s32 %s116, 1
      %p120 = scmp.eq.s32.totalorder %s19, 1
      %p121 = scmp.ne.s32.totalorder %s116, %s118
      %p122 = scmp.eq.s32.totalorder %s19, 0
      %p123 = por %p121, %p122
      %p124 = scmp.ne.s32.totalorder %s116, %s118
      %p125 = scmp.eq.s32.totalorder %s24, 1
      %p126 = por %p124, %p125
      %p127 = scmp.ne.s32.totalorder %s118, %s119
      %p128 = scmp.eq.s32.totalorder %s24, 0
      %p129 = por %p127, %p128
      %p130 = scmp.ne.s32.totalorder %s118, %s119
      %p131 = scmp.eq.s32.totalorder %s25, 1
      %p132 = por %p130, %p131
      %p134 = scmp.ne.s32.totalorder %s119, %s133
      %p135 = scmp.eq.s32.totalorder %s25, 0
      %p136 = por %p134, %p135
      %s138 = sadd.s32 %s137, 1
      %p141 = scmp.eq.s32.totalorder %s19, 1
      %p142 = scmp.ne.s32.totalorder %s137, %s139
      %p143 = scmp.eq.s32.totalorder %s19, 0
      %p144 = por %p142, %p143
      %p145 = scmp.ne.s32.totalorder %s137, %s139
      %p146 = scmp.eq.s32.totalorder %s24, 1
      %p147 = por %p145, %p146
      %p148 = scmp.ne.s32.totalorder %s139, %s140
      %p149 = scmp.eq.s32.totalorder %s24, 0
      %p150 = por %p148, %p149
      %p151 = scmp.ne.s32.totalorder %s139, %s140
      %p152 = scmp.eq.s32.totalorder %s25, 1
      %p153 = por %p151, %p152
      %p155 = scmp.ne.s32.totalorder %s140, %s154
      %p156 = scmp.eq.s32.totalorder %s25, 0
      %p157 = por %p155, %p156
      %s159 = sadd.s32 %s158, 1
      %p162 = scmp.eq.s32.totalorder %s19, 1
      %p163 = scmp.ne.s32.totalorder %s158, %s160
      %p164 = scmp.eq.s32.totalorder %s19, 0
      %p165 = por %p163, %p164
      %p166 = scmp.ne.s32.totalorder %s158, %s160
      %p167 = scmp.eq.s32.totalorder %s24, 1
      %p168 = por %p166, %p167
      %p169 = scmp.ne.s32.totalorder %s160, %s161
      %p170 = scmp.eq.s32.totalorder %s24, 0
      %p171 = por %p169, %p170
      %p172 = scmp.ne.s32.totalorder %s160, %s161
      %p173 = scmp.eq.s32.totalorder %s25, 1
      %p174 = por %p172, %p173
      %p176 = scmp.ne.s32.totalorder %s161, %s175
      %p177 = scmp.eq.s32.totalorder %s25, 0
      %p178 = por %p176, %p177
      %s180 = sadd.s32 %s179, 1
      %p183 = scmp.eq.s32.totalorder %s19, 1
      %p184 = scmp.ne.s32.totalorder %s179, %s181
      %p185 = scmp.eq.s32.totalorder %s19, 0
      %p186 = por %p184, %p185
      %p187 = scmp.ne.s32.totalorder %s179, %s181
      %p188 = scmp.eq.s32.totalorder %s24, 1
      %p189 = por %p187, %p188
      %p190 = scmp.ne.s32.totalorder %s181, %s182
      %p191 = scmp.eq.s32.totalorder %s24, 0
      %p192 = por %p190, %p191
      %p193 = scmp.ne.s32.totalorder %s181, %s182
      %p194 = scmp.eq.s32.totalorder %s25, 1
      %p195 = por %p193, %p194
      %p197 = scmp.ne.s32.totalorder %s182, %s196
      %p198 = scmp.eq.s32.totalorder %s25, 0
      %p199 = por %p197, %p198
      %s201 = sadd.s32 %s200, 1
      %p204 = scmp.eq.s32.totalorder %s19, 1
      %p205 = scmp.ne.s32.totalorder %s200, %s202
      %p206 = scmp.eq.s32.totalorder %s19, 0
      %p207 = por %p205, %p206
      %p208 = scmp.ne.s32.totalorder %s200, %s202
      %p209 = scmp.eq.s32.totalorder %s24, 1
      %p210 = por %p208, %p209
      %p211 = scmp.ne.s32.totalorder %s202, %s203
      %p212 = scmp.eq.s32.totalorder %s24, 0
      %p213 = por %p211, %p212
      %p214 = scmp.ne.s32.totalorder %s202, %s203
      %p215 = scmp.eq.s32.totalorder %s25, 1
      %p216 = por %p214, %p215
      %p218 = scmp.ne.s32.totalorder %s203, %s217
      %p219 = scmp.eq.s32.totalorder %s25, 0
      %p220 = por %p218, %p219
      %s222 = sadd.s32 %s221, 1
      %p225 = scmp.eq.s32.totalorder %s19, 1
      %p226 = scmp.ne.s32.totalorder %s221, %s223
      %p227 = scmp.eq.s32.totalorder %s19, 0
      %p228 = por %p226, %p227
      %p229 = scmp.ne.s32.totalorder %s221, %s223
      %p230 = scmp.eq.s32.totalorder %s24, 1
      %p231 = por %p229, %p230
      %p232 = scmp.ne.s32.totalorder %s223, %s224
      %p233 = scmp.eq.s32.totalorder %s24, 0
      %p234 = por %p232, %p233
      %p235 = scmp.ne.s32.totalorder %s223, %s224
      %p236 = scmp.eq.s32.totalorder %s25, 1
      %p237 = por %p235, %p236
      %p239 = scmp.ne.s32.totalorder %s224, %s238
      %p240 = scmp.eq.s32.totalorder %s25, 0
      %p241 = por %p239, %p240
      %p242 = scmp.le.s32.totalorder 1, %s19
      %p243 = scmp.lt.s32.totalorder %s19, 3
      %p244 = pnand %p242, %p243
      %p245 = pneg %p244
      // Predicated region
      $region9: #{tpu_custom_call.1} parent=5 // pred_check
        _
      $region10: #{tpu_custom_call.1} parent=5 // pred_check_branch
        %247 = sbr.rel (%p244) target = $region12
      $region11: #{tpu_custom_call.1} parent=5 // pred_region
        %s248 = ssub.s32 %s19, 1
        // Predicated region
        $region13: #{tpu_custom_call.1} parent=11 // pred_check
          %p249 = pneg %p66
        $region14: #{tpu_custom_call.1} parent=11 // pred_check_branch
          %251 = sbr.rel (%p249) target = $region16
        $region15: #{tpu_custom_call.1} parent=11 // pred_region
          _
        $region16: #{tpu_custom_call.1} parent=11 // pred_fallthru
          _
        // Predicated region
        $region17: #{tpu_custom_call.1} parent=11 // pred_check
          %p252 = pneg %p87
        $region18: #{tpu_custom_call.1} parent=11 // pred_check_branch
          %254 = sbr.rel (%p252) target = $region20
        $region19: #{tpu_custom_call.1} parent=11 // pred_region
          %s256 = ssub.s32 4096, 4096
          %257 = vsyncadd [#allocation8], %s256
          %s258 = sshll.u32 [#allocation7], 4
          %s259 = int_to_ptr.vmem [resolvable:$true] %s258
          %264 = dma.hbm_to_vmem [thread:$0]  %s2, 4096, %s259, [#allocation8], 256, 256, 16
        $region20: #{tpu_custom_call.1} parent=11 // pred_fallthru
          _
        // Predicated region
        $region21: #{tpu_custom_call.1} parent=11 // pred_check
          %p265 = pneg %p108
        $region22: #{tpu_custom_call.1} parent=11 // pred_check_branch
          %267 = sbr.rel (%p265) target = $region24
        $region23: #{tpu_custom_call.1} parent=11 // pred_region
          _
        $region24: #{tpu_custom_call.1} parent=11 // pred_fallthru
          _
        // Predicated region
        $region25: #{tpu_custom_call.1} parent=11 // pred_check
          %p268 = pneg %p129
        $region26: #{tpu_custom_call.1} parent=11 // pred_check_branch
          %270 = sbr.rel (%p268) target = $region28
        $region27: #{tpu_custom_call.1} parent=11 // pred_region
          %s272 = ssub.s32 4096, 4096
          %273 = vsyncadd [#allocation11], %s272
          %s274 = sshll.u32 [#allocation10], 4
          %s275 = int_to_ptr.vmem [resolvable:$true] %s274
          %280 = dma.hbm_to_vmem [thread:$0]  %s4, 4096, %s275, [#allocation11], 256, 256, 16
        $region28: #{tpu_custom_call.1} parent=11 // pred_fallthru
          _
        // Predicated region
        $region29: #{tpu_custom_call.1} parent=11 // pred_check
          %p281 = pneg %p150
        $region30: #{tpu_custom_call.1} parent=11 // pred_check_branch
          %283 = sbr.rel (%p281) target = $region32
        $region31: #{tpu_custom_call.1} parent=11 // pred_region
          %s285 = ssub.s32 4096, 4096
          %286 = vsyncadd [#allocation11], %s285
          %s287 = sshll.u32 [#allocation12], 4
          %s288 = int_to_ptr.vmem [resolvable:$true] %s287
          %293 = dma.hbm_to_vmem [thread:$0]  %s5, 4096, %s288, [#allocation11], 256, 256, 16
        $region32: #{tpu_custom_call.1} parent=11 // pred_fallthru
          _
        // Predicated region
        $region33: #{tpu_custom_call.1} parent=11 // pred_check
          %p294 = pneg %p171
        $region34: #{tpu_custom_call.1} parent=11 // pred_check_branch
          %296 = sbr.rel (%p294) target = $region36
        $region35: #{tpu_custom_call.1} parent=11 // pred_region
          _
        $region36: #{tpu_custom_call.1} parent=11 // pred_fallthru
          _
        // Predicated region
        $region37: #{tpu_custom_call.1} parent=11 // pred_check
          %p297 = pneg %p192
        $region38: #{tpu_custom_call.1} parent=11 // pred_check_branch
          %299 = sbr.rel (%p297) target = $region40
        $region39: #{tpu_custom_call.1} parent=11 // pred_region
          %s301 = ssub.s32 1024, 1024
          %302 = vsyncadd [#allocation14], %s301
          %s303 = sshll.u32 [#allocation13], 4
          %s304 = int_to_ptr.vmem [resolvable:$true] %s303
          %309 = dma.hbm_to_vmem [thread:$0]  %s7, 1024, %s304, [#allocation14], 64, 64, 4
        $region40: #{tpu_custom_call.1} parent=11 // pred_fallthru
          _
        // Predicated region
        $region41: #{tpu_custom_call.1} parent=11 // pred_check
          %p310 = pneg %p213
        $region42: #{tpu_custom_call.1} parent=11 // pred_check_branch
          %312 = sbr.rel (%p310) target = $region44
        $region43: #{tpu_custom_call.1} parent=11 // pred_region
          _
        $region44: #{tpu_custom_call.1} parent=11 // pred_fallthru
          _
      $region12: #{tpu_custom_call.1} parent=5 // pred_fallthru
        _
      %p313 = scmp.lt.s32.totalorder %s19, 2
      // Predicated region
      $region45: #{tpu_custom_call.1} parent=5 // pred_check
        %p314 = pneg %p313
      $region46: #{tpu_custom_call.1} parent=5 // pred_check_branch
        %316 = sbr.rel (%p314) target = $region48
      $region47: #{tpu_custom_call.1} parent=5 // pred_region
        // Predicated region
        $region49: #{tpu_custom_call.1} parent=47 // pred_check
          %p317 = pneg %p39
        $region50: #{tpu_custom_call.1} parent=47 // pred_check_branch
          %319 = sbr.rel (%p317) target = $region52
        $region51: #{tpu_custom_call.1} parent=47 // pred_region
          %s320 = smul.u32 4, %s19
          %p321 = scmp.lt.s32.totalorder %s320, 7
          %s322 = scalar_select %p321, %s320, 7
          %s323 = smul.addr %s322, 4
          %s324 = scalar_lea.vmem %s0, %s323
          %s325 = smul.u32 4, %s19
        $region52: #{tpu_custom_call.1} parent=47 // pred_fallthru
          _
      $region48: #{tpu_custom_call.1} parent=5 // pred_fallthru
        _
      %p326 = scmp.le.s32.totalorder 1, %s19
      %p327 = scmp.lt.s32.totalorder %s19, 3
      %p328 = pnand %p326, %p327
      %p329 = pneg %p328
      // Predicated region
      $region53: #{tpu_custom_call.1} parent=5 // pred_check
        _
      $region54: #{tpu_custom_call.1} parent=5 // pred_check_branch
        %331 = sbr.rel (%p328) target = $region56
      $region55: #{tpu_custom_call.1} parent=5 // pred_region
        %s332 = ssub.s32 %s19, 1
        // Predicated region
        $region57: #{tpu_custom_call.1} parent=55 // pred_check
          %p333 = pneg %p87
        $region58: #{tpu_custom_call.1} parent=55 // pred_check_branch
          %335 = sbr.rel (%p333) target = $region60
        $region59: #{tpu_custom_call.1} parent=55 // pred_region
          %336 = dma.done [#allocation8], 4096
        $region60: #{tpu_custom_call.1} parent=55 // pred_fallthru
          _
        // Predicated region
        $region61: #{tpu_custom_call.1} parent=55 // pred_check
          %p337 = pneg %p129
        $region62: #{tpu_custom_call.1} parent=55 // pred_check_branch
          %339 = sbr.rel (%p337) target = $region64
        $region63: #{tpu_custom_call.1} parent=55 // pred_region
          %340 = dma.done [#allocation11], 4096
        $region64: #{tpu_custom_call.1} parent=55 // pred_fallthru
          _
        // Predicated region
        $region65: #{tpu_custom_call.1} parent=55 // pred_check
          %p341 = pneg %p150
        $region66: #{tpu_custom_call.1} parent=55 // pred_check_branch
          %343 = sbr.rel (%p341) target = $region68
        $region67: #{tpu_custom_call.1} parent=55 // pred_region
          %344 = dma.done [#allocation11], 4096
        $region68: #{tpu_custom_call.1} parent=55 // pred_fallthru
          _
        // Predicated region
        $region69: #{tpu_custom_call.1} parent=55 // pred_check
          %p345 = pneg %p192
        $region70: #{tpu_custom_call.1} parent=55 // pred_check_branch
          %347 = sbr.rel (%p345) target = $region72
        $region71: #{tpu_custom_call.1} parent=55 // pred_region
          %348 = dma.done [#allocation14], 1024
        $region72: #{tpu_custom_call.1} parent=55 // pred_fallthru
          _
        %s349 = smul.u32 4, %s24
        %p350 = scmp.lt.s32.totalorder %s349, 7
        %s351 = scalar_select %p350, %s349, 7
        %s352 = smul.addr %s351, 4
        %s353 = scalar_lea.vmem %s0, %s352
        %p354 = pneg %p45
        %p355 = pneg %p42
        %p356 = pneg %p66
        %p357 = pneg %p63
        %p358 = pneg %p87
        %p359 = pneg %p84
        %p360 = pneg %p108
        %p361 = pneg %p105
        %p362 = pneg %p129
        %p363 = pneg %p126
        %p364 = pneg %p150
        %p365 = pneg %p147
        %p366 = pneg %p171
        %p367 = pneg %p168
        %p368 = pneg %p192
        %p369 = pneg %p189
        %p370 = pneg %p213
        %p371 = pneg %p210
        %p372 = pneg %p234
        %p373 = pneg %p231
        %s374 = smul.u32 4, %s24
        %p375 = scmp.lt.s32.totalorder %s374, 7
        %s376 = scalar_select %p375, %s374, 7
        %s377 = smul.addr %s376, 4
        %s378 = scalar_lea.vmem %s0, %s377
        %s379 = smul.u32 4, %s24
        %p381 = scmp.eq.s32.totalorder %s24, 0
        // Predicated region
        $region73: #{tpu_custom_call.1} parent=55 // pred_check
          %p382 = pneg %p381
        $region74: #{tpu_custom_call.1} parent=55 // pred_check_branch
          %384 = sbr.rel (%p382) target = $region76
        $region75: #{tpu_custom_call.1} parent=55 // pred_region
          %385 = vst [vmem:[#allocation3] sm:$0xf] 0
          %386 = vst [vmem:[#allocation4] sm:$0xff] 0.0
          %387 = vst [vmem:[#allocation5] sm:$0xf] 0
          %388 = vst [vmem:[#allocation6] sm:$0xff] 0.0
        $region76: #{tpu_custom_call.1} parent=55 // pred_fallthru
          _
        %v389 = vld [vmem:[%s378] sm:$0xf]
        %v390 = vld [vmem:[%s378 + $0x4] sm:$0xf]
        %v391 = vld [vmem:[%s378 + $0x8] sm:$0xf]
        %v392 = vld [vmem:[%s378 + $0xc] sm:$0xf]
        %v393 = vld [vmem:[%s1] sm:$0xff]
        %v394 = vld [vmem:[%s3] sm:$0xf]
        %v396 = vlaneseq
        %v397 = vshrl.u32 %v396, 7
        %v398 = vsub.s32 0, %v397
        %v399 = vrot.slane %v394, %v398
        %v400 = vlaneseq
        %v401 = vshrl.u32 %v400, 7
        %v402 = vsub.s32 1, %v401
        %v403 = vrot.slane %v394, %v402
        %v404 = vlaneseq
        %v405 = vshrl.u32 %v404, 7
        %v406 = vsub.s32 2, %v405
        %v407 = vrot.slane %v394, %v406
        %v408 = vlaneseq
        %v409 = vshrl.u32 %v408, 7
        %v410 = vsub.s32 3, %v409
        %v411 = vrot.slane %v394, %v410
        %v420 = vunpack.c.l.b16 %v389
        %v421 = vunpack.c.l.b16 %v390
        %v422 = vunpack.c.l.b16 %v391
        %v423 = vunpack.c.l.b16 %v392
        %v424 = vpack.c.b16 %v421, %v420
        %v425 = vpack.c.b16 %v423, %v422
        %v427 = vcombine.high %v393, %v393
        %v429 = vunpack.c.l.s4 1983009808
        %v430 = vunpack.c.0.s8 %v429
        %v431 = vlaneseq
        %v432 = vshrl.u32 %v431, 7
        %v433 = vsub.s32 %v430, %v432
        %v434 = vrot.slane %v393, %v433
        %v436 = vunpack.c.l.s4 1983009808
        %v437 = vunpack.c.0.s8 %v436
        %v438 = vlaneseq
        %v439 = vshrl.u32 %v438, 7
        %v440 = vsub.s32 %v437, %v439
        %v441 = vrot.slane %v427, %v440
        %v442 = vcombine.high %v434, %v434
        %v443 = vcombine.high %v441, %v441
        %vm444 = vcmask 31744
        %v446 = vsel %vm444, %v424, 0
        %v449 = vsel %vm444, %v425, 0
        %vm451 = vcmask 1041408
        %v453 = vsel %vm451, %v434, 0
        %v456 = vsel %vm451, %v442, 0
        %v459 = vsel %vm451, %v441, 0
        %v462 = vsel %vm451, %v443, 0
        %464 = vmatprep.subr.bf16.mxu0 0
        %465 = vmatpush1.bf16.msra.mxu0 0
        %466 = vmatprep.subr.bf16.mxu0 0
        %467 = vmatpush1.bf16.msra.mxu0 0
        %468 = vmatprep.subr.bf16.mxu0 0
        %469 = vmatpush1.bf16.msra.mxu0 0
        %470 = vmatprep.subr.bf16.mxu0 0
        %471 = vmatpush1.bf16.msra.mxu0 0
        %472 = vmatprep.subr.bf16.mxu0 0
        %473 = vmatpush1.bf16.msra.mxu0 0
        %474 = vmatprep.subr.bf16.mxu0 0
        %475 = vmatpush1.bf16.msra.mxu0 0
        %476 = vmatprep.subr.bf16.mxu0 0
        %477 = vmatpush1.bf16.msra.mxu0 0
        %478 = vmatprep.subr.bf16.mxu0 %v456
        %479 = vmatpush1.bf16.msra.mxu0 %v453
        %480 = vmatprep.subr.bf16.mxu0 0
        %481 = vmatpush2.bf16.msra.mxu0 0
        %482 = vmatprep.subr.bf16.mxu0 0
        %483 = vmatpush2.bf16.msra.mxu0 0
        %484 = vmatprep.subr.bf16.mxu0 0
        %485 = vmatpush2.bf16.msra.mxu0 0
        %486 = vmatprep.subr.bf16.mxu0 0
        %487 = vmatpush2.bf16.msra.mxu0 0
        %488 = vmatprep.subr.bf16.mxu0 0
        %489 = vmatpush2.bf16.msra.mxu0 0
        %490 = vmatprep.subr.bf16.mxu0 0
        %491 = vmatpush2.bf16.msra.mxu0 0
        %492 = vmatprep.subr.bf16.mxu0 0
        %493 = vmatpush2.bf16.msra.mxu0 0
        %494 = vmatprep.subr.bf16.mxu0 0
        %495 = vmatpush2.bf16.msra.mxu0 0
        %496 = vmatprep.mubr.bf16.mxu0 0
        %497 = vmatmul.mubr.bf16.gmra.mxu0 %v446
        %v498 = vpop.f32.mrf.mxu0
        %v499 = vadd.f32 %v399, %v498
        %v500 = vpop.f32.mrf.mxu0
        %v501 = vadd.f32 %v403, %v500
        %v502 = vpop.f32.mrf.mxu0
        %v503 = vadd.f32 %v399, %v502
        %v504 = vpop.f32.mrf.mxu0
        %v505 = vadd.f32 %v403, %v504
        %506 = vmatprep.mubr.bf16.mxu0 0
        %507 = vmatmul.mubr.bf16.gmra.mxu0 %v449
        %v508 = vpop.f32.mrf.mxu0
        %v509 = vadd.f32 %v399, %v508
        %v510 = vpop.f32.mrf.mxu0
        %v511 = vadd.f32 %v403, %v510
        %v512 = vpop.f32.mrf.mxu0
        %v513 = vadd.f32 %v399, %v512
        %v514 = vpop.f32.mrf.mxu0
        %v515 = vadd.f32 %v403, %v514
        %516 = vdwg.mxu0
        %517 = vmatprep.subr.bf16.mxu0 0
        %518 = vmatpush1.bf16.msra.mxu0 0
        %519 = vmatprep.subr.bf16.mxu0 0
        %520 = vmatpush1.bf16.msra.mxu0 0
        %521 = vmatprep.subr.bf16.mxu0 0
        %522 = vmatpush1.bf16.msra.mxu0 0
        %523 = vmatprep.subr.bf16.mxu0 0
        %524 = vmatpush1.bf16.msra.mxu0 0
        %525 = vmatprep.subr.bf16.mxu0 0
        %526 = vmatpush1.bf16.msra.mxu0 0
        %527 = vmatprep.subr.bf16.mxu0 0
        %528 = vmatpush1.bf16.msra.mxu0 0
        %529 = vmatprep.subr.bf16.mxu0 0
        %530 = vmatpush1.bf16.msra.mxu0 0
        %531 = vmatprep.subr.bf16.mxu0 %v462
        %532 = vmatpush1.bf16.msra.mxu0 %v459
        %533 = vmatprep.subr.bf16.mxu0 0
        %534 = vmatpush2.bf16.msra.mxu0 0
        %535 = vmatprep.subr.bf16.mxu0 0
        %536 = vmatpush2.bf16.msra.mxu0 0
        %537 = vmatprep.subr.bf16.mxu0 0
        %538 = vmatpush2.bf16.msra.mxu0 0
        %539 = vmatprep.subr.bf16.mxu0 0
        %540 = vmatpush2.bf16.msra.mxu0 0
        %541 = vmatprep.subr.bf16.mxu0 0
        %542 = vmatpush2.bf16.msra.mxu0 0
        %543 = vmatprep.subr.bf16.mxu0 0
        %544 = vmatpush2.bf16.msra.mxu0 0
        %545 = vmatprep.subr.bf16.mxu0 0
        %546 = vmatpush2.bf16.msra.mxu0 0
        %547 = vmatprep.subr.bf16.mxu0 0
        %548 = vmatpush2.bf16.msra.mxu0 0
        %549 = vmatprep.mubr.bf16.mxu0 0
        %550 = vmatmul.mubr.bf16.gmra.mxu0 %v446
        %v551 = vpop.f32.mrf.mxu0
        %v552 = vadd.f32 %v407, %v551
        %v553 = vpop.f32.mrf.mxu0
        %v554 = vadd.f32 %v411, %v553
        %v555 = vpop.f32.mrf.mxu0
        %v556 = vadd.f32 %v407, %v555
        %v557 = vpop.f32.mrf.mxu0
        %v558 = vadd.f32 %v411, %v557
        %559 = vmatprep.mubr.bf16.mxu0 0
        %560 = vmatmul.mubr.bf16.gmra.mxu0 %v449
        %v561 = vpop.f32.mrf.mxu0
        %v562 = vadd.f32 %v407, %v561
        %v563 = vpop.f32.mrf.mxu0
        %v564 = vadd.f32 %v411, %v563
        %v565 = vpop.f32.mrf.mxu0
        %v566 = vadd.f32 %v407, %v565
        %v567 = vpop.f32.mrf.mxu0
        %v568 = vadd.f32 %v411, %v567
        %569 = vdwg.mxu0
        %570 = vst [vmem:[#allocation2] sm:$0xff] %v499
        %571 = vst [vmem:[#allocation2 + $0x8] sm:$0xff] %v501
        %572 = vst [vmem:[#allocation2 + $0x10] sm:$0xff] %v552
        %573 = vst [vmem:[#allocation2 + $0x18] sm:$0xff] %v554
        %574 = vst [vmem:[#allocation2 + $0x20] sm:$0xff] %v503
        %575 = vst [vmem:[#allocation2 + $0x28] sm:$0xff] %v505
        %576 = vst [vmem:[#allocation2 + $0x30] sm:$0xff] %v556
        %577 = vst [vmem:[#allocation2 + $0x38] sm:$0xff] %v558
        %578 = vst [vmem:[#allocation2 + $0x40] sm:$0xff] %v509
        %579 = vst [vmem:[#allocation2 + $0x48] sm:$0xff] %v511
        %580 = vst [vmem:[#allocation2 + $0x50] sm:$0xff] %v562
        %581 = vst [vmem:[#allocation2 + $0x58] sm:$0xff] %v564
        %582 = vst [vmem:[#allocation2 + $0x60] sm:$0xff] %v513
        %583 = vst [vmem:[#allocation2 + $0x68] sm:$0xff] %v515
        %584 = vst [vmem:[#allocation2 + $0x70] sm:$0xff] %v566
        %585 = vst [vmem:[#allocation2 + $0x78] sm:$0xff] %v568
        %v586 = vld [vmem:[#allocation7] sm:$0xff]
        %v587 = vld [vmem:[#allocation7 + $0x8] sm:$0xff]
        %v588 = vld [vmem:[#allocation7 + $0x10] sm:$0xff]
        %v589 = vld [vmem:[#allocation7 + $0x18] sm:$0xff]
        %v590 = vld [vmem:[#allocation7 + $0x20] sm:$0xff]
        %v591 = vld [vmem:[#allocation7 + $0x28] sm:$0xff]
        %v592 = vld [vmem:[#allocation7 + $0x30] sm:$0xff]
        %v593 = vld [vmem:[#allocation7 + $0x38] sm:$0xff]
        %v594 = vld [vmem:[#allocation7 + $0x40] sm:$0xff]
        %v595 = vld [vmem:[#allocation7 + $0x48] sm:$0xff]
        %v596 = vld [vmem:[#allocation7 + $0x50] sm:$0xff]
        %v597 = vld [vmem:[#allocation7 + $0x58] sm:$0xff]
        %v598 = vld [vmem:[#allocation7 + $0x60] sm:$0xff]
        %v599 = vld [vmem:[#allocation7 + $0x68] sm:$0xff]
        %v600 = vld [vmem:[#allocation7 + $0x70] sm:$0xff]
        %v601 = vld [vmem:[#allocation7 + $0x78] sm:$0xff]
        %v602 = vld [vmem:[#allocation7 + $0x80] sm:$0xff]
        %v603 = vld [vmem:[#allocation7 + $0x88] sm:$0xff]
        %v604 = vld [vmem:[#allocation7 + $0x90] sm:$0xff]
        %v605 = vld [vmem:[#allocation7 + $0x98] sm:$0xff]
        %v606 = vld [vmem:[#allocation7 + $0xa0] sm:$0xff]
        %v607 = vld [vmem:[#allocation7 + $0xa8] sm:$0xff]
        %v608 = vld [vmem:[#allocation7 + $0xb0] sm:$0xff]
        %v609 = vld [vmem:[#allocation7 + $0xb8] sm:$0xff]
        %v610 = vld [vmem:[#allocation7 + $0xc0] sm:$0xff]
        %v611 = vld [vmem:[#allocation7 + $0xc8] sm:$0xff]
        %v612 = vld [vmem:[#allocation7 + $0xd0] sm:$0xff]
        %v613 = vld [vmem:[#allocation7 + $0xd8] sm:$0xff]
        %v614 = vld [vmem:[#allocation7 + $0xe0] sm:$0xff]
        %v615 = vld [vmem:[#allocation7 + $0xe8] sm:$0xff]
        %v616 = vld [vmem:[#allocation7 + $0xf0] sm:$0xff]
        %v617 = vld [vmem:[#allocation7 + $0xf8] sm:$0xff]
        %v618 = vld [vmem:[#allocation10] sm:$0xff]
        %v619 = vld [vmem:[#allocation10 + $0x8] sm:$0xff]
        %v620 = vld [vmem:[#allocation10 + $0x10] sm:$0xff]
        %v621 = vld [vmem:[#allocation10 + $0x18] sm:$0xff]
        %v622 = vld [vmem:[#allocation10 + $0x20] sm:$0xff]
        %v623 = vld [vmem:[#allocation10 + $0x28] sm:$0xff]
        %v624 = vld [vmem:[#allocation10 + $0x30] sm:$0xff]
        %v625 = vld [vmem:[#allocation10 + $0x38] sm:$0xff]
        %v626 = vld [vmem:[#allocation10 + $0x40] sm:$0xff]
        %v627 = vld [vmem:[#allocation10 + $0x48] sm:$0xff]
        %v628 = vld [vmem:[#allocation10 + $0x50] sm:$0xff]
        %v629 = vld [vmem:[#allocation10 + $0x58] sm:$0xff]
        %v630 = vld [vmem:[#allocation10 + $0x60] sm:$0xff]
        %v631 = vld [vmem:[#allocation10 + $0x68] sm:$0xff]
        %v632 = vld [vmem:[#allocation10 + $0x70] sm:$0xff]
        %v633 = vld [vmem:[#allocation10 + $0x78] sm:$0xff]
        %v634 = vld [vmem:[#allocation10 + $0x80] sm:$0xff]
        %v635 = vld [vmem:[#allocation10 + $0x88] sm:$0xff]
        %v636 = vld [vmem:[#allocation10 + $0x90] sm:$0xff]
        %v637 = vld [vmem:[#allocation10 + $0x98] sm:$0xff]
        %v638 = vld [vmem:[#allocation10 + $0xa0] sm:$0xff]
        %v639 = vld [vmem:[#allocation10 + $0xa8] sm:$0xff]
        %v640 = vld [vmem:[#allocation10 + $0xb0] sm:$0xff]
        %v641 = vld [vmem:[#allocation10 + $0xb8] sm:$0xff]
        %v642 = vld [vmem:[#allocation10 + $0xc0] sm:$0xff]
        %v643 = vld [vmem:[#allocation10 + $0xc8] sm:$0xff]
        %v644 = vld [vmem:[#allocation10 + $0xd0] sm:$0xff]
        %v645 = vld [vmem:[#allocation10 + $0xd8] sm:$0xff]
        %v646 = vld [vmem:[#allocation10 + $0xe0] sm:$0xff]
        %v647 = vld [vmem:[#allocation10 + $0xe8] sm:$0xff]
        %v648 = vld [vmem:[#allocation10 + $0xf0] sm:$0xff]
        %v649 = vld [vmem:[#allocation10 + $0xf8] sm:$0xff]
        %v650 = vld [vmem:[#allocation12] sm:$0xff]
        %v651 = vld [vmem:[#allocation12 + $0x8] sm:$0xff]
        %v652 = vld [vmem:[#allocation12 + $0x10] sm:$0xff]
        %v653 = vld [vmem:[#allocation12 + $0x18] sm:$0xff]
        %v654 = vld [vmem:[#allocation12 + $0x20] sm:$0xff]
        %v655 = vld [vmem:[#allocation12 + $0x28] sm:$0xff]
        %v656 = vld [vmem:[#allocation12 + $0x30] sm:$0xff]
        %v657 = vld [vmem:[#allocation12 + $0x38] sm:$0xff]
        %v658 = vld [vmem:[#allocation12 + $0x40] sm:$0xff]
        %v659 = vld [vmem:[#allocation12 + $0x48] sm:$0xff]
        %v660 = vld [vmem:[#allocation12 + $0x50] sm:$0xff]
        %v661 = vld [vmem:[#allocation12 + $0x58] sm:$0xff]
        %v662 = vld [vmem:[#allocation12 + $0x60] sm:$0xff]
        %v663 = vld [vmem:[#allocation12 + $0x68] sm:$0xff]
        %v664 = vld [vmem:[#allocation12 + $0x70] sm:$0xff]
        %v665 = vld [vmem:[#allocation12 + $0x78] sm:$0xff]
        %v666 = vld [vmem:[#allocation12 + $0x80] sm:$0xff]
        %v667 = vld [vmem:[#allocation12 + $0x88] sm:$0xff]
        %v668 = vld [vmem:[#allocation12 + $0x90] sm:$0xff]
        %v669 = vld [vmem:[#allocation12 + $0x98] sm:$0xff]
        %v670 = vld [vmem:[#allocation12 + $0xa0] sm:$0xff]
        %v671 = vld [vmem:[#allocation12 + $0xa8] sm:$0xff]
        %v672 = vld [vmem:[#allocation12 + $0xb0] sm:$0xff]
        %v673 = vld [vmem:[#allocation12 + $0xb8] sm:$0xff]
        %v674 = vld [vmem:[#allocation12 + $0xc0] sm:$0xff]
        %v675 = vld [vmem:[#allocation12 + $0xc8] sm:$0xff]
        %v676 = vld [vmem:[#allocation12 + $0xd0] sm:$0xff]
        %v677 = vld [vmem:[#allocation12 + $0xd8] sm:$0xff]
        %v678 = vld [vmem:[#allocation12 + $0xe0] sm:$0xff]
        %v679 = vld [vmem:[#allocation12 + $0xe8] sm:$0xff]
        %v680 = vld [vmem:[#allocation12 + $0xf0] sm:$0xff]
        %v681 = vld [vmem:[#allocation12 + $0xf8] sm:$0xff]
        %v682 = vld [vmem:[%s6] sm:$0xf]
        %v684 = vlaneseq
        %v685 = vshrl.u32 %v684, 7
        %v686 = vsub.s32 0, %v685
        %v687 = vrot.slane %v682, %v686
        %v688 = vlaneseq
        %v689 = vshrl.u32 %v688, 7
        %v690 = vsub.s32 1, %v689
        %v691 = vrot.slane %v682, %v690
        %v692 = vlaneseq
        %v693 = vshrl.u32 %v692, 7
        %v694 = vsub.s32 2, %v693
        %v695 = vrot.slane %v682, %v694
        %v696 = vlaneseq
        %v697 = vshrl.u32 %v696, 7
        %v698 = vsub.s32 3, %v697
        %v699 = vrot.slane %v682, %v698
        %v704 = vld [vmem:[#allocation3] sm:$0xf]
        %v705 = vld [vmem:[#allocation4] sm:$0xff]
        %v706 = vld [vmem:[#allocation5] sm:$0xf]
        %v707 = vld [vmem:[#allocation6] sm:$0xff]
        %s708 = smul.u32 0, 4
        %s709 = smul.addr %s708, 8
        %s710 = scalar_lea.vmem [#allocation2], %s709
        %v711 = vld [vmem:[%s710] sm:$0xff]
        %v712 = vld [vmem:[%s710 + $0x8] sm:$0xff]
        %v713 = vld [vmem:[%s710 + $0x10] sm:$0xff]
        %v714 = vld [vmem:[%s710 + $0x18] sm:$0xff]
        %v747 = vunpack.c.l.b16 %v586
        %v748 = vunpack.c.h.b16 %v586
        %v749 = vunpack.c.l.b16 %v587
        %v750 = vunpack.c.h.b16 %v587
        %v751 = vunpack.c.l.b16 %v588
        %v752 = vunpack.c.h.b16 %v588
        %v753 = vunpack.c.l.b16 %v589
        %v754 = vunpack.c.h.b16 %v589
        %v755 = vunpack.c.l.b16 %v590
        %v756 = vunpack.c.h.b16 %v590
        %v757 = vunpack.c.l.b16 %v591
        %v758 = vunpack.c.h.b16 %v591
        %v759 = vunpack.c.l.b16 %v592
        %v760 = vunpack.c.h.b16 %v592
        %v761 = vunpack.c.l.b16 %v593
        %v762 = vunpack.c.h.b16 %v593
        %v763 = vunpack.c.l.b16 %v594
        %v764 = vunpack.c.h.b16 %v594
        %v765 = vunpack.c.l.b16 %v595
        %v766 = vunpack.c.h.b16 %v595
        %v767 = vunpack.c.l.b16 %v596
        %v768 = vunpack.c.h.b16 %v596
        %v769 = vunpack.c.l.b16 %v597
        %v770 = vunpack.c.h.b16 %v597
        %v771 = vunpack.c.l.b16 %v598
        %v772 = vunpack.c.h.b16 %v598
        %v773 = vunpack.c.l.b16 %v599
        %v774 = vunpack.c.h.b16 %v599
        %v775 = vunpack.c.l.b16 %v600
        %v776 = vunpack.c.h.b16 %v600
        %v777 = vunpack.c.l.b16 %v601
        %v778 = vunpack.c.h.b16 %v601
        %v779 = vunpack.c.l.b16 %v602
        %v780 = vunpack.c.h.b16 %v602
        %v781 = vunpack.c.l.b16 %v603
        %v782 = vunpack.c.h.b16 %v603
        %v783 = vunpack.c.l.b16 %v604
        %v784 = vunpack.c.h.b16 %v604
        %v785 = vunpack.c.l.b16 %v605
        %v786 = vunpack.c.h.b16 %v605
        %v787 = vunpack.c.l.b16 %v606
        %v788 = vunpack.c.h.b16 %v606
        %v789 = vunpack.c.l.b16 %v607
        %v790 = vunpack.c.h.b16 %v607
        %v791 = vunpack.c.l.b16 %v608
        %v792 = vunpack.c.h.b16 %v608
        %v793 = vunpack.c.l.b16 %v609
        %v794 = vunpack.c.h.b16 %v609
        %v795 = vunpack.c.l.b16 %v610
        %v796 = vunpack.c.h.b16 %v610
        %v797 = vunpack.c.l.b16 %v611
        %v798 = vunpack.c.h.b16 %v611
        %v799 = vunpack.c.l.b16 %v612
        %v800 = vunpack.c.h.b16 %v612
        %v801 = vunpack.c.l.b16 %v613
        %v802 = vunpack.c.h.b16 %v613
        %v803 = vunpack.c.l.b16 %v614
        %v804 = vunpack.c.h.b16 %v614
        %v805 = vunpack.c.l.b16 %v615
        %v806 = vunpack.c.h.b16 %v615
        %v807 = vunpack.c.l.b16 %v616
        %v808 = vunpack.c.h.b16 %v616
        %v809 = vunpack.c.l.b16 %v617
        %v810 = vunpack.c.h.b16 %v617
        %v811 = vpack.c.b16 %v751, %v747
        %v812 = vpack.c.b16 %v752, %v748
        %v813 = vpack.c.b16 %v753, %v749
        %v814 = vpack.c.b16 %v754, %v750
        %v815 = vpack.c.b16 %v759, %v755
        %v816 = vpack.c.b16 %v760, %v756
        %v817 = vpack.c.b16 %v761, %v757
        %v818 = vpack.c.b16 %v762, %v758
        %v819 = vpack.c.b16 %v767, %v763
        %v820 = vpack.c.b16 %v768, %v764
        %v821 = vpack.c.b16 %v769, %v765
        %v822 = vpack.c.b16 %v770, %v766
        %v823 = vpack.c.b16 %v775, %v771
        %v824 = vpack.c.b16 %v776, %v772
        %v825 = vpack.c.b16 %v777, %v773
        %v826 = vpack.c.b16 %v778, %v774
        %v827 = vpack.c.b16 %v783, %v779
        %v828 = vpack.c.b16 %v784, %v780
        %v829 = vpack.c.b16 %v785, %v781
        %v830 = vpack.c.b16 %v786, %v782
        %v831 = vpack.c.b16 %v791, %v787
        %v832 = vpack.c.b16 %v792, %v788
        %v833 = vpack.c.b16 %v793, %v789
        %v834 = vpack.c.b16 %v794, %v790
        %v835 = vpack.c.b16 %v799, %v795
        %v836 = vpack.c.b16 %v800, %v796
        %v837 = vpack.c.b16 %v801, %v797
        %v838 = vpack.c.b16 %v802, %v798
        %v839 = vpack.c.b16 %v807, %v803
        %v840 = vpack.c.b16 %v808, %v804
        %v841 = vpack.c.b16 %v809, %v805
        %v842 = vpack.c.b16 %v810, %v806
        %875 = vmatprep.subr.bf16.mxu0 %v840
        %876 = vmatpush1.bf16.msra.mxu0 %v839
        %877 = vmatprep.subr.bf16.mxu0 %v836
        %878 = vmatpush1.bf16.msra.mxu0 %v835
        %879 = vmatprep.subr.bf16.mxu0 %v832
        %880 = vmatpush1.bf16.msra.mxu0 %v831
        %881 = vmatprep.subr.bf16.mxu0 %v828
        %882 = vmatpush1.bf16.msra.mxu0 %v827
        %883 = vmatprep.subr.bf16.mxu0 %v824
        %884 = vmatpush1.bf16.msra.mxu0 %v823
        %885 = vmatprep.subr.bf16.mxu0 %v820
        %886 = vmatpush1.bf16.msra.mxu0 %v819
        %887 = vmatprep.subr.bf16.mxu0 %v816
        %888 = vmatpush1.bf16.msra.mxu0 %v815
        %889 = vmatprep.subr.bf16.mxu0 %v812
        %890 = vmatpush1.bf16.msra.mxu0 %v811
        %891 = vmatprep.subr.bf16.mxu0 0
        %892 = vmatpush2.bf16.msra.mxu0 0
        %893 = vmatprep.subr.bf16.mxu0 0
        %894 = vmatpush2.bf16.msra.mxu0 0
        %895 = vmatprep.subr.bf16.mxu0 0
        %896 = vmatpush2.bf16.msra.mxu0 0
        %897 = vmatprep.subr.bf16.mxu0 0
        %898 = vmatpush2.bf16.msra.mxu0 0
        %899 = vmatprep.subr.bf16.mxu0 0
        %900 = vmatpush2.bf16.msra.mxu0 0
        %901 = vmatprep.subr.bf16.mxu0 0
        %902 = vmatpush2.bf16.msra.mxu0 0
        %903 = vmatprep.subr.bf16.mxu0 0
        %904 = vmatpush2.bf16.msra.mxu0 0
        %905 = vmatprep.subr.bf16.mxu0 0
        %906 = vmatpush2.bf16.msra.mxu0 0
        %907 = vmatprep.mubr.bf16.mxu0 0
        %908 = vmatmul.mubr.bf16.gmra.mxu0 %v704
        %v909 = vpop.f32.mrf.mxu0
        %v910 = vadd.f32 0.0, %v909
        %v911 = vpop.f32.mrf.mxu0
        %v912 = vadd.f32 0.0, %v911
        %v913 = vpop.f32.mrf.mxu0
        %v914 = vpop.f32.mrf.mxu0
        %915 = vdwg.mxu0
        %916 = vmatprep.subr.bf16.mxu0 %v842
        %917 = vmatpush1.bf16.msra.mxu0 %v841
        %918 = vmatprep.subr.bf16.mxu0 %v838
        %919 = vmatpush1.bf16.msra.mxu0 %v837
        %920 = vmatprep.subr.bf16.mxu0 %v834
        %921 = vmatpush1.bf16.msra.mxu0 %v833
        %922 = vmatprep.subr.bf16.mxu0 %v830
        %923 = vmatpush1.bf16.msra.mxu0 %v829
        %924 = vmatprep.subr.bf16.mxu0 %v826
        %925 = vmatpush1.bf16.msra.mxu0 %v825
        %926 = vmatprep.subr.bf16.mxu0 %v822
        %927 = vmatpush1.bf16.msra.mxu0 %v821
        %928 = vmatprep.subr.bf16.mxu0 %v818
        %929 = vmatpush1.bf16.msra.mxu0 %v817
        %930 = vmatprep.subr.bf16.mxu0 %v814
        %931 = vmatpush1.bf16.msra.mxu0 %v813
        %932 = vmatprep.subr.bf16.mxu0 0
        %933 = vmatpush2.bf16.msra.mxu0 0
        %934 = vmatprep.subr.bf16.mxu0 0
        %935 = vmatpush2.bf16.msra.mxu0 0
        %936 = vmatprep.subr.bf16.mxu0 0
        %937 = vmatpush2.bf16.msra.mxu0 0
        %938 = vmatprep.subr.bf16.mxu0 0
        %939 = vmatpush2.bf16.msra.mxu0 0
        %940 = vmatprep.subr.bf16.mxu0 0
        %941 = vmatpush2.bf16.msra.mxu0 0
        %942 = vmatprep.subr.bf16.mxu0 0
        %943 = vmatpush2.bf16.msra.mxu0 0
        %944 = vmatprep.subr.bf16.mxu0 0
        %945 = vmatpush2.bf16.msra.mxu0 0
        %946 = vmatprep.subr.bf16.mxu0 0
        %947 = vmatpush2.bf16.msra.mxu0 0
        %948 = vmatprep.mubr.bf16.mxu0 0
        %949 = vmatmul.mubr.bf16.gmra.mxu0 %v704
        %v950 = vpop.f32.mrf.mxu0
        %v951 = vadd.f32 0.0, %v950
        %v952 = vpop.f32.mrf.mxu0
        %v953 = vadd.f32 0.0, %v952
        %v954 = vpop.f32.mrf.mxu0
        %v955 = vpop.f32.mrf.mxu0
        %956 = vdwg.mxu0
        %v957 = vadd.f32 %v711, %v910
        %v958 = vadd.f32 %v712, %v912
        %v959 = vadd.f32 %v713, %v951
        %v960 = vadd.f32 %v714, %v953
        %v961 = vmul.f32 %v957, 0.5
        %v962 = vtanh.pop %v961
        %v963 = vmul.f32 %v962, 0.5
        %v964 = vadd.f32 %v963, 0.5
        %v965 = vmul.f32 %v958, 0.5
        %v966 = vtanh.pop %v965
        %v967 = vmul.f32 %v966, 0.5
        %v968 = vadd.f32 %v967, 0.5
        %v969 = vtanh.pop %v959
        %v970 = vmul.f32 %v960, 0.5
        %v971 = vtanh.pop %v970
        %v972 = vmul.f32 %v971, 0.5
        %v973 = vadd.f32 %v972, 0.5
        %v974 = vmul.f32 %v968, %v705
        %v975 = vmul.f32 %v964, %v969
        %v976 = vadd.f32 %v974, %v975
        %v977 = vtanh.pop %v976
        %v978 = vmul.f32 %v973, %v977
        %v979 = vpack.c.bf16 %v978, %v978
        %v1012 = vunpack.c.l.b16 %v650
        %v1013 = vunpack.c.h.b16 %v650
        %v1014 = vunpack.c.l.b16 %v651
        %v1015 = vunpack.c.h.b16 %v651
        %v1016 = vunpack.c.l.b16 %v652
        %v1017 = vunpack.c.h.b16 %v652
        %v1018 = vunpack.c.l.b16 %v653
        %v1019 = vunpack.c.h.b16 %v653
        %v1020 = vunpack.c.l.b16 %v654
        %v1021 = vunpack.c.h.b16 %v654
        %v1022 = vunpack.c.l.b16 %v655
        %v1023 = vunpack.c.h.b16 %v655
        %v1024 = vunpack.c.l.b16 %v656
        %v1025 = vunpack.c.h.b16 %v656
        %v1026 = vunpack.c.l.b16 %v657
        %v1027 = vunpack.c.h.b16 %v657
        %v1028 = vunpack.c.l.b16 %v658
        %v1029 = vunpack.c.h.b16 %v658
        %v1030 = vunpack.c.l.b16 %v659
        %v1031 = vunpack.c.h.b16 %v659
        %v1032 = vunpack.c.l.b16 %v660
        %v1033 = vunpack.c.h.b16 %v660
        %v1034 = vunpack.c.l.b16 %v661
        %v1035 = vunpack.c.h.b16 %v661
        %v1036 = vunpack.c.l.b16 %v662
        %v1037 = vunpack.c.h.b16 %v662
        %v1038 = vunpack.c.l.b16 %v663
        %v1039 = vunpack.c.h.b16 %v663
        %v1040 = vunpack.c.l.b16 %v664
        %v1041 = vunpack.c.h.b16 %v664
        %v1042 = vunpack.c.l.b16 %v665
        %v1043 = vunpack.c.h.b16 %v665
        %v1044 = vunpack.c.l.b16 %v666
        %v1045 = vunpack.c.h.b16 %v666
        %v1046 = vunpack.c.l.b16 %v667
        %v1047 = vunpack.c.h.b16 %v667
        %v1048 = vunpack.c.l.b16 %v668
        %v1049 = vunpack.c.h.b16 %v668
        %v1050 = vunpack.c.l.b16 %v669
        %v1051 = vunpack.c.h.b16 %v669
        %v1052 = vunpack.c.l.b16 %v670
        %v1053 = vunpack.c.h.b16 %v670
        %v1054 = vunpack.c.l.b16 %v671
        %v1055 = vunpack.c.h.b16 %v671
        %v1056 = vunpack.c.l.b16 %v672
        %v1057 = vunpack.c.h.b16 %v672
        %v1058 = vunpack.c.l.b16 %v673
        %v1059 = vunpack.c.h.b16 %v673
        %v1060 = vunpack.c.l.b16 %v674
        %v1061 = vunpack.c.h.b16 %v674
        %v1062 = vunpack.c.l.b16 %v675
        %v1063 = vunpack.c.h.b16 %v675
        %v1064 = vunpack.c.l.b16 %v676
        %v1065 = vunpack.c.h.b16 %v676
        %v1066 = vunpack.c.l.b16 %v677
        %v1067 = vunpack.c.h.b16 %v677
        %v1068 = vunpack.c.l.b16 %v678
        %v1069 = vunpack.c.h.b16 %v678
        %v1070 = vunpack.c.l.b16 %v679
        %v1071 = vunpack.c.h.b16 %v679
        %v1072 = vunpack.c.l.b16 %v680
        %v1073 = vunpack.c.h.b16 %v680
        %v1074 = vunpack.c.l.b16 %v681
        %v1075 = vunpack.c.h.b16 %v681
        %v1076 = vpack.c.b16 %v1016, %v1012
        %v1077 = vpack.c.b16 %v1017, %v1013
        %v1078 = vpack.c.b16 %v1018, %v1014
        %v1079 = vpack.c.b16 %v1019, %v1015
        %v1080 = vpack.c.b16 %v1024, %v1020
        %v1081 = vpack.c.b16 %v1025, %v1021
        %v1082 = vpack.c.b16 %v1026, %v1022
        %v1083 = vpack.c.b16 %v1027, %v1023
        %v1084 = vpack.c.b16 %v1032, %v1028
        %v1085 = vpack.c.b16 %v1033, %v1029
        %v1086 = vpack.c.b16 %v1034, %v1030
        %v1087 = vpack.c.b16 %v1035, %v1031
        %v1088 = vpack.c.b16 %v1040, %v1036
        %v1089 = vpack.c.b16 %v1041, %v1037
        %v1090 = vpack.c.b16 %v1042, %v1038
        %v1091 = vpack.c.b16 %v1043, %v1039
        %v1092 = vpack.c.b16 %v1048, %v1044
        %v1093 = vpack.c.b16 %v1049, %v1045
        %v1094 = vpack.c.b16 %v1050, %v1046
        %v1095 = vpack.c.b16 %v1051, %v1047
        %v1096 = vpack.c.b16 %v1056, %v1052
        %v1097 = vpack.c.b16 %v1057, %v1053
        %v1098 = vpack.c.b16 %v1058, %v1054
        %v1099 = vpack.c.b16 %v1059, %v1055
        %v1100 = vpack.c.b16 %v1064, %v1060
        %v1101 = vpack.c.b16 %v1065, %v1061
        %v1102 = vpack.c.b16 %v1066, %v1062
        %v1103 = vpack.c.b16 %v1067, %v1063
        %v1104 = vpack.c.b16 %v1072, %v1068
        %v1105 = vpack.c.b16 %v1073, %v1069
        %v1106 = vpack.c.b16 %v1074, %v1070
        %v1107 = vpack.c.b16 %v1075, %v1071
        %1140 = vmatprep.subr.bf16.mxu0 %v1105
        %1141 = vmatpush1.bf16.msra.mxu0 %v1104
        %1142 = vmatprep.subr.bf16.mxu0 %v1101
        %1143 = vmatpush1.bf16.msra.mxu0 %v1100
        %1144 = vmatprep.subr.bf16.mxu0 %v1097
        %1145 = vmatpush1.bf16.msra.mxu0 %v1096
        %1146 = vmatprep.subr.bf16.mxu0 %v1093
        %1147 = vmatpush1.bf16.msra.mxu0 %v1092
        %1148 = vmatprep.subr.bf16.mxu0 %v1089
        %1149 = vmatpush1.bf16.msra.mxu0 %v1088
        %1150 = vmatprep.subr.bf16.mxu0 %v1085
        %1151 = vmatpush1.bf16.msra.mxu0 %v1084
        %1152 = vmatprep.subr.bf16.mxu0 %v1081
        %1153 = vmatpush1.bf16.msra.mxu0 %v1080
        %1154 = vmatprep.subr.bf16.mxu0 %v1077
        %1155 = vmatpush1.bf16.msra.mxu0 %v1076
        %1156 = vmatprep.subr.bf16.mxu0 0
        %1157 = vmatpush2.bf16.msra.mxu0 0
        %1158 = vmatprep.subr.bf16.mxu0 0
        %1159 = vmatpush2.bf16.msra.mxu0 0
        %1160 = vmatprep.subr.bf16.mxu0 0
        %1161 = vmatpush2.bf16.msra.mxu0 0
        %1162 = vmatprep.subr.bf16.mxu0 0
        %1163 = vmatpush2.bf16.msra.mxu0 0
        %1164 = vmatprep.subr.bf16.mxu0 0
        %1165 = vmatpush2.bf16.msra.mxu0 0
        %1166 = vmatprep.subr.bf16.mxu0 0
        %1167 = vmatpush2.bf16.msra.mxu0 0
        %1168 = vmatprep.subr.bf16.mxu0 0
        %1169 = vmatpush2.bf16.msra.mxu0 0
        %1170 = vmatprep.subr.bf16.mxu0 0
        %1171 = vmatpush2.bf16.msra.mxu0 0
        %1172 = vmatprep.mubr.bf16.mxu0 0
        %1173 = vmatmul.mubr.bf16.gmra.mxu0 %v706
        %v1174 = vpop.f32.mrf.mxu0
        %v1175 = vadd.f32 0.0, %v1174
        %v1176 = vpop.f32.mrf.mxu0
        %v1177 = vadd.f32 0.0, %v1176
        %v1178 = vpop.f32.mrf.mxu0
        %v1179 = vpop.f32.mrf.mxu0
        %1180 = vdwg.mxu0
        %1181 = vmatprep.subr.bf16.mxu0 %v1107
        %1182 = vmatpush1.bf16.msra.mxu0 %v1106
        %1183 = vmatprep.subr.bf16.mxu0 %v1103
        %1184 = vmatpush1.bf16.msra.mxu0 %v1102
        %1185 = vmatprep.subr.bf16.mxu0 %v1099
        %1186 = vmatpush1.bf16.msra.mxu0 %v1098
        %1187 = vmatprep.subr.bf16.mxu0 %v1095
        %1188 = vmatpush1.bf16.msra.mxu0 %v1094
        %1189 = vmatprep.subr.bf16.mxu0 %v1091
        %1190 = vmatpush1.bf16.msra.mxu0 %v1090
        %1191 = vmatprep.subr.bf16.mxu0 %v1087
        %1192 = vmatpush1.bf16.msra.mxu0 %v1086
        %1193 = vmatprep.subr.bf16.mxu0 %v1083
        %1194 = vmatpush1.bf16.msra.mxu0 %v1082
        %1195 = vmatprep.subr.bf16.mxu0 %v1079
        %1196 = vmatpush1.bf16.msra.mxu0 %v1078
        %1197 = vmatprep.subr.bf16.mxu0 0
        %1198 = vmatpush2.bf16.msra.mxu0 0
        %1199 = vmatprep.subr.bf16.mxu0 0
        %1200 = vmatpush2.bf16.msra.mxu0 0
        %1201 = vmatprep.subr.bf16.mxu0 0
        %1202 = vmatpush2.bf16.msra.mxu0 0
        %1203 = vmatprep.subr.bf16.mxu0 0
        %1204 = vmatpush2.bf16.msra.mxu0 0
        %1205 = vmatprep.subr.bf16.mxu0 0
        %1206 = vmatpush2.bf16.msra.mxu0 0
        %1207 = vmatprep.subr.bf16.mxu0 0
        %1208 = vmatpush2.bf16.msra.mxu0 0
        %1209 = vmatprep.subr.bf16.mxu0 0
        %1210 = vmatpush2.bf16.msra.mxu0 0
        %1211 = vmatprep.subr.bf16.mxu0 0
        %1212 = vmatpush2.bf16.msra.mxu0 0
        %1213 = vmatprep.mubr.bf16.mxu0 0
        %1214 = vmatmul.mubr.bf16.gmra.mxu0 %v706
        %v1215 = vpop.f32.mrf.mxu0
        %v1216 = vadd.f32 0.0, %v1215
        %v1217 = vpop.f32.mrf.mxu0
        %v1218 = vadd.f32 0.0, %v1217
        %v1219 = vpop.f32.mrf.mxu0
        %v1220 = vpop.f32.mrf.mxu0
        %1221 = vdwg.mxu0
        %v1254 = vunpack.c.l.b16 %v618
        %v1255 = vunpack.c.h.b16 %v618
        %v1256 = vunpack.c.l.b16 %v619
        %v1257 = vunpack.c.h.b16 %v619
        %v1258 = vunpack.c.l.b16 %v620
        %v1259 = vunpack.c.h.b16 %v620
        %v1260 = vunpack.c.l.b16 %v621
        %v1261 = vunpack.c.h.b16 %v621
        %v1262 = vunpack.c.l.b16 %v622
        %v1263 = vunpack.c.h.b16 %v622
        %v1264 = vunpack.c.l.b16 %v623
        %v1265 = vunpack.c.h.b16 %v623
        %v1266 = vunpack.c.l.b16 %v624
        %v1267 = vunpack.c.h.b16 %v624
        %v1268 = vunpack.c.l.b16 %v625
        %v1269 = vunpack.c.h.b16 %v625
        %v1270 = vunpack.c.l.b16 %v626
        %v1271 = vunpack.c.h.b16 %v626
        %v1272 = vunpack.c.l.b16 %v627
        %v1273 = vunpack.c.h.b16 %v627
        %v1274 = vunpack.c.l.b16 %v628
        %v1275 = vunpack.c.h.b16 %v628
        %v1276 = vunpack.c.l.b16 %v629
        %v1277 = vunpack.c.h.b16 %v629
        %v1278 = vunpack.c.l.b16 %v630
        %v1279 = vunpack.c.h.b16 %v630
        %v1280 = vunpack.c.l.b16 %v631
        %v1281 = vunpack.c.h.b16 %v631
        %v1282 = vunpack.c.l.b16 %v632
        %v1283 = vunpack.c.h.b16 %v632
        %v1284 = vunpack.c.l.b16 %v633
        %v1285 = vunpack.c.h.b16 %v633
        %v1286 = vunpack.c.l.b16 %v634
        %v1287 = vunpack.c.h.b16 %v634
        %v1288 = vunpack.c.l.b16 %v635
        %v1289 = vunpack.c.h.b16 %v635
        %v1290 = vunpack.c.l.b16 %v636
        %v1291 = vunpack.c.h.b16 %v636
        %v1292 = vunpack.c.l.b16 %v637
        %v1293 = vunpack.c.h.b16 %v637
        %v1294 = vunpack.c.l.b16 %v638
        %v1295 = vunpack.c.h.b16 %v638
        %v1296 = vunpack.c.l.b16 %v639
        %v1297 = vunpack.c.h.b16 %v639
        %v1298 = vunpack.c.l.b16 %v640
        %v1299 = vunpack.c.h.b16 %v640
        %v1300 = vunpack.c.l.b16 %v641
        %v1301 = vunpack.c.h.b16 %v641
        %v1302 = vunpack.c.l.b16 %v642
        %v1303 = vunpack.c.h.b16 %v642
        %v1304 = vunpack.c.l.b16 %v643
        %v1305 = vunpack.c.h.b16 %v643
        %v1306 = vunpack.c.l.b16 %v644
        %v1307 = vunpack.c.h.b16 %v644
        %v1308 = vunpack.c.l.b16 %v645
        %v1309 = vunpack.c.h.b16 %v645
        %v1310 = vunpack.c.l.b16 %v646
        %v1311 = vunpack.c.h.b16 %v646
        %v1312 = vunpack.c.l.b16 %v647
        %v1313 = vunpack.c.h.b16 %v647
        %v1314 = vunpack.c.l.b16 %v648
        %v1315 = vunpack.c.h.b16 %v648
        %v1316 = vunpack.c.l.b16 %v649
        %v1317 = vunpack.c.h.b16 %v649
        %v1318 = vpack.c.b16 %v1258, %v1254
        %v1319 = vpack.c.b16 %v1259, %v1255
        %v1320 = vpack.c.b16 %v1260, %v1256
        %v1321 = vpack.c.b16 %v1261, %v1257
        %v1322 = vpack.c.b16 %v1266, %v1262
        %v1323 = vpack.c.b16 %v1267, %v1263
        %v1324 = vpack.c.b16 %v1268, %v1264
        %v1325 = vpack.c.b16 %v1269, %v1265
        %v1326 = vpack.c.b16 %v1274, %v1270
        %v1327 = vpack.c.b16 %v1275, %v1271
        %v1328 = vpack.c.b16 %v1276, %v1272
        %v1329 = vpack.c.b16 %v1277, %v1273
        %v1330 = vpack.c.b16 %v1282, %v1278
        %v1331 = vpack.c.b16 %v1283, %v1279
        %v1332 = vpack.c.b16 %v1284, %v1280
        %v1333 = vpack.c.b16 %v1285, %v1281
        %v1334 = vpack.c.b16 %v1290, %v1286
        %v1335 = vpack.c.b16 %v1291, %v1287
        %v1336 = vpack.c.b16 %v1292, %v1288
        %v1337 = vpack.c.b16 %v1293, %v1289
        %v1338 = vpack.c.b16 %v1298, %v1294
        %v1339 = vpack.c.b16 %v1299, %v1295
        %v1340 = vpack.c.b16 %v1300, %v1296
        %v1341 = vpack.c.b16 %v1301, %v1297
        %v1342 = vpack.c.b16 %v1306, %v1302
        %v1343 = vpack.c.b16 %v1307, %v1303
        %v1344 = vpack.c.b16 %v1308, %v1304
        %v1345 = vpack.c.b16 %v1309, %v1305
        %v1346 = vpack.c.b16 %v1314, %v1310
        %v1347 = vpack.c.b16 %v1315, %v1311
        %v1348 = vpack.c.b16 %v1316, %v1312
        %v1349 = vpack.c.b16 %v1317, %v1313
        %1382 = vmatprep.subr.bf16.mxu0 %v1347
        %1383 = vmatpush1.bf16.msra.mxu0 %v1346
        %1384 = vmatprep.subr.bf16.mxu0 %v1343
        %1385 = vmatpush1.bf16.msra.mxu0 %v1342
        %1386 = vmatprep.subr.bf16.mxu0 %v1339
        %1387 = vmatpush1.bf16.msra.mxu0 %v1338
        %1388 = vmatprep.subr.bf16.mxu0 %v1335
        %1389 = vmatpush1.bf16.msra.mxu0 %v1334
        %1390 = vmatprep.subr.bf16.mxu0 %v1331
        %1391 = vmatpush1.bf16.msra.mxu0 %v1330
        %1392 = vmatprep.subr.bf16.mxu0 %v1327
        %1393 = vmatpush1.bf16.msra.mxu0 %v1326
        %1394 = vmatprep.subr.bf16.mxu0 %v1323
        %1395 = vmatpush1.bf16.msra.mxu0 %v1322
        %1396 = vmatprep.subr.bf16.mxu0 %v1319
        %1397 = vmatpush1.bf16.msra.mxu0 %v1318
        %1398 = vmatprep.subr.bf16.mxu0 0
        %1399 = vmatpush2.bf16.msra.mxu0 0
        %1400 = vmatprep.subr.bf16.mxu0 0
        %1401 = vmatpush2.bf16.msra.mxu0 0
        %1402 = vmatprep.subr.bf16.mxu0 0
        %1403 = vmatpush2.bf16.msra.mxu0 0
        %1404 = vmatprep.subr.bf16.mxu0 0
        %1405 = vmatpush2.bf16.msra.mxu0 0
        %1406 = vmatprep.subr.bf16.mxu0 0
        %1407 = vmatpush2.bf16.msra.mxu0 0
        %1408 = vmatprep.subr.bf16.mxu0 0
        %1409 = vmatpush2.bf16.msra.mxu0 0
        %1410 = vmatprep.subr.bf16.mxu0 0
        %1411 = vmatpush2.bf16.msra.mxu0 0
        %1412 = vmatprep.subr.bf16.mxu0 0
        %1413 = vmatpush2.bf16.msra.mxu0 0
        %1414 = vmatprep.mubr.bf16.mxu0 0
        %1415 = vmatmul.mubr.bf16.gmra.mxu0 %v979
        %v1416 = vpop.f32.mrf.mxu0
        %v1417 = vadd.f32 %v1175, %v1416
        %v1418 = vpop.f32.mrf.mxu0
        %v1419 = vadd.f32 %v1177, %v1418
        %v1420 = vpop.f32.mrf.mxu0
        %v1421 = vpop.f32.mrf.mxu0
        %1422 = vdwg.mxu0
        %1423 = vmatprep.subr.bf16.mxu0 %v1349
        %1424 = vmatpush1.bf16.msra.mxu0 %v1348
        %1425 = vmatprep.subr.bf16.mxu0 %v1345
        %1426 = vmatpush1.bf16.msra.mxu0 %v1344
        %1427 = vmatprep.subr.bf16.mxu0 %v1341
        %1428 = vmatpush1.bf16.msra.mxu0 %v1340
        %1429 = vmatprep.subr.bf16.mxu0 %v1337
        %1430 = vmatpush1.bf16.msra.mxu0 %v1336
        %1431 = vmatprep.subr.bf16.mxu0 %v1333
        %1432 = vmatpush1.bf16.msra.mxu0 %v1332
        %1433 = vmatprep.subr.bf16.mxu0 %v1329
        %1434 = vmatpush1.bf16.msra.mxu0 %v1328
        %1435 = vmatprep.subr.bf16.mxu0 %v1325
        %1436 = vmatpush1.bf16.msra.mxu0 %v1324
        %1437 = vmatprep.subr.bf16.mxu0 %v1321
        %1438 = vmatpush1.bf16.msra.mxu0 %v1320
        %1439 = vmatprep.subr.bf16.mxu0 0
        %1440 = vmatpush2.bf16.msra.mxu0 0
        %1441 = vmatprep.subr.bf16.mxu0 0
        %1442 = vmatpush2.bf16.msra.mxu0 0
        %1443 = vmatprep.subr.bf16.mxu0 0
        %1444 = vmatpush2.bf16.msra.mxu0 0
        %1445 = vmatprep.subr.bf16.mxu0 0
        %1446 = vmatpush2.bf16.msra.mxu0 0
        %1447 = vmatprep.subr.bf16.mxu0 0
        %1448 = vmatpush2.bf16.msra.mxu0 0
        %1449 = vmatprep.subr.bf16.mxu0 0
        %1450 = vmatpush2.bf16.msra.mxu0 0
        %1451 = vmatprep.subr.bf16.mxu0 0
        %1452 = vmatpush2.bf16.msra.mxu0 0
        %1453 = vmatprep.subr.bf16.mxu0 0
        %1454 = vmatpush2.bf16.msra.mxu0 0
        %1455 = vmatprep.mubr.bf16.mxu0 0
        %1456 = vmatmul.mubr.bf16.gmra.mxu0 %v979
        %v1457 = vpop.f32.mrf.mxu0
        %v1458 = vadd.f32 %v1216, %v1457
        %v1459 = vpop.f32.mrf.mxu0
        %v1460 = vadd.f32 %v1218, %v1459
        %v1461 = vpop.f32.mrf.mxu0
        %v1462 = vpop.f32.mrf.mxu0
        %1463 = vdwg.mxu0
        %v1464 = vadd.f32 %v1417, %v687
        %v1465 = vadd.f32 %v1419, %v691
        %v1466 = vadd.f32 %v1458, %v695
        %v1467 = vadd.f32 %v1460, %v699
        %v1468 = vmul.f32 %v1464, 0.5
        %v1469 = vtanh.pop %v1468
        %v1470 = vmul.f32 %v1469, 0.5
        %v1471 = vadd.f32 %v1470, 0.5
        %v1472 = vmul.f32 %v1465, 0.5
        %v1473 = vtanh.pop %v1472
        %v1474 = vmul.f32 %v1473, 0.5
        %v1475 = vadd.f32 %v1474, 0.5
        %v1476 = vtanh.pop %v1466
        %v1477 = vmul.f32 %v1467, 0.5
        %v1478 = vtanh.pop %v1477
        %v1479 = vmul.f32 %v1478, 0.5
        %v1480 = vadd.f32 %v1479, 0.5
        %v1481 = vmul.f32 %v1475, %v707
        %v1482 = vmul.f32 %v1471, %v1476
        %v1483 = vadd.f32 %v1481, %v1482
        %v1484 = vtanh.pop %v1483
        %v1485 = vmul.f32 %v1480, %v1484
        %v1486 = vpack.c.bf16 %v1485, %v1485
        %s1487 = smul.u32 1, 4
        %s1488 = smul.addr %s1487, 8
        %s1489 = scalar_lea.vmem [#allocation2], %s1488
        %v1490 = vld [vmem:[%s1489] sm:$0xff]
        %v1491 = vld [vmem:[%s1489 + $0x8] sm:$0xff]
        %v1492 = vld [vmem:[%s1489 + $0x10] sm:$0xff]
        %v1493 = vld [vmem:[%s1489 + $0x18] sm:$0xff]
        %1494 = vmatprep.subr.bf16.mxu0 %v840
        %1495 = vmatpush1.bf16.msra.mxu0 %v839
        %1496 = vmatprep.subr.bf16.mxu0 %v836
        %1497 = vmatpush1.bf16.msra.mxu0 %v835
        %1498 = vmatprep.subr.bf16.mxu0 %v832
        %1499 = vmatpush1.bf16.msra.mxu0 %v831
        %1500 = vmatprep.subr.bf16.mxu0 %v828
        %1501 = vmatpush1.bf16.msra.mxu0 %v827
        %1502 = vmatprep.subr.bf16.mxu0 %v824
        %1503 = vmatpush1.bf16.msra.mxu0 %v823
        %1504 = vmatprep.subr.bf16.mxu0 %v820
        %1505 = vmatpush1.bf16.msra.mxu0 %v819
        %1506 = vmatprep.subr.bf16.mxu0 %v816
        %1507 = vmatpush1.bf16.msra.mxu0 %v815
        %1508 = vmatprep.subr.bf16.mxu0 %v812
        %1509 = vmatpush1.bf16.msra.mxu0 %v811
        %1510 = vmatprep.subr.bf16.mxu0 0
        %1511 = vmatpush2.bf16.msra.mxu0 0
        %1512 = vmatprep.subr.bf16.mxu0 0
        %1513 = vmatpush2.bf16.msra.mxu0 0
        %1514 = vmatprep.subr.bf16.mxu0 0
        %1515 = vmatpush2.bf16.msra.mxu0 0
        %1516 = vmatprep.subr.bf16.mxu0 0
        %1517 = vmatpush2.bf16.msra.mxu0 0
        %1518 = vmatprep.subr.bf16.mxu0 0
        %1519 = vmatpush2.bf16.msra.mxu0 0
        %1520 = vmatprep.subr.bf16.mxu0 0
        %1521 = vmatpush2.bf16.msra.mxu0 0
        %1522 = vmatprep.subr.bf16.mxu0 0
        %1523 = vmatpush2.bf16.msra.mxu0 0
        %1524 = vmatprep.subr.bf16.mxu0 0
        %1525 = vmatpush2.bf16.msra.mxu0 0
        %1526 = vmatprep.mubr.bf16.mxu0 0
        %1527 = vmatmul.mubr.bf16.gmra.mxu0 %v979
        %v1528 = vpop.f32.mrf.mxu0
        %v1529 = vadd.f32 0.0, %v1528
        %v1530 = vpop.f32.mrf.mxu0
        %v1531 = vadd.f32 0.0, %v1530
        %v1532 = vpop.f32.mrf.mxu0
        %v1533 = vpop.f32.mrf.mxu0
        %1534 = vdwg.mxu0
        %1535 = vmatprep.subr.bf16.mxu0 %v842
        %1536 = vmatpush1.bf16.msra.mxu0 %v841
        %1537 = vmatprep.subr.bf16.mxu0 %v838
        %1538 = vmatpush1.bf16.msra.mxu0 %v837
        %1539 = vmatprep.subr.bf16.mxu0 %v834
        %1540 = vmatpush1.bf16.msra.mxu0 %v833
        %1541 = vmatprep.subr.bf16.mxu0 %v830
        %1542 = vmatpush1.bf16.msra.mxu0 %v829
        %1543 = vmatprep.subr.bf16.mxu0 %v826
        %1544 = vmatpush1.bf16.msra.mxu0 %v825
        %1545 = vmatprep.subr.bf16.mxu0 %v822
        %1546 = vmatpush1.bf16.msra.mxu0 %v821
        %1547 = vmatprep.subr.bf16.mxu0 %v818
        %1548 = vmatpush1.bf16.msra.mxu0 %v817
        %1549 = vmatprep.subr.bf16.mxu0 %v814
        %1550 = vmatpush1.bf16.msra.mxu0 %v813
        %1551 = vmatprep.subr.bf16.mxu0 0
        %1552 = vmatpush2.bf16.msra.mxu0 0
        %1553 = vmatprep.subr.bf16.mxu0 0
        %1554 = vmatpush2.bf16.msra.mxu0 0
        %1555 = vmatprep.subr.bf16.mxu0 0
        %1556 = vmatpush2.bf16.msra.mxu0 0
        %1557 = vmatprep.subr.bf16.mxu0 0
        %1558 = vmatpush2.bf16.msra.mxu0 0
        %1559 = vmatprep.subr.bf16.mxu0 0
        %1560 = vmatpush2.bf16.msra.mxu0 0
        %1561 = vmatprep.subr.bf16.mxu0 0
        %1562 = vmatpush2.bf16.msra.mxu0 0
        %1563 = vmatprep.subr.bf16.mxu0 0
        %1564 = vmatpush2.bf16.msra.mxu0 0
        %1565 = vmatprep.subr.bf16.mxu0 0
        %1566 = vmatpush2.bf16.msra.mxu0 0
        %1567 = vmatprep.mubr.bf16.mxu0 0
        %1568 = vmatmul.mubr.bf16.gmra.mxu0 %v979
        %v1569 = vpop.f32.mrf.mxu0
        %v1570 = vadd.f32 0.0, %v1569
        %v1571 = vpop.f32.mrf.mxu0
        %v1572 = vadd.f32 0.0, %v1571
        %v1573 = vpop.f32.mrf.mxu0
        %v1574 = vpop.f32.mrf.mxu0
        %1575 = vdwg.mxu0
        %v1576 = vadd.f32 %v1490, %v1529
        %v1577 = vadd.f32 %v1491, %v1531
        %v1578 = vadd.f32 %v1492, %v1570
        %v1579 = vadd.f32 %v1493, %v1572
        %v1580 = vmul.f32 %v1576, 0.5
        %v1581 = vtanh.pop %v1580
        %v1582 = vmul.f32 %v1581, 0.5
        %v1583 = vadd.f32 %v1582, 0.5
        %v1584 = vmul.f32 %v1577, 0.5
        %v1585 = vtanh.pop %v1584
        %v1586 = vmul.f32 %v1585, 0.5
        %v1587 = vadd.f32 %v1586, 0.5
        %v1588 = vtanh.pop %v1578
        %v1589 = vmul.f32 %v1579, 0.5
        %v1590 = vtanh.pop %v1589
        %v1591 = vmul.f32 %v1590, 0.5
        %v1592 = vadd.f32 %v1591, 0.5
        %v1593 = vmul.f32 %v1587, %v976
        %v1594 = vmul.f32 %v1583, %v1588
        %v1595 = vadd.f32 %v1593, %v1594
        %v1596 = vtanh.pop %v1595
        %v1597 = vmul.f32 %v1592, %v1596
        %v1598 = vpack.c.bf16 %v1597, %v1597
        %1599 = vmatprep.subr.bf16.mxu0 %v1105
        %1600 = vmatpush1.bf16.msra.mxu0 %v1104
        %1601 = vmatprep.subr.bf16.mxu0 %v1101
        %1602 = vmatpush1.bf16.msra.mxu0 %v1100
        %1603 = vmatprep.subr.bf16.mxu0 %v1097
        %1604 = vmatpush1.bf16.msra.mxu0 %v1096
        %1605 = vmatprep.subr.bf16.mxu0 %v1093
        %1606 = vmatpush1.bf16.msra.mxu0 %v1092
        %1607 = vmatprep.subr.bf16.mxu0 %v1089
        %1608 = vmatpush1.bf16.msra.mxu0 %v1088
        %1609 = vmatprep.subr.bf16.mxu0 %v1085
        %1610 = vmatpush1.bf16.msra.mxu0 %v1084
        %1611 = vmatprep.subr.bf16.mxu0 %v1081
        %1612 = vmatpush1.bf16.msra.mxu0 %v1080
        %1613 = vmatprep.subr.bf16.mxu0 %v1077
        %1614 = vmatpush1.bf16.msra.mxu0 %v1076
        %1615 = vmatprep.subr.bf16.mxu0 0
        %1616 = vmatpush2.bf16.msra.mxu0 0
        %1617 = vmatprep.subr.bf16.mxu0 0
        %1618 = vmatpush2.bf16.msra.mxu0 0
        %1619 = vmatprep.subr.bf16.mxu0 0
        %1620 = vmatpush2.bf16.msra.mxu0 0
        %1621 = vmatprep.subr.bf16.mxu0 0
        %1622 = vmatpush2.bf16.msra.mxu0 0
        %1623 = vmatprep.subr.bf16.mxu0 0
        %1624 = vmatpush2.bf16.msra.mxu0 0
        %1625 = vmatprep.subr.bf16.mxu0 0
        %1626 = vmatpush2.bf16.msra.mxu0 0
        %1627 = vmatprep.subr.bf16.mxu0 0
        %1628 = vmatpush2.bf16.msra.mxu0 0
        %1629 = vmatprep.subr.bf16.mxu0 0
        %1630 = vmatpush2.bf16.msra.mxu0 0
        %1631 = vmatprep.mubr.bf16.mxu0 0
        %1632 = vmatmul.mubr.bf16.gmra.mxu0 %v1486
        %v1633 = vpop.f32.mrf.mxu0
        %v1634 = vadd.f32 0.0, %v1633
        %v1635 = vpop.f32.mrf.mxu0
        %v1636 = vadd.f32 0.0, %v1635
        %v1637 = vpop.f32.mrf.mxu0
        %v1638 = vpop.f32.mrf.mxu0
        %1639 = vdwg.mxu0
        %1640 = vmatprep.subr.bf16.mxu0 %v1107
        %1641 = vmatpush1.bf16.msra.mxu0 %v1106
        %1642 = vmatprep.subr.bf16.mxu0 %v1103
        %1643 = vmatpush1.bf16.msra.mxu0 %v1102
        %1644 = vmatprep.subr.bf16.mxu0 %v1099
        %1645 = vmatpush1.bf16.msra.mxu0 %v1098
        %1646 = vmatprep.subr.bf16.mxu0 %v1095
        %1647 = vmatpush1.bf16.msra.mxu0 %v1094
        %1648 = vmatprep.subr.bf16.mxu0 %v1091
        %1649 = vmatpush1.bf16.msra.mxu0 %v1090
        %1650 = vmatprep.subr.bf16.mxu0 %v1087
        %1651 = vmatpush1.bf16.msra.mxu0 %v1086
        %1652 = vmatprep.subr.bf16.mxu0 %v1083
        %1653 = vmatpush1.bf16.msra.mxu0 %v1082
        %1654 = vmatprep.subr.bf16.mxu0 %v1079
        %1655 = vmatpush1.bf16.msra.mxu0 %v1078
        %1656 = vmatprep.subr.bf16.mxu0 0
        %1657 = vmatpush2.bf16.msra.mxu0 0
        %1658 = vmatprep.subr.bf16.mxu0 0
        %1659 = vmatpush2.bf16.msra.mxu0 0
        %1660 = vmatprep.subr.bf16.mxu0 0
        %1661 = vmatpush2.bf16.msra.mxu0 0
        %1662 = vmatprep.subr.bf16.mxu0 0
        %1663 = vmatpush2.bf16.msra.mxu0 0
        %1664 = vmatprep.subr.bf16.mxu0 0
        %1665 = vmatpush2.bf16.msra.mxu0 0
        %1666 = vmatprep.subr.bf16.mxu0 0
        %1667 = vmatpush2.bf16.msra.mxu0 0
        %1668 = vmatprep.subr.bf16.mxu0 0
        %1669 = vmatpush2.bf16.msra.mxu0 0
        %1670 = vmatprep.subr.bf16.mxu0 0
        %1671 = vmatpush2.bf16.msra.mxu0 0
        %1672 = vmatprep.mubr.bf16.mxu0 0
        %1673 = vmatmul.mubr.bf16.gmra.mxu0 %v1486
        %v1674 = vpop.f32.mrf.mxu0
        %v1675 = vadd.f32 0.0, %v1674
        %v1676 = vpop.f32.mrf.mxu0
        %v1677 = vadd.f32 0.0, %v1676
        %v1678 = vpop.f32.mrf.mxu0
        %v1679 = vpop.f32.mrf.mxu0
        %1680 = vdwg.mxu0
        %1681 = vmatprep.subr.bf16.mxu0 %v1347
        %1682 = vmatpush1.bf16.msra.mxu0 %v1346
        %1683 = vmatprep.subr.bf16.mxu0 %v1343
        %1684 = vmatpush1.bf16.msra.mxu0 %v1342
        %1685 = vmatprep.subr.bf16.mxu0 %v1339
        %1686 = vmatpush1.bf16.msra.mxu0 %v1338
        %1687 = vmatprep.subr.bf16.mxu0 %v1335
        %1688 = vmatpush1.bf16.msra.mxu0 %v1334
        %1689 = vmatprep.subr.bf16.mxu0 %v1331
        %1690 = vmatpush1.bf16.msra.mxu0 %v1330
        %1691 = vmatprep.subr.bf16.mxu0 %v1327
        %1692 = vmatpush1.bf16.msra.mxu0 %v1326
        %1693 = vmatprep.subr.bf16.mxu0 %v1323
        %1694 = vmatpush1.bf16.msra.mxu0 %v1322
        %1695 = vmatprep.subr.bf16.mxu0 %v1319
        %1696 = vmatpush1.bf16.msra.mxu0 %v1318
        %1697 = vmatprep.subr.bf16.mxu0 0
        %1698 = vmatpush2.bf16.msra.mxu0 0
        %1699 = vmatprep.subr.bf16.mxu0 0
        %1700 = vmatpush2.bf16.msra.mxu0 0
        %1701 = vmatprep.subr.bf16.mxu0 0
        %1702 = vmatpush2.bf16.msra.mxu0 0
        %1703 = vmatprep.subr.bf16.mxu0 0
        %1704 = vmatpush2.bf16.msra.mxu0 0
        %1705 = vmatprep.subr.bf16.mxu0 0
        %1706 = vmatpush2.bf16.msra.mxu0 0
        %1707 = vmatprep.subr.bf16.mxu0 0
        %1708 = vmatpush2.bf16.msra.mxu0 0
        %1709 = vmatprep.subr.bf16.mxu0 0
        %1710 = vmatpush2.bf16.msra.mxu0 0
        %1711 = vmatprep.subr.bf16.mxu0 0
        %1712 = vmatpush2.bf16.msra.mxu0 0
        %1713 = vmatprep.mubr.bf16.mxu0 0
        %1714 = vmatmul.mubr.bf16.gmra.mxu0 %v1598
        %v1715 = vpop.f32.mrf.mxu0
        %v1716 = vadd.f32 %v1634, %v1715
        %v1717 = vpop.f32.mrf.mxu0
        %v1718 = vadd.f32 %v1636, %v1717
        %v1719 = vpop.f32.mrf.mxu0
        %v1720 = vpop.f32.mrf.mxu0
        %1721 = vdwg.mxu0
        %1722 = vmatprep.subr.bf16.mxu0 %v1349
        %1723 = vmatpush1.bf16.msra.mxu0 %v1348
        %1724 = vmatprep.subr.bf16.mxu0 %v1345
        %1725 = vmatpush1.bf16.msra.mxu0 %v1344
        %1726 = vmatprep.subr.bf16.mxu0 %v1341
        %1727 = vmatpush1.bf16.msra.mxu0 %v1340
        %1728 = vmatprep.subr.bf16.mxu0 %v1337
        %1729 = vmatpush1.bf16.msra.mxu0 %v1336
        %1730 = vmatprep.subr.bf16.mxu0 %v1333
        %1731 = vmatpush1.bf16.msra.mxu0 %v1332
        %1732 = vmatprep.subr.bf16.mxu0 %v1329
        %1733 = vmatpush1.bf16.msra.mxu0 %v1328
        %1734 = vmatprep.subr.bf16.mxu0 %v1325
        %1735 = vmatpush1.bf16.msra.mxu0 %v1324
        %1736 = vmatprep.subr.bf16.mxu0 %v1321
        %1737 = vmatpush1.bf16.msra.mxu0 %v1320
        %1738 = vmatprep.subr.bf16.mxu0 0
        %1739 = vmatpush2.bf16.msra.mxu0 0
        %1740 = vmatprep.subr.bf16.mxu0 0
        %1741 = vmatpush2.bf16.msra.mxu0 0
        %1742 = vmatprep.subr.bf16.mxu0 0
        %1743 = vmatpush2.bf16.msra.mxu0 0
        %1744 = vmatprep.subr.bf16.mxu0 0
        %1745 = vmatpush2.bf16.msra.mxu0 0
        %1746 = vmatprep.subr.bf16.mxu0 0
        %1747 = vmatpush2.bf16.msra.mxu0 0
        %1748 = vmatprep.subr.bf16.mxu0 0
        %1749 = vmatpush2.bf16.msra.mxu0 0
        %1750 = vmatprep.subr.bf16.mxu0 0
        %1751 = vmatpush2.bf16.msra.mxu0 0
        %1752 = vmatprep.subr.bf16.mxu0 0
        %1753 = vmatpush2.bf16.msra.mxu0 0
        %1754 = vmatprep.mubr.bf16.mxu0 0
        %1755 = vmatmul.mubr.bf16.gmra.mxu0 %v1598
        %v1756 = vpop.f32.mrf.mxu0
        %v1757 = vadd.f32 %v1675, %v1756
        %v1758 = vpop.f32.mrf.mxu0
        %v1759 = vadd.f32 %v1677, %v1758
        %v1760 = vpop.f32.mrf.mxu0
        %v1761 = vpop.f32.mrf.mxu0
        %1762 = vdwg.mxu0
        %v1763 = vadd.f32 %v1716, %v687
        %v1764 = vadd.f32 %v1718, %v691
        %v1765 = vadd.f32 %v1757, %v695
        %v1766 = vadd.f32 %v1759, %v699
        %v1767 = vmul.f32 %v1763, 0.5
        %v1768 = vtanh.pop %v1767
        %v1769 = vmul.f32 %v1768, 0.5
        %v1770 = vadd.f32 %v1769, 0.5
        %v1771 = vmul.f32 %v1764, 0.5
        %v1772 = vtanh.pop %v1771
        %v1773 = vmul.f32 %v1772, 0.5
        %v1774 = vadd.f32 %v1773, 0.5
        %v1775 = vtanh.pop %v1765
        %v1776 = vmul.f32 %v1766, 0.5
        %v1777 = vtanh.pop %v1776
        %v1778 = vmul.f32 %v1777, 0.5
        %v1779 = vadd.f32 %v1778, 0.5
        %v1780 = vmul.f32 %v1774, %v1483
        %v1781 = vmul.f32 %v1770, %v1775
        %v1782 = vadd.f32 %v1780, %v1781
        %v1783 = vtanh.pop %v1782
        %v1784 = vmul.f32 %v1779, %v1783
        %v1785 = vpack.c.bf16 %v1784, %v1784
        %s1786 = smul.u32 2, 4
        %s1787 = smul.addr %s1786, 8
        %s1788 = scalar_lea.vmem [#allocation2], %s1787
        %v1789 = vld [vmem:[%s1788] sm:$0xff]
        %v1790 = vld [vmem:[%s1788 + $0x8] sm:$0xff]
        %v1791 = vld [vmem:[%s1788 + $0x10] sm:$0xff]
        %v1792 = vld [vmem:[%s1788 + $0x18] sm:$0xff]
        %1793 = vmatprep.subr.bf16.mxu0 %v840
        %1794 = vmatpush1.bf16.msra.mxu0 %v839
        %1795 = vmatprep.subr.bf16.mxu0 %v836
        %1796 = vmatpush1.bf16.msra.mxu0 %v835
        %1797 = vmatprep.subr.bf16.mxu0 %v832
        %1798 = vmatpush1.bf16.msra.mxu0 %v831
        %1799 = vmatprep.subr.bf16.mxu0 %v828
        %1800 = vmatpush1.bf16.msra.mxu0 %v827
        %1801 = vmatprep.subr.bf16.mxu0 %v824
        %1802 = vmatpush1.bf16.msra.mxu0 %v823
        %1803 = vmatprep.subr.bf16.mxu0 %v820
        %1804 = vmatpush1.bf16.msra.mxu0 %v819
        %1805 = vmatprep.subr.bf16.mxu0 %v816
        %1806 = vmatpush1.bf16.msra.mxu0 %v815
        %1807 = vmatprep.subr.bf16.mxu0 %v812
        %1808 = vmatpush1.bf16.msra.mxu0 %v811
        %1809 = vmatprep.subr.bf16.mxu0 0
        %1810 = vmatpush2.bf16.msra.mxu0 0
        %1811 = vmatprep.subr.bf16.mxu0 0
        %1812 = vmatpush2.bf16.msra.mxu0 0
        %1813 = vmatprep.subr.bf16.mxu0 0
        %1814 = vmatpush2.bf16.msra.mxu0 0
        %1815 = vmatprep.subr.bf16.mxu0 0
        %1816 = vmatpush2.bf16.msra.mxu0 0
        %1817 = vmatprep.subr.bf16.mxu0 0
        %1818 = vmatpush2.bf16.msra.mxu0 0
        %1819 = vmatprep.subr.bf16.mxu0 0
        %1820 = vmatpush2.bf16.msra.mxu0 0
        %1821 = vmatprep.subr.bf16.mxu0 0
        %1822 = vmatpush2.bf16.msra.mxu0 0
        %1823 = vmatprep.subr.bf16.mxu0 0
        %1824 = vmatpush2.bf16.msra.mxu0 0
        %1825 = vmatprep.mubr.bf16.mxu0 0
        %1826 = vmatmul.mubr.bf16.gmra.mxu0 %v1598
        %v1827 = vpop.f32.mrf.mxu0
        %v1828 = vadd.f32 0.0, %v1827
        %v1829 = vpop.f32.mrf.mxu0
        %v1830 = vadd.f32 0.0, %v1829
        %v1831 = vpop.f32.mrf.mxu0
        %v1832 = vpop.f32.mrf.mxu0
        %1833 = vdwg.mxu0
        %1834 = vmatprep.subr.bf16.mxu0 %v842
        %1835 = vmatpush1.bf16.msra.mxu0 %v841
        %1836 = vmatprep.subr.bf16.mxu0 %v838
        %1837 = vmatpush1.bf16.msra.mxu0 %v837
        %1838 = vmatprep.subr.bf16.mxu0 %v834
        %1839 = vmatpush1.bf16.msra.mxu0 %v833
        %1840 = vmatprep.subr.bf16.mxu0 %v830
        %1841 = vmatpush1.bf16.msra.mxu0 %v829
        %1842 = vmatprep.subr.bf16.mxu0 %v826
        %1843 = vmatpush1.bf16.msra.mxu0 %v825
        %1844 = vmatprep.subr.bf16.mxu0 %v822
        %1845 = vmatpush1.bf16.msra.mxu0 %v821
        %1846 = vmatprep.subr.bf16.mxu0 %v818
        %1847 = vmatpush1.bf16.msra.mxu0 %v817
        %1848 = vmatprep.subr.bf16.mxu0 %v814
        %1849 = vmatpush1.bf16.msra.mxu0 %v813
        %1850 = vmatprep.subr.bf16.mxu0 0
        %1851 = vmatpush2.bf16.msra.mxu0 0
        %1852 = vmatprep.subr.bf16.mxu0 0
        %1853 = vmatpush2.bf16.msra.mxu0 0
        %1854 = vmatprep.subr.bf16.mxu0 0
        %1855 = vmatpush2.bf16.msra.mxu0 0
        %1856 = vmatprep.subr.bf16.mxu0 0
        %1857 = vmatpush2.bf16.msra.mxu0 0
        %1858 = vmatprep.subr.bf16.mxu0 0
        %1859 = vmatpush2.bf16.msra.mxu0 0
        %1860 = vmatprep.subr.bf16.mxu0 0
        %1861 = vmatpush2.bf16.msra.mxu0 0
        %1862 = vmatprep.subr.bf16.mxu0 0
        %1863 = vmatpush2.bf16.msra.mxu0 0
        %1864 = vmatprep.subr.bf16.mxu0 0
        %1865 = vmatpush2.bf16.msra.mxu0 0
        %1866 = vmatprep.mubr.bf16.mxu0 0
        %1867 = vmatmul.mubr.bf16.gmra.mxu0 %v1598
        %v1868 = vpop.f32.mrf.mxu0
        %v1869 = vadd.f32 0.0, %v1868
        %v1870 = vpop.f32.mrf.mxu0
        %v1871 = vadd.f32 0.0, %v1870
        %v1872 = vpop.f32.mrf.mxu0
        %v1873 = vpop.f32.mrf.mxu0
        %1874 = vdwg.mxu0
        %v1875 = vadd.f32 %v1789, %v1828
        %v1876 = vadd.f32 %v1790, %v1830
        %v1877 = vadd.f32 %v1791, %v1869
        %v1878 = vadd.f32 %v1792, %v1871
        %v1879 = vmul.f32 %v1875, 0.5
        %v1880 = vtanh.pop %v1879
        %v1881 = vmul.f32 %v1880, 0.5
        %v1882 = vadd.f32 %v1881, 0.5
        %v1883 = vmul.f32 %v1876, 0.5
        %v1884 = vtanh.pop %v1883
        %v1885 = vmul.f32 %v1884, 0.5
        %v1886 = vadd.f32 %v1885, 0.5
        %v1887 = vtanh.pop %v1877
        %v1888 = vmul.f32 %v1878, 0.5
        %v1889 = vtanh.pop %v1888
        %v1890 = vmul.f32 %v1889, 0.5
        %v1891 = vadd.f32 %v1890, 0.5
        %v1892 = vmul.f32 %v1886, %v1595
        %v1893 = vmul.f32 %v1882, %v1887
        %v1894 = vadd.f32 %v1892, %v1893
        %v1895 = vtanh.pop %v1894
        %v1896 = vmul.f32 %v1891, %v1895
        %v1897 = vpack.c.bf16 %v1896, %v1896
        %1898 = vmatprep.subr.bf16.mxu0 %v1105
        %1899 = vmatpush1.bf16.msra.mxu0 %v1104
        %1900 = vmatprep.subr.bf16.mxu0 %v1101
        %1901 = vmatpush1.bf16.msra.mxu0 %v1100
        %1902 = vmatprep.subr.bf16.mxu0 %v1097
        %1903 = vmatpush1.bf16.msra.mxu0 %v1096
        %1904 = vmatprep.subr.bf16.mxu0 %v1093
        %1905 = vmatpush1.bf16.msra.mxu0 %v1092
        %1906 = vmatprep.subr.bf16.mxu0 %v1089
        %1907 = vmatpush1.bf16.msra.mxu0 %v1088
        %1908 = vmatprep.subr.bf16.mxu0 %v1085
        %1909 = vmatpush1.bf16.msra.mxu0 %v1084
        %1910 = vmatprep.subr.bf16.mxu0 %v1081
        %1911 = vmatpush1.bf16.msra.mxu0 %v1080
        %1912 = vmatprep.subr.bf16.mxu0 %v1077
        %1913 = vmatpush1.bf16.msra.mxu0 %v1076
        %1914 = vmatprep.subr.bf16.mxu0 0
        %1915 = vmatpush2.bf16.msra.mxu0 0
        %1916 = vmatprep.subr.bf16.mxu0 0
        %1917 = vmatpush2.bf16.msra.mxu0 0
        %1918 = vmatprep.subr.bf16.mxu0 0
        %1919 = vmatpush2.bf16.msra.mxu0 0
        %1920 = vmatprep.subr.bf16.mxu0 0
        %1921 = vmatpush2.bf16.msra.mxu0 0
        %1922 = vmatprep.subr.bf16.mxu0 0
        %1923 = vmatpush2.bf16.msra.mxu0 0
        %1924 = vmatprep.subr.bf16.mxu0 0
        %1925 = vmatpush2.bf16.msra.mxu0 0
        %1926 = vmatprep.subr.bf16.mxu0 0
        %1927 = vmatpush2.bf16.msra.mxu0 0
        %1928 = vmatprep.subr.bf16.mxu0 0
        %1929 = vmatpush2.bf16.msra.mxu0 0
        %1930 = vmatprep.mubr.bf16.mxu0 0
        %1931 = vmatmul.mubr.bf16.gmra.mxu0 %v1785
        %v1932 = vpop.f32.mrf.mxu0
        %v1933 = vadd.f32 0.0, %v1932
        %v1934 = vpop.f32.mrf.mxu0
        %v1935 = vadd.f32 0.0, %v1934
        %v1936 = vpop.f32.mrf.mxu0
        %v1937 = vpop.f32.mrf.mxu0
        %1938 = vdwg.mxu0
        %1939 = vmatprep.subr.bf16.mxu0 %v1107
        %1940 = vmatpush1.bf16.msra.mxu0 %v1106
        %1941 = vmatprep.subr.bf16.mxu0 %v1103
        %1942 = vmatpush1.bf16.msra.mxu0 %v1102
        %1943 = vmatprep.subr.bf16.mxu0 %v1099
        %1944 = vmatpush1.bf16.msra.mxu0 %v1098
        %1945 = vmatprep.subr.bf16.mxu0 %v1095
        %1946 = vmatpush1.bf16.msra.mxu0 %v1094
        %1947 = vmatprep.subr.bf16.mxu0 %v1091
        %1948 = vmatpush1.bf16.msra.mxu0 %v1090
        %1949 = vmatprep.subr.bf16.mxu0 %v1087
        %1950 = vmatpush1.bf16.msra.mxu0 %v1086
        %1951 = vmatprep.subr.bf16.mxu0 %v1083
        %1952 = vmatpush1.bf16.msra.mxu0 %v1082
        %1953 = vmatprep.subr.bf16.mxu0 %v1079
        %1954 = vmatpush1.bf16.msra.mxu0 %v1078
        %1955 = vmatprep.subr.bf16.mxu0 0
        %1956 = vmatpush2.bf16.msra.mxu0 0
        %1957 = vmatprep.subr.bf16.mxu0 0
        %1958 = vmatpush2.bf16.msra.mxu0 0
        %1959 = vmatprep.subr.bf16.mxu0 0
        %1960 = vmatpush2.bf16.msra.mxu0 0
        %1961 = vmatprep.subr.bf16.mxu0 0
        %1962 = vmatpush2.bf16.msra.mxu0 0
        %1963 = vmatprep.subr.bf16.mxu0 0
        %1964 = vmatpush2.bf16.msra.mxu0 0
        %1965 = vmatprep.subr.bf16.mxu0 0
        %1966 = vmatpush2.bf16.msra.mxu0 0
        %1967 = vmatprep.subr.bf16.mxu0 0
        %1968 = vmatpush2.bf16.msra.mxu0 0
        %1969 = vmatprep.subr.bf16.mxu0 0
        %1970 = vmatpush2.bf16.msra.mxu0 0
        %1971 = vmatprep.mubr.bf16.mxu0 0
        %1972 = vmatmul.mubr.bf16.gmra.mxu0 %v1785
        %v1973 = vpop.f32.mrf.mxu0
        %v1974 = vadd.f32 0.0, %v1973
        %v1975 = vpop.f32.mrf.mxu0
        %v1976 = vadd.f32 0.0, %v1975
        %v1977 = vpop.f32.mrf.mxu0
        %v1978 = vpop.f32.mrf.mxu0
        %1979 = vdwg.mxu0
        %1980 = vmatprep.subr.bf16.mxu0 %v1347
        %1981 = vmatpush1.bf16.msra.mxu0 %v1346
        %1982 = vmatprep.subr.bf16.mxu0 %v1343
        %1983 = vmatpush1.bf16.msra.mxu0 %v1342
        %1984 = vmatprep.subr.bf16.mxu0 %v1339
        %1985 = vmatpush1.bf16.msra.mxu0 %v1338
        %1986 = vmatprep.subr.bf16.mxu0 %v1335
        %1987 = vmatpush1.bf16.msra.mxu0 %v1334
        %1988 = vmatprep.subr.bf16.mxu0 %v1331
        %1989 = vmatpush1.bf16.msra.mxu0 %v1330
        %1990 = vmatprep.subr.bf16.mxu0 %v1327
        %1991 = vmatpush1.bf16.msra.mxu0 %v1326
        %1992 = vmatprep.subr.bf16.mxu0 %v1323
        %1993 = vmatpush1.bf16.msra.mxu0 %v1322
        %1994 = vmatprep.subr.bf16.mxu0 %v1319
        %1995 = vmatpush1.bf16.msra.mxu0 %v1318
        %1996 = vmatprep.subr.bf16.mxu0 0
        %1997 = vmatpush2.bf16.msra.mxu0 0
        %1998 = vmatprep.subr.bf16.mxu0 0
        %1999 = vmatpush2.bf16.msra.mxu0 0
        %2000 = vmatprep.subr.bf16.mxu0 0
        %2001 = vmatpush2.bf16.msra.mxu0 0
        %2002 = vmatprep.subr.bf16.mxu0 0
        %2003 = vmatpush2.bf16.msra.mxu0 0
        %2004 = vmatprep.subr.bf16.mxu0 0
        %2005 = vmatpush2.bf16.msra.mxu0 0
        %2006 = vmatprep.subr.bf16.mxu0 0
        %2007 = vmatpush2.bf16.msra.mxu0 0
        %2008 = vmatprep.subr.bf16.mxu0 0
        %2009 = vmatpush2.bf16.msra.mxu0 0
        %2010 = vmatprep.subr.bf16.mxu0 0
        %2011 = vmatpush2.bf16.msra.mxu0 0
        %2012 = vmatprep.mubr.bf16.mxu0 0
        %2013 = vmatmul.mubr.bf16.gmra.mxu0 %v1897
        %v2014 = vpop.f32.mrf.mxu0
        %v2015 = vadd.f32 %v1933, %v2014
        %v2016 = vpop.f32.mrf.mxu0
        %v2017 = vadd.f32 %v1935, %v2016
        %v2018 = vpop.f32.mrf.mxu0
        %v2019 = vpop.f32.mrf.mxu0
        %2020 = vdwg.mxu0
        %2021 = vmatprep.subr.bf16.mxu0 %v1349
        %2022 = vmatpush1.bf16.msra.mxu0 %v1348
        %2023 = vmatprep.subr.bf16.mxu0 %v1345
        %2024 = vmatpush1.bf16.msra.mxu0 %v1344
        %2025 = vmatprep.subr.bf16.mxu0 %v1341
        %2026 = vmatpush1.bf16.msra.mxu0 %v1340
        %2027 = vmatprep.subr.bf16.mxu0 %v1337
        %2028 = vmatpush1.bf16.msra.mxu0 %v1336
        %2029 = vmatprep.subr.bf16.mxu0 %v1333
        %2030 = vmatpush1.bf16.msra.mxu0 %v1332
        %2031 = vmatprep.subr.bf16.mxu0 %v1329
        %2032 = vmatpush1.bf16.msra.mxu0 %v1328
        %2033 = vmatprep.subr.bf16.mxu0 %v1325
        %2034 = vmatpush1.bf16.msra.mxu0 %v1324
        %2035 = vmatprep.subr.bf16.mxu0 %v1321
        %2036 = vmatpush1.bf16.msra.mxu0 %v1320
        %2037 = vmatprep.subr.bf16.mxu0 0
        %2038 = vmatpush2.bf16.msra.mxu0 0
        %2039 = vmatprep.subr.bf16.mxu0 0
        %2040 = vmatpush2.bf16.msra.mxu0 0
        %2041 = vmatprep.subr.bf16.mxu0 0
        %2042 = vmatpush2.bf16.msra.mxu0 0
        %2043 = vmatprep.subr.bf16.mxu0 0
        %2044 = vmatpush2.bf16.msra.mxu0 0
        %2045 = vmatprep.subr.bf16.mxu0 0
        %2046 = vmatpush2.bf16.msra.mxu0 0
        %2047 = vmatprep.subr.bf16.mxu0 0
        %2048 = vmatpush2.bf16.msra.mxu0 0
        %2049 = vmatprep.subr.bf16.mxu0 0
        %2050 = vmatpush2.bf16.msra.mxu0 0
        %2051 = vmatprep.subr.bf16.mxu0 0
        %2052 = vmatpush2.bf16.msra.mxu0 0
        %2053 = vmatprep.mubr.bf16.mxu0 0
        %2054 = vmatmul.mubr.bf16.gmra.mxu0 %v1897
        %v2055 = vpop.f32.mrf.mxu0
        %v2056 = vadd.f32 %v1974, %v2055
        %v2057 = vpop.f32.mrf.mxu0
        %v2058 = vadd.f32 %v1976, %v2057
        %v2059 = vpop.f32.mrf.mxu0
        %v2060 = vpop.f32.mrf.mxu0
        %2061 = vdwg.mxu0
        %v2062 = vadd.f32 %v2015, %v687
        %v2063 = vadd.f32 %v2017, %v691
        %v2064 = vadd.f32 %v2056, %v695
        %v2065 = vadd.f32 %v2058, %v699
        %v2066 = vmul.f32 %v2062, 0.5
        %v2067 = vtanh.pop %v2066
        %v2068 = vmul.f32 %v2067, 0.5
        %v2069 = vadd.f32 %v2068, 0.5
        %v2070 = vmul.f32 %v2063, 0.5
        %v2071 = vtanh.pop %v2070
        %v2072 = vmul.f32 %v2071, 0.5
        %v2073 = vadd.f32 %v2072, 0.5
        %v2074 = vtanh.pop %v2064
        %v2075 = vmul.f32 %v2065, 0.5
        %v2076 = vtanh.pop %v2075
        %v2077 = vmul.f32 %v2076, 0.5
        %v2078 = vadd.f32 %v2077, 0.5
        %v2079 = vmul.f32 %v2073, %v1782
        %v2080 = vmul.f32 %v2069, %v2074
        %v2081 = vadd.f32 %v2079, %v2080
        %v2082 = vtanh.pop %v2081
        %v2083 = vmul.f32 %v2078, %v2082
        %v2084 = vpack.c.bf16 %v2083, %v2083
        %s2085 = smul.u32 3, 4
        %s2086 = smul.addr %s2085, 8
        %s2087 = scalar_lea.vmem [#allocation2], %s2086
        %v2088 = vld [vmem:[%s2087] sm:$0xff]
        %v2089 = vld [vmem:[%s2087 + $0x8] sm:$0xff]
        %v2090 = vld [vmem:[%s2087 + $0x10] sm:$0xff]
        %v2091 = vld [vmem:[%s2087 + $0x18] sm:$0xff]
        %2092 = vmatprep.subr.bf16.mxu0 %v840
        %2093 = vmatpush1.bf16.msra.mxu0 %v839
        %2094 = vmatprep.subr.bf16.mxu0 %v836
        %2095 = vmatpush1.bf16.msra.mxu0 %v835
        %2096 = vmatprep.subr.bf16.mxu0 %v832
        %2097 = vmatpush1.bf16.msra.mxu0 %v831
        %2098 = vmatprep.subr.bf16.mxu0 %v828
        %2099 = vmatpush1.bf16.msra.mxu0 %v827
        %2100 = vmatprep.subr.bf16.mxu0 %v824
        %2101 = vmatpush1.bf16.msra.mxu0 %v823
        %2102 = vmatprep.subr.bf16.mxu0 %v820
        %2103 = vmatpush1.bf16.msra.mxu0 %v819
        %2104 = vmatprep.subr.bf16.mxu0 %v816
        %2105 = vmatpush1.bf16.msra.mxu0 %v815
        %2106 = vmatprep.subr.bf16.mxu0 %v812
        %2107 = vmatpush1.bf16.msra.mxu0 %v811
        %2108 = vmatprep.subr.bf16.mxu0 0
        %2109 = vmatpush2.bf16.msra.mxu0 0
        %2110 = vmatprep.subr.bf16.mxu0 0
        %2111 = vmatpush2.bf16.msra.mxu0 0
        %2112 = vmatprep.subr.bf16.mxu0 0
        %2113 = vmatpush2.bf16.msra.mxu0 0
        %2114 = vmatprep.subr.bf16.mxu0 0
        %2115 = vmatpush2.bf16.msra.mxu0 0
        %2116 = vmatprep.subr.bf16.mxu0 0
        %2117 = vmatpush2.bf16.msra.mxu0 0
        %2118 = vmatprep.subr.bf16.mxu0 0
        %2119 = vmatpush2.bf16.msra.mxu0 0
        %2120 = vmatprep.subr.bf16.mxu0 0
        %2121 = vmatpush2.bf16.msra.mxu0 0
        %2122 = vmatprep.subr.bf16.mxu0 0
        %2123 = vmatpush2.bf16.msra.mxu0 0
        %2124 = vmatprep.mubr.bf16.mxu0 0
        %2125 = vmatmul.mubr.bf16.gmra.mxu0 %v1897
        %v2126 = vpop.f32.mrf.mxu0
        %v2127 = vadd.f32 0.0, %v2126
        %v2128 = vpop.f32.mrf.mxu0
        %v2129 = vadd.f32 0.0, %v2128
        %v2130 = vpop.f32.mrf.mxu0
        %v2131 = vpop.f32.mrf.mxu0
        %2132 = vdwg.mxu0
        %2133 = vmatprep.subr.bf16.mxu0 %v842
        %2134 = vmatpush1.bf16.msra.mxu0 %v841
        %2135 = vmatprep.subr.bf16.mxu0 %v838
        %2136 = vmatpush1.bf16.msra.mxu0 %v837
        %2137 = vmatprep.subr.bf16.mxu0 %v834
        %2138 = vmatpush1.bf16.msra.mxu0 %v833
        %2139 = vmatprep.subr.bf16.mxu0 %v830
        %2140 = vmatpush1.bf16.msra.mxu0 %v829
        %2141 = vmatprep.subr.bf16.mxu0 %v826
        %2142 = vmatpush1.bf16.msra.mxu0 %v825
        %2143 = vmatprep.subr.bf16.mxu0 %v822
        %2144 = vmatpush1.bf16.msra.mxu0 %v821
        %2145 = vmatprep.subr.bf16.mxu0 %v818
        %2146 = vmatpush1.bf16.msra.mxu0 %v817
        %2147 = vmatprep.subr.bf16.mxu0 %v814
        %2148 = vmatpush1.bf16.msra.mxu0 %v813
        %2149 = vmatprep.subr.bf16.mxu0 0
        %2150 = vmatpush2.bf16.msra.mxu0 0
        %2151 = vmatprep.subr.bf16.mxu0 0
        %2152 = vmatpush2.bf16.msra.mxu0 0
        %2153 = vmatprep.subr.bf16.mxu0 0
        %2154 = vmatpush2.bf16.msra.mxu0 0
        %2155 = vmatprep.subr.bf16.mxu0 0
        %2156 = vmatpush2.bf16.msra.mxu0 0
        %2157 = vmatprep.subr.bf16.mxu0 0
        %2158 = vmatpush2.bf16.msra.mxu0 0
        %2159 = vmatprep.subr.bf16.mxu0 0
        %2160 = vmatpush2.bf16.msra.mxu0 0
        %2161 = vmatprep.subr.bf16.mxu0 0
        %2162 = vmatpush2.bf16.msra.mxu0 0
        %2163 = vmatprep.subr.bf16.mxu0 0
        %2164 = vmatpush2.bf16.msra.mxu0 0
        %2165 = vmatprep.mubr.bf16.mxu0 0
        %2166 = vmatmul.mubr.bf16.gmra.mxu0 %v1897
        %v2167 = vpop.f32.mrf.mxu0
        %v2168 = vadd.f32 0.0, %v2167
        %v2169 = vpop.f32.mrf.mxu0
        %v2170 = vadd.f32 0.0, %v2169
        %v2171 = vpop.f32.mrf.mxu0
        %v2172 = vpop.f32.mrf.mxu0
        %2173 = vdwg.mxu0
        %v2174 = vadd.f32 %v2088, %v2127
        %v2175 = vadd.f32 %v2089, %v2129
        %v2176 = vadd.f32 %v2090, %v2168
        %v2177 = vadd.f32 %v2091, %v2170
        %v2178 = vmul.f32 %v2174, 0.5
        %v2179 = vtanh.pop %v2178
        %v2180 = vmul.f32 %v2179, 0.5
        %v2181 = vadd.f32 %v2180, 0.5
        %v2182 = vmul.f32 %v2175, 0.5
        %v2183 = vtanh.pop %v2182
        %v2184 = vmul.f32 %v2183, 0.5
        %v2185 = vadd.f32 %v2184, 0.5
        %v2186 = vtanh.pop %v2176
        %v2187 = vmul.f32 %v2177, 0.5
        %v2188 = vtanh.pop %v2187
        %v2189 = vmul.f32 %v2188, 0.5
        %v2190 = vadd.f32 %v2189, 0.5
        %v2191 = vmul.f32 %v2185, %v1894
        %v2192 = vmul.f32 %v2181, %v2186
        %v2193 = vadd.f32 %v2191, %v2192
        %v2194 = vtanh.pop %v2193
        %v2195 = vmul.f32 %v2190, %v2194
        %v2196 = vpack.c.bf16 %v2195, %v2195
        %2197 = vmatprep.subr.bf16.mxu0 %v1105
        %2198 = vmatpush1.bf16.msra.mxu0 %v1104
        %2199 = vmatprep.subr.bf16.mxu0 %v1101
        %2200 = vmatpush1.bf16.msra.mxu0 %v1100
        %2201 = vmatprep.subr.bf16.mxu0 %v1097
        %2202 = vmatpush1.bf16.msra.mxu0 %v1096
        %2203 = vmatprep.subr.bf16.mxu0 %v1093
        %2204 = vmatpush1.bf16.msra.mxu0 %v1092
        %2205 = vmatprep.subr.bf16.mxu0 %v1089
        %2206 = vmatpush1.bf16.msra.mxu0 %v1088
        %2207 = vmatprep.subr.bf16.mxu0 %v1085
        %2208 = vmatpush1.bf16.msra.mxu0 %v1084
        %2209 = vmatprep.subr.bf16.mxu0 %v1081
        %2210 = vmatpush1.bf16.msra.mxu0 %v1080
        %2211 = vmatprep.subr.bf16.mxu0 %v1077
        %2212 = vmatpush1.bf16.msra.mxu0 %v1076
        %2213 = vmatprep.subr.bf16.mxu0 0
        %2214 = vmatpush2.bf16.msra.mxu0 0
        %2215 = vmatprep.subr.bf16.mxu0 0
        %2216 = vmatpush2.bf16.msra.mxu0 0
        %2217 = vmatprep.subr.bf16.mxu0 0
        %2218 = vmatpush2.bf16.msra.mxu0 0
        %2219 = vmatprep.subr.bf16.mxu0 0
        %2220 = vmatpush2.bf16.msra.mxu0 0
        %2221 = vmatprep.subr.bf16.mxu0 0
        %2222 = vmatpush2.bf16.msra.mxu0 0
        %2223 = vmatprep.subr.bf16.mxu0 0
        %2224 = vmatpush2.bf16.msra.mxu0 0
        %2225 = vmatprep.subr.bf16.mxu0 0
        %2226 = vmatpush2.bf16.msra.mxu0 0
        %2227 = vmatprep.subr.bf16.mxu0 0
        %2228 = vmatpush2.bf16.msra.mxu0 0
        %2229 = vmatprep.mubr.bf16.mxu0 0
        %2230 = vmatmul.mubr.bf16.gmra.mxu0 %v2084
        %v2231 = vpop.f32.mrf.mxu0
        %v2232 = vadd.f32 0.0, %v2231
        %v2233 = vpop.f32.mrf.mxu0
        %v2234 = vadd.f32 0.0, %v2233
        %v2235 = vpop.f32.mrf.mxu0
        %v2236 = vpop.f32.mrf.mxu0
        %2237 = vdwg.mxu0
        %2238 = vmatprep.subr.bf16.mxu0 %v1107
        %2239 = vmatpush1.bf16.msra.mxu0 %v1106
        %2240 = vmatprep.subr.bf16.mxu0 %v1103
        %2241 = vmatpush1.bf16.msra.mxu0 %v1102
        %2242 = vmatprep.subr.bf16.mxu0 %v1099
        %2243 = vmatpush1.bf16.msra.mxu0 %v1098
        %2244 = vmatprep.subr.bf16.mxu0 %v1095
        %2245 = vmatpush1.bf16.msra.mxu0 %v1094
        %2246 = vmatprep.subr.bf16.mxu0 %v1091
        %2247 = vmatpush1.bf16.msra.mxu0 %v1090
        %2248 = vmatprep.subr.bf16.mxu0 %v1087
        %2249 = vmatpush1.bf16.msra.mxu0 %v1086
        %2250 = vmatprep.subr.bf16.mxu0 %v1083
        %2251 = vmatpush1.bf16.msra.mxu0 %v1082
        %2252 = vmatprep.subr.bf16.mxu0 %v1079
        %2253 = vmatpush1.bf16.msra.mxu0 %v1078
        %2254 = vmatprep.subr.bf16.mxu0 0
        %2255 = vmatpush2.bf16.msra.mxu0 0
        %2256 = vmatprep.subr.bf16.mxu0 0
        %2257 = vmatpush2.bf16.msra.mxu0 0
        %2258 = vmatprep.subr.bf16.mxu0 0
        %2259 = vmatpush2.bf16.msra.mxu0 0
        %2260 = vmatprep.subr.bf16.mxu0 0
        %2261 = vmatpush2.bf16.msra.mxu0 0
        %2262 = vmatprep.subr.bf16.mxu0 0
        %2263 = vmatpush2.bf16.msra.mxu0 0
        %2264 = vmatprep.subr.bf16.mxu0 0
        %2265 = vmatpush2.bf16.msra.mxu0 0
        %2266 = vmatprep.subr.bf16.mxu0 0
        %2267 = vmatpush2.bf16.msra.mxu0 0
        %2268 = vmatprep.subr.bf16.mxu0 0
        %2269 = vmatpush2.bf16.msra.mxu0 0
        %2270 = vmatprep.mubr.bf16.mxu0 0
        %2271 = vmatmul.mubr.bf16.gmra.mxu0 %v2084
        %v2272 = vpop.f32.mrf.mxu0
        %v2273 = vadd.f32 0.0, %v2272
        %v2274 = vpop.f32.mrf.mxu0
        %v2275 = vadd.f32 0.0, %v2274
        %v2276 = vpop.f32.mrf.mxu0
        %v2277 = vpop.f32.mrf.mxu0
        %2278 = vdwg.mxu0
        %2279 = vmatprep.subr.bf16.mxu0 %v1347
        %2280 = vmatpush1.bf16.msra.mxu0 %v1346
        %2281 = vmatprep.subr.bf16.mxu0 %v1343
        %2282 = vmatpush1.bf16.msra.mxu0 %v1342
        %2283 = vmatprep.subr.bf16.mxu0 %v1339
        %2284 = vmatpush1.bf16.msra.mxu0 %v1338
        %2285 = vmatprep.subr.bf16.mxu0 %v1335
        %2286 = vmatpush1.bf16.msra.mxu0 %v1334
        %2287 = vmatprep.subr.bf16.mxu0 %v1331
        %2288 = vmatpush1.bf16.msra.mxu0 %v1330
        %2289 = vmatprep.subr.bf16.mxu0 %v1327
        %2290 = vmatpush1.bf16.msra.mxu0 %v1326
        %2291 = vmatprep.subr.bf16.mxu0 %v1323
        %2292 = vmatpush1.bf16.msra.mxu0 %v1322
        %2293 = vmatprep.subr.bf16.mxu0 %v1319
        %2294 = vmatpush1.bf16.msra.mxu0 %v1318
        %2295 = vmatprep.subr.bf16.mxu0 0
        %2296 = vmatpush2.bf16.msra.mxu0 0
        %2297 = vmatprep.subr.bf16.mxu0 0
        %2298 = vmatpush2.bf16.msra.mxu0 0
        %2299 = vmatprep.subr.bf16.mxu0 0
        %2300 = vmatpush2.bf16.msra.mxu0 0
        %2301 = vmatprep.subr.bf16.mxu0 0
        %2302 = vmatpush2.bf16.msra.mxu0 0
        %2303 = vmatprep.subr.bf16.mxu0 0
        %2304 = vmatpush2.bf16.msra.mxu0 0
        %2305 = vmatprep.subr.bf16.mxu0 0
        %2306 = vmatpush2.bf16.msra.mxu0 0
        %2307 = vmatprep.subr.bf16.mxu0 0
        %2308 = vmatpush2.bf16.msra.mxu0 0
        %2309 = vmatprep.subr.bf16.mxu0 0
        %2310 = vmatpush2.bf16.msra.mxu0 0
        %2311 = vmatprep.mubr.bf16.mxu0 0
        %2312 = vmatmul.mubr.bf16.gmra.mxu0 %v2196
        %v2313 = vpop.f32.mrf.mxu0
        %v2314 = vadd.f32 %v2232, %v2313
        %v2315 = vpop.f32.mrf.mxu0
        %v2316 = vadd.f32 %v2234, %v2315
        %v2317 = vpop.f32.mrf.mxu0
        %v2318 = vpop.f32.mrf.mxu0
        %2319 = vdwg.mxu0
        %2320 = vmatprep.subr.bf16.mxu0 %v1349
        %2321 = vmatpush1.bf16.msra.mxu0 %v1348
        %2322 = vmatprep.subr.bf16.mxu0 %v1345
        %2323 = vmatpush1.bf16.msra.mxu0 %v1344
        %2324 = vmatprep.subr.bf16.mxu0 %v1341
        %2325 = vmatpush1.bf16.msra.mxu0 %v1340
        %2326 = vmatprep.subr.bf16.mxu0 %v1337
        %2327 = vmatpush1.bf16.msra.mxu0 %v1336
        %2328 = vmatprep.subr.bf16.mxu0 %v1333
        %2329 = vmatpush1.bf16.msra.mxu0 %v1332
        %2330 = vmatprep.subr.bf16.mxu0 %v1329
        %2331 = vmatpush1.bf16.msra.mxu0 %v1328
        %2332 = vmatprep.subr.bf16.mxu0 %v1325
        %2333 = vmatpush1.bf16.msra.mxu0 %v1324
        %2334 = vmatprep.subr.bf16.mxu0 %v1321
        %2335 = vmatpush1.bf16.msra.mxu0 %v1320
        %2336 = vmatprep.subr.bf16.mxu0 0
        %2337 = vmatpush2.bf16.msra.mxu0 0
        %2338 = vmatprep.subr.bf16.mxu0 0
        %2339 = vmatpush2.bf16.msra.mxu0 0
        %2340 = vmatprep.subr.bf16.mxu0 0
        %2341 = vmatpush2.bf16.msra.mxu0 0
        %2342 = vmatprep.subr.bf16.mxu0 0
        %2343 = vmatpush2.bf16.msra.mxu0 0
        %2344 = vmatprep.subr.bf16.mxu0 0
        %2345 = vmatpush2.bf16.msra.mxu0 0
        %2346 = vmatprep.subr.bf16.mxu0 0
        %2347 = vmatpush2.bf16.msra.mxu0 0
        %2348 = vmatprep.subr.bf16.mxu0 0
        %2349 = vmatpush2.bf16.msra.mxu0 0
        %2350 = vmatprep.subr.bf16.mxu0 0
        %2351 = vmatpush2.bf16.msra.mxu0 0
        %2352 = vmatprep.mubr.bf16.mxu0 0
        %2353 = vmatmul.mubr.bf16.gmra.mxu0 %v2196
        %v2354 = vpop.f32.mrf.mxu0
        %v2355 = vadd.f32 %v2273, %v2354
        %v2356 = vpop.f32.mrf.mxu0
        %v2357 = vadd.f32 %v2275, %v2356
        %v2358 = vpop.f32.mrf.mxu0
        %v2359 = vpop.f32.mrf.mxu0
        %2360 = vdwg.mxu0
        %v2361 = vadd.f32 %v2314, %v687
        %v2362 = vadd.f32 %v2316, %v691
        %v2363 = vadd.f32 %v2355, %v695
        %v2364 = vadd.f32 %v2357, %v699
        %v2365 = vmul.f32 %v2361, 0.5
        %v2366 = vtanh.pop %v2365
        %v2367 = vmul.f32 %v2366, 0.5
        %v2368 = vadd.f32 %v2367, 0.5
        %v2369 = vmul.f32 %v2362, 0.5
        %v2370 = vtanh.pop %v2369
        %v2371 = vmul.f32 %v2370, 0.5
        %v2372 = vadd.f32 %v2371, 0.5
        %v2373 = vtanh.pop %v2363
        %v2374 = vmul.f32 %v2364, 0.5
        %v2375 = vtanh.pop %v2374
        %v2376 = vmul.f32 %v2375, 0.5
        %v2377 = vadd.f32 %v2376, 0.5
        %v2378 = vmul.f32 %v2372, %v2081
        %v2379 = vmul.f32 %v2368, %v2373
        %v2380 = vadd.f32 %v2378, %v2379
        %v2381 = vtanh.pop %v2380
        %v2382 = vmul.f32 %v2377, %v2381
        %v2383 = vpack.c.bf16 %v2382, %v2382
        %2384 = vst [vmem:[#allocation3] sm:$0xf] %v2196
        %2385 = vst [vmem:[#allocation4] sm:$0xff] %v2193
        %2386 = vst [vmem:[#allocation5] sm:$0xf] %v2383
        %2387 = vst [vmem:[#allocation6] sm:$0xff] %v2380
        %p2388 = scmp.eq.s32.totalorder %s24, 1
        // Predicated region
        $region77: #{tpu_custom_call.1} parent=55 // pred_check
          %p2389 = pneg %p2388
        $region78: #{tpu_custom_call.1} parent=55 // pred_check_branch
          %2391 = sbr.rel (%p2389) target = $region80
        $region79: #{tpu_custom_call.1} parent=55 // pred_region
          %v2392 = vld [vmem:[#allocation13] sm:$0xf]
          %v2393 = vld [vmem:[#allocation13 + $0x4] sm:$0xf]
          %v2394 = vld [vmem:[#allocation13 + $0x8] sm:$0xf]
          %v2395 = vld [vmem:[#allocation13 + $0xc] sm:$0xf]
          %v2396 = vld [vmem:[#allocation13 + $0x10] sm:$0xf]
          %v2397 = vld [vmem:[#allocation13 + $0x14] sm:$0xf]
          %v2398 = vld [vmem:[#allocation13 + $0x18] sm:$0xf]
          %v2399 = vld [vmem:[#allocation13 + $0x1c] sm:$0xf]
          %v2400 = vld [vmem:[#allocation13 + $0x20] sm:$0xf]
          %v2401 = vld [vmem:[#allocation13 + $0x24] sm:$0xf]
          %v2402 = vld [vmem:[#allocation13 + $0x28] sm:$0xf]
          %v2403 = vld [vmem:[#allocation13 + $0x2c] sm:$0xf]
          %v2404 = vld [vmem:[#allocation13 + $0x30] sm:$0xf]
          %v2405 = vld [vmem:[#allocation13 + $0x34] sm:$0xf]
          %v2406 = vld [vmem:[#allocation13 + $0x38] sm:$0xf]
          %v2407 = vld [vmem:[#allocation13 + $0x3c] sm:$0xf]
          %v2408 = vld [vmem:[%s8] sm:$0x1]
          %v2410 = vlaneseq
          %v2411 = vshrl.u32 %v2410, 7
          %v2412 = vsub.s32 0, %v2411
          %v2413 = vrot.slane %v2408, %v2412
          %v2431 = vunpack.c.l.b16 %v2392
          %v2432 = vunpack.c.l.b16 %v2393
          %v2433 = vunpack.c.l.b16 %v2394
          %v2434 = vunpack.c.l.b16 %v2395
          %v2435 = vunpack.c.l.b16 %v2396
          %v2436 = vunpack.c.l.b16 %v2397
          %v2437 = vunpack.c.l.b16 %v2398
          %v2438 = vunpack.c.l.b16 %v2399
          %v2439 = vunpack.c.l.b16 %v2400
          %v2440 = vunpack.c.l.b16 %v2401
          %v2441 = vunpack.c.l.b16 %v2402
          %v2442 = vunpack.c.l.b16 %v2403
          %v2443 = vunpack.c.l.b16 %v2404
          %v2444 = vunpack.c.l.b16 %v2405
          %v2445 = vunpack.c.l.b16 %v2406
          %v2446 = vunpack.c.l.b16 %v2407
          %v2447 = vpack.c.b16 %v2432, %v2431
          %v2448 = vpack.c.b16 %v2434, %v2433
          %v2449 = vpack.c.b16 %v2436, %v2435
          %v2450 = vpack.c.b16 %v2438, %v2437
          %v2451 = vpack.c.b16 %v2440, %v2439
          %v2452 = vpack.c.b16 %v2442, %v2441
          %v2453 = vpack.c.b16 %v2444, %v2443
          %v2454 = vpack.c.b16 %v2446, %v2445
          %2463 = vmatprep.subr.bf16.mxu0 0
          %2464 = vmatpush1.bf16.msra.mxu0 %v2454
          %2465 = vmatprep.subr.bf16.mxu0 0
          %2466 = vmatpush1.bf16.msra.mxu0 %v2453
          %2467 = vmatprep.subr.bf16.mxu0 0
          %2468 = vmatpush1.bf16.msra.mxu0 %v2452
          %2469 = vmatprep.subr.bf16.mxu0 0
          %2470 = vmatpush1.bf16.msra.mxu0 %v2451
          %2471 = vmatprep.subr.bf16.mxu0 0
          %2472 = vmatpush1.bf16.msra.mxu0 %v2450
          %2473 = vmatprep.subr.bf16.mxu0 0
          %2474 = vmatpush1.bf16.msra.mxu0 %v2449
          %2475 = vmatprep.subr.bf16.mxu0 0
          %2476 = vmatpush1.bf16.msra.mxu0 %v2448
          %2477 = vmatprep.subr.bf16.mxu0 0
          %2478 = vmatpush1.bf16.msra.mxu0 %v2447
          %2479 = vmatprep.subr.bf16.mxu0 0
          %2480 = vmatpush2.bf16.msra.mxu0 0
          %2481 = vmatprep.subr.bf16.mxu0 0
          %2482 = vmatpush2.bf16.msra.mxu0 0
          %2483 = vmatprep.subr.bf16.mxu0 0
          %2484 = vmatpush2.bf16.msra.mxu0 0
          %2485 = vmatprep.subr.bf16.mxu0 0
          %2486 = vmatpush2.bf16.msra.mxu0 0
          %2487 = vmatprep.subr.bf16.mxu0 0
          %2488 = vmatpush2.bf16.msra.mxu0 0
          %2489 = vmatprep.subr.bf16.mxu0 0
          %2490 = vmatpush2.bf16.msra.mxu0 0
          %2491 = vmatprep.subr.bf16.mxu0 0
          %2492 = vmatpush2.bf16.msra.mxu0 0
          %2493 = vmatprep.subr.bf16.mxu0 0
          %2494 = vmatpush2.bf16.msra.mxu0 0
          %2495 = vmatprep.mubr.bf16.mxu0 0
          %2496 = vmatmul.mubr.bf16.gmra.mxu0 %v2383
          %v2497 = vpop.f32.mrf.mxu0
          %v2498 = vadd.f32 %v2413, %v2497
          %v2499 = vpop.f32.mrf.mxu0
          %v2500 = vpop.f32.mrf.mxu0
          %v2501 = vpop.f32.mrf.mxu0
          %2502 = vdwg.mxu0
          %2503 = vst [vmem:[#allocation15] sm:$0xff] %v2498
        $region80: #{tpu_custom_call.1} parent=55 // pred_fallthru
          _
        // Predicated region
        $region81: #{tpu_custom_call.1} parent=55 // pred_check
          %p2504 = pneg %p231
        $region82: #{tpu_custom_call.1} parent=55 // pred_check_branch
          %2506 = sbr.rel (%p2504) target = $region84
        $region83: #{tpu_custom_call.1} parent=55 // pred_region
          %s2508 = ssub.s32 128, 128
          %2509 = vsyncadd [#allocation9], %s2508
          %s2511 = sshll.u32 [#allocation15], 4
          %s2512 = int_to_ptr.vmem [resolvable:$true] %s2511
          %2514 = dma.vmem_to_hbm [thread:$0]  %s2512, 128, %s9, [#allocation9]
        $region84: #{tpu_custom_call.1} parent=55 // pred_fallthru
          _
        // Predicated region
        $region85: #{tpu_custom_call.1} parent=55 // pred_check
          %p2515 = pneg %p231
        $region86: #{tpu_custom_call.1} parent=55 // pred_check_branch
          %2517 = sbr.rel (%p2515) target = $region88
        $region87: #{tpu_custom_call.1} parent=55 // pred_region
          %2518 = dma.done [#allocation9], 128
        $region88: #{tpu_custom_call.1} parent=55 // pred_fallthru
          _
      $region56: #{tpu_custom_call.1} parent=5 // pred_fallthru
        _
      %p2519 = scmp.le.s32.totalorder 2, %s19
      // Predicated region
      $region89: #{tpu_custom_call.1} parent=5 // pred_check
        %p2520 = pneg %p2519
      $region90: #{tpu_custom_call.1} parent=5 // pred_check_branch
        %2522 = sbr.rel (%p2520) target = $region92
      $region91: #{tpu_custom_call.1} parent=5 // pred_region
        %s2523 = ssub.s32 %s19, 2
      $region92: #{tpu_custom_call.1} parent=5 // pred_fallthru
        _
    $region6: #{tpu_custom_call.1} parent=1 // loop_footer
      %s23 = sadd.s32 1, %s19
    $region7: #{tpu_custom_call.1} parent=1 // loop_footer_branch
      %18 = sbr.rel target = $region3
    $region8: #{tpu_custom_call.1} parent=1 // loop_exit
      _
    %2524 = vsyncpa [#allocation8], 1
    %s2525 = scalar_lea.sflag [#allocation8], 1
    %2526 = vsyncpa %s2525, 1
    %2527 = vsyncpa [#allocation11], 1
    %2528 = vsyncpa [#allocation14], 1
    %2529 = vsyncpa [#allocation9], 1
    %s2530 = scalar_lea.sflag [#allocation9], 1
    %2531 = vsyncpa %s2530, 1

</llo_original>
